<compile_context>
chip_gen: v7x
topology: tpu7x:2x2x1
jax: 0.10.0
libtpu: 0.0.40
codegen_flags: <defaults>
</compile_context>

<pallas_src>
import functools

import jax
import jax.numpy as jnp
from jax.experimental import pallas as pl
from jax.experimental.pallas import tpu as pltpu


_VMEM_LIMIT = 32 * 1024 * 1024  # explicit scoped-VMEM budget (safe on v5e/v6e/v7x)


# -----------------------------------------------------------------------------
# helpers: tile-size selection (always exact divisors -> no dropped rows)
# -----------------------------------------------------------------------------
def _pick_nb(n_seq, seq_len, cap=32):
    """Largest divisor of n_seq (<= cap) with a sublane-aligned row block."""
    for nb in range(min(n_seq, cap), 0, -1):
        if n_seq % nb == 0 and (nb * seq_len) % 8 == 0:
            return nb
    return n_seq  # block == full array dims is always legal


def _pick_tile_m(m_rows, cap=512):
    """Largest row tile <= cap that exactly divides m_rows (multiple of 8)."""
    if m_rows <= cap:
        return m_rows
    for t in range(cap, 0, -1):
        if m_rows % t == 0 and t % 8 == 0:
            return t
    return m_rows


# -----------------------------------------------------------------------------
# Kernel 1: multi-head attention over a batch of NB sequences per grid step.
#   x_ref  : (NB*L, D) rows (NB sequences of length L, contiguous)
#   wq/wk/wv_ref : (H, D, Dh) per-head projection weights (scale folded into q)
#   bq/bk/bv_ref : (H, 1, Dh)
#   wo_ref : (H, Dh, D), bo_ref : (1, D)
# -----------------------------------------------------------------------------
def mha_kernel(x_ref, wq_ref, wk_ref, wv_ref, bq_ref, bk_ref, bv_ref,
               wo_ref, bo_ref, o_ref, *, n_heads, nb, seq_len, causal):
    rows, D = x_ref.shape
    L = seq_len
    H = n_heads
    Dh = D // H

    x = x_ref[...].astype(jnp.float32)                       # (rows, D)

    if causal:
        r = jax.lax.broadcasted_iota(jnp.int32, (L, L), 0)
        c = jax.lax.broadcasted_iota(jnp.int32, (L, L), 1)
        causal_mask = (c > r)[None]                           # (1, L, L)

    acc = jnp.zeros((rows, D), jnp.float32)
    for h in range(H):                                        # static unroll
        # per-head projections: plain 2-D MXU matmuls, no activation slicing
        q = jnp.dot(x, wq_ref[h], preferred_element_type=jnp.float32) + bq_ref[h]
        k = jnp.dot(x, wk_ref[h], preferred_element_type=jnp.float32) + bk_ref[h]
        v = jnp.dot(x, wv_ref[h], preferred_element_type=jnp.float32) + bv_ref[h]

        qb = q.reshape(nb, L, Dh)
        kb = k.reshape(nb, L, Dh)
        vb = v.reshape(nb, L, Dh)

        # batched scores over the NB sequences
        s = jnp.einsum('bld,bmd->blm', qb, kb,
                       preferred_element_type=jnp.float32)    # (nb, L, L)
        if causal:
            s = jnp.where(causal_mask, jnp.float32(-1e30), s)
        s = s - jnp.max(s, axis=-1, keepdims=True)
        p = jnp.exp(s)
        p = p * pl.reciprocal(jnp.sum(p, axis=-1, keepdims=True), approx=True)

        o_h = jnp.einsum('blm,bmd->bld', p, vb,
                         preferred_element_type=jnp.float32)  # (nb, L, Dh)
        # accumulate this head's slice of the output projection (no concat)
        acc = acc + jnp.dot(o_h.reshape(rows, Dh), wo_ref[h],
                            preferred_element_type=jnp.float32)

    out = acc + bo_ref[...]
    o_ref[...] = out.astype(o_ref.dtype)


def mha(x_nld, wq, wk, wv, bq, bk, bv, wo, bo, *, n_heads, causal, seq_cap=32):
    N, L, D = x_nld.shape
    H = n_heads
    assert D % H == 0
    Dh = D // H
    scale = 1.0 / (Dh ** 0.5)

    # host-side per-head weight layout (tiny, done once per call)
    wq_h = jnp.transpose(wq.reshape(D, H, Dh), (1, 0, 2)) * scale   # (H, D, Dh)
    wk_h = jnp.transpose(wk.reshape(D, H, Dh), (1, 0, 2))
    wv_h = jnp.transpose(wv.reshape(D, H, Dh), (1, 0, 2))
    bq_h = bq.reshape(H, 1, Dh) * scale
    bk_h = bk.reshape(H, 1, Dh)
    bv_h = bv.reshape(H, 1, Dh)
    wo_h = wo.reshape(H, Dh, D)                                      # (H, Dh, D)

    NB = _pick_nb(N, L, cap=seq_cap)
    assert N % NB == 0
    rows = NB * L

    x2d = x_nld.reshape(N * L, D)
    row_spec = pl.BlockSpec((rows, D), lambda i: (i, 0))
    full3 = lambda i: (0, 0, 0)
    full2 = lambda i: (0, 0)

    out2d = pl.pallas_call(
        functools.partial(mha_kernel, n_heads=H, nb=NB, seq_len=L, causal=causal),
        out_shape=jax.ShapeDtypeStruct((N * L, D), x_nld.dtype),
        grid=(N // NB,),
        in_specs=[
            row_spec,
            pl.BlockSpec((H, D, Dh), full3), pl.BlockSpec((H, D, Dh), full3),
            pl.BlockSpec((H, D, Dh), full3),
            pl.BlockSpec((H, 1, Dh), full3), pl.BlockSpec((H, 1, Dh), full3),
            pl.BlockSpec((H, 1, Dh), full3),
            pl.BlockSpec((H, Dh, D), full3), pl.BlockSpec((1, D), full2),
        ],
        out_specs=row_spec,
        compiler_params=pltpu.CompilerParams(
            dimension_semantics=("parallel",),
            vmem_limit_bytes=_VMEM_LIMIT),
    )(x2d, wq_h, wk_h, wv_h, bq_h, bk_h, bv_h, wo_h, bo)
    return out2d.reshape(N, L, D)


# -----------------------------------------------------------------------------
# Kernel 2 (fused): merge Linear(2D->D) + residual + LN1 + FFN + residual + LN2
# operating on (tile_m, D) row blocks.  One kernel instead of two -> one fewer
# HBM round trip of the activations per layer.
# -----------------------------------------------------------------------------
def merge_ffn_kernel(x_ref, temp_ref, spat_ref, wm_ref, bm_ref,
                     g1_ref, b1_ref, w1_ref, fb1_ref, w2_ref, fb2_ref,
                     g2_ref, b2_ref, o_ref):
    x = x_ref[...].astype(jnp.float32)
    ts = jnp.concatenate([temp_ref[...].astype(jnp.float32),
                          spat_ref[...].astype(jnp.float32)], axis=-1)  # (m, 2D)
    merged = jnp.dot(ts, wm_ref[...], preferred_element_type=jnp.float32) + bm_ref[...]

    # residual + LayerNorm1
    y = x + merged
    mean = jnp.mean(y, axis=-1, keepdims=True)
    yc = y - mean
    var = jnp.mean(yc * yc, axis=-1, keepdims=True)
    h1 = yc * jax.lax.rsqrt(var + 1e-5) * g1_ref[...] + b1_ref[...]

    # FFN (D -> 4D -> ReLU -> D)
    h = jnp.dot(h1, w1_ref[...], preferred_element_type=jnp.float32) + fb1_ref[...]
    h = jnp.maximum(h, 0.0)
    f = jnp.dot(h, w2_ref[...], preferred_element_type=jnp.float32) + fb2_ref[...]

    # residual + LayerNorm2
    y2 = h1 + f
    mean2 = jnp.mean(y2, axis=-1, keepdims=True)
    yc2 = y2 - mean2
    var2 = jnp.mean(yc2 * yc2, axis=-1, keepdims=True)
    out = yc2 * jax.lax.rsqrt(var2 + 1e-5) * g2_ref[...] + b2_ref[...]
    o_ref[...] = out.astype(o_ref.dtype)


def merge_ffn(x2d, temp2d, spat2d, wm, bm, g1, b1, w1, fb1, w2, fb2, g2, b2):
    M, D = x2d.shape
    Dh = w1.shape[1]
    tile_m = _pick_tile_m(M)
    assert M % tile_m == 0, "row tile must divide M exactly"

    row = pl.BlockSpec((tile_m, D), lambda i: (i, 0))
    full2 = lambda i: (0, 0)
    return pl.pallas_call(
        merge_ffn_kernel,
        out_shape=jax.ShapeDtypeStruct((M, D), x2d.dtype),
        grid=(M // tile_m,),
        in_specs=[row, row, row,
                  pl.BlockSpec((2 * D, D), full2), pl.BlockSpec((1, D), full2),
                  pl.BlockSpec((1, D), full2), pl.BlockSpec((1, D), full2),
                  pl.BlockSpec((D, Dh), full2), pl.BlockSpec((1, Dh), full2),
                  pl.BlockSpec((Dh, D), full2), pl.BlockSpec((1, D), full2),
                  pl.BlockSpec((1, D), full2), pl.BlockSpec((1, D), full2)],
        out_specs=row,
        compiler_params=pltpu.CompilerParams(
            dimension_semantics=("parallel",),
            vmem_limit_bytes=_VMEM_LIMIT),
    )(x2d, temp2d, spat2d, wm, bm, g1, b1, w1, fb1, w2, fb2, g2, b2)


# -----------------------------------------------------------------------------
# Parameters (deterministic, synthetic)
# -----------------------------------------------------------------------------
def init_params(key, d_model, n_heads, num_layers, max_seq_len):
    D = d_model
    keys = jax.random.split(key, 1 + num_layers)
    params = {
        "pos_embed": jax.random.normal(keys[0], (max_seq_len, D), jnp.float32) * 0.02,
        "layers": [],
    }
    for li in range(num_layers):
        k = jax.random.split(keys[1 + li], 20)
        w = lambda i, shape: jax.random.normal(k[i], shape, jnp.float32) * 0.02
        layer = dict(
            t_wq=w(0, (D, D)), t_wk=w(1, (D, D)), t_wv=w(2, (D, D)),
            t_bq=w(3, (1, D)), t_bk=w(4, (1, D)), t_bv=w(5, (1, D)),
            t_wo=w(6, (D, D)), t_bo=w(7, (1, D)),
            s_wq=w(8, (D, D)), s_wk=w(9, (D, D)), s_wv=w(10, (D, D)),
            s_bq=w(11, (1, D)), s_bk=w(12, (1, D)), s_bv=w(13, (1, D)),
            s_wo=w(14, (D, D)), s_bo=w(15, (1, D)),
            m_w=w(16, (2 * D, D)), m_b=w(17, (1, D)),
            n1_g=jnp.ones((1, D), jnp.float32), n1_b=jnp.zeros((1, D), jnp.float32),
            f_w1=w(18, (D, 4 * D)), f_b1=jnp.zeros((1, 4 * D), jnp.float32),
            f_w2=w(19, (4 * D, D)), f_b2=jnp.zeros((1, D), jnp.float32),
            n2_g=jnp.ones((1, D), jnp.float32), n2_b=jnp.zeros((1, D), jnp.float32),
        )
        params["layers"].append(layer)
    return params


# -----------------------------------------------------------------------------
# Full Decoder forward (glue in JAX, hot paths in Pallas)
# -----------------------------------------------------------------------------
def decoder_forward(x, params, n_heads):
    B, T, V, D = x.shape
    # positional embedding: pos_embed(arange(T)) broadcast over (B, V)
    x = x + params["pos_embed"][:T][None, :, None, :]

    for lp in params["layers"]:
        # --- temporal attention: sequence axis T, batch = B*V (1 transpose) ---
        t_in = jnp.transpose(x, (0, 2, 1, 3)).reshape(B * V, T, D)
        temp = mha(t_in, lp["t_wq"], lp["t_wk"], lp["t_wv"],
                   lp["t_bq"], lp["t_bk"], lp["t_bv"],
                   lp["t_wo"], lp["t_bo"], n_heads=n_heads, causal=True)
        temp = jnp.transpose(temp.reshape(B, V, T, D), (0, 2, 1, 3))

        # --- spatial attention: sequence axis V, batch = B*T (no mask) ---
        s_in = x.reshape(B * T, V, D)
        spat = mha(s_in, lp["s_wq"], lp["s_wk"], lp["s_wv"],
                   lp["s_bq"], lp["s_bk"], lp["s_bv"],
                   lp["s_wo"], lp["s_bo"], n_heads=n_heads, causal=False)
        spat = spat.reshape(B, T, V, D)

        # --- fused: merge + residual + LN1 + FFN + residual + LN2 ---
        M = B * T * V
        x = merge_ffn(x.reshape(M, D), temp.reshape(M, D), spat.reshape(M, D),
                      lp["m_w"], lp["m_b"], lp["n1_g"], lp["n1_b"],
                      lp["f_w1"], lp["f_b1"], lp["f_w2"], lp["f_b2"],
                      lp["n2_g"], lp["n2_b"]).reshape(B, T, V, D)
    return x


if __name__ == "__main__":
    B, T, V, D = 2, 8, 4, 32
    n_heads, num_layers, max_seq_len = 4, 2, 16

    key = jax.random.PRNGKey(0)
    kx, kp = jax.random.split(key)
    x = jax.random.normal(kx, (B, T, V, D), jnp.float32)
    params = init_params(kp, D, n_heads, num_layers, max_seq_len)

    out = decoder_forward(x, params, n_heads)
    out = jax.block_until_ready(out)
    assert out.shape == (B, T, V, D) and out.dtype == jnp.float32
    # TODO(synk): for production shapes, pad D to a multiple of 128 end-to-end
    # (lane-dense stores) and feed bf16 operands to the MXU.
    print("KERNEL_OK")
</pallas_src>

<mosaic_0001>
module attributes {stable_mosaic.version = 11 : i64} {
  func.func @mha_kernel(%arg0: i32, %arg1: memref<64x32xf32, #tpu.memory_space<vmem>>, %arg2: memref<4x32x8xf32, #tpu.memory_space<vmem>>, %arg3: memref<4x32x8xf32, #tpu.memory_space<vmem>>, %arg4: memref<4x32x8xf32, #tpu.memory_space<vmem>>, %arg5: memref<4x1x8xf32, #tpu.memory_space<vmem>>, %arg6: memref<4x1x8xf32, #tpu.memory_space<vmem>>, %arg7: memref<4x1x8xf32, #tpu.memory_space<vmem>>, %arg8: memref<4x8x32xf32, #tpu.memory_space<vmem>>, %arg9: memref<1x32xf32, #tpu.memory_space<vmem>>, %arg10: memref<64x32xf32, #tpu.memory_space<vmem>>) attributes {dimension_semantics = [#tpu.dimension_semantics<parallel>], iteration_bounds = array<i64: 1>, scalar_prefetch = 0 : i64, scratch_operands = 0 : i64, tpu.core_type = #tpu.core_type<tc>, window_params = [{transform_indices = @transform_0, window_bounds = array<i64: 64, 32>}, {pipeline_mode = #tpu.pipeline_mode<synchronous>, transform_indices = @transform_1, window_bounds = array<i64: 4, 32, 8>}, {pipeline_mode = #tpu.pipeline_mode<synchronous>, transform_indices = @transform_2, window_bounds = array<i64: 4, 32, 8>}, {pipeline_mode = #tpu.pipeline_mode<synchronous>, transform_indices = @transform_3, window_bounds = array<i64: 4, 32, 8>}, {pipeline_mode = #tpu.pipeline_mode<synchronous>, transform_indices = @transform_4, window_bounds = array<i64: 4, 1, 8>}, {pipeline_mode = #tpu.pipeline_mode<synchronous>, transform_indices = @transform_5, window_bounds = array<i64: 4, 1, 8>}, {pipeline_mode = #tpu.pipeline_mode<synchronous>, transform_indices = @transform_6, window_bounds = array<i64: 4, 1, 8>}, {pipeline_mode = #tpu.pipeline_mode<synchronous>, transform_indices = @transform_7, window_bounds = array<i64: 4, 8, 32>}, {pipeline_mode = #tpu.pipeline_mode<synchronous>, transform_indices = @transform_8, window_bounds = array<i64: 1, 32>}, {transform_indices = @transform_9, window_bounds = array<i64: 64, 32>}]} {
    %c0 = arith.constant 0 : index
    %c0_0 = arith.constant 0 : index
    %0 = vector.load %arg1[%c0, %c0_0] : memref<64x32xf32, #tpu.memory_space<vmem>>, vector<64x32xf32>
    %1 = tpu.iota {dimensions = array<i32: 0>} : vector<8x8xi32>
    %2 = tpu.iota {dimensions = array<i32: 1>} : vector<8x8xi32>
    %3 = arith.cmpi sgt, %2, %1 : vector<8x8xi32>
    %4 = vector.shape_cast %3 : vector<8x8xi1> to vector<1x8x8xi1>
    %cst = arith.constant 0.000000e+00 : f32
    %5 = vector.broadcast %cst : f32 to vector<64x32xf32>
    %c0_1 = arith.constant 0 : index
    %c0_2 = arith.constant 0 : index
    %c0_3 = arith.constant 0 : index
    %6 = vector.load %arg2[%c0_1, %c0_2, %c0_3] : memref<4x32x8xf32, #tpu.memory_space<vmem>>, vector<1x32x8xf32>
    %7 = vector.shape_cast %6 : vector<1x32x8xf32> to vector<32x8xf32>
    %cst_4 = arith.constant dense<0.000000e+00> : vector<64x8xf32>
    %8 = tpu.matmul %0, %7, %cst_4 {dimension_numbers = #tpu.dot_dimension_numbers<[1], [0], [0], [1], [0, 0, 1, 1], [], []>} : vector<64x32xf32>, vector<32x8xf32>, vector<64x8xf32> -> vector<64x8xf32>
    %c0_5 = arith.constant 0 : index
    %c0_6 = arith.constant 0 : index
    %c0_7 = arith.constant 0 : index
    %9 = vector.load %arg5[%c0_5, %c0_6, %c0_7] : memref<4x1x8xf32, #tpu.memory_space<vmem>>, vector<1x1x8xf32>
    %10 = vector.shape_cast %9 : vector<1x1x8xf32> to vector<1x8xf32>
    %11 = vector.broadcast %10 : vector<1x8xf32> to vector<64x8xf32>
    %12 = arith.addf %8, %11 : vector<64x8xf32>
    %c0_8 = arith.constant 0 : index
    %c0_9 = arith.constant 0 : index
    %c0_10 = arith.constant 0 : index
    %13 = vector.load %arg3[%c0_8, %c0_9, %c0_10] : memref<4x32x8xf32, #tpu.memory_space<vmem>>, vector<1x32x8xf32>
    %14 = vector.shape_cast %13 : vector<1x32x8xf32> to vector<32x8xf32>
    %cst_11 = arith.constant dense<0.000000e+00> : vector<64x8xf32>
    %15 = tpu.matmul %0, %14, %cst_11 {dimension_numbers = #tpu.dot_dimension_numbers<[1], [0], [0], [1], [0, 0, 1, 1], [], []>} : vector<64x32xf32>, vector<32x8xf32>, vector<64x8xf32> -> vector<64x8xf32>
    %c0_12 = arith.constant 0 : index
    %c0_13 = arith.constant 0 : index
    %c0_14 = arith.constant 0 : index
    %16 = vector.load %arg6[%c0_12, %c0_13, %c0_14] : memref<4x1x8xf32, #tpu.memory_space<vmem>>, vector<1x1x8xf32>
    %17 = vector.shape_cast %16 : vector<1x1x8xf32> to vector<1x8xf32>
    %18 = vector.broadcast %17 : vector<1x8xf32> to vector<64x8xf32>
    %19 = arith.addf %15, %18 : vector<64x8xf32>
    %c0_15 = arith.constant 0 : index
    %c0_16 = arith.constant 0 : index
    %c0_17 = arith.constant 0 : index
    %20 = vector.load %arg4[%c0_15, %c0_16, %c0_17] : memref<4x32x8xf32, #tpu.memory_space<vmem>>, vector<1x32x8xf32>
    %21 = vector.shape_cast %20 : vector<1x32x8xf32> to vector<32x8xf32>
    %cst_18 = arith.constant dense<0.000000e+00> : vector<64x8xf32>
    %22 = tpu.matmul %0, %21, %cst_18 {dimension_numbers = #tpu.dot_dimension_numbers<[1], [0], [0], [1], [0, 0, 1, 1], [], []>} : vector<64x32xf32>, vector<32x8xf32>, vector<64x8xf32> -> vector<64x8xf32>
    %c0_19 = arith.constant 0 : index
    %c0_20 = arith.constant 0 : index
    %c0_21 = arith.constant 0 : index
    %23 = vector.load %arg7[%c0_19, %c0_20, %c0_21] : memref<4x1x8xf32, #tpu.memory_space<vmem>>, vector<1x1x8xf32>
    %24 = vector.shape_cast %23 : vector<1x1x8xf32> to vector<1x8xf32>
    %25 = vector.broadcast %24 : vector<1x8xf32> to vector<64x8xf32>
    %26 = arith.addf %22, %25 : vector<64x8xf32>
    %27 = vector.shape_cast %12 : vector<64x8xf32> to vector<8x8x8xf32>
    %28 = vector.shape_cast %19 : vector<64x8xf32> to vector<8x8x8xf32>
    %29 = vector.shape_cast %26 : vector<64x8xf32> to vector<8x8x8xf32>
    "tpu.trace_start"() <{level = 10 : i32, message = "bld,bmd->blm"}> : () -> ()
    %cst_22 = arith.constant dense<0.000000e+00> : vector<8x8x8xf32>
    %30 = tpu.matmul %27, %28, %cst_22 {dimension_numbers = #tpu.dot_dimension_numbers<[2], [2], [1], [1], [0, 0, 0, 1, 1, 1], [0], [0]>} : vector<8x8x8xf32>, vector<8x8x8xf32>, vector<8x8x8xf32> -> vector<8x8x8xf32>
    %cst_23 = arith.constant -1.000000e+30 : f32
    "tpu.trace_stop"() : () -> ()
    %31 = vector.shape_cast %4 : vector<1x8x8xi1> to vector<1x8x8xi1>
    %32 = vector.broadcast %31 : vector<1x8x8xi1> to vector<8x8x8xi1>
    %33 = vector.broadcast %cst_23 : f32 to vector<8x8x8xf32>
    %34 = arith.select %32, %33, %30 : vector<8x8x8xi1>, vector<8x8x8xf32>
    %cst_24 = arith.constant dense<0xFF800000> : vector<8x8xf32>
    %35 = vector.multi_reduction <maximumf>, %34, %cst_24 [2] : vector<8x8x8xf32> to vector<8x8xf32>
    %36 = vector.shape_cast %35 : vector<8x8xf32> to vector<8x8x1xf32>
    %37 = vector.broadcast %36 : vector<8x8x1xf32> to vector<8x8x8xf32>
    %38 = arith.subf %34, %37 : vector<8x8x8xf32>
    %39 = math.exp %38 : vector<8x8x8xf32>
    %cst_25 = arith.constant dense<0.000000e+00> : vector<8x8xf32>
    %40 = vector.multi_reduction <add>, %39, %cst_25 [2] : vector<8x8x8xf32> to vector<8x8xf32>
    %41 = vector.shape_cast %40 : vector<8x8xf32> to vector<8x8x1xf32>
    %42 = tpu.reciprocal %41 {approx = true} : vector<8x8x1xf32> -> vector<8x8x1xf32>
    %43 = vector.broadcast %42 : vector<8x8x1xf32> to vector<8x8x8xf32>
    %44 = arith.mulf %39, %43 : vector<8x8x8xf32>
    "tpu.trace_start"() <{level = 10 : i32, message = "blm,bmd->bld"}> : () -> ()
    %cst_26 = arith.constant dense<0.000000e+00> : vector<8x8x8xf32>
    %45 = tpu.matmul %44, %29, %cst_26 {dimension_numbers = #tpu.dot_dimension_numbers<[2], [1], [1], [2], [0, 0, 0, 1, 1, 2], [0], [0]>} : vector<8x8x8xf32>, vector<8x8x8xf32>, vector<8x8x8xf32> -> vector<8x8x8xf32>
    "tpu.trace_stop"() : () -> ()
    %46 = vector.shape_cast %45 : vector<8x8x8xf32> to vector<64x8xf32>
    %c0_27 = arith.constant 0 : index
    %c0_28 = arith.constant 0 : index
    %c0_29 = arith.constant 0 : index
    %47 = vector.load %arg8[%c0_27, %c0_28, %c0_29] : memref<4x8x32xf32, #tpu.memory_space<vmem>>, vector<1x8x32xf32>
    %48 = vector.shape_cast %47 : vector<1x8x32xf32> to vector<8x32xf32>
    %cst_30 = arith.constant dense<0.000000e+00> : vector<64x32xf32>
    %49 = tpu.matmul %46, %48, %cst_30 {dimension_numbers = #tpu.dot_dimension_numbers<[1], [0], [0], [1], [0, 0, 1, 1], [], []>} : vector<64x8xf32>, vector<8x32xf32>, vector<64x32xf32> -> vector<64x32xf32>
    %50 = arith.addf %5, %49 : vector<64x32xf32>
    %c1 = arith.constant 1 : index
    %c0_31 = arith.constant 0 : index
    %c0_32 = arith.constant 0 : index
    %51 = vector.load %arg2[%c1, %c0_31, %c0_32] : memref<4x32x8xf32, #tpu.memory_space<vmem>>, vector<1x32x8xf32>
    %52 = vector.shape_cast %51 : vector<1x32x8xf32> to vector<32x8xf32>
    %cst_33 = arith.constant dense<0.000000e+00> : vector<64x8xf32>
    %53 = tpu.matmul %0, %52, %cst_33 {dimension_numbers = #tpu.dot_dimension_numbers<[1], [0], [0], [1], [0, 0, 1, 1], [], []>} : vector<64x32xf32>, vector<32x8xf32>, vector<64x8xf32> -> vector<64x8xf32>
    %c1_34 = arith.constant 1 : index
    %c0_35 = arith.constant 0 : index
    %c0_36 = arith.constant 0 : index
    %54 = vector.load %arg5[%c1_34, %c0_35, %c0_36] : memref<4x1x8xf32, #tpu.memory_space<vmem>>, vector<1x1x8xf32>
    %55 = vector.shape_cast %54 : vector<1x1x8xf32> to vector<1x8xf32>
    %56 = vector.broadcast %55 : vector<1x8xf32> to vector<64x8xf32>
    %57 = arith.addf %53, %56 : vector<64x8xf32>
    %c1_37 = arith.constant 1 : index
    %c0_38 = arith.constant 0 : index
    %c0_39 = arith.constant 0 : index
    %58 = vector.load %arg3[%c1_37, %c0_38, %c0_39] : memref<4x32x8xf32, #tpu.memory_space<vmem>>, vector<1x32x8xf32>
    %59 = vector.shape_cast %58 : vector<1x32x8xf32> to vector<32x8xf32>
    %cst_40 = arith.constant dense<0.000000e+00> : vector<64x8xf32>
    %60 = tpu.matmul %0, %59, %cst_40 {dimension_numbers = #tpu.dot_dimension_numbers<[1], [0], [0], [1], [0, 0, 1, 1], [], []>} : vector<64x32xf32>, vector<32x8xf32>, vector<64x8xf32> -> vector<64x8xf32>
    %c1_41 = arith.constant 1 : index
    %c0_42 = arith.constant 0 : index
    %c0_43 = arith.constant 0 : index
    %61 = vector.load %arg6[%c1_41, %c0_42, %c0_43] : memref<4x1x8xf32, #tpu.memory_space<vmem>>, vector<1x1x8xf32>
    %62 = vector.shape_cast %61 : vector<1x1x8xf32> to vector<1x8xf32>
    %63 = vector.broadcast %62 : vector<1x8xf32> to vector<64x8xf32>
    %64 = arith.addf %60, %63 : vector<64x8xf32>
    %c1_44 = arith.constant 1 : index
    %c0_45 = arith.constant 0 : index
    %c0_46 = arith.constant 0 : index
    %65 = vector.load %arg4[%c1_44, %c0_45, %c0_46] : memref<4x32x8xf32, #tpu.memory_space<vmem>>, vector<1x32x8xf32>
    %66 = vector.shape_cast %65 : vector<1x32x8xf32> to vector<32x8xf32>
    %cst_47 = arith.constant dense<0.000000e+00> : vector<64x8xf32>
    %67 = tpu.matmul %0, %66, %cst_47 {dimension_numbers = #tpu.dot_dimension_numbers<[1], [0], [0], [1], [0, 0, 1, 1], [], []>} : vector<64x32xf32>, vector<32x8xf32>, vector<64x8xf32> -> vector<64x8xf32>
    %c1_48 = arith.constant 1 : index
    %c0_49 = arith.constant 0 : index
    %c0_50 = arith.constant 0 : index
    %68 = vector.load %arg7[%c1_48, %c0_49, %c0_50] : memref<4x1x8xf32, #tpu.memory_space<vmem>>, vector<1x1x8xf32>
    %69 = vector.shape_cast %68 : vector<1x1x8xf32> to vector<1x8xf32>
    %70 = vector.broadcast %69 : vector<1x8xf32> to vector<64x8xf32>
    %71 = arith.addf %67, %70 : vector<64x8xf32>
    %72 = vector.shape_cast %57 : vector<64x8xf32> to vector<8x8x8xf32>
    %73 = vector.shape_cast %64 : vector<64x8xf32> to vector<8x8x8xf32>
    %74 = vector.shape_cast %71 : vector<64x8xf32> to vector<8x8x8xf32>
    "tpu.trace_start"() <{level = 10 : i32, message = "bld,bmd->blm"}> : () -> ()
    %cst_51 = arith.constant dense<0.000000e+00> : vector<8x8x8xf32>
    %75 = tpu.matmul %72, %73, %cst_51 {dimension_numbers = #tpu.dot_dimension_numbers<[2], [2], [1], [1], [0, 0, 0, 1, 1, 1], [0], [0]>} : vector<8x8x8xf32>, vector<8x8x8xf32>, vector<8x8x8xf32> -> vector<8x8x8xf32>
    %cst_52 = arith.constant -1.000000e+30 : f32
    "tpu.trace_stop"() : () -> ()
    %76 = vector.shape_cast %4 : vector<1x8x8xi1> to vector<1x8x8xi1>
    %77 = vector.broadcast %76 : vector<1x8x8xi1> to vector<8x8x8xi1>
    %78 = vector.broadcast %cst_52 : f32 to vector<8x8x8xf32>
    %79 = arith.select %77, %78, %75 : vector<8x8x8xi1>, vector<8x8x8xf32>
    %cst_53 = arith.constant dense<0xFF800000> : vector<8x8xf32>
    %80 = vector.multi_reduction <maximumf>, %79, %cst_53 [2] : vector<8x8x8xf32> to vector<8x8xf32>
    %81 = vector.shape_cast %80 : vector<8x8xf32> to vector<8x8x1xf32>
    %82 = vector.broadcast %81 : vector<8x8x1xf32> to vector<8x8x8xf32>
    %83 = arith.subf %79, %82 : vector<8x8x8xf32>
    %84 = math.exp %83 : vector<8x8x8xf32>
    %cst_54 = arith.constant dense<0.000000e+00> : vector<8x8xf32>
    %85 = vector.multi_reduction <add>, %84, %cst_54 [2] : vector<8x8x8xf32> to vector<8x8xf32>
    %86 = vector.shape_cast %85 : vector<8x8xf32> to vector<8x8x1xf32>
    %87 = tpu.reciprocal %86 {approx = true} : vector<8x8x1xf32> -> vector<8x8x1xf32>
    %88 = vector.broadcast %87 : vector<8x8x1xf32> to vector<8x8x8xf32>
    %89 = arith.mulf %84, %88 : vector<8x8x8xf32>
    "tpu.trace_start"() <{level = 10 : i32, message = "blm,bmd->bld"}> : () -> ()
    %cst_55 = arith.constant dense<0.000000e+00> : vector<8x8x8xf32>
    %90 = tpu.matmul %89, %74, %cst_55 {dimension_numbers = #tpu.dot_dimension_numbers<[2], [1], [1], [2], [0, 0, 0, 1, 1, 2], [0], [0]>} : vector<8x8x8xf32>, vector<8x8x8xf32>, vector<8x8x8xf32> -> vector<8x8x8xf32>
    "tpu.trace_stop"() : () -> ()
    %91 = vector.shape_cast %90 : vector<8x8x8xf32> to vector<64x8xf32>
    %c1_56 = arith.constant 1 : index
    %c0_57 = arith.constant 0 : index
    %c0_58 = arith.constant 0 : index
    %92 = vector.load %arg8[%c1_56, %c0_57, %c0_58] : memref<4x8x32xf32, #tpu.memory_space<vmem>>, vector<1x8x32xf32>
    %93 = vector.shape_cast %92 : vector<1x8x32xf32> to vector<8x32xf32>
    %cst_59 = arith.constant dense<0.000000e+00> : vector<64x32xf32>
    %94 = tpu.matmul %91, %93, %cst_59 {dimension_numbers = #tpu.dot_dimension_numbers<[1], [0], [0], [1], [0, 0, 1, 1], [], []>} : vector<64x8xf32>, vector<8x32xf32>, vector<64x32xf32> -> vector<64x32xf32>
    %95 = arith.addf %50, %94 : vector<64x32xf32>
    %c2 = arith.constant 2 : index
    %c0_60 = arith.constant 0 : index
    %c0_61 = arith.constant 0 : index
    %96 = vector.load %arg2[%c2, %c0_60, %c0_61] : memref<4x32x8xf32, #tpu.memory_space<vmem>>, vector<1x32x8xf32>
    %97 = vector.shape_cast %96 : vector<1x32x8xf32> to vector<32x8xf32>
    %cst_62 = arith.constant dense<0.000000e+00> : vector<64x8xf32>
    %98 = tpu.matmul %0, %97, %cst_62 {dimension_numbers = #tpu.dot_dimension_numbers<[1], [0], [0], [1], [0, 0, 1, 1], [], []>} : vector<64x32xf32>, vector<32x8xf32>, vector<64x8xf32> -> vector<64x8xf32>
    %c2_63 = arith.constant 2 : index
    %c0_64 = arith.constant 0 : index
    %c0_65 = arith.constant 0 : index
    %99 = vector.load %arg5[%c2_63, %c0_64, %c0_65] : memref<4x1x8xf32, #tpu.memory_space<vmem>>, vector<1x1x8xf32>
    %100 = vector.shape_cast %99 : vector<1x1x8xf32> to vector<1x8xf32>
    %101 = vector.broadcast %100 : vector<1x8xf32> to vector<64x8xf32>
    %102 = arith.addf %98, %101 : vector<64x8xf32>
    %c2_66 = arith.constant 2 : index
    %c0_67 = arith.constant 0 : index
    %c0_68 = arith.constant 0 : index
    %103 = vector.load %arg3[%c2_66, %c0_67, %c0_68] : memref<4x32x8xf32, #tpu.memory_space<vmem>>, vector<1x32x8xf32>
    %104 = vector.shape_cast %103 : vector<1x32x8xf32> to vector<32x8xf32>
    %cst_69 = arith.constant dense<0.000000e+00> : vector<64x8xf32>
    %105 = tpu.matmul %0, %104, %cst_69 {dimension_numbers = #tpu.dot_dimension_numbers<[1], [0], [0], [1], [0, 0, 1, 1], [], []>} : vector<64x32xf32>, vector<32x8xf32>, vector<64x8xf32> -> vector<64x8xf32>
    %c2_70 = arith.constant 2 : index
    %c0_71 = arith.constant 0 : index
    %c0_72 = arith.constant 0 : index
    %106 = vector.load %arg6[%c2_70, %c0_71, %c0_72] : memref<4x1x8xf32, #tpu.memory_space<vmem>>, vector<1x1x8xf32>
    %107 = vector.shape_cast %106 : vector<1x1x8xf32> to vector<1x8xf32>
    %108 = vector.broadcast %107 : vector<1x8xf32> to vector<64x8xf32>
    %109 = arith.addf %105, %108 : vector<64x8xf32>
    %c2_73 = arith.constant 2 : index
    %c0_74 = arith.constant 0 : index
    %c0_75 = arith.constant 0 : index
    %110 = vector.load %arg4[%c2_73, %c0_74, %c0_75] : memref<4x32x8xf32, #tpu.memory_space<vmem>>, vector<1x32x8xf32>
    %111 = vector.shape_cast %110 : vector<1x32x8xf32> to vector<32x8xf32>
    %cst_76 = arith.constant dense<0.000000e+00> : vector<64x8xf32>
    %112 = tpu.matmul %0, %111, %cst_76 {dimension_numbers = #tpu.dot_dimension_numbers<[1], [0], [0], [1], [0, 0, 1, 1], [], []>} : vector<64x32xf32>, vector<32x8xf32>, vector<64x8xf32> -> vector<64x8xf32>
    %c2_77 = arith.constant 2 : index
    %c0_78 = arith.constant 0 : index
    %c0_79 = arith.constant 0 : index
    %113 = vector.load %arg7[%c2_77, %c0_78, %c0_79] : memref<4x1x8xf32, #tpu.memory_space<vmem>>, vector<1x1x8xf32>
    %114 = vector.shape_cast %113 : vector<1x1x8xf32> to vector<1x8xf32>
    %115 = vector.broadcast %114 : vector<1x8xf32> to vector<64x8xf32>
    %116 = arith.addf %112, %115 : vector<64x8xf32>
    %117 = vector.shape_cast %102 : vector<64x8xf32> to vector<8x8x8xf32>
    %118 = vector.shape_cast %109 : vector<64x8xf32> to vector<8x8x8xf32>
    %119 = vector.shape_cast %116 : vector<64x8xf32> to vector<8x8x8xf32>
    "tpu.trace_start"() <{level = 10 : i32, message = "bld,bmd->blm"}> : () -> ()
    %cst_80 = arith.constant dense<0.000000e+00> : vector<8x8x8xf32>
    %120 = tpu.matmul %117, %118, %cst_80 {dimension_numbers = #tpu.dot_dimension_numbers<[2], [2], [1], [1], [0, 0, 0, 1, 1, 1], [0], [0]>} : vector<8x8x8xf32>, vector<8x8x8xf32>, vector<8x8x8xf32> -> vector<8x8x8xf32>
    %cst_81 = arith.constant -1.000000e+30 : f32
    "tpu.trace_stop"() : () -> ()
    %121 = vector.shape_cast %4 : vector<1x8x8xi1> to vector<1x8x8xi1>
    %122 = vector.broadcast %121 : vector<1x8x8xi1> to vector<8x8x8xi1>
    %123 = vector.broadcast %cst_81 : f32 to vector<8x8x8xf32>
    %124 = arith.select %122, %123, %120 : vector<8x8x8xi1>, vector<8x8x8xf32>
    %cst_82 = arith.constant dense<0xFF800000> : vector<8x8xf32>
    %125 = vector.multi_reduction <maximumf>, %124, %cst_82 [2] : vector<8x8x8xf32> to vector<8x8xf32>
    %126 = vector.shape_cast %125 : vector<8x8xf32> to vector<8x8x1xf32>
    %127 = vector.broadcast %126 : vector<8x8x1xf32> to vector<8x8x8xf32>
    %128 = arith.subf %124, %127 : vector<8x8x8xf32>
    %129 = math.exp %128 : vector<8x8x8xf32>
    %cst_83 = arith.constant dense<0.000000e+00> : vector<8x8xf32>
    %130 = vector.multi_reduction <add>, %129, %cst_83 [2] : vector<8x8x8xf32> to vector<8x8xf32>
    %131 = vector.shape_cast %130 : vector<8x8xf32> to vector<8x8x1xf32>
    %132 = tpu.reciprocal %131 {approx = true} : vector<8x8x1xf32> -> vector<8x8x1xf32>
    %133 = vector.broadcast %132 : vector<8x8x1xf32> to vector<8x8x8xf32>
    %134 = arith.mulf %129, %133 : vector<8x8x8xf32>
    "tpu.trace_start"() <{level = 10 : i32, message = "blm,bmd->bld"}> : () -> ()
    %cst_84 = arith.constant dense<0.000000e+00> : vector<8x8x8xf32>
    %135 = tpu.matmul %134, %119, %cst_84 {dimension_numbers = #tpu.dot_dimension_numbers<[2], [1], [1], [2], [0, 0, 0, 1, 1, 2], [0], [0]>} : vector<8x8x8xf32>, vector<8x8x8xf32>, vector<8x8x8xf32> -> vector<8x8x8xf32>
    "tpu.trace_stop"() : () -> ()
    %136 = vector.shape_cast %135 : vector<8x8x8xf32> to vector<64x8xf32>
    %c2_85 = arith.constant 2 : index
    %c0_86 = arith.constant 0 : index
    %c0_87 = arith.constant 0 : index
    %137 = vector.load %arg8[%c2_85, %c0_86, %c0_87] : memref<4x8x32xf32, #tpu.memory_space<vmem>>, vector<1x8x32xf32>
    %138 = vector.shape_cast %137 : vector<1x8x32xf32> to vector<8x32xf32>
    %cst_88 = arith.constant dense<0.000000e+00> : vector<64x32xf32>
    %139 = tpu.matmul %136, %138, %cst_88 {dimension_numbers = #tpu.dot_dimension_numbers<[1], [0], [0], [1], [0, 0, 1, 1], [], []>} : vector<64x8xf32>, vector<8x32xf32>, vector<64x32xf32> -> vector<64x32xf32>
    %140 = arith.addf %95, %139 : vector<64x32xf32>
    %c3 = arith.constant 3 : index
    %c0_89 = arith.constant 0 : index
    %c0_90 = arith.constant 0 : index
    %141 = vector.load %arg2[%c3, %c0_89, %c0_90] : memref<4x32x8xf32, #tpu.memory_space<vmem>>, vector<1x32x8xf32>
    %142 = vector.shape_cast %141 : vector<1x32x8xf32> to vector<32x8xf32>
    %cst_91 = arith.constant dense<0.000000e+00> : vector<64x8xf32>
    %143 = tpu.matmul %0, %142, %cst_91 {dimension_numbers = #tpu.dot_dimension_numbers<[1], [0], [0], [1], [0, 0, 1, 1], [], []>} : vector<64x32xf32>, vector<32x8xf32>, vector<64x8xf32> -> vector<64x8xf32>
    %c3_92 = arith.constant 3 : index
    %c0_93 = arith.constant 0 : index
    %c0_94 = arith.constant 0 : index
    %144 = vector.load %arg5[%c3_92, %c0_93, %c0_94] : memref<4x1x8xf32, #tpu.memory_space<vmem>>, vector<1x1x8xf32>
    %145 = vector.shape_cast %144 : vector<1x1x8xf32> to vector<1x8xf32>
    %146 = vector.broadcast %145 : vector<1x8xf32> to vector<64x8xf32>
    %147 = arith.addf %143, %146 : vector<64x8xf32>
    %c3_95 = arith.constant 3 : index
    %c0_96 = arith.constant 0 : index
    %c0_97 = arith.constant 0 : index
    %148 = vector.load %arg3[%c3_95, %c0_96, %c0_97] : memref<4x32x8xf32, #tpu.memory_space<vmem>>, vector<1x32x8xf32>
    %149 = vector.shape_cast %148 : vector<1x32x8xf32> to vector<32x8xf32>
    %cst_98 = arith.constant dense<0.000000e+00> : vector<64x8xf32>
    %150 = tpu.matmul %0, %149, %cst_98 {dimension_numbers = #tpu.dot_dimension_numbers<[1], [0], [0], [1], [0, 0, 1, 1], [], []>} : vector<64x32xf32>, vector<32x8xf32>, vector<64x8xf32> -> vector<64x8xf32>
    %c3_99 = arith.constant 3 : index
    %c0_100 = arith.constant 0 : index
    %c0_101 = arith.constant 0 : index
    %151 = vector.load %arg6[%c3_99, %c0_100, %c0_101] : memref<4x1x8xf32, #tpu.memory_space<vmem>>, vector<1x1x8xf32>
    %152 = vector.shape_cast %151 : vector<1x1x8xf32> to vector<1x8xf32>
    %153 = vector.broadcast %152 : vector<1x8xf32> to vector<64x8xf32>
    %154 = arith.addf %150, %153 : vector<64x8xf32>
    %c3_102 = arith.constant 3 : index
    %c0_103 = arith.constant 0 : index
    %c0_104 = arith.constant 0 : index
    %155 = vector.load %arg4[%c3_102, %c0_103, %c0_104] : memref<4x32x8xf32, #tpu.memory_space<vmem>>, vector<1x32x8xf32>
    %156 = vector.shape_cast %155 : vector<1x32x8xf32> to vector<32x8xf32>
    %cst_105 = arith.constant dense<0.000000e+00> : vector<64x8xf32>
    %157 = tpu.matmul %0, %156, %cst_105 {dimension_numbers = #tpu.dot_dimension_numbers<[1], [0], [0], [1], [0, 0, 1, 1], [], []>} : vector<64x32xf32>, vector<32x8xf32>, vector<64x8xf32> -> vector<64x8xf32>
    %c3_106 = arith.constant 3 : index
    %c0_107 = arith.constant 0 : index
    %c0_108 = arith.constant 0 : index
    %158 = vector.load %arg7[%c3_106, %c0_107, %c0_108] : memref<4x1x8xf32, #tpu.memory_space<vmem>>, vector<1x1x8xf32>
    %159 = vector.shape_cast %158 : vector<1x1x8xf32> to vector<1x8xf32>
    %160 = vector.broadcast %159 : vector<1x8xf32> to vector<64x8xf32>
    %161 = arith.addf %157, %160 : vector<64x8xf32>
    %162 = vector.shape_cast %147 : vector<64x8xf32> to vector<8x8x8xf32>
    %163 = vector.shape_cast %154 : vector<64x8xf32> to vector<8x8x8xf32>
    %164 = vector.shape_cast %161 : vector<64x8xf32> to vector<8x8x8xf32>
    "tpu.trace_start"() <{level = 10 : i32, message = "bld,bmd->blm"}> : () -> ()
    %cst_109 = arith.constant dense<0.000000e+00> : vector<8x8x8xf32>
    %165 = tpu.matmul %162, %163, %cst_109 {dimension_numbers = #tpu.dot_dimension_numbers<[2], [2], [1], [1], [0, 0, 0, 1, 1, 1], [0], [0]>} : vector<8x8x8xf32>, vector<8x8x8xf32>, vector<8x8x8xf32> -> vector<8x8x8xf32>
    %cst_110 = arith.constant -1.000000e+30 : f32
    "tpu.trace_stop"() : () -> ()
    %166 = vector.shape_cast %4 : vector<1x8x8xi1> to vector<1x8x8xi1>
    %167 = vector.broadcast %166 : vector<1x8x8xi1> to vector<8x8x8xi1>
    %168 = vector.broadcast %cst_110 : f32 to vector<8x8x8xf32>
    %169 = arith.select %167, %168, %165 : vector<8x8x8xi1>, vector<8x8x8xf32>
    %cst_111 = arith.constant dense<0xFF800000> : vector<8x8xf32>
    %170 = vector.multi_reduction <maximumf>, %169, %cst_111 [2] : vector<8x8x8xf32> to vector<8x8xf32>
    %171 = vector.shape_cast %170 : vector<8x8xf32> to vector<8x8x1xf32>
    %172 = vector.broadcast %171 : vector<8x8x1xf32> to vector<8x8x8xf32>
    %173 = arith.subf %169, %172 : vector<8x8x8xf32>
    %174 = math.exp %173 : vector<8x8x8xf32>
    %cst_112 = arith.constant dense<0.000000e+00> : vector<8x8xf32>
    %175 = vector.multi_reduction <add>, %174, %cst_112 [2] : vector<8x8x8xf32> to vector<8x8xf32>
    %176 = vector.shape_cast %175 : vector<8x8xf32> to vector<8x8x1xf32>
    %177 = tpu.reciprocal %176 {approx = true} : vector<8x8x1xf32> -> vector<8x8x1xf32>
    %178 = vector.broadcast %177 : vector<8x8x1xf32> to vector<8x8x8xf32>
    %179 = arith.mulf %174, %178 : vector<8x8x8xf32>
    "tpu.trace_start"() <{level = 10 : i32, message = "blm,bmd->bld"}> : () -> ()
    %cst_113 = arith.constant dense<0.000000e+00> : vector<8x8x8xf32>
    %180 = tpu.matmul %179, %164, %cst_113 {dimension_numbers = #tpu.dot_dimension_numbers<[2], [1], [1], [2], [0, 0, 0, 1, 1, 2], [0], [0]>} : vector<8x8x8xf32>, vector<8x8x8xf32>, vector<8x8x8xf32> -> vector<8x8x8xf32>
    "tpu.trace_stop"() : () -> ()
    %181 = vector.shape_cast %180 : vector<8x8x8xf32> to vector<64x8xf32>
    %c3_114 = arith.constant 3 : index
    %c0_115 = arith.constant 0 : index
    %c0_116 = arith.constant 0 : index
    %182 = vector.load %arg8[%c3_114, %c0_115, %c0_116] : memref<4x8x32xf32, #tpu.memory_space<vmem>>, vector<1x8x32xf32>
    %183 = vector.shape_cast %182 : vector<1x8x32xf32> to vector<8x32xf32>
    %cst_117 = arith.constant dense<0.000000e+00> : vector<64x32xf32>
    %184 = tpu.matmul %181, %183, %cst_117 {dimension_numbers = #tpu.dot_dimension_numbers<[1], [0], [0], [1], [0, 0, 1, 1], [], []>} : vector<64x8xf32>, vector<8x32xf32>, vector<64x32xf32> -> vector<64x32xf32>
    %185 = arith.addf %140, %184 : vector<64x32xf32>
    %c0_118 = arith.constant 0 : index
    %c0_119 = arith.constant 0 : index
    %186 = vector.load %arg9[%c0_118, %c0_119] : memref<1x32xf32, #tpu.memory_space<vmem>>, vector<1x32xf32>
    %187 = vector.broadcast %186 : vector<1x32xf32> to vector<64x32xf32>
    %188 = arith.addf %185, %187 : vector<64x32xf32>
    %c0_120 = arith.constant 0 : index
    %c0_121 = arith.constant 0 : index
    %189 = vector.load %arg10[%c0_120, %c0_121] : memref<64x32xf32, #tpu.memory_space<vmem>>, vector<64x32xf32>
    tpu.vector_store %arg10[%c0_120, %c0_121], %188 {strides = array<i32>} : memref<64x32xf32, #tpu.memory_space<vmem>>, vector<64x32xf32>,
    return
  }
  func.func @transform_0(%arg0: i32) -> (i32, i32) {
    %c0_i32 = arith.constant 0 : i32
    %c0_i32_0 = arith.constant 0 : i32
    return %arg0, %c0_i32 : i32, i32
  }
  func.func @transform_1(%arg0: i32) -> (i32, i32, i32) {
    %c0_i32 = arith.constant 0 : i32
    %c0_i32_0 = arith.constant 0 : i32
    %c0_i32_1 = arith.constant 0 : i32
    %c0_i32_2 = arith.constant 0 : i32
    return %c0_i32, %c0_i32_0, %c0_i32_1 : i32, i32, i32
  }
  func.func @transform_2(%arg0: i32) -> (i32, i32, i32) {
    %c0_i32 = arith.constant 0 : i32
    %c0_i32_0 = arith.constant 0 : i32
    %c0_i32_1 = arith.constant 0 : i32
    %c0_i32_2 = arith.constant 0 : i32
    return %c0_i32, %c0_i32_0, %c0_i32_1 : i32, i32, i32
  }
  func.func @transform_3(%arg0: i32) -> (i32, i32, i32) {
    %c0_i32 = arith.constant 0 : i32
    %c0_i32_0 = arith.constant 0 : i32
    %c0_i32_1 = arith.constant 0 : i32
    %c0_i32_2 = arith.constant 0 : i32
    return %c0_i32, %c0_i32_0, %c0_i32_1 : i32, i32, i32
  }
  func.func @transform_4(%arg0: i32) -> (i32, i32, i32) {
    %c0_i32 = arith.constant 0 : i32
    %c0_i32_0 = arith.constant 0 : i32
    %c0_i32_1 = arith.constant 0 : i32
    %c0_i32_2 = arith.constant 0 : i32
    return %c0_i32, %c0_i32_0, %c0_i32_1 : i32, i32, i32
  }
  func.func @transform_5(%arg0: i32) -> (i32, i32, i32) {
    %c0_i32 = arith.constant 0 : i32
    %c0_i32_0 = arith.constant 0 : i32
    %c0_i32_1 = arith.constant 0 : i32
    %c0_i32_2 = arith.constant 0 : i32
    return %c0_i32, %c0_i32_0, %c0_i32_1 : i32, i32, i32
  }
  func.func @transform_6(%arg0: i32) -> (i32, i32, i32) {
    %c0_i32 = arith.constant 0 : i32
    %c0_i32_0 = arith.constant 0 : i32
    %c0_i32_1 = arith.constant 0 : i32
    %c0_i32_2 = arith.constant 0 : i32
    return %c0_i32, %c0_i32_0, %c0_i32_1 : i32, i32, i32
  }
  func.func @transform_7(%arg0: i32) -> (i32, i32, i32) {
    %c0_i32 = arith.constant 0 : i32
    %c0_i32_0 = arith.constant 0 : i32
    %c0_i32_1 = arith.constant 0 : i32
    %c0_i32_2 = arith.constant 0 : i32
    return %c0_i32, %c0_i32_0, %c0_i32_1 : i32, i32, i32
  }
  func.func @transform_8(%arg0: i32) -> (i32, i32) {
    %c0_i32 = arith.constant 0 : i32
    %c0_i32_0 = arith.constant 0 : i32
    %c0_i32_1 = arith.constant 0 : i32
    return %c0_i32, %c0_i32_0 : i32, i32
  }
  func.func @transform_9(%arg0: i32) -> (i32, i32) {
    %c0_i32 = arith.constant 0 : i32
    %c0_i32_0 = arith.constant 0 : i32
    return %arg0, %c0_i32 : i32, i32
  }
}

</mosaic_0001>

<llo_original>
// kernel: tpu_custom_call.1
$region0: #{tpu_custom_call.1}
  #allocation0 [shape = 'u32[]', space=smem, size = 0x4, offset = 0x4, fixed_abs, tag = 'smem constant byte address 0x4 - core index']
  #allocation1 [shape = 'u32[144,128]{1,0:T(1,128)}', space=vmem, size = 0x12000, scoped, tag = 'internal scratch']
  %s0 = inlined_call_operand.vmem [shape: f32[64,32], index: 0, kind: input, shape index: {}]
  %s1 = inlined_call_operand.vmem [shape: f32[4,32,8], index: 1, kind: input, shape index: {}]
  %s2 = inlined_call_operand.vmem [shape: f32[4,32,8], index: 2, kind: input, shape index: {}]
  %s3 = inlined_call_operand.vmem [shape: f32[4,32,8], index: 3, kind: input, shape index: {}]
  %s4 = inlined_call_operand.vmem [shape: f32[4,1,8], index: 4, kind: input, shape index: {}]
  %s5 = inlined_call_operand.vmem [shape: f32[4,1,8], index: 5, kind: input, shape index: {}]
  %s6 = inlined_call_operand.vmem [shape: f32[4,1,8], index: 6, kind: input, shape index: {}]
  %s7 = inlined_call_operand.vmem [shape: f32[4,8,32], index: 7, kind: input, shape index: {}]
  %s8 = inlined_call_operand.vmem [shape: f32[1,32], index: 8, kind: input, shape index: {}]
  %s9 = inlined_call_operand.vmem [shape: f32[64,32], index: 9, kind: output, shape index: {}]
  %s10 = sld [smem:[#allocation0]]
  $region46: #{tpu_custom_call.1} parent=0
    _
  %s12 = ssub.s32 1, %s10
  %s13 = scalar_select 0, %s12, %s10
  // Predicated region
  $region2: #{tpu_custom_call.1} parent=0 // pred_check
    _
  $region3: #{tpu_custom_call.1} parent=0 // pred_check_branch
    %15 = sbr.rel (0) target = $region5
  $region4: #{tpu_custom_call.1} parent=0 // pred_region
    _
  $region5: #{tpu_custom_call.1} parent=0 // pred_fallthru
    _
  // Predicated region
  $region6: #{tpu_custom_call.1} parent=0 // pred_check
    _
  $region7: #{tpu_custom_call.1} parent=0 // pred_check_branch
    %17 = sbr.rel (0) target = $region9
  $region8: #{tpu_custom_call.1} parent=0 // pred_region
    _
  $region9: #{tpu_custom_call.1} parent=0 // pred_fallthru
    _
  // Predicated region
  $region10: #{tpu_custom_call.1} parent=0 // pred_check
    _
  $region11: #{tpu_custom_call.1} parent=0 // pred_check_branch
    %19 = sbr.rel (0) target = $region13
  $region12: #{tpu_custom_call.1} parent=0 // pred_region
    _
  $region13: #{tpu_custom_call.1} parent=0 // pred_fallthru
    _
  // Predicated region
  $region14: #{tpu_custom_call.1} parent=0 // pred_check
    _
  $region15: #{tpu_custom_call.1} parent=0 // pred_check_branch
    %21 = sbr.rel (0) target = $region17
  $region16: #{tpu_custom_call.1} parent=0 // pred_region
    _
  $region17: #{tpu_custom_call.1} parent=0 // pred_fallthru
    _
  // Predicated region
  $region18: #{tpu_custom_call.1} parent=0 // pred_check
    _
  $region19: #{tpu_custom_call.1} parent=0 // pred_check_branch
    %23 = sbr.rel (0) target = $region21
  $region20: #{tpu_custom_call.1} parent=0 // pred_region
    _
  $region21: #{tpu_custom_call.1} parent=0 // pred_fallthru
    _
  // Predicated region
  $region22: #{tpu_custom_call.1} parent=0 // pred_check
    _
  $region23: #{tpu_custom_call.1} parent=0 // pred_check_branch
    %25 = sbr.rel (0) target = $region25
  $region24: #{tpu_custom_call.1} parent=0 // pred_region
    _
  $region25: #{tpu_custom_call.1} parent=0 // pred_fallthru
    _
  // Predicated region
  $region26: #{tpu_custom_call.1} parent=0 // pred_check
    _
  $region27: #{tpu_custom_call.1} parent=0 // pred_check_branch
    %27 = sbr.rel (0) target = $region29
  $region28: #{tpu_custom_call.1} parent=0 // pred_region
    _
  $region29: #{tpu_custom_call.1} parent=0 // pred_fallthru
    _
  // Predicated region
  $region30: #{tpu_custom_call.1} parent=0 // pred_check
    _
  $region31: #{tpu_custom_call.1} parent=0 // pred_check_branch
    %29 = sbr.rel (0) target = $region33
  $region32: #{tpu_custom_call.1} parent=0 // pred_region
    _
  $region33: #{tpu_custom_call.1} parent=0 // pred_fallthru
    _
  // Predicated region
  $region34: #{tpu_custom_call.1} parent=0 // pred_check
    _
  $region35: #{tpu_custom_call.1} parent=0 // pred_check_branch
    %31 = sbr.rel (0) target = $region37
  $region36: #{tpu_custom_call.1} parent=0 // pred_region
    _
  $region37: #{tpu_custom_call.1} parent=0 // pred_fallthru
    _
  %v32 = vld [vmem:[%s0] sm:$0xff]
  %v33 = vld [vmem:[%s0 + $0x8] sm:$0xff]
  %v34 = vld [vmem:[%s0 + $0x10] sm:$0xff]
  %v35 = vld [vmem:[%s0 + $0x18] sm:$0xff]
  %v36 = vld [vmem:[%s0 + $0x20] sm:$0xff]
  %v37 = vld [vmem:[%s0 + $0x28] sm:$0xff]
  %v38 = vld [vmem:[%s0 + $0x30] sm:$0xff]
  %v39 = vld [vmem:[%s0 + $0x38] sm:$0xff]
  %v40 = vlaneseq
  %v41 = vshrl.u32 %v40, 7
  %v42 = vlaneseq
  %v43 = vand.u32 %v42, 127
  %vm44 = vcmp.gt.s32.totalorder %v43, %v41
  %v45 = vld [vmem:[%s1] sm:$0xff]
  %v46 = vld [vmem:[%s1 + $0x8] sm:$0xff]
  %v47 = vld [vmem:[%s1 + $0x10] sm:$0xff]
  %v48 = vld [vmem:[%s1 + $0x18] sm:$0xff]
  %v49 = vld [vmem:[%s4] sm:$0x1]
  %v51 = vlaneseq
  %v52 = vshrl.u32 %v51, 7
  %v53 = vsub.s32 0, %v52
  %v54 = vrot.slane %v49, %v53
  %vm56 = vcmask 261120
  %v58 = vsel %vm56, %v32, 0
  %v61 = vsel %vm56, %v33, 0
  %v64 = vsel %vm56, %v34, 0
  %v67 = vsel %vm56, %v35, 0
  %v70 = vsel %vm56, %v36, 0
  %v73 = vsel %vm56, %v37, 0
  %v76 = vsel %vm56, %v38, 0
  %v79 = vsel %vm56, %v39, 0
  %81 = vmatprep.subr.mxu0 0.0
  %82 = vmatpush1.msra.mxu0 %v45
  %83 = vmatprep.subr.mxu0 0.0
  %84 = vmatpush1.msra.mxu0 %v46
  %85 = vmatprep.subr.mxu0 0.0
  %86 = vmatpush1.msra.mxu0 %v47
  %87 = vmatprep.subr.mxu0 0.0
  %88 = vmatpush1.msra.mxu0 %v48
  %89 = vmatprep.subr.mxu0 0.0
  %90 = vmatpush1.msra.mxu0 0.0
  %91 = vmatprep.subr.mxu0 0.0
  %92 = vmatpush1.msra.mxu0 0.0
  %93 = vmatprep.subr.mxu0 0.0
  %94 = vmatpush1.msra.mxu0 0.0
  %95 = vmatprep.subr.mxu0 0.0
  %96 = vmatpush1.msra.mxu0 0.0
  %97 = vmatprep.subr.mxu0 0.0
  %98 = vmatpush1.msra.mxu0 0.0
  %99 = vmatprep.subr.mxu0 0.0
  %100 = vmatpush1.msra.mxu0 0.0
  %101 = vmatprep.subr.mxu0 0.0
  %102 = vmatpush1.msra.mxu0 0.0
  %103 = vmatprep.subr.mxu0 0.0
  %104 = vmatpush1.msra.mxu0 0.0
  %105 = vmatprep.subr.mxu0 0.0
  %106 = vmatpush1.msra.mxu0 0.0
  %107 = vmatprep.subr.mxu0 0.0
  %108 = vmatpush1.msra.mxu0 0.0
  %109 = vmatprep.subr.mxu0 0.0
  %110 = vmatpush1.msra.mxu0 0.0
  %111 = vmatprep.subr.mxu0 0.0
  %112 = vmatpush1.msra.mxu0 0.0
  %113 = vmatprep.subr.mxu0 0.0
  %114 = vmatpush1.msra.mxu0 0.0
  %115 = vmatprep.subr.mxu0 0.0
  %116 = vmatpush1.msra.mxu0 0.0
  %117 = vmatprep.subr.mxu0 0.0
  %118 = vmatpush1.msra.mxu0 0.0
  %119 = vmatprep.subr.mxu0 0.0
  %120 = vmatpush1.msra.mxu0 0.0
  %121 = vmatprep.subr.mxu0 0.0
  %122 = vmatpush1.msra.mxu0 0.0
  %123 = vmatprep.subr.mxu0 0.0
  %124 = vmatpush1.msra.mxu0 0.0
  %125 = vmatprep.subr.mxu0 0.0
  %126 = vmatpush1.msra.mxu0 0.0
  %127 = vmatprep.subr.mxu0 0.0
  %128 = vmatpush1.msra.mxu0 0.0
  %129 = vmatprep.subr.mxu0 0.0
  %130 = vmatpush1.msra.mxu0 0.0
  %131 = vmatprep.subr.mxu0 0.0
  %132 = vmatpush1.msra.mxu0 0.0
  %133 = vmatprep.subr.mxu0 0.0
  %134 = vmatpush1.msra.mxu0 0.0
  %135 = vmatprep.subr.mxu0 0.0
  %136 = vmatpush1.msra.mxu0 0.0
  %137 = vmatprep.subr.mxu0 0.0
  %138 = vmatpush1.msra.mxu0 0.0
  %139 = vmatprep.subr.mxu0 0.0
  %140 = vmatpush1.msra.mxu0 0.0
  %141 = vmatprep.subr.mxu0 0.0
  %142 = vmatpush1.msra.mxu0 0.0
  %143 = vmatprep.subr.mxu0 0.0
  %144 = vmatpush1.msra.mxu0 0.0
  %145 = vmatprep.mubr.f32.mxu0 0.0
  %146 = vmatmul.mubr.f32.gmra.mrb[0].mxu0 %v58
  %v147 = vpop.f32.mrb[0].mxu0
  %v148 = vadd.f32 %v54, %v147
  %v149 = vpop.f32.mrb[0].mxu0
  %150 = vmatprep.mubr.f32.mxu0 0.0
  %151 = vmatmul.mubr.f32.gmra.mrb[0].mxu0 %v61
  %v152 = vpop.f32.mrb[0].mxu0
  %v153 = vadd.f32 %v54, %v152
  %v154 = vpop.f32.mrb[0].mxu0
  %155 = vmatprep.mubr.f32.mxu0 0.0
  %156 = vmatmul.mubr.f32.gmra.mrb[0].mxu0 %v64
  %v157 = vpop.f32.mrb[0].mxu0
  %v158 = vadd.f32 %v54, %v157
  %v159 = vpop.f32.mrb[0].mxu0
  %160 = vmatprep.mubr.f32.mxu0 0.0
  %161 = vmatmul.mubr.f32.gmra.mrb[0].mxu0 %v67
  %v162 = vpop.f32.mrb[0].mxu0
  %v163 = vadd.f32 %v54, %v162
  %v164 = vpop.f32.mrb[0].mxu0
  %165 = vmatprep.mubr.f32.mxu0 0.0
  %166 = vmatmul.mubr.f32.gmra.mrb[0].mxu0 %v70
  %v167 = vpop.f32.mrb[0].mxu0
  %v168 = vadd.f32 %v54, %v167
  %v169 = vpop.f32.mrb[0].mxu0
  %170 = vmatprep.mubr.f32.mxu0 0.0
  %171 = vmatmul.mubr.f32.gmra.mrb[0].mxu0 %v73
  %v172 = vpop.f32.mrb[0].mxu0
  %v173 = vadd.f32 %v54, %v172
  %v174 = vpop.f32.mrb[0].mxu0
  %175 = vmatprep.mubr.f32.mxu0 0.0
  %176 = vmatmul.mubr.f32.gmra.mrb[0].mxu0 %v76
  %v177 = vpop.f32.mrb[0].mxu0
  %v178 = vadd.f32 %v54, %v177
  %v179 = vpop.f32.mrb[0].mxu0
  %180 = vmatprep.mubr.f32.mxu0 0.0
  %181 = vmatmul.mubr.f32.gmra.mrb[0].mxu0 %v79
  %v182 = vpop.f32.mrb[0].mxu0
  %v183 = vadd.f32 %v54, %v182
  %v184 = vpop.f32.mrb[0].mxu0
  %185 = vdwg.mxu0
  %v186 = vld [vmem:[%s2] sm:$0xff]
  %v187 = vld [vmem:[%s2 + $0x8] sm:$0xff]
  %v188 = vld [vmem:[%s2 + $0x10] sm:$0xff]
  %v189 = vld [vmem:[%s2 + $0x18] sm:$0xff]
  %v190 = vld [vmem:[%s5] sm:$0x1]
  %v192 = vlaneseq
  %v193 = vshrl.u32 %v192, 7
  %v194 = vsub.s32 0, %v193
  %v195 = vrot.slane %v190, %v194
  %197 = vmatprep.subr.mxu0 0.0
  %198 = vmatpush1.msra.mxu0 %v186
  %199 = vmatprep.subr.mxu0 0.0
  %200 = vmatpush1.msra.mxu0 %v187
  %201 = vmatprep.subr.mxu0 0.0
  %202 = vmatpush1.msra.mxu0 %v188
  %203 = vmatprep.subr.mxu0 0.0
  %204 = vmatpush1.msra.mxu0 %v189
  %205 = vmatprep.subr.mxu0 0.0
  %206 = vmatpush1.msra.mxu0 0.0
  %207 = vmatprep.subr.mxu0 0.0
  %208 = vmatpush1.msra.mxu0 0.0
  %209 = vmatprep.subr.mxu0 0.0
  %210 = vmatpush1.msra.mxu0 0.0
  %211 = vmatprep.subr.mxu0 0.0
  %212 = vmatpush1.msra.mxu0 0.0
  %213 = vmatprep.subr.mxu0 0.0
  %214 = vmatpush1.msra.mxu0 0.0
  %215 = vmatprep.subr.mxu0 0.0
  %216 = vmatpush1.msra.mxu0 0.0
  %217 = vmatprep.subr.mxu0 0.0
  %218 = vmatpush1.msra.mxu0 0.0
  %219 = vmatprep.subr.mxu0 0.0
  %220 = vmatpush1.msra.mxu0 0.0
  %221 = vmatprep.subr.mxu0 0.0
  %222 = vmatpush1.msra.mxu0 0.0
  %223 = vmatprep.subr.mxu0 0.0
  %224 = vmatpush1.msra.mxu0 0.0
  %225 = vmatprep.subr.mxu0 0.0
  %226 = vmatpush1.msra.mxu0 0.0
  %227 = vmatprep.subr.mxu0 0.0
  %228 = vmatpush1.msra.mxu0 0.0
  %229 = vmatprep.subr.mxu0 0.0
  %230 = vmatpush1.msra.mxu0 0.0
  %231 = vmatprep.subr.mxu0 0.0
  %232 = vmatpush1.msra.mxu0 0.0
  %233 = vmatprep.subr.mxu0 0.0
  %234 = vmatpush1.msra.mxu0 0.0
  %235 = vmatprep.subr.mxu0 0.0
  %236 = vmatpush1.msra.mxu0 0.0
  %237 = vmatprep.subr.mxu0 0.0
  %238 = vmatpush1.msra.mxu0 0.0
  %239 = vmatprep.subr.mxu0 0.0
  %240 = vmatpush1.msra.mxu0 0.0
  %241 = vmatprep.subr.mxu0 0.0
  %242 = vmatpush1.msra.mxu0 0.0
  %243 = vmatprep.subr.mxu0 0.0
  %244 = vmatpush1.msra.mxu0 0.0
  %245 = vmatprep.subr.mxu0 0.0
  %246 = vmatpush1.msra.mxu0 0.0
  %247 = vmatprep.subr.mxu0 0.0
  %248 = vmatpush1.msra.mxu0 0.0
  %249 = vmatprep.subr.mxu0 0.0
  %250 = vmatpush1.msra.mxu0 0.0
  %251 = vmatprep.subr.mxu0 0.0
  %252 = vmatpush1.msra.mxu0 0.0
  %253 = vmatprep.subr.mxu0 0.0
  %254 = vmatpush1.msra.mxu0 0.0
  %255 = vmatprep.subr.mxu0 0.0
  %256 = vmatpush1.msra.mxu0 0.0
  %257 = vmatprep.subr.mxu0 0.0
  %258 = vmatpush1.msra.mxu0 0.0
  %259 = vmatprep.subr.mxu0 0.0
  %260 = vmatpush1.msra.mxu0 0.0
  %261 = vmatprep.mubr.f32.mxu0 0.0
  %262 = vmatmul.mubr.f32.gmra.mrb[0].mxu0 %v58
  %v263 = vpop.f32.mrb[0].mxu0
  %v264 = vadd.f32 %v195, %v263
  %v265 = vpop.f32.mrb[0].mxu0
  %266 = vmatprep.mubr.f32.mxu0 0.0
  %267 = vmatmul.mubr.f32.gmra.mrb[0].mxu0 %v61
  %v268 = vpop.f32.mrb[0].mxu0
  %v269 = vadd.f32 %v195, %v268
  %v270 = vpop.f32.mrb[0].mxu0
  %271 = vmatprep.mubr.f32.mxu0 0.0
  %272 = vmatmul.mubr.f32.gmra.mrb[0].mxu0 %v64
  %v273 = vpop.f32.mrb[0].mxu0
  %v274 = vadd.f32 %v195, %v273
  %v275 = vpop.f32.mrb[0].mxu0
  %276 = vmatprep.mubr.f32.mxu0 0.0
  %277 = vmatmul.mubr.f32.gmra.mrb[0].mxu0 %v67
  %v278 = vpop.f32.mrb[0].mxu0
  %v279 = vadd.f32 %v195, %v278
  %v280 = vpop.f32.mrb[0].mxu0
  %281 = vmatprep.mubr.f32.mxu0 0.0
  %282 = vmatmul.mubr.f32.gmra.mrb[0].mxu0 %v70
  %v283 = vpop.f32.mrb[0].mxu0
  %v284 = vadd.f32 %v195, %v283
  %v285 = vpop.f32.mrb[0].mxu0
  %286 = vmatprep.mubr.f32.mxu0 0.0
  %287 = vmatmul.mubr.f32.gmra.mrb[0].mxu0 %v73
  %v288 = vpop.f32.mrb[0].mxu0
  %v289 = vadd.f32 %v195, %v288
  %v290 = vpop.f32.mrb[0].mxu0
  %291 = vmatprep.mubr.f32.mxu0 0.0
  %292 = vmatmul.mubr.f32.gmra.mrb[0].mxu0 %v76
  %v293 = vpop.f32.mrb[0].mxu0
  %v294 = vadd.f32 %v195, %v293
  %v295 = vpop.f32.mrb[0].mxu0
  %296 = vmatprep.mubr.f32.mxu0 0.0
  %297 = vmatmul.mubr.f32.gmra.mrb[0].mxu0 %v79
  %v298 = vpop.f32.mrb[0].mxu0
  %v299 = vadd.f32 %v195, %v298
  %v300 = vpop.f32.mrb[0].mxu0
  %301 = vdwg.mxu0
  %v302 = vld [vmem:[%s3] sm:$0xff]
  %v303 = vld [vmem:[%s3 + $0x8] sm:$0xff]
  %v304 = vld [vmem:[%s3 + $0x10] sm:$0xff]
  %v305 = vld [vmem:[%s3 + $0x18] sm:$0xff]
  %v306 = vld [vmem:[%s6] sm:$0x1]
  %v308 = vlaneseq
  %v309 = vshrl.u32 %v308, 7
  %v310 = vsub.s32 0, %v309
  %v311 = vrot.slane %v306, %v310
  %313 = vmatprep.subr.mxu0 0.0
  %314 = vmatpush1.msra.mxu0 %v302
  %315 = vmatprep.subr.mxu0 0.0
  %316 = vmatpush1.msra.mxu0 %v303
  %317 = vmatprep.subr.mxu0 0.0
  %318 = vmatpush1.msra.mxu0 %v304
  %319 = vmatprep.subr.mxu0 0.0
  %320 = vmatpush1.msra.mxu0 %v305
  %321 = vmatprep.subr.mxu0 0.0
  %322 = vmatpush1.msra.mxu0 0.0
  %323 = vmatprep.subr.mxu0 0.0
  %324 = vmatpush1.msra.mxu0 0.0
  %325 = vmatprep.subr.mxu0 0.0
  %326 = vmatpush1.msra.mxu0 0.0
  %327 = vmatprep.subr.mxu0 0.0
  %328 = vmatpush1.msra.mxu0 0.0
  %329 = vmatprep.subr.mxu0 0.0
  %330 = vmatpush1.msra.mxu0 0.0
  %331 = vmatprep.subr.mxu0 0.0
  %332 = vmatpush1.msra.mxu0 0.0
  %333 = vmatprep.subr.mxu0 0.0
  %334 = vmatpush1.msra.mxu0 0.0
  %335 = vmatprep.subr.mxu0 0.0
  %336 = vmatpush1.msra.mxu0 0.0
  %337 = vmatprep.subr.mxu0 0.0
  %338 = vmatpush1.msra.mxu0 0.0
  %339 = vmatprep.subr.mxu0 0.0
  %340 = vmatpush1.msra.mxu0 0.0
  %341 = vmatprep.subr.mxu0 0.0
  %342 = vmatpush1.msra.mxu0 0.0
  %343 = vmatprep.subr.mxu0 0.0
  %344 = vmatpush1.msra.mxu0 0.0
  %345 = vmatprep.subr.mxu0 0.0
  %346 = vmatpush1.msra.mxu0 0.0
  %347 = vmatprep.subr.mxu0 0.0
  %348 = vmatpush1.msra.mxu0 0.0
  %349 = vmatprep.subr.mxu0 0.0
  %350 = vmatpush1.msra.mxu0 0.0
  %351 = vmatprep.subr.mxu0 0.0
  %352 = vmatpush1.msra.mxu0 0.0
  %353 = vmatprep.subr.mxu0 0.0
  %354 = vmatpush1.msra.mxu0 0.0
  %355 = vmatprep.subr.mxu0 0.0
  %356 = vmatpush1.msra.mxu0 0.0
  %357 = vmatprep.subr.mxu0 0.0
  %358 = vmatpush1.msra.mxu0 0.0
  %359 = vmatprep.subr.mxu0 0.0
  %360 = vmatpush1.msra.mxu0 0.0
  %361 = vmatprep.subr.mxu0 0.0
  %362 = vmatpush1.msra.mxu0 0.0
  %363 = vmatprep.subr.mxu0 0.0
  %364 = vmatpush1.msra.mxu0 0.0
  %365 = vmatprep.subr.mxu0 0.0
  %366 = vmatpush1.msra.mxu0 0.0
  %367 = vmatprep.subr.mxu0 0.0
  %368 = vmatpush1.msra.mxu0 0.0
  %369 = vmatprep.subr.mxu0 0.0
  %370 = vmatpush1.msra.mxu0 0.0
  %371 = vmatprep.subr.mxu0 0.0
  %372 = vmatpush1.msra.mxu0 0.0
  %373 = vmatprep.subr.mxu0 0.0
  %374 = vmatpush1.msra.mxu0 0.0
  %375 = vmatprep.subr.mxu0 0.0
  %376 = vmatpush1.msra.mxu0 0.0
  %377 = vmatprep.mubr.f32.mxu0 0.0
  %378 = vmatmul.mubr.f32.gmra.mrb[0].mxu0 %v58
  %v379 = vpop.f32.mrb[0].mxu0
  %v380 = vadd.f32 %v311, %v379
  %v381 = vpop.f32.mrb[0].mxu0
  %382 = vmatprep.mubr.f32.mxu0 0.0
  %383 = vmatmul.mubr.f32.gmra.mrb[0].mxu0 %v61
  %v384 = vpop.f32.mrb[0].mxu0
  %v385 = vadd.f32 %v311, %v384
  %v386 = vpop.f32.mrb[0].mxu0
  %387 = vmatprep.mubr.f32.mxu0 0.0
  %388 = vmatmul.mubr.f32.gmra.mrb[0].mxu0 %v64
  %v389 = vpop.f32.mrb[0].mxu0
  %v390 = vadd.f32 %v311, %v389
  %v391 = vpop.f32.mrb[0].mxu0
  %392 = vmatprep.mubr.f32.mxu0 0.0
  %393 = vmatmul.mubr.f32.gmra.mrb[0].mxu0 %v67
  %v394 = vpop.f32.mrb[0].mxu0
  %v395 = vadd.f32 %v311, %v394
  %v396 = vpop.f32.mrb[0].mxu0
  %397 = vmatprep.mubr.f32.mxu0 0.0
  %398 = vmatmul.mubr.f32.gmra.mrb[0].mxu0 %v70
  %v399 = vpop.f32.mrb[0].mxu0
  %v400 = vadd.f32 %v311, %v399
  %v401 = vpop.f32.mrb[0].mxu0
  %402 = vmatprep.mubr.f32.mxu0 0.0
  %403 = vmatmul.mubr.f32.gmra.mrb[0].mxu0 %v73
  %v404 = vpop.f32.mrb[0].mxu0
  %v405 = vadd.f32 %v311, %v404
  %v406 = vpop.f32.mrb[0].mxu0
  %407 = vmatprep.mubr.f32.mxu0 0.0
  %408 = vmatmul.mubr.f32.gmra.mrb[0].mxu0 %v76
  %v409 = vpop.f32.mrb[0].mxu0
  %v410 = vadd.f32 %v311, %v409
  %v411 = vpop.f32.mrb[0].mxu0
  %412 = vmatprep.mubr.f32.mxu0 0.0
  %413 = vmatmul.mubr.f32.gmra.mrb[0].mxu0 %v79
  %v414 = vpop.f32.mrb[0].mxu0
  %v415 = vadd.f32 %v311, %v414
  %v416 = vpop.f32.mrb[0].mxu0
  %417 = vdwg.mxu0
  %vm418 = vcmask 64512
  %v420 = vsel %vm418, %v148, 0
  %v423 = vsel %vm418, %v264, 0
  %425 = vmatprep.subr.mxu0 0.0
  %426 = vmatpush1.xpose.msra.mxu0 %v423
  %427 = vmatprep.subr.mxu0 0.0
  %428 = vmatpush1.xpose.msra.mxu0 0.0
  %429 = vmatprep.subr.mxu0 0.0
  %430 = vmatpush1.xpose.msra.mxu0 0.0
  %431 = vmatprep.subr.mxu0 0.0
  %432 = vmatpush1.xpose.msra.mxu0 0.0
  %433 = vmatprep.subr.mxu0 0.0
  %434 = vmatpush1.xpose.msra.mxu0 0.0
  %435 = vmatprep.subr.mxu0 0.0
  %436 = vmatpush1.xpose.msra.mxu0 0.0
  %437 = vmatprep.subr.mxu0 0.0
  %438 = vmatpush1.xpose.msra.mxu0 0.0
  %439 = vmatprep.subr.mxu0 0.0
  %440 = vmatpush1.xpose.msra.mxu0 0.0
  %441 = vmatprep.subr.mxu0 0.0
  %442 = vmatpush1.xpose.msra.mxu0 0.0
  %443 = vmatprep.subr.mxu0 0.0
  %444 = vmatpush1.xpose.msra.mxu0 0.0
  %445 = vmatprep.subr.mxu0 0.0
  %446 = vmatpush1.xpose.msra.mxu0 0.0
  %447 = vmatprep.subr.mxu0 0.0
  %448 = vmatpush1.xpose.msra.mxu0 0.0
  %449 = vmatprep.subr.mxu0 0.0
  %450 = vmatpush1.xpose.msra.mxu0 0.0
  %451 = vmatprep.subr.mxu0 0.0
  %452 = vmatpush1.xpose.msra.mxu0 0.0
  %453 = vmatprep.subr.mxu0 0.0
  %454 = vmatpush1.xpose.msra.mxu0 0.0
  %455 = vmatprep.subr.mxu0 0.0
  %456 = vmatpush1.xpose.msra.mxu0 0.0
  %457 = vmatprep.subr.mxu0 0.0
  %458 = vmatpush1.xpose.msra.mxu0 0.0
  %459 = vmatprep.subr.mxu0 0.0
  %460 = vmatpush1.xpose.msra.mxu0 0.0
  %461 = vmatprep.subr.mxu0 0.0
  %462 = vmatpush1.xpose.msra.mxu0 0.0
  %463 = vmatprep.subr.mxu0 0.0
  %464 = vmatpush1.xpose.msra.mxu0 0.0
  %465 = vmatprep.subr.mxu0 0.0
  %466 = vmatpush1.xpose.msra.mxu0 0.0
  %467 = vmatprep.subr.mxu0 0.0
  %468 = vmatpush1.xpose.msra.mxu0 0.0
  %469 = vmatprep.subr.mxu0 0.0
  %470 = vmatpush1.xpose.msra.mxu0 0.0
  %471 = vmatprep.subr.mxu0 0.0
  %472 = vmatpush1.xpose.msra.mxu0 0.0
  %473 = vmatprep.subr.mxu0 0.0
  %474 = vmatpush1.xpose.msra.mxu0 0.0
  %475 = vmatprep.subr.mxu0 0.0
  %476 = vmatpush1.xpose.msra.mxu0 0.0
  %477 = vmatprep.subr.mxu0 0.0
  %478 = vmatpush1.xpose.msra.mxu0 0.0
  %479 = vmatprep.subr.mxu0 0.0
  %480 = vmatpush1.xpose.msra.mxu0 0.0
  %481 = vmatprep.subr.mxu0 0.0
  %482 = vmatpush1.xpose.msra.mxu0 0.0
  %483 = vmatprep.subr.mxu0 0.0
  %484 = vmatpush1.xpose.msra.mxu0 0.0
  %485 = vmatprep.subr.mxu0 0.0
  %486 = vmatpush1.xpose.msra.mxu0 0.0
  %487 = vmatprep.subr.mxu0 0.0
  %488 = vmatpush1.xpose.msra.mxu0 0.0
  %489 = vmatprep.mubr.f32.mxu0 0.0
  %490 = vmatmul.mubr.f32.gmra.mrb[0].mxu0 %v420
  %v491 = vpop.f32.mrb[0].mxu0
  %v492 = vadd.f32 0.0, %v491
  %v493 = vpop.f32.mrb[0].mxu0
  %494 = vdwg.mxu0
  %v496 = vsel %vm418, %v153, 0
  %v499 = vsel %vm418, %v269, 0
  %501 = vmatprep.subr.mxu0 0.0
  %502 = vmatpush1.xpose.msra.mxu0 %v499
  %503 = vmatprep.subr.mxu0 0.0
  %504 = vmatpush1.xpose.msra.mxu0 0.0
  %505 = vmatprep.subr.mxu0 0.0
  %506 = vmatpush1.xpose.msra.mxu0 0.0
  %507 = vmatprep.subr.mxu0 0.0
  %508 = vmatpush1.xpose.msra.mxu0 0.0
  %509 = vmatprep.subr.mxu0 0.0
  %510 = vmatpush1.xpose.msra.mxu0 0.0
  %511 = vmatprep.subr.mxu0 0.0
  %512 = vmatpush1.xpose.msra.mxu0 0.0
  %513 = vmatprep.subr.mxu0 0.0
  %514 = vmatpush1.xpose.msra.mxu0 0.0
  %515 = vmatprep.subr.mxu0 0.0
  %516 = vmatpush1.xpose.msra.mxu0 0.0
  %517 = vmatprep.subr.mxu0 0.0
  %518 = vmatpush1.xpose.msra.mxu0 0.0
  %519 = vmatprep.subr.mxu0 0.0
  %520 = vmatpush1.xpose.msra.mxu0 0.0
  %521 = vmatprep.subr.mxu0 0.0
  %522 = vmatpush1.xpose.msra.mxu0 0.0
  %523 = vmatprep.subr.mxu0 0.0
  %524 = vmatpush1.xpose.msra.mxu0 0.0
  %525 = vmatprep.subr.mxu0 0.0
  %526 = vmatpush1.xpose.msra.mxu0 0.0
  %527 = vmatprep.subr.mxu0 0.0
  %528 = vmatpush1.xpose.msra.mxu0 0.0
  %529 = vmatprep.subr.mxu0 0.0
  %530 = vmatpush1.xpose.msra.mxu0 0.0
  %531 = vmatprep.subr.mxu0 0.0
  %532 = vmatpush1.xpose.msra.mxu0 0.0
  %533 = vmatprep.subr.mxu0 0.0
  %534 = vmatpush1.xpose.msra.mxu0 0.0
  %535 = vmatprep.subr.mxu0 0.0
  %536 = vmatpush1.xpose.msra.mxu0 0.0
  %537 = vmatprep.subr.mxu0 0.0
  %538 = vmatpush1.xpose.msra.mxu0 0.0
  %539 = vmatprep.subr.mxu0 0.0
  %540 = vmatpush1.xpose.msra.mxu0 0.0
  %541 = vmatprep.subr.mxu0 0.0
  %542 = vmatpush1.xpose.msra.mxu0 0.0
  %543 = vmatprep.subr.mxu0 0.0
  %544 = vmatpush1.xpose.msra.mxu0 0.0
  %545 = vmatprep.subr.mxu0 0.0
  %546 = vmatpush1.xpose.msra.mxu0 0.0
  %547 = vmatprep.subr.mxu0 0.0
  %548 = vmatpush1.xpose.msra.mxu0 0.0
  %549 = vmatprep.subr.mxu0 0.0
  %550 = vmatpush1.xpose.msra.mxu0 0.0
  %551 = vmatprep.subr.mxu0 0.0
  %552 = vmatpush1.xpose.msra.mxu0 0.0
  %553 = vmatprep.subr.mxu0 0.0
  %554 = vmatpush1.xpose.msra.mxu0 0.0
  %555 = vmatprep.subr.mxu0 0.0
  %556 = vmatpush1.xpose.msra.mxu0 0.0
  %557 = vmatprep.subr.mxu0 0.0
  %558 = vmatpush1.xpose.msra.mxu0 0.0
  %559 = vmatprep.subr.mxu0 0.0
  %560 = vmatpush1.xpose.msra.mxu0 0.0
  %561 = vmatprep.subr.mxu0 0.0
  %562 = vmatpush1.xpose.msra.mxu0 0.0
  %563 = vmatprep.subr.mxu0 0.0
  %564 = vmatpush1.xpose.msra.mxu0 0.0
  %565 = vmatprep.mubr.f32.mxu0 0.0
  %566 = vmatmul.mubr.f32.gmra.mrb[0].mxu0 %v496
  %v567 = vpop.f32.mrb[0].mxu0
  %v568 = vadd.f32 0.0, %v567
  %v569 = vpop.f32.mrb[0].mxu0
  %570 = vdwg.mxu0
  %v572 = vsel %vm418, %v158, 0
  %v575 = vsel %vm418, %v274, 0
  %577 = vmatprep.subr.mxu0 0.0
  %578 = vmatpush1.xpose.msra.mxu0 %v575
  %579 = vmatprep.subr.mxu0 0.0
  %580 = vmatpush1.xpose.msra.mxu0 0.0
  %581 = vmatprep.subr.mxu0 0.0
  %582 = vmatpush1.xpose.msra.mxu0 0.0
  %583 = vmatprep.subr.mxu0 0.0
  %584 = vmatpush1.xpose.msra.mxu0 0.0
  %585 = vmatprep.subr.mxu0 0.0
  %586 = vmatpush1.xpose.msra.mxu0 0.0
  %587 = vmatprep.subr.mxu0 0.0
  %588 = vmatpush1.xpose.msra.mxu0 0.0
  %589 = vmatprep.subr.mxu0 0.0
  %590 = vmatpush1.xpose.msra.mxu0 0.0
  %591 = vmatprep.subr.mxu0 0.0
  %592 = vmatpush1.xpose.msra.mxu0 0.0
  %593 = vmatprep.subr.mxu0 0.0
  %594 = vmatpush1.xpose.msra.mxu0 0.0
  %595 = vmatprep.subr.mxu0 0.0
  %596 = vmatpush1.xpose.msra.mxu0 0.0
  %597 = vmatprep.subr.mxu0 0.0
  %598 = vmatpush1.xpose.msra.mxu0 0.0
  %599 = vmatprep.subr.mxu0 0.0
  %600 = vmatpush1.xpose.msra.mxu0 0.0
  %601 = vmatprep.subr.mxu0 0.0
  %602 = vmatpush1.xpose.msra.mxu0 0.0
  %603 = vmatprep.subr.mxu0 0.0
  %604 = vmatpush1.xpose.msra.mxu0 0.0
  %605 = vmatprep.subr.mxu0 0.0
  %606 = vmatpush1.xpose.msra.mxu0 0.0
  %607 = vmatprep.subr.mxu0 0.0
  %608 = vmatpush1.xpose.msra.mxu0 0.0
  %609 = vmatprep.subr.mxu0 0.0
  %610 = vmatpush1.xpose.msra.mxu0 0.0
  %611 = vmatprep.subr.mxu0 0.0
  %612 = vmatpush1.xpose.msra.mxu0 0.0
  %613 = vmatprep.subr.mxu0 0.0
  %614 = vmatpush1.xpose.msra.mxu0 0.0
  %615 = vmatprep.subr.mxu0 0.0
  %616 = vmatpush1.xpose.msra.mxu0 0.0
  %617 = vmatprep.subr.mxu0 0.0
  %618 = vmatpush1.xpose.msra.mxu0 0.0
  %619 = vmatprep.subr.mxu0 0.0
  %620 = vmatpush1.xpose.msra.mxu0 0.0
  %621 = vmatprep.subr.mxu0 0.0
  %622 = vmatpush1.xpose.msra.mxu0 0.0
  %623 = vmatprep.subr.mxu0 0.0
  %624 = vmatpush1.xpose.msra.mxu0 0.0
  %625 = vmatprep.subr.mxu0 0.0
  %626 = vmatpush1.xpose.msra.mxu0 0.0
  %627 = vmatprep.subr.mxu0 0.0
  %628 = vmatpush1.xpose.msra.mxu0 0.0
  %629 = vmatprep.subr.mxu0 0.0
  %630 = vmatpush1.xpose.msra.mxu0 0.0
  %631 = vmatprep.subr.mxu0 0.0
  %632 = vmatpush1.xpose.msra.mxu0 0.0
  %633 = vmatprep.subr.mxu0 0.0
  %634 = vmatpush1.xpose.msra.mxu0 0.0
  %635 = vmatprep.subr.mxu0 0.0
  %636 = vmatpush1.xpose.msra.mxu0 0.0
  %637 = vmatprep.subr.mxu0 0.0
  %638 = vmatpush1.xpose.msra.mxu0 0.0
  %639 = vmatprep.subr.mxu0 0.0
  %640 = vmatpush1.xpose.msra.mxu0 0.0
  %641 = vmatprep.mubr.f32.mxu0 0.0
  %642 = vmatmul.mubr.f32.gmra.mrb[0].mxu0 %v572
  %v643 = vpop.f32.mrb[0].mxu0
  %v644 = vadd.f32 0.0, %v643
  %v645 = vpop.f32.mrb[0].mxu0
  %646 = vdwg.mxu0
  %v648 = vsel %vm418, %v163, 0
  %v651 = vsel %vm418, %v279, 0
  %653 = vmatprep.subr.mxu0 0.0
  %654 = vmatpush1.xpose.msra.mxu0 %v651
  %655 = vmatprep.subr.mxu0 0.0
  %656 = vmatpush1.xpose.msra.mxu0 0.0
  %657 = vmatprep.subr.mxu0 0.0
  %658 = vmatpush1.xpose.msra.mxu0 0.0
  %659 = vmatprep.subr.mxu0 0.0
  %660 = vmatpush1.xpose.msra.mxu0 0.0
  %661 = vmatprep.subr.mxu0 0.0
  %662 = vmatpush1.xpose.msra.mxu0 0.0
  %663 = vmatprep.subr.mxu0 0.0
  %664 = vmatpush1.xpose.msra.mxu0 0.0
  %665 = vmatprep.subr.mxu0 0.0
  %666 = vmatpush1.xpose.msra.mxu0 0.0
  %667 = vmatprep.subr.mxu0 0.0
  %668 = vmatpush1.xpose.msra.mxu0 0.0
  %669 = vmatprep.subr.mxu0 0.0
  %670 = vmatpush1.xpose.msra.mxu0 0.0
  %671 = vmatprep.subr.mxu0 0.0
  %672 = vmatpush1.xpose.msra.mxu0 0.0
  %673 = vmatprep.subr.mxu0 0.0
  %674 = vmatpush1.xpose.msra.mxu0 0.0
  %675 = vmatprep.subr.mxu0 0.0
  %676 = vmatpush1.xpose.msra.mxu0 0.0
  %677 = vmatprep.subr.mxu0 0.0
  %678 = vmatpush1.xpose.msra.mxu0 0.0
  %679 = vmatprep.subr.mxu0 0.0
  %680 = vmatpush1.xpose.msra.mxu0 0.0
  %681 = vmatprep.subr.mxu0 0.0
  %682 = vmatpush1.xpose.msra.mxu0 0.0
  %683 = vmatprep.subr.mxu0 0.0
  %684 = vmatpush1.xpose.msra.mxu0 0.0
  %685 = vmatprep.subr.mxu0 0.0
  %686 = vmatpush1.xpose.msra.mxu0 0.0
  %687 = vmatprep.subr.mxu0 0.0
  %688 = vmatpush1.xpose.msra.mxu0 0.0
  %689 = vmatprep.subr.mxu0 0.0
  %690 = vmatpush1.xpose.msra.mxu0 0.0
  %691 = vmatprep.subr.mxu0 0.0
  %692 = vmatpush1.xpose.msra.mxu0 0.0
  %693 = vmatprep.subr.mxu0 0.0
  %694 = vmatpush1.xpose.msra.mxu0 0.0
  %695 = vmatprep.subr.mxu0 0.0
  %696 = vmatpush1.xpose.msra.mxu0 0.0
  %697 = vmatprep.subr.mxu0 0.0
  %698 = vmatpush1.xpose.msra.mxu0 0.0
  %699 = vmatprep.subr.mxu0 0.0
  %700 = vmatpush1.xpose.msra.mxu0 0.0
  %701 = vmatprep.subr.mxu0 0.0
  %702 = vmatpush1.xpose.msra.mxu0 0.0
  %703 = vmatprep.subr.mxu0 0.0
  %704 = vmatpush1.xpose.msra.mxu0 0.0
  %705 = vmatprep.subr.mxu0 0.0
  %706 = vmatpush1.xpose.msra.mxu0 0.0
  %707 = vmatprep.subr.mxu0 0.0
  %708 = vmatpush1.xpose.msra.mxu0 0.0
  %709 = vmatprep.subr.mxu0 0.0
  %710 = vmatpush1.xpose.msra.mxu0 0.0
  %711 = vmatprep.subr.mxu0 0.0
  %712 = vmatpush1.xpose.msra.mxu0 0.0
  %713 = vmatprep.subr.mxu0 0.0
  %714 = vmatpush1.xpose.msra.mxu0 0.0
  %715 = vmatprep.subr.mxu0 0.0
  %716 = vmatpush1.xpose.msra.mxu0 0.0
  %717 = vmatprep.mubr.f32.mxu0 0.0
  %718 = vmatmul.mubr.f32.gmra.mrb[0].mxu0 %v648
  %v719 = vpop.f32.mrb[0].mxu0
  %v720 = vadd.f32 0.0, %v719
  %v721 = vpop.f32.mrb[0].mxu0
  %722 = vdwg.mxu0
  %v724 = vsel %vm418, %v168, 0
  %v727 = vsel %vm418, %v284, 0
  %729 = vmatprep.subr.mxu0 0.0
  %730 = vmatpush1.xpose.msra.mxu0 %v727
  %731 = vmatprep.subr.mxu0 0.0
  %732 = vmatpush1.xpose.msra.mxu0 0.0
  %733 = vmatprep.subr.mxu0 0.0
  %734 = vmatpush1.xpose.msra.mxu0 0.0
  %735 = vmatprep.subr.mxu0 0.0
  %736 = vmatpush1.xpose.msra.mxu0 0.0
  %737 = vmatprep.subr.mxu0 0.0
  %738 = vmatpush1.xpose.msra.mxu0 0.0
  %739 = vmatprep.subr.mxu0 0.0
  %740 = vmatpush1.xpose.msra.mxu0 0.0
  %741 = vmatprep.subr.mxu0 0.0
  %742 = vmatpush1.xpose.msra.mxu0 0.0
  %743 = vmatprep.subr.mxu0 0.0
  %744 = vmatpush1.xpose.msra.mxu0 0.0
  %745 = vmatprep.subr.mxu0 0.0
  %746 = vmatpush1.xpose.msra.mxu0 0.0
  %747 = vmatprep.subr.mxu0 0.0
  %748 = vmatpush1.xpose.msra.mxu0 0.0
  %749 = vmatprep.subr.mxu0 0.0
  %750 = vmatpush1.xpose.msra.mxu0 0.0
  %751 = vmatprep.subr.mxu0 0.0
  %752 = vmatpush1.xpose.msra.mxu0 0.0
  %753 = vmatprep.subr.mxu0 0.0
  %754 = vmatpush1.xpose.msra.mxu0 0.0
  %755 = vmatprep.subr.mxu0 0.0
  %756 = vmatpush1.xpose.msra.mxu0 0.0
  %757 = vmatprep.subr.mxu0 0.0
  %758 = vmatpush1.xpose.msra.mxu0 0.0
  %759 = vmatprep.subr.mxu0 0.0
  %760 = vmatpush1.xpose.msra.mxu0 0.0
  %761 = vmatprep.subr.mxu0 0.0
  %762 = vmatpush1.xpose.msra.mxu0 0.0
  %763 = vmatprep.subr.mxu0 0.0
  %764 = vmatpush1.xpose.msra.mxu0 0.0
  %765 = vmatprep.subr.mxu0 0.0
  %766 = vmatpush1.xpose.msra.mxu0 0.0
  %767 = vmatprep.subr.mxu0 0.0
  %768 = vmatpush1.xpose.msra.mxu0 0.0
  %769 = vmatprep.subr.mxu0 0.0
  %770 = vmatpush1.xpose.msra.mxu0 0.0
  %771 = vmatprep.subr.mxu0 0.0
  %772 = vmatpush1.xpose.msra.mxu0 0.0
  %773 = vmatprep.subr.mxu0 0.0
  %774 = vmatpush1.xpose.msra.mxu0 0.0
  %775 = vmatprep.subr.mxu0 0.0
  %776 = vmatpush1.xpose.msra.mxu0 0.0
  %777 = vmatprep.subr.mxu0 0.0
  %778 = vmatpush1.xpose.msra.mxu0 0.0
  %779 = vmatprep.subr.mxu0 0.0
  %780 = vmatpush1.xpose.msra.mxu0 0.0
  %781 = vmatprep.subr.mxu0 0.0
  %782 = vmatpush1.xpose.msra.mxu0 0.0
  %783 = vmatprep.subr.mxu0 0.0
  %784 = vmatpush1.xpose.msra.mxu0 0.0
  %785 = vmatprep.subr.mxu0 0.0
  %786 = vmatpush1.xpose.msra.mxu0 0.0
  %787 = vmatprep.subr.mxu0 0.0
  %788 = vmatpush1.xpose.msra.mxu0 0.0
  %789 = vmatprep.subr.mxu0 0.0
  %790 = vmatpush1.xpose.msra.mxu0 0.0
  %791 = vmatprep.subr.mxu0 0.0
  %792 = vmatpush1.xpose.msra.mxu0 0.0
  %793 = vmatprep.mubr.f32.mxu0 0.0
  %794 = vmatmul.mubr.f32.gmra.mrb[0].mxu0 %v724
  %v795 = vpop.f32.mrb[0].mxu0
  %v796 = vadd.f32 0.0, %v795
  %v797 = vpop.f32.mrb[0].mxu0
  %798 = vdwg.mxu0
  %v800 = vsel %vm418, %v173, 0
  %v803 = vsel %vm418, %v289, 0
  %805 = vmatprep.subr.mxu0 0.0
  %806 = vmatpush1.xpose.msra.mxu0 %v803
  %807 = vmatprep.subr.mxu0 0.0
  %808 = vmatpush1.xpose.msra.mxu0 0.0
  %809 = vmatprep.subr.mxu0 0.0
  %810 = vmatpush1.xpose.msra.mxu0 0.0
  %811 = vmatprep.subr.mxu0 0.0
  %812 = vmatpush1.xpose.msra.mxu0 0.0
  %813 = vmatprep.subr.mxu0 0.0
  %814 = vmatpush1.xpose.msra.mxu0 0.0
  %815 = vmatprep.subr.mxu0 0.0
  %816 = vmatpush1.xpose.msra.mxu0 0.0
  %817 = vmatprep.subr.mxu0 0.0
  %818 = vmatpush1.xpose.msra.mxu0 0.0
  %819 = vmatprep.subr.mxu0 0.0
  %820 = vmatpush1.xpose.msra.mxu0 0.0
  %821 = vmatprep.subr.mxu0 0.0
  %822 = vmatpush1.xpose.msra.mxu0 0.0
  %823 = vmatprep.subr.mxu0 0.0
  %824 = vmatpush1.xpose.msra.mxu0 0.0
  %825 = vmatprep.subr.mxu0 0.0
  %826 = vmatpush1.xpose.msra.mxu0 0.0
  %827 = vmatprep.subr.mxu0 0.0
  %828 = vmatpush1.xpose.msra.mxu0 0.0
  %829 = vmatprep.subr.mxu0 0.0
  %830 = vmatpush1.xpose.msra.mxu0 0.0
  %831 = vmatprep.subr.mxu0 0.0
  %832 = vmatpush1.xpose.msra.mxu0 0.0
  %833 = vmatprep.subr.mxu0 0.0
  %834 = vmatpush1.xpose.msra.mxu0 0.0
  %835 = vmatprep.subr.mxu0 0.0
  %836 = vmatpush1.xpose.msra.mxu0 0.0
  %837 = vmatprep.subr.mxu0 0.0
  %838 = vmatpush1.xpose.msra.mxu0 0.0
  %839 = vmatprep.subr.mxu0 0.0
  %840 = vmatpush1.xpose.msra.mxu0 0.0
  %841 = vmatprep.subr.mxu0 0.0
  %842 = vmatpush1.xpose.msra.mxu0 0.0
  %843 = vmatprep.subr.mxu0 0.0
  %844 = vmatpush1.xpose.msra.mxu0 0.0
  %845 = vmatprep.subr.mxu0 0.0
  %846 = vmatpush1.xpose.msra.mxu0 0.0
  %847 = vmatprep.subr.mxu0 0.0
  %848 = vmatpush1.xpose.msra.mxu0 0.0
  %849 = vmatprep.subr.mxu0 0.0
  %850 = vmatpush1.xpose.msra.mxu0 0.0
  %851 = vmatprep.subr.mxu0 0.0
  %852 = vmatpush1.xpose.msra.mxu0 0.0
  %853 = vmatprep.subr.mxu0 0.0
  %854 = vmatpush1.xpose.msra.mxu0 0.0
  %855 = vmatprep.subr.mxu0 0.0
  %856 = vmatpush1.xpose.msra.mxu0 0.0
  %857 = vmatprep.subr.mxu0 0.0
  %858 = vmatpush1.xpose.msra.mxu0 0.0
  %859 = vmatprep.subr.mxu0 0.0
  %860 = vmatpush1.xpose.msra.mxu0 0.0
  %861 = vmatprep.subr.mxu0 0.0
  %862 = vmatpush1.xpose.msra.mxu0 0.0
  %863 = vmatprep.subr.mxu0 0.0
  %864 = vmatpush1.xpose.msra.mxu0 0.0
  %865 = vmatprep.subr.mxu0 0.0
  %866 = vmatpush1.xpose.msra.mxu0 0.0
  %867 = vmatprep.subr.mxu0 0.0
  %868 = vmatpush1.xpose.msra.mxu0 0.0
  %869 = vmatprep.mubr.f32.mxu0 0.0
  %870 = vmatmul.mubr.f32.gmra.mrb[0].mxu0 %v800
  %v871 = vpop.f32.mrb[0].mxu0
  %v872 = vadd.f32 0.0, %v871
  %v873 = vpop.f32.mrb[0].mxu0
  %874 = vdwg.mxu0
  %v876 = vsel %vm418, %v178, 0
  %v879 = vsel %vm418, %v294, 0
  %881 = vmatprep.subr.mxu0 0.0
  %882 = vmatpush1.xpose.msra.mxu0 %v879
  %883 = vmatprep.subr.mxu0 0.0
  %884 = vmatpush1.xpose.msra.mxu0 0.0
  %885 = vmatprep.subr.mxu0 0.0
  %886 = vmatpush1.xpose.msra.mxu0 0.0
  %887 = vmatprep.subr.mxu0 0.0
  %888 = vmatpush1.xpose.msra.mxu0 0.0
  %889 = vmatprep.subr.mxu0 0.0
  %890 = vmatpush1.xpose.msra.mxu0 0.0
  %891 = vmatprep.subr.mxu0 0.0
  %892 = vmatpush1.xpose.msra.mxu0 0.0
  %893 = vmatprep.subr.mxu0 0.0
  %894 = vmatpush1.xpose.msra.mxu0 0.0
  %895 = vmatprep.subr.mxu0 0.0
  %896 = vmatpush1.xpose.msra.mxu0 0.0
  %897 = vmatprep.subr.mxu0 0.0
  %898 = vmatpush1.xpose.msra.mxu0 0.0
  %899 = vmatprep.subr.mxu0 0.0
  %900 = vmatpush1.xpose.msra.mxu0 0.0
  %901 = vmatprep.subr.mxu0 0.0
  %902 = vmatpush1.xpose.msra.mxu0 0.0
  %903 = vmatprep.subr.mxu0 0.0
  %904 = vmatpush1.xpose.msra.mxu0 0.0
  %905 = vmatprep.subr.mxu0 0.0
  %906 = vmatpush1.xpose.msra.mxu0 0.0
  %907 = vmatprep.subr.mxu0 0.0
  %908 = vmatpush1.xpose.msra.mxu0 0.0
  %909 = vmatprep.subr.mxu0 0.0
  %910 = vmatpush1.xpose.msra.mxu0 0.0
  %911 = vmatprep.subr.mxu0 0.0
  %912 = vmatpush1.xpose.msra.mxu0 0.0
  %913 = vmatprep.subr.mxu0 0.0
  %914 = vmatpush1.xpose.msra.mxu0 0.0
  %915 = vmatprep.subr.mxu0 0.0
  %916 = vmatpush1.xpose.msra.mxu0 0.0
  %917 = vmatprep.subr.mxu0 0.0
  %918 = vmatpush1.xpose.msra.mxu0 0.0
  %919 = vmatprep.subr.mxu0 0.0
  %920 = vmatpush1.xpose.msra.mxu0 0.0
  %921 = vmatprep.subr.mxu0 0.0
  %922 = vmatpush1.xpose.msra.mxu0 0.0
  %923 = vmatprep.subr.mxu0 0.0
  %924 = vmatpush1.xpose.msra.mxu0 0.0
  %925 = vmatprep.subr.mxu0 0.0
  %926 = vmatpush1.xpose.msra.mxu0 0.0
  %927 = vmatprep.subr.mxu0 0.0
  %928 = vmatpush1.xpose.msra.mxu0 0.0
  %929 = vmatprep.subr.mxu0 0.0
  %930 = vmatpush1.xpose.msra.mxu0 0.0
  %931 = vmatprep.subr.mxu0 0.0
  %932 = vmatpush1.xpose.msra.mxu0 0.0
  %933 = vmatprep.subr.mxu0 0.0
  %934 = vmatpush1.xpose.msra.mxu0 0.0
  %935 = vmatprep.subr.mxu0 0.0
  %936 = vmatpush1.xpose.msra.mxu0 0.0
  %937 = vmatprep.subr.mxu0 0.0
  %938 = vmatpush1.xpose.msra.mxu0 0.0
  %939 = vmatprep.subr.mxu0 0.0
  %940 = vmatpush1.xpose.msra.mxu0 0.0
  %941 = vmatprep.subr.mxu0 0.0
  %942 = vmatpush1.xpose.msra.mxu0 0.0
  %943 = vmatprep.subr.mxu0 0.0
  %944 = vmatpush1.xpose.msra.mxu0 0.0
  %945 = vmatprep.mubr.f32.mxu0 0.0
  %946 = vmatmul.mubr.f32.gmra.mrb[0].mxu0 %v876
  %v947 = vpop.f32.mrb[0].mxu0
  %v948 = vadd.f32 0.0, %v947
  %v949 = vpop.f32.mrb[0].mxu0
  %950 = vdwg.mxu0
  %v952 = vsel %vm418, %v183, 0
  %v955 = vsel %vm418, %v299, 0
  %957 = vmatprep.subr.mxu0 0.0
  %958 = vmatpush1.xpose.msra.mxu0 %v955
  %959 = vmatprep.subr.mxu0 0.0
  %960 = vmatpush1.xpose.msra.mxu0 0.0
  %961 = vmatprep.subr.mxu0 0.0
  %962 = vmatpush1.xpose.msra.mxu0 0.0
  %963 = vmatprep.subr.mxu0 0.0
  %964 = vmatpush1.xpose.msra.mxu0 0.0
  %965 = vmatprep.subr.mxu0 0.0
  %966 = vmatpush1.xpose.msra.mxu0 0.0
  %967 = vmatprep.subr.mxu0 0.0
  %968 = vmatpush1.xpose.msra.mxu0 0.0
  %969 = vmatprep.subr.mxu0 0.0
  %970 = vmatpush1.xpose.msra.mxu0 0.0
  %971 = vmatprep.subr.mxu0 0.0
  %972 = vmatpush1.xpose.msra.mxu0 0.0
  %973 = vmatprep.subr.mxu0 0.0
  %974 = vmatpush1.xpose.msra.mxu0 0.0
  %975 = vmatprep.subr.mxu0 0.0
  %976 = vmatpush1.xpose.msra.mxu0 0.0
  %977 = vmatprep.subr.mxu0 0.0
  %978 = vmatpush1.xpose.msra.mxu0 0.0
  %979 = vmatprep.subr.mxu0 0.0
  %980 = vmatpush1.xpose.msra.mxu0 0.0
  %981 = vmatprep.subr.mxu0 0.0
  %982 = vmatpush1.xpose.msra.mxu0 0.0
  %983 = vmatprep.subr.mxu0 0.0
  %984 = vmatpush1.xpose.msra.mxu0 0.0
  %985 = vmatprep.subr.mxu0 0.0
  %986 = vmatpush1.xpose.msra.mxu0 0.0
  %987 = vmatprep.subr.mxu0 0.0
  %988 = vmatpush1.xpose.msra.mxu0 0.0
  %989 = vmatprep.subr.mxu0 0.0
  %990 = vmatpush1.xpose.msra.mxu0 0.0
  %991 = vmatprep.subr.mxu0 0.0
  %992 = vmatpush1.xpose.msra.mxu0 0.0
  %993 = vmatprep.subr.mxu0 0.0
  %994 = vmatpush1.xpose.msra.mxu0 0.0
  %995 = vmatprep.subr.mxu0 0.0
  %996 = vmatpush1.xpose.msra.mxu0 0.0
  %997 = vmatprep.subr.mxu0 0.0
  %998 = vmatpush1.xpose.msra.mxu0 0.0
  %999 = vmatprep.subr.mxu0 0.0
  %1000 = vmatpush1.xpose.msra.mxu0 0.0
  %1001 = vmatprep.subr.mxu0 0.0
  %1002 = vmatpush1.xpose.msra.mxu0 0.0
  %1003 = vmatprep.subr.mxu0 0.0
  %1004 = vmatpush1.xpose.msra.mxu0 0.0
  %1005 = vmatprep.subr.mxu0 0.0
  %1006 = vmatpush1.xpose.msra.mxu0 0.0
  %1007 = vmatprep.subr.mxu0 0.0
  %1008 = vmatpush1.xpose.msra.mxu0 0.0
  %1009 = vmatprep.subr.mxu0 0.0
  %1010 = vmatpush1.xpose.msra.mxu0 0.0
  %1011 = vmatprep.subr.mxu0 0.0
  %1012 = vmatpush1.xpose.msra.mxu0 0.0
  %1013 = vmatprep.subr.mxu0 0.0
  %1014 = vmatpush1.xpose.msra.mxu0 0.0
  %1015 = vmatprep.subr.mxu0 0.0
  %1016 = vmatpush1.xpose.msra.mxu0 0.0
  %1017 = vmatprep.subr.mxu0 0.0
  %1018 = vmatpush1.xpose.msra.mxu0 0.0
  %1019 = vmatprep.subr.mxu0 0.0
  %1020 = vmatpush1.xpose.msra.mxu0 0.0
  %1021 = vmatprep.mubr.f32.mxu0 0.0
  %1022 = vmatmul.mubr.f32.gmra.mrb[0].mxu0 %v952
  %v1023 = vpop.f32.mrb[0].mxu0
  %v1024 = vadd.f32 0.0, %v1023
  %v1025 = vpop.f32.mrb[0].mxu0
  %1026 = vdwg.mxu0
  %v1027 = vsel %vm44, 1, 0
  %vm1028 = vcmp.eq.s32.totalorder %v1027, 1
  %v1029 = vsel %vm1028, -1e+30, %v492
  %v1030 = vsel %vm1028, -1e+30, %v568
  %v1031 = vsel %vm1028, -1e+30, %v644
  %v1032 = vsel %vm1028, -1e+30, %v720
  %v1033 = vsel %vm1028, -1e+30, %v796
  %v1034 = vsel %vm1028, -1e+30, %v872
  %v1035 = vsel %vm1028, -1e+30, %v948
  %v1036 = vsel %vm1028, -1e+30, %v1024
  %v1037 = vsel %vm418, %v1029, -inf
  %1038 = vmax.xlane.f32.xlu0 %v1037
  %v1039 = vpop.xlane.xlu0 %1038
  %v1040 = vsel %vm418, %v1030, -inf
  %1041 = vmax.xlane.f32.xlu0 %v1040
  %v1042 = vpop.xlane.xlu0 %1041
  %v1043 = vsel %vm418, %v1031, -inf
  %1044 = vmax.xlane.f32.xlu0 %v1043
  %v1045 = vpop.xlane.xlu0 %1044
  %v1046 = vsel %vm418, %v1032, -inf
  %1047 = vmax.xlane.f32.xlu0 %v1046
  %v1048 = vpop.xlane.xlu0 %1047
  %v1049 = vsel %vm418, %v1033, -inf
  %1050 = vmax.xlane.f32.xlu0 %v1049
  %v1051 = vpop.xlane.xlu0 %1050
  %v1052 = vsel %vm418, %v1034, -inf
  %1053 = vmax.xlane.f32.xlu0 %v1052
  %v1054 = vpop.xlane.xlu0 %1053
  %v1055 = vsel %vm418, %v1035, -inf
  %1056 = vmax.xlane.f32.xlu0 %v1055
  %v1057 = vpop.xlane.xlu0 %1056
  %v1058 = vsel %vm418, %v1036, -inf
  %1059 = vmax.xlane.f32.xlu0 %v1058
  %v1060 = vpop.xlane.xlu0 %1059
  %v1061 = vsub.f32 %v1029, %v1039
  %v1062 = vsub.f32 %v1030, %v1042
  %v1063 = vsub.f32 %v1031, %v1045
  %v1064 = vsub.f32 %v1032, %v1048
  %v1065 = vsub.f32 %v1033, %v1051
  %v1066 = vsub.f32 %v1034, %v1054
  %v1067 = vsub.f32 %v1035, %v1057
  %v1068 = vsub.f32 %v1036, %v1060
  %v1069 = vmul.f32 %v1061, 1.442695
  %v1070 = vpow.pop %v1069
  %v1071 = vmul.f32 %v1062, 1.442695
  %v1072 = vpow.pop %v1071
  %v1073 = vmul.f32 %v1063, 1.442695
  %v1074 = vpow.pop %v1073
  %v1075 = vmul.f32 %v1064, 1.442695
  %v1076 = vpow.pop %v1075
  %v1077 = vmul.f32 %v1065, 1.442695
  %v1078 = vpow.pop %v1077
  %v1079 = vmul.f32 %v1066, 1.442695
  %v1080 = vpow.pop %v1079
  %v1081 = vmul.f32 %v1067, 1.442695
  %v1082 = vpow.pop %v1081
  %v1083 = vmul.f32 %v1068, 1.442695
  %v1084 = vpow.pop %v1083
  %v1085 = vsel %vm418, %v1070, 0.0
  %1086 = vadd.xlane.f32.xlu0 %v1085
  %v1087 = vpop.xlane.xlu0 %1086
  %v1088 = vsel %vm418, %v1072, 0.0
  %1089 = vadd.xlane.f32.xlu0 %v1088
  %v1090 = vpop.xlane.xlu0 %1089
  %v1091 = vsel %vm418, %v1074, 0.0
  %1092 = vadd.xlane.f32.xlu0 %v1091
  %v1093 = vpop.xlane.xlu0 %1092
  %v1094 = vsel %vm418, %v1076, 0.0
  %1095 = vadd.xlane.f32.xlu0 %v1094
  %v1096 = vpop.xlane.xlu0 %1095
  %v1097 = vsel %vm418, %v1078, 0.0
  %1098 = vadd.xlane.f32.xlu0 %v1097
  %v1099 = vpop.xlane.xlu0 %1098
  %v1100 = vsel %vm418, %v1080, 0.0
  %1101 = vadd.xlane.f32.xlu0 %v1100
  %v1102 = vpop.xlane.xlu0 %1101
  %v1103 = vsel %vm418, %v1082, 0.0
  %1104 = vadd.xlane.f32.xlu0 %v1103
  %v1105 = vpop.xlane.xlu0 %1104
  %v1106 = vsel %vm418, %v1084, 0.0
  %1107 = vadd.xlane.f32.xlu0 %v1106
  %v1108 = vpop.xlane.xlu0 %1107
  %v1109 = vrcp.pop %v1087
  %v1110 = vrcp.pop %v1090
  %v1111 = vrcp.pop %v1093
  %v1112 = vrcp.pop %v1096
  %v1113 = vrcp.pop %v1099
  %v1114 = vrcp.pop %v1102
  %v1115 = vrcp.pop %v1105
  %v1116 = vrcp.pop %v1108
  %v1117 = vmul.f32 %v1070, %v1109
  %v1118 = vmul.f32 %v1072, %v1110
  %v1119 = vmul.f32 %v1074, %v1111
  %v1120 = vmul.f32 %v1076, %v1112
  %v1121 = vmul.f32 %v1078, %v1113
  %v1122 = vmul.f32 %v1080, %v1114
  %v1123 = vmul.f32 %v1082, %v1115
  %v1124 = vmul.f32 %v1084, %v1116
  %v1126 = vsel %vm418, %v1117, 0
  %1128 = vmatprep.subr.mxu0 0.0
  %1129 = vmatpush1.msra.mxu0 %v380
  %1130 = vmatprep.subr.mxu0 0.0
  %1131 = vmatpush1.msra.mxu0 0.0
  %1132 = vmatprep.subr.mxu0 0.0
  %1133 = vmatpush1.msra.mxu0 0.0
  %1134 = vmatprep.subr.mxu0 0.0
  %1135 = vmatpush1.msra.mxu0 0.0
  %1136 = vmatprep.subr.mxu0 0.0
  %1137 = vmatpush1.msra.mxu0 0.0
  %1138 = vmatprep.subr.mxu0 0.0
  %1139 = vmatpush1.msra.mxu0 0.0
  %1140 = vmatprep.subr.mxu0 0.0
  %1141 = vmatpush1.msra.mxu0 0.0
  %1142 = vmatprep.subr.mxu0 0.0
  %1143 = vmatpush1.msra.mxu0 0.0
  %1144 = vmatprep.subr.mxu0 0.0
  %1145 = vmatpush1.msra.mxu0 0.0
  %1146 = vmatprep.subr.mxu0 0.0
  %1147 = vmatpush1.msra.mxu0 0.0
  %1148 = vmatprep.subr.mxu0 0.0
  %1149 = vmatpush1.msra.mxu0 0.0
  %1150 = vmatprep.subr.mxu0 0.0
  %1151 = vmatpush1.msra.mxu0 0.0
  %1152 = vmatprep.subr.mxu0 0.0
  %1153 = vmatpush1.msra.mxu0 0.0
  %1154 = vmatprep.subr.mxu0 0.0
  %1155 = vmatpush1.msra.mxu0 0.0
  %1156 = vmatprep.subr.mxu0 0.0
  %1157 = vmatpush1.msra.mxu0 0.0
  %1158 = vmatprep.subr.mxu0 0.0
  %1159 = vmatpush1.msra.mxu0 0.0
  %1160 = vmatprep.subr.mxu0 0.0
  %1161 = vmatpush1.msra.mxu0 0.0
  %1162 = vmatprep.subr.mxu0 0.0
  %1163 = vmatpush1.msra.mxu0 0.0
  %1164 = vmatprep.subr.mxu0 0.0
  %1165 = vmatpush1.msra.mxu0 0.0
  %1166 = vmatprep.subr.mxu0 0.0
  %1167 = vmatpush1.msra.mxu0 0.0
  %1168 = vmatprep.subr.mxu0 0.0
  %1169 = vmatpush1.msra.mxu0 0.0
  %1170 = vmatprep.subr.mxu0 0.0
  %1171 = vmatpush1.msra.mxu0 0.0
  %1172 = vmatprep.subr.mxu0 0.0
  %1173 = vmatpush1.msra.mxu0 0.0
  %1174 = vmatprep.subr.mxu0 0.0
  %1175 = vmatpush1.msra.mxu0 0.0
  %1176 = vmatprep.subr.mxu0 0.0
  %1177 = vmatpush1.msra.mxu0 0.0
  %1178 = vmatprep.subr.mxu0 0.0
  %1179 = vmatpush1.msra.mxu0 0.0
  %1180 = vmatprep.subr.mxu0 0.0
  %1181 = vmatpush1.msra.mxu0 0.0
  %1182 = vmatprep.subr.mxu0 0.0
  %1183 = vmatpush1.msra.mxu0 0.0
  %1184 = vmatprep.subr.mxu0 0.0
  %1185 = vmatpush1.msra.mxu0 0.0
  %1186 = vmatprep.subr.mxu0 0.0
  %1187 = vmatpush1.msra.mxu0 0.0
  %1188 = vmatprep.subr.mxu0 0.0
  %1189 = vmatpush1.msra.mxu0 0.0
  %1190 = vmatprep.subr.mxu0 0.0
  %1191 = vmatpush1.msra.mxu0 0.0
  %1192 = vmatprep.mubr.f32.mxu0 0.0
  %1193 = vmatmul.mubr.f32.gmra.mrb[0].mxu0 %v1126
  %v1194 = vpop.f32.mrb[0].mxu0
  %v1195 = vadd.f32 0.0, %v1194
  %v1196 = vpop.f32.mrb[0].mxu0
  %1197 = vdwg.mxu0
  %v1199 = vsel %vm418, %v1118, 0
  %1201 = vmatprep.subr.mxu0 0.0
  %1202 = vmatpush1.msra.mxu0 %v385
  %1203 = vmatprep.subr.mxu0 0.0
  %1204 = vmatpush1.msra.mxu0 0.0
  %1205 = vmatprep.subr.mxu0 0.0
  %1206 = vmatpush1.msra.mxu0 0.0
  %1207 = vmatprep.subr.mxu0 0.0
  %1208 = vmatpush1.msra.mxu0 0.0
  %1209 = vmatprep.subr.mxu0 0.0
  %1210 = vmatpush1.msra.mxu0 0.0
  %1211 = vmatprep.subr.mxu0 0.0
  %1212 = vmatpush1.msra.mxu0 0.0
  %1213 = vmatprep.subr.mxu0 0.0
  %1214 = vmatpush1.msra.mxu0 0.0
  %1215 = vmatprep.subr.mxu0 0.0
  %1216 = vmatpush1.msra.mxu0 0.0
  %1217 = vmatprep.subr.mxu0 0.0
  %1218 = vmatpush1.msra.mxu0 0.0
  %1219 = vmatprep.subr.mxu0 0.0
  %1220 = vmatpush1.msra.mxu0 0.0
  %1221 = vmatprep.subr.mxu0 0.0
  %1222 = vmatpush1.msra.mxu0 0.0
  %1223 = vmatprep.subr.mxu0 0.0
  %1224 = vmatpush1.msra.mxu0 0.0
  %1225 = vmatprep.subr.mxu0 0.0
  %1226 = vmatpush1.msra.mxu0 0.0
  %1227 = vmatprep.subr.mxu0 0.0
  %1228 = vmatpush1.msra.mxu0 0.0
  %1229 = vmatprep.subr.mxu0 0.0
  %1230 = vmatpush1.msra.mxu0 0.0
  %1231 = vmatprep.subr.mxu0 0.0
  %1232 = vmatpush1.msra.mxu0 0.0
  %1233 = vmatprep.subr.mxu0 0.0
  %1234 = vmatpush1.msra.mxu0 0.0
  %1235 = vmatprep.subr.mxu0 0.0
  %1236 = vmatpush1.msra.mxu0 0.0
  %1237 = vmatprep.subr.mxu0 0.0
  %1238 = vmatpush1.msra.mxu0 0.0
  %1239 = vmatprep.subr.mxu0 0.0
  %1240 = vmatpush1.msra.mxu0 0.0
  %1241 = vmatprep.subr.mxu0 0.0
  %1242 = vmatpush1.msra.mxu0 0.0
  %1243 = vmatprep.subr.mxu0 0.0
  %1244 = vmatpush1.msra.mxu0 0.0
  %1245 = vmatprep.subr.mxu0 0.0
  %1246 = vmatpush1.msra.mxu0 0.0
  %1247 = vmatprep.subr.mxu0 0.0
  %1248 = vmatpush1.msra.mxu0 0.0
  %1249 = vmatprep.subr.mxu0 0.0
  %1250 = vmatpush1.msra.mxu0 0.0
  %1251 = vmatprep.subr.mxu0 0.0
  %1252 = vmatpush1.msra.mxu0 0.0
  %1253 = vmatprep.subr.mxu0 0.0
  %1254 = vmatpush1.msra.mxu0 0.0
  %1255 = vmatprep.subr.mxu0 0.0
  %1256 = vmatpush1.msra.mxu0 0.0
  %1257 = vmatprep.subr.mxu0 0.0
  %1258 = vmatpush1.msra.mxu0 0.0
  %1259 = vmatprep.subr.mxu0 0.0
  %1260 = vmatpush1.msra.mxu0 0.0
  %1261 = vmatprep.subr.mxu0 0.0
  %1262 = vmatpush1.msra.mxu0 0.0
  %1263 = vmatprep.subr.mxu0 0.0
  %1264 = vmatpush1.msra.mxu0 0.0
  %1265 = vmatprep.mubr.f32.mxu0 0.0
  %1266 = vmatmul.mubr.f32.gmra.mrb[0].mxu0 %v1199
  %v1267 = vpop.f32.mrb[0].mxu0
  %v1268 = vadd.f32 0.0, %v1267
  %v1269 = vpop.f32.mrb[0].mxu0
  %1270 = vdwg.mxu0
  %v1272 = vsel %vm418, %v1119, 0
  %1274 = vmatprep.subr.mxu0 0.0
  %1275 = vmatpush1.msra.mxu0 %v390
  %1276 = vmatprep.subr.mxu0 0.0
  %1277 = vmatpush1.msra.mxu0 0.0
  %1278 = vmatprep.subr.mxu0 0.0
  %1279 = vmatpush1.msra.mxu0 0.0
  %1280 = vmatprep.subr.mxu0 0.0
  %1281 = vmatpush1.msra.mxu0 0.0
  %1282 = vmatprep.subr.mxu0 0.0
  %1283 = vmatpush1.msra.mxu0 0.0
  %1284 = vmatprep.subr.mxu0 0.0
  %1285 = vmatpush1.msra.mxu0 0.0
  %1286 = vmatprep.subr.mxu0 0.0
  %1287 = vmatpush1.msra.mxu0 0.0
  %1288 = vmatprep.subr.mxu0 0.0
  %1289 = vmatpush1.msra.mxu0 0.0
  %1290 = vmatprep.subr.mxu0 0.0
  %1291 = vmatpush1.msra.mxu0 0.0
  %1292 = vmatprep.subr.mxu0 0.0
  %1293 = vmatpush1.msra.mxu0 0.0
  %1294 = vmatprep.subr.mxu0 0.0
  %1295 = vmatpush1.msra.mxu0 0.0
  %1296 = vmatprep.subr.mxu0 0.0
  %1297 = vmatpush1.msra.mxu0 0.0
  %1298 = vmatprep.subr.mxu0 0.0
  %1299 = vmatpush1.msra.mxu0 0.0
  %1300 = vmatprep.subr.mxu0 0.0
  %1301 = vmatpush1.msra.mxu0 0.0
  %1302 = vmatprep.subr.mxu0 0.0
  %1303 = vmatpush1.msra.mxu0 0.0
  %1304 = vmatprep.subr.mxu0 0.0
  %1305 = vmatpush1.msra.mxu0 0.0
  %1306 = vmatprep.subr.mxu0 0.0
  %1307 = vmatpush1.msra.mxu0 0.0
  %1308 = vmatprep.subr.mxu0 0.0
  %1309 = vmatpush1.msra.mxu0 0.0
  %1310 = vmatprep.subr.mxu0 0.0
  %1311 = vmatpush1.msra.mxu0 0.0
  %1312 = vmatprep.subr.mxu0 0.0
  %1313 = vmatpush1.msra.mxu0 0.0
  %1314 = vmatprep.subr.mxu0 0.0
  %1315 = vmatpush1.msra.mxu0 0.0
  %1316 = vmatprep.subr.mxu0 0.0
  %1317 = vmatpush1.msra.mxu0 0.0
  %1318 = vmatprep.subr.mxu0 0.0
  %1319 = vmatpush1.msra.mxu0 0.0
  %1320 = vmatprep.subr.mxu0 0.0
  %1321 = vmatpush1.msra.mxu0 0.0
  %1322 = vmatprep.subr.mxu0 0.0
  %1323 = vmatpush1.msra.mxu0 0.0
  %1324 = vmatprep.subr.mxu0 0.0
  %1325 = vmatpush1.msra.mxu0 0.0
  %1326 = vmatprep.subr.mxu0 0.0
  %1327 = vmatpush1.msra.mxu0 0.0
  %1328 = vmatprep.subr.mxu0 0.0
  %1329 = vmatpush1.msra.mxu0 0.0
  %1330 = vmatprep.subr.mxu0 0.0
  %1331 = vmatpush1.msra.mxu0 0.0
  %1332 = vmatprep.subr.mxu0 0.0
  %1333 = vmatpush1.msra.mxu0 0.0
  %1334 = vmatprep.subr.mxu0 0.0
  %1335 = vmatpush1.msra.mxu0 0.0
  %1336 = vmatprep.subr.mxu0 0.0
  %1337 = vmatpush1.msra.mxu0 0.0
  %1338 = vmatprep.mubr.f32.mxu0 0.0
  %1339 = vmatmul.mubr.f32.gmra.mrb[0].mxu0 %v1272
  %v1340 = vpop.f32.mrb[0].mxu0
  %v1341 = vadd.f32 0.0, %v1340
  %v1342 = vpop.f32.mrb[0].mxu0
  %1343 = vdwg.mxu0
  %v1345 = vsel %vm418, %v1120, 0
  %1347 = vmatprep.subr.mxu0 0.0
  %1348 = vmatpush1.msra.mxu0 %v395
  %1349 = vmatprep.subr.mxu0 0.0
  %1350 = vmatpush1.msra.mxu0 0.0
  %1351 = vmatprep.subr.mxu0 0.0
  %1352 = vmatpush1.msra.mxu0 0.0
  %1353 = vmatprep.subr.mxu0 0.0
  %1354 = vmatpush1.msra.mxu0 0.0
  %1355 = vmatprep.subr.mxu0 0.0
  %1356 = vmatpush1.msra.mxu0 0.0
  %1357 = vmatprep.subr.mxu0 0.0
  %1358 = vmatpush1.msra.mxu0 0.0
  %1359 = vmatprep.subr.mxu0 0.0
  %1360 = vmatpush1.msra.mxu0 0.0
  %1361 = vmatprep.subr.mxu0 0.0
  %1362 = vmatpush1.msra.mxu0 0.0
  %1363 = vmatprep.subr.mxu0 0.0
  %1364 = vmatpush1.msra.mxu0 0.0
  %1365 = vmatprep.subr.mxu0 0.0
  %1366 = vmatpush1.msra.mxu0 0.0
  %1367 = vmatprep.subr.mxu0 0.0
  %1368 = vmatpush1.msra.mxu0 0.0
  %1369 = vmatprep.subr.mxu0 0.0
  %1370 = vmatpush1.msra.mxu0 0.0
  %1371 = vmatprep.subr.mxu0 0.0
  %1372 = vmatpush1.msra.mxu0 0.0
  %1373 = vmatprep.subr.mxu0 0.0
  %1374 = vmatpush1.msra.mxu0 0.0
  %1375 = vmatprep.subr.mxu0 0.0
  %1376 = vmatpush1.msra.mxu0 0.0
  %1377 = vmatprep.subr.mxu0 0.0
  %1378 = vmatpush1.msra.mxu0 0.0
  %1379 = vmatprep.subr.mxu0 0.0
  %1380 = vmatpush1.msra.mxu0 0.0
  %1381 = vmatprep.subr.mxu0 0.0
  %1382 = vmatpush1.msra.mxu0 0.0
  %1383 = vmatprep.subr.mxu0 0.0
  %1384 = vmatpush1.msra.mxu0 0.0
  %1385 = vmatprep.subr.mxu0 0.0
  %1386 = vmatpush1.msra.mxu0 0.0
  %1387 = vmatprep.subr.mxu0 0.0
  %1388 = vmatpush1.msra.mxu0 0.0
  %1389 = vmatprep.subr.mxu0 0.0
  %1390 = vmatpush1.msra.mxu0 0.0
  %1391 = vmatprep.subr.mxu0 0.0
  %1392 = vmatpush1.msra.mxu0 0.0
  %1393 = vmatprep.subr.mxu0 0.0
  %1394 = vmatpush1.msra.mxu0 0.0
  %1395 = vmatprep.subr.mxu0 0.0
  %1396 = vmatpush1.msra.mxu0 0.0
  %1397 = vmatprep.subr.mxu0 0.0
  %1398 = vmatpush1.msra.mxu0 0.0
  %1399 = vmatprep.subr.mxu0 0.0
  %1400 = vmatpush1.msra.mxu0 0.0
  %1401 = vmatprep.subr.mxu0 0.0
  %1402 = vmatpush1.msra.mxu0 0.0
  %1403 = vmatprep.subr.mxu0 0.0
  %1404 = vmatpush1.msra.mxu0 0.0
  %1405 = vmatprep.subr.mxu0 0.0
  %1406 = vmatpush1.msra.mxu0 0.0
  %1407 = vmatprep.subr.mxu0 0.0
  %1408 = vmatpush1.msra.mxu0 0.0
  %1409 = vmatprep.subr.mxu0 0.0
  %1410 = vmatpush1.msra.mxu0 0.0
  %1411 = vmatprep.mubr.f32.mxu0 0.0
  %1412 = vmatmul.mubr.f32.gmra.mrb[0].mxu0 %v1345
  %v1413 = vpop.f32.mrb[0].mxu0
  %v1414 = vadd.f32 0.0, %v1413
  %v1415 = vpop.f32.mrb[0].mxu0
  %1416 = vdwg.mxu0
  %v1418 = vsel %vm418, %v1121, 0
  %1420 = vmatprep.subr.mxu0 0.0
  %1421 = vmatpush1.msra.mxu0 %v400
  %1422 = vmatprep.subr.mxu0 0.0
  %1423 = vmatpush1.msra.mxu0 0.0
  %1424 = vmatprep.subr.mxu0 0.0
  %1425 = vmatpush1.msra.mxu0 0.0
  %1426 = vmatprep.subr.mxu0 0.0
  %1427 = vmatpush1.msra.mxu0 0.0
  %1428 = vmatprep.subr.mxu0 0.0
  %1429 = vmatpush1.msra.mxu0 0.0
  %1430 = vmatprep.subr.mxu0 0.0
  %1431 = vmatpush1.msra.mxu0 0.0
  %1432 = vmatprep.subr.mxu0 0.0
  %1433 = vmatpush1.msra.mxu0 0.0
  %1434 = vmatprep.subr.mxu0 0.0
  %1435 = vmatpush1.msra.mxu0 0.0
  %1436 = vmatprep.subr.mxu0 0.0
  %1437 = vmatpush1.msra.mxu0 0.0
  %1438 = vmatprep.subr.mxu0 0.0
  %1439 = vmatpush1.msra.mxu0 0.0
  %1440 = vmatprep.subr.mxu0 0.0
  %1441 = vmatpush1.msra.mxu0 0.0
  %1442 = vmatprep.subr.mxu0 0.0
  %1443 = vmatpush1.msra.mxu0 0.0
  %1444 = vmatprep.subr.mxu0 0.0
  %1445 = vmatpush1.msra.mxu0 0.0
  %1446 = vmatprep.subr.mxu0 0.0
  %1447 = vmatpush1.msra.mxu0 0.0
  %1448 = vmatprep.subr.mxu0 0.0
  %1449 = vmatpush1.msra.mxu0 0.0
  %1450 = vmatprep.subr.mxu0 0.0
  %1451 = vmatpush1.msra.mxu0 0.0
  %1452 = vmatprep.subr.mxu0 0.0
  %1453 = vmatpush1.msra.mxu0 0.0
  %1454 = vmatprep.subr.mxu0 0.0
  %1455 = vmatpush1.msra.mxu0 0.0
  %1456 = vmatprep.subr.mxu0 0.0
  %1457 = vmatpush1.msra.mxu0 0.0
  %1458 = vmatprep.subr.mxu0 0.0
  %1459 = vmatpush1.msra.mxu0 0.0
  %1460 = vmatprep.subr.mxu0 0.0
  %1461 = vmatpush1.msra.mxu0 0.0
  %1462 = vmatprep.subr.mxu0 0.0
  %1463 = vmatpush1.msra.mxu0 0.0
  %1464 = vmatprep.subr.mxu0 0.0
  %1465 = vmatpush1.msra.mxu0 0.0
  %1466 = vmatprep.subr.mxu0 0.0
  %1467 = vmatpush1.msra.mxu0 0.0
  %1468 = vmatprep.subr.mxu0 0.0
  %1469 = vmatpush1.msra.mxu0 0.0
  %1470 = vmatprep.subr.mxu0 0.0
  %1471 = vmatpush1.msra.mxu0 0.0
  %1472 = vmatprep.subr.mxu0 0.0
  %1473 = vmatpush1.msra.mxu0 0.0
  %1474 = vmatprep.subr.mxu0 0.0
  %1475 = vmatpush1.msra.mxu0 0.0
  %1476 = vmatprep.subr.mxu0 0.0
  %1477 = vmatpush1.msra.mxu0 0.0
  %1478 = vmatprep.subr.mxu0 0.0
  %1479 = vmatpush1.msra.mxu0 0.0
  %1480 = vmatprep.subr.mxu0 0.0
  %1481 = vmatpush1.msra.mxu0 0.0
  %1482 = vmatprep.subr.mxu0 0.0
  %1483 = vmatpush1.msra.mxu0 0.0
  %1484 = vmatprep.mubr.f32.mxu0 0.0
  %1485 = vmatmul.mubr.f32.gmra.mrb[0].mxu0 %v1418
  %v1486 = vpop.f32.mrb[0].mxu0
  %v1487 = vadd.f32 0.0, %v1486
  %v1488 = vpop.f32.mrb[0].mxu0
  %1489 = vdwg.mxu0
  %v1491 = vsel %vm418, %v1122, 0
  %1493 = vmatprep.subr.mxu0 0.0
  %1494 = vmatpush1.msra.mxu0 %v405
  %1495 = vmatprep.subr.mxu0 0.0
  %1496 = vmatpush1.msra.mxu0 0.0
  %1497 = vmatprep.subr.mxu0 0.0
  %1498 = vmatpush1.msra.mxu0 0.0
  %1499 = vmatprep.subr.mxu0 0.0
  %1500 = vmatpush1.msra.mxu0 0.0
  %1501 = vmatprep.subr.mxu0 0.0
  %1502 = vmatpush1.msra.mxu0 0.0
  %1503 = vmatprep.subr.mxu0 0.0
  %1504 = vmatpush1.msra.mxu0 0.0
  %1505 = vmatprep.subr.mxu0 0.0
  %1506 = vmatpush1.msra.mxu0 0.0
  %1507 = vmatprep.subr.mxu0 0.0
  %1508 = vmatpush1.msra.mxu0 0.0
  %1509 = vmatprep.subr.mxu0 0.0
  %1510 = vmatpush1.msra.mxu0 0.0
  %1511 = vmatprep.subr.mxu0 0.0
  %1512 = vmatpush1.msra.mxu0 0.0
  %1513 = vmatprep.subr.mxu0 0.0
  %1514 = vmatpush1.msra.mxu0 0.0
  %1515 = vmatprep.subr.mxu0 0.0
  %1516 = vmatpush1.msra.mxu0 0.0
  %1517 = vmatprep.subr.mxu0 0.0
  %1518 = vmatpush1.msra.mxu0 0.0
  %1519 = vmatprep.subr.mxu0 0.0
  %1520 = vmatpush1.msra.mxu0 0.0
  %1521 = vmatprep.subr.mxu0 0.0
  %1522 = vmatpush1.msra.mxu0 0.0
  %1523 = vmatprep.subr.mxu0 0.0
  %1524 = vmatpush1.msra.mxu0 0.0
  %1525 = vmatprep.subr.mxu0 0.0
  %1526 = vmatpush1.msra.mxu0 0.0
  %1527 = vmatprep.subr.mxu0 0.0
  %1528 = vmatpush1.msra.mxu0 0.0
  %1529 = vmatprep.subr.mxu0 0.0
  %1530 = vmatpush1.msra.mxu0 0.0
  %1531 = vmatprep.subr.mxu0 0.0
  %1532 = vmatpush1.msra.mxu0 0.0
  %1533 = vmatprep.subr.mxu0 0.0
  %1534 = vmatpush1.msra.mxu0 0.0
  %1535 = vmatprep.subr.mxu0 0.0
  %1536 = vmatpush1.msra.mxu0 0.0
  %1537 = vmatprep.subr.mxu0 0.0
  %1538 = vmatpush1.msra.mxu0 0.0
  %1539 = vmatprep.subr.mxu0 0.0
  %1540 = vmatpush1.msra.mxu0 0.0
  %1541 = vmatprep.subr.mxu0 0.0
  %1542 = vmatpush1.msra.mxu0 0.0
  %1543 = vmatprep.subr.mxu0 0.0
  %1544 = vmatpush1.msra.mxu0 0.0
  %1545 = vmatprep.subr.mxu0 0.0
  %1546 = vmatpush1.msra.mxu0 0.0
  %1547 = vmatprep.subr.mxu0 0.0
  %1548 = vmatpush1.msra.mxu0 0.0
  %1549 = vmatprep.subr.mxu0 0.0
  %1550 = vmatpush1.msra.mxu0 0.0
  %1551 = vmatprep.subr.mxu0 0.0
  %1552 = vmatpush1.msra.mxu0 0.0
  %1553 = vmatprep.subr.mxu0 0.0
  %1554 = vmatpush1.msra.mxu0 0.0
  %1555 = vmatprep.subr.mxu0 0.0
  %1556 = vmatpush1.msra.mxu0 0.0
  %1557 = vmatprep.mubr.f32.mxu0 0.0
  %1558 = vmatmul.mubr.f32.gmra.mrb[0].mxu0 %v1491
  %v1559 = vpop.f32.mrb[0].mxu0
  %v1560 = vadd.f32 0.0, %v1559
  %v1561 = vpop.f32.mrb[0].mxu0
  %1562 = vdwg.mxu0
  %v1564 = vsel %vm418, %v1123, 0
  %1566 = vmatprep.subr.mxu0 0.0
  %1567 = vmatpush1.msra.mxu0 %v410
  %1568 = vmatprep.subr.mxu0 0.0
  %1569 = vmatpush1.msra.mxu0 0.0
  %1570 = vmatprep.subr.mxu0 0.0
  %1571 = vmatpush1.msra.mxu0 0.0
  %1572 = vmatprep.subr.mxu0 0.0
  %1573 = vmatpush1.msra.mxu0 0.0
  %1574 = vmatprep.subr.mxu0 0.0
  %1575 = vmatpush1.msra.mxu0 0.0
  %1576 = vmatprep.subr.mxu0 0.0
  %1577 = vmatpush1.msra.mxu0 0.0
  %1578 = vmatprep.subr.mxu0 0.0
  %1579 = vmatpush1.msra.mxu0 0.0
  %1580 = vmatprep.subr.mxu0 0.0
  %1581 = vmatpush1.msra.mxu0 0.0
  %1582 = vmatprep.subr.mxu0 0.0
  %1583 = vmatpush1.msra.mxu0 0.0
  %1584 = vmatprep.subr.mxu0 0.0
  %1585 = vmatpush1.msra.mxu0 0.0
  %1586 = vmatprep.subr.mxu0 0.0
  %1587 = vmatpush1.msra.mxu0 0.0
  %1588 = vmatprep.subr.mxu0 0.0
  %1589 = vmatpush1.msra.mxu0 0.0
  %1590 = vmatprep.subr.mxu0 0.0
  %1591 = vmatpush1.msra.mxu0 0.0
  %1592 = vmatprep.subr.mxu0 0.0
  %1593 = vmatpush1.msra.mxu0 0.0
  %1594 = vmatprep.subr.mxu0 0.0
  %1595 = vmatpush1.msra.mxu0 0.0
  %1596 = vmatprep.subr.mxu0 0.0
  %1597 = vmatpush1.msra.mxu0 0.0
  %1598 = vmatprep.subr.mxu0 0.0
  %1599 = vmatpush1.msra.mxu0 0.0
  %1600 = vmatprep.subr.mxu0 0.0
  %1601 = vmatpush1.msra.mxu0 0.0
  %1602 = vmatprep.subr.mxu0 0.0
  %1603 = vmatpush1.msra.mxu0 0.0
  %1604 = vmatprep.subr.mxu0 0.0
  %1605 = vmatpush1.msra.mxu0 0.0
  %1606 = vmatprep.subr.mxu0 0.0
  %1607 = vmatpush1.msra.mxu0 0.0
  %1608 = vmatprep.subr.mxu0 0.0
  %1609 = vmatpush1.msra.mxu0 0.0
  %1610 = vmatprep.subr.mxu0 0.0
  %1611 = vmatpush1.msra.mxu0 0.0
  %1612 = vmatprep.subr.mxu0 0.0
  %1613 = vmatpush1.msra.mxu0 0.0
  %1614 = vmatprep.subr.mxu0 0.0
  %1615 = vmatpush1.msra.mxu0 0.0
  %1616 = vmatprep.subr.mxu0 0.0
  %1617 = vmatpush1.msra.mxu0 0.0
  %1618 = vmatprep.subr.mxu0 0.0
  %1619 = vmatpush1.msra.mxu0 0.0
  %1620 = vmatprep.subr.mxu0 0.0
  %1621 = vmatpush1.msra.mxu0 0.0
  %1622 = vmatprep.subr.mxu0 0.0
  %1623 = vmatpush1.msra.mxu0 0.0
  %1624 = vmatprep.subr.mxu0 0.0
  %1625 = vmatpush1.msra.mxu0 0.0
  %1626 = vmatprep.subr.mxu0 0.0
  %1627 = vmatpush1.msra.mxu0 0.0
  %1628 = vmatprep.subr.mxu0 0.0
  %1629 = vmatpush1.msra.mxu0 0.0
  %1630 = vmatprep.mubr.f32.mxu0 0.0
  %1631 = vmatmul.mubr.f32.gmra.mrb[0].mxu0 %v1564
  %v1632 = vpop.f32.mrb[0].mxu0
  %v1633 = vadd.f32 0.0, %v1632
  %v1634 = vpop.f32.mrb[0].mxu0
  %1635 = vdwg.mxu0
  %v1637 = vsel %vm418, %v1124, 0
  %1639 = vmatprep.subr.mxu0 0.0
  %1640 = vmatpush1.msra.mxu0 %v415
  %1641 = vmatprep.subr.mxu0 0.0
  %1642 = vmatpush1.msra.mxu0 0.0
  %1643 = vmatprep.subr.mxu0 0.0
  %1644 = vmatpush1.msra.mxu0 0.0
  %1645 = vmatprep.subr.mxu0 0.0
  %1646 = vmatpush1.msra.mxu0 0.0
  %1647 = vmatprep.subr.mxu0 0.0
  %1648 = vmatpush1.msra.mxu0 0.0
  %1649 = vmatprep.subr.mxu0 0.0
  %1650 = vmatpush1.msra.mxu0 0.0
  %1651 = vmatprep.subr.mxu0 0.0
  %1652 = vmatpush1.msra.mxu0 0.0
  %1653 = vmatprep.subr.mxu0 0.0
  %1654 = vmatpush1.msra.mxu0 0.0
  %1655 = vmatprep.subr.mxu0 0.0
  %1656 = vmatpush1.msra.mxu0 0.0
  %1657 = vmatprep.subr.mxu0 0.0
  %1658 = vmatpush1.msra.mxu0 0.0
  %1659 = vmatprep.subr.mxu0 0.0
  %1660 = vmatpush1.msra.mxu0 0.0
  %1661 = vmatprep.subr.mxu0 0.0
  %1662 = vmatpush1.msra.mxu0 0.0
  %1663 = vmatprep.subr.mxu0 0.0
  %1664 = vmatpush1.msra.mxu0 0.0
  %1665 = vmatprep.subr.mxu0 0.0
  %1666 = vmatpush1.msra.mxu0 0.0
  %1667 = vmatprep.subr.mxu0 0.0
  %1668 = vmatpush1.msra.mxu0 0.0
  %1669 = vmatprep.subr.mxu0 0.0
  %1670 = vmatpush1.msra.mxu0 0.0
  %1671 = vmatprep.subr.mxu0 0.0
  %1672 = vmatpush1.msra.mxu0 0.0
  %1673 = vmatprep.subr.mxu0 0.0
  %1674 = vmatpush1.msra.mxu0 0.0
  %1675 = vmatprep.subr.mxu0 0.0
  %1676 = vmatpush1.msra.mxu0 0.0
  %1677 = vmatprep.subr.mxu0 0.0
  %1678 = vmatpush1.msra.mxu0 0.0
  %1679 = vmatprep.subr.mxu0 0.0
  %1680 = vmatpush1.msra.mxu0 0.0
  %1681 = vmatprep.subr.mxu0 0.0
  %1682 = vmatpush1.msra.mxu0 0.0
  %1683 = vmatprep.subr.mxu0 0.0
  %1684 = vmatpush1.msra.mxu0 0.0
  %1685 = vmatprep.subr.mxu0 0.0
  %1686 = vmatpush1.msra.mxu0 0.0
  %1687 = vmatprep.subr.mxu0 0.0
  %1688 = vmatpush1.msra.mxu0 0.0
  %1689 = vmatprep.subr.mxu0 0.0
  %1690 = vmatpush1.msra.mxu0 0.0
  %1691 = vmatprep.subr.mxu0 0.0
  %1692 = vmatpush1.msra.mxu0 0.0
  %1693 = vmatprep.subr.mxu0 0.0
  %1694 = vmatpush1.msra.mxu0 0.0
  %1695 = vmatprep.subr.mxu0 0.0
  %1696 = vmatpush1.msra.mxu0 0.0
  %1697 = vmatprep.subr.mxu0 0.0
  %1698 = vmatpush1.msra.mxu0 0.0
  %1699 = vmatprep.subr.mxu0 0.0
  %1700 = vmatpush1.msra.mxu0 0.0
  %1701 = vmatprep.subr.mxu0 0.0
  %1702 = vmatpush1.msra.mxu0 0.0
  %1703 = vmatprep.mubr.f32.mxu0 0.0
  %1704 = vmatmul.mubr.f32.gmra.mrb[0].mxu0 %v1637
  %v1705 = vpop.f32.mrb[0].mxu0
  %v1706 = vadd.f32 0.0, %v1705
  %v1707 = vpop.f32.mrb[0].mxu0
  %1708 = vdwg.mxu0
  %v1709 = vld [vmem:[%s7] sm:$0xff]
  %s1710 = scalar_lea.vmem %s1, 32
  %v1711 = vld [vmem:[%s1710] sm:$0xff]
  %v1712 = vld [vmem:[%s1710 + $0x8] sm:$0xff]
  %v1713 = vld [vmem:[%s1710 + $0x10] sm:$0xff]
  %v1714 = vld [vmem:[%s1710 + $0x18] sm:$0xff]
  %s1715 = scalar_lea.vmem %s4, 1
  %v1716 = vld [vmem:[%s1715] sm:$0x1]
  %v1718 = vlaneseq
  %v1719 = vshrl.u32 %v1718, 7
  %v1720 = vsub.s32 0, %v1719
  %v1721 = vrot.slane %v1716, %v1720
  %1723 = vmatprep.subr.mxu0 0.0
  %1724 = vmatpush1.msra.mxu0 %v1711
  %1725 = vmatprep.subr.mxu0 0.0
  %1726 = vmatpush1.msra.mxu0 %v1712
  %1727 = vmatprep.subr.mxu0 0.0
  %1728 = vmatpush1.msra.mxu0 %v1713
  %1729 = vmatprep.subr.mxu0 0.0
  %1730 = vmatpush1.msra.mxu0 %v1714
  %1731 = vmatprep.subr.mxu0 0.0
  %1732 = vmatpush1.msra.mxu0 0.0
  %1733 = vmatprep.subr.mxu0 0.0
  %1734 = vmatpush1.msra.mxu0 0.0
  %1735 = vmatprep.subr.mxu0 0.0
  %1736 = vmatpush1.msra.mxu0 0.0
  %1737 = vmatprep.subr.mxu0 0.0
  %1738 = vmatpush1.msra.mxu0 0.0
  %1739 = vmatprep.subr.mxu0 0.0
  %1740 = vmatpush1.msra.mxu0 0.0
  %1741 = vmatprep.subr.mxu0 0.0
  %1742 = vmatpush1.msra.mxu0 0.0
  %1743 = vmatprep.subr.mxu0 0.0
  %1744 = vmatpush1.msra.mxu0 0.0
  %1745 = vmatprep.subr.mxu0 0.0
  %1746 = vmatpush1.msra.mxu0 0.0
  %1747 = vmatprep.subr.mxu0 0.0
  %1748 = vmatpush1.msra.mxu0 0.0
  %1749 = vmatprep.subr.mxu0 0.0
  %1750 = vmatpush1.msra.mxu0 0.0
  %1751 = vmatprep.subr.mxu0 0.0
  %1752 = vmatpush1.msra.mxu0 0.0
  %1753 = vmatprep.subr.mxu0 0.0
  %1754 = vmatpush1.msra.mxu0 0.0
  %1755 = vmatprep.subr.mxu0 0.0
  %1756 = vmatpush1.msra.mxu0 0.0
  %1757 = vmatprep.subr.mxu0 0.0
  %1758 = vmatpush1.msra.mxu0 0.0
  %1759 = vmatprep.subr.mxu0 0.0
  %1760 = vmatpush1.msra.mxu0 0.0
  %1761 = vmatprep.subr.mxu0 0.0
  %1762 = vmatpush1.msra.mxu0 0.0
  %1763 = vmatprep.subr.mxu0 0.0
  %1764 = vmatpush1.msra.mxu0 0.0
  %1765 = vmatprep.subr.mxu0 0.0
  %1766 = vmatpush1.msra.mxu0 0.0
  %1767 = vmatprep.subr.mxu0 0.0
  %1768 = vmatpush1.msra.mxu0 0.0
  %1769 = vmatprep.subr.mxu0 0.0
  %1770 = vmatpush1.msra.mxu0 0.0
  %1771 = vmatprep.subr.mxu0 0.0
  %1772 = vmatpush1.msra.mxu0 0.0
  %1773 = vmatprep.subr.mxu0 0.0
  %1774 = vmatpush1.msra.mxu0 0.0
  %1775 = vmatprep.subr.mxu0 0.0
  %1776 = vmatpush1.msra.mxu0 0.0
  %1777 = vmatprep.subr.mxu0 0.0
  %1778 = vmatpush1.msra.mxu0 0.0
  %1779 = vmatprep.subr.mxu0 0.0
  %1780 = vmatpush1.msra.mxu0 0.0
  %1781 = vmatprep.subr.mxu0 0.0
  %1782 = vmatpush1.msra.mxu0 0.0
  %1783 = vmatprep.subr.mxu0 0.0
  %1784 = vmatpush1.msra.mxu0 0.0
  %1785 = vmatprep.subr.mxu0 0.0
  %1786 = vmatpush1.msra.mxu0 0.0
  %1787 = vmatprep.mubr.f32.mxu0 0.0
  %1788 = vmatmul.mubr.f32.gmra.mrb[0].mxu0 %v58
  %v1789 = vpop.f32.mrb[0].mxu0
  %v1790 = vadd.f32 %v1721, %v1789
  %v1791 = vpop.f32.mrb[0].mxu0
  %1792 = vmatprep.mubr.f32.mxu0 0.0
  %1793 = vmatmul.mubr.f32.gmra.mrb[0].mxu0 %v61
  %v1794 = vpop.f32.mrb[0].mxu0
  %v1795 = vadd.f32 %v1721, %v1794
  %v1796 = vpop.f32.mrb[0].mxu0
  %1797 = vmatprep.mubr.f32.mxu0 0.0
  %1798 = vmatmul.mubr.f32.gmra.mrb[0].mxu0 %v64
  %v1799 = vpop.f32.mrb[0].mxu0
  %v1800 = vadd.f32 %v1721, %v1799
  %v1801 = vpop.f32.mrb[0].mxu0
  %1802 = vmatprep.mubr.f32.mxu0 0.0
  %1803 = vmatmul.mubr.f32.gmra.mrb[0].mxu0 %v67
  %v1804 = vpop.f32.mrb[0].mxu0
  %v1805 = vadd.f32 %v1721, %v1804
  %v1806 = vpop.f32.mrb[0].mxu0
  %1807 = vmatprep.mubr.f32.mxu0 0.0
  %1808 = vmatmul.mubr.f32.gmra.mrb[0].mxu0 %v70
  %v1809 = vpop.f32.mrb[0].mxu0
  %v1810 = vadd.f32 %v1721, %v1809
  %v1811 = vpop.f32.mrb[0].mxu0
  %1812 = vmatprep.mubr.f32.mxu0 0.0
  %1813 = vmatmul.mubr.f32.gmra.mrb[0].mxu0 %v73
  %v1814 = vpop.f32.mrb[0].mxu0
  %v1815 = vadd.f32 %v1721, %v1814
  %v1816 = vpop.f32.mrb[0].mxu0
  %1817 = vmatprep.mubr.f32.mxu0 0.0
  %1818 = vmatmul.mubr.f32.gmra.mrb[0].mxu0 %v76
  %v1819 = vpop.f32.mrb[0].mxu0
  %v1820 = vadd.f32 %v1721, %v1819
  %v1821 = vpop.f32.mrb[0].mxu0
  %1822 = vmatprep.mubr.f32.mxu0 0.0
  %1823 = vmatmul.mubr.f32.gmra.mrb[0].mxu0 %v79
  %v1824 = vpop.f32.mrb[0].mxu0
  %v1825 = vadd.f32 %v1721, %v1824
  %v1826 = vpop.f32.mrb[0].mxu0
  %1827 = vdwg.mxu0
  %s1828 = scalar_lea.vmem %s2, 32
  %v1829 = vld [vmem:[%s1828] sm:$0xff]
  %v1830 = vld [vmem:[%s1828 + $0x8] sm:$0xff]
  %v1831 = vld [vmem:[%s1828 + $0x10] sm:$0xff]
  %v1832 = vld [vmem:[%s1828 + $0x18] sm:$0xff]
  %s1833 = scalar_lea.vmem %s5, 1
  %v1834 = vld [vmem:[%s1833] sm:$0x1]
  %v1836 = vlaneseq
  %v1837 = vshrl.u32 %v1836, 7
  %v1838 = vsub.s32 0, %v1837
  %v1839 = vrot.slane %v1834, %v1838
  %1841 = vmatprep.subr.mxu0 0.0
  %1842 = vmatpush1.msra.mxu0 %v1829
  %1843 = vmatprep.subr.mxu0 0.0
  %1844 = vmatpush1.msra.mxu0 %v1830
  %1845 = vmatprep.subr.mxu0 0.0
  %1846 = vmatpush1.msra.mxu0 %v1831
  %1847 = vmatprep.subr.mxu0 0.0
  %1848 = vmatpush1.msra.mxu0 %v1832
  %1849 = vmatprep.subr.mxu0 0.0
  %1850 = vmatpush1.msra.mxu0 0.0
  %1851 = vmatprep.subr.mxu0 0.0
  %1852 = vmatpush1.msra.mxu0 0.0
  %1853 = vmatprep.subr.mxu0 0.0
  %1854 = vmatpush1.msra.mxu0 0.0
  %1855 = vmatprep.subr.mxu0 0.0
  %1856 = vmatpush1.msra.mxu0 0.0
  %1857 = vmatprep.subr.mxu0 0.0
  %1858 = vmatpush1.msra.mxu0 0.0
  %1859 = vmatprep.subr.mxu0 0.0
  %1860 = vmatpush1.msra.mxu0 0.0
  %1861 = vmatprep.subr.mxu0 0.0
  %1862 = vmatpush1.msra.mxu0 0.0
  %1863 = vmatprep.subr.mxu0 0.0
  %1864 = vmatpush1.msra.mxu0 0.0
  %1865 = vmatprep.subr.mxu0 0.0
  %1866 = vmatpush1.msra.mxu0 0.0
  %1867 = vmatprep.subr.mxu0 0.0
  %1868 = vmatpush1.msra.mxu0 0.0
  %1869 = vmatprep.subr.mxu0 0.0
  %1870 = vmatpush1.msra.mxu0 0.0
  %1871 = vmatprep.subr.mxu0 0.0
  %1872 = vmatpush1.msra.mxu0 0.0
  %1873 = vmatprep.subr.mxu0 0.0
  %1874 = vmatpush1.msra.mxu0 0.0
  %1875 = vmatprep.subr.mxu0 0.0
  %1876 = vmatpush1.msra.mxu0 0.0
  %1877 = vmatprep.subr.mxu0 0.0
  %1878 = vmatpush1.msra.mxu0 0.0
  %1879 = vmatprep.subr.mxu0 0.0
  %1880 = vmatpush1.msra.mxu0 0.0
  %1881 = vmatprep.subr.mxu0 0.0
  %1882 = vmatpush1.msra.mxu0 0.0
  %1883 = vmatprep.subr.mxu0 0.0
  %1884 = vmatpush1.msra.mxu0 0.0
  %1885 = vmatprep.subr.mxu0 0.0
  %1886 = vmatpush1.msra.mxu0 0.0
  %1887 = vmatprep.subr.mxu0 0.0
  %1888 = vmatpush1.msra.mxu0 0.0
  %1889 = vmatprep.subr.mxu0 0.0
  %1890 = vmatpush1.msra.mxu0 0.0
  %1891 = vmatprep.subr.mxu0 0.0
  %1892 = vmatpush1.msra.mxu0 0.0
  %1893 = vmatprep.subr.mxu0 0.0
  %1894 = vmatpush1.msra.mxu0 0.0
  %1895 = vmatprep.subr.mxu0 0.0
  %1896 = vmatpush1.msra.mxu0 0.0
  %1897 = vmatprep.subr.mxu0 0.0
  %1898 = vmatpush1.msra.mxu0 0.0
  %1899 = vmatprep.subr.mxu0 0.0
  %1900 = vmatpush1.msra.mxu0 0.0
  %1901 = vmatprep.subr.mxu0 0.0
  %1902 = vmatpush1.msra.mxu0 0.0
  %1903 = vmatprep.subr.mxu0 0.0
  %1904 = vmatpush1.msra.mxu0 0.0
  %1905 = vmatprep.mubr.f32.mxu0 0.0
  %1906 = vmatmul.mubr.f32.gmra.mrb[0].mxu0 %v58
  %v1907 = vpop.f32.mrb[0].mxu0
  %v1908 = vadd.f32 %v1839, %v1907
  %v1909 = vpop.f32.mrb[0].mxu0
  %1910 = vmatprep.mubr.f32.mxu0 0.0
  %1911 = vmatmul.mubr.f32.gmra.mrb[0].mxu0 %v61
  %v1912 = vpop.f32.mrb[0].mxu0
  %v1913 = vadd.f32 %v1839, %v1912
  %v1914 = vpop.f32.mrb[0].mxu0
  %1915 = vmatprep.mubr.f32.mxu0 0.0
  %1916 = vmatmul.mubr.f32.gmra.mrb[0].mxu0 %v64
  %v1917 = vpop.f32.mrb[0].mxu0
  %v1918 = vadd.f32 %v1839, %v1917
  %v1919 = vpop.f32.mrb[0].mxu0
  %1920 = vmatprep.mubr.f32.mxu0 0.0
  %1921 = vmatmul.mubr.f32.gmra.mrb[0].mxu0 %v67
  %v1922 = vpop.f32.mrb[0].mxu0
  %v1923 = vadd.f32 %v1839, %v1922
  %v1924 = vpop.f32.mrb[0].mxu0
  %1925 = vmatprep.mubr.f32.mxu0 0.0
  %1926 = vmatmul.mubr.f32.gmra.mrb[0].mxu0 %v70
  %v1927 = vpop.f32.mrb[0].mxu0
  %v1928 = vadd.f32 %v1839, %v1927
  %v1929 = vpop.f32.mrb[0].mxu0
  %1930 = vmatprep.mubr.f32.mxu0 0.0
  %1931 = vmatmul.mubr.f32.gmra.mrb[0].mxu0 %v73
  %v1932 = vpop.f32.mrb[0].mxu0
  %v1933 = vadd.f32 %v1839, %v1932
  %v1934 = vpop.f32.mrb[0].mxu0
  %1935 = vmatprep.mubr.f32.mxu0 0.0
  %1936 = vmatmul.mubr.f32.gmra.mrb[0].mxu0 %v76
  %v1937 = vpop.f32.mrb[0].mxu0
  %v1938 = vadd.f32 %v1839, %v1937
  %v1939 = vpop.f32.mrb[0].mxu0
  %1940 = vmatprep.mubr.f32.mxu0 0.0
  %1941 = vmatmul.mubr.f32.gmra.mrb[0].mxu0 %v79
  %v1942 = vpop.f32.mrb[0].mxu0
  %v1943 = vadd.f32 %v1839, %v1942
  %v1944 = vpop.f32.mrb[0].mxu0
  %1945 = vdwg.mxu0
  %s1946 = scalar_lea.vmem %s3, 32
  %v1947 = vld [vmem:[%s1946] sm:$0xff]
  %v1948 = vld [vmem:[%s1946 + $0x8] sm:$0xff]
  %v1949 = vld [vmem:[%s1946 + $0x10] sm:$0xff]
  %v1950 = vld [vmem:[%s1946 + $0x18] sm:$0xff]
  %s1951 = scalar_lea.vmem %s6, 1
  %v1952 = vld [vmem:[%s1951] sm:$0x1]
  %v1954 = vlaneseq
  %v1955 = vshrl.u32 %v1954, 7
  %v1956 = vsub.s32 0, %v1955
  %v1957 = vrot.slane %v1952, %v1956
  %1959 = vmatprep.subr.mxu0 0.0
  %1960 = vmatpush1.msra.mxu0 %v1947
  %1961 = vmatprep.subr.mxu0 0.0
  %1962 = vmatpush1.msra.mxu0 %v1948
  %1963 = vmatprep.subr.mxu0 0.0
  %1964 = vmatpush1.msra.mxu0 %v1949
  %1965 = vmatprep.subr.mxu0 0.0
  %1966 = vmatpush1.msra.mxu0 %v1950
  %1967 = vmatprep.subr.mxu0 0.0
  %1968 = vmatpush1.msra.mxu0 0.0
  %1969 = vmatprep.subr.mxu0 0.0
  %1970 = vmatpush1.msra.mxu0 0.0
  %1971 = vmatprep.subr.mxu0 0.0
  %1972 = vmatpush1.msra.mxu0 0.0
  %1973 = vmatprep.subr.mxu0 0.0
  %1974 = vmatpush1.msra.mxu0 0.0
  %1975 = vmatprep.subr.mxu0 0.0
  %1976 = vmatpush1.msra.mxu0 0.0
  %1977 = vmatprep.subr.mxu0 0.0
  %1978 = vmatpush1.msra.mxu0 0.0
  %1979 = vmatprep.subr.mxu0 0.0
  %1980 = vmatpush1.msra.mxu0 0.0
  %1981 = vmatprep.subr.mxu0 0.0
  %1982 = vmatpush1.msra.mxu0 0.0
  %1983 = vmatprep.subr.mxu0 0.0
  %1984 = vmatpush1.msra.mxu0 0.0
  %1985 = vmatprep.subr.mxu0 0.0
  %1986 = vmatpush1.msra.mxu0 0.0
  %1987 = vmatprep.subr.mxu0 0.0
  %1988 = vmatpush1.msra.mxu0 0.0
  %1989 = vmatprep.subr.mxu0 0.0
  %1990 = vmatpush1.msra.mxu0 0.0
  %1991 = vmatprep.subr.mxu0 0.0
  %1992 = vmatpush1.msra.mxu0 0.0
  %1993 = vmatprep.subr.mxu0 0.0
  %1994 = vmatpush1.msra.mxu0 0.0
  %1995 = vmatprep.subr.mxu0 0.0
  %1996 = vmatpush1.msra.mxu0 0.0
  %1997 = vmatprep.subr.mxu0 0.0
  %1998 = vmatpush1.msra.mxu0 0.0
  %1999 = vmatprep.subr.mxu0 0.0
  %2000 = vmatpush1.msra.mxu0 0.0
  %2001 = vmatprep.subr.mxu0 0.0
  %2002 = vmatpush1.msra.mxu0 0.0
  %2003 = vmatprep.subr.mxu0 0.0
  %2004 = vmatpush1.msra.mxu0 0.0
  %2005 = vmatprep.subr.mxu0 0.0
  %2006 = vmatpush1.msra.mxu0 0.0
  %2007 = vmatprep.subr.mxu0 0.0
  %2008 = vmatpush1.msra.mxu0 0.0
  %2009 = vmatprep.subr.mxu0 0.0
  %2010 = vmatpush1.msra.mxu0 0.0
  %2011 = vmatprep.subr.mxu0 0.0
  %2012 = vmatpush1.msra.mxu0 0.0
  %2013 = vmatprep.subr.mxu0 0.0
  %2014 = vmatpush1.msra.mxu0 0.0
  %2015 = vmatprep.subr.mxu0 0.0
  %2016 = vmatpush1.msra.mxu0 0.0
  %2017 = vmatprep.subr.mxu0 0.0
  %2018 = vmatpush1.msra.mxu0 0.0
  %2019 = vmatprep.subr.mxu0 0.0
  %2020 = vmatpush1.msra.mxu0 0.0
  %2021 = vmatprep.subr.mxu0 0.0
  %2022 = vmatpush1.msra.mxu0 0.0
  %2023 = vmatprep.mubr.f32.mxu0 0.0
  %2024 = vmatmul.mubr.f32.gmra.mrb[0].mxu0 %v58
  %v2025 = vpop.f32.mrb[0].mxu0
  %v2026 = vadd.f32 %v1957, %v2025
  %v2027 = vpop.f32.mrb[0].mxu0
  %2028 = vmatprep.mubr.f32.mxu0 0.0
  %2029 = vmatmul.mubr.f32.gmra.mrb[0].mxu0 %v61
  %v2030 = vpop.f32.mrb[0].mxu0
  %v2031 = vadd.f32 %v1957, %v2030
  %v2032 = vpop.f32.mrb[0].mxu0
  %2033 = vmatprep.mubr.f32.mxu0 0.0
  %2034 = vmatmul.mubr.f32.gmra.mrb[0].mxu0 %v64
  %v2035 = vpop.f32.mrb[0].mxu0
  %v2036 = vadd.f32 %v1957, %v2035
  %v2037 = vpop.f32.mrb[0].mxu0
  %2038 = vmatprep.mubr.f32.mxu0 0.0
  %2039 = vmatmul.mubr.f32.gmra.mrb[0].mxu0 %v67
  %v2040 = vpop.f32.mrb[0].mxu0
  %v2041 = vadd.f32 %v1957, %v2040
  %v2042 = vpop.f32.mrb[0].mxu0
  %2043 = vmatprep.mubr.f32.mxu0 0.0
  %2044 = vmatmul.mubr.f32.gmra.mrb[0].mxu0 %v70
  %v2045 = vpop.f32.mrb[0].mxu0
  %v2046 = vadd.f32 %v1957, %v2045
  %v2047 = vpop.f32.mrb[0].mxu0
  %2048 = vmatprep.mubr.f32.mxu0 0.0
  %2049 = vmatmul.mubr.f32.gmra.mrb[0].mxu0 %v73
  %v2050 = vpop.f32.mrb[0].mxu0
  %v2051 = vadd.f32 %v1957, %v2050
  %v2052 = vpop.f32.mrb[0].mxu0
  %2053 = vmatprep.mubr.f32.mxu0 0.0
  %2054 = vmatmul.mubr.f32.gmra.mrb[0].mxu0 %v76
  %v2055 = vpop.f32.mrb[0].mxu0
  %v2056 = vadd.f32 %v1957, %v2055
  %v2057 = vpop.f32.mrb[0].mxu0
  %2058 = vmatprep.mubr.f32.mxu0 0.0
  %2059 = vmatmul.mubr.f32.gmra.mrb[0].mxu0 %v79
  %v2060 = vpop.f32.mrb[0].mxu0
  %v2061 = vadd.f32 %v1957, %v2060
  %v2062 = vpop.f32.mrb[0].mxu0
  %2063 = vdwg.mxu0
  %v2065 = vsel %vm418, %v1790, 0
  %v2068 = vsel %vm418, %v1908, 0
  %2070 = vmatprep.subr.mxu0 0.0
  %2071 = vmatpush1.xpose.msra.mxu0 %v2068
  %2072 = vmatprep.subr.mxu0 0.0
  %2073 = vmatpush1.xpose.msra.mxu0 0.0
  %2074 = vmatprep.subr.mxu0 0.0
  %2075 = vmatpush1.xpose.msra.mxu0 0.0
  %2076 = vmatprep.subr.mxu0 0.0
  %2077 = vmatpush1.xpose.msra.mxu0 0.0
  %2078 = vmatprep.subr.mxu0 0.0
  %2079 = vmatpush1.xpose.msra.mxu0 0.0
  %2080 = vmatprep.subr.mxu0 0.0
  %2081 = vmatpush1.xpose.msra.mxu0 0.0
  %2082 = vmatprep.subr.mxu0 0.0
  %2083 = vmatpush1.xpose.msra.mxu0 0.0
  %2084 = vmatprep.subr.mxu0 0.0
  %2085 = vmatpush1.xpose.msra.mxu0 0.0
  %2086 = vmatprep.subr.mxu0 0.0
  %2087 = vmatpush1.xpose.msra.mxu0 0.0
  %2088 = vmatprep.subr.mxu0 0.0
  %2089 = vmatpush1.xpose.msra.mxu0 0.0
  %2090 = vmatprep.subr.mxu0 0.0
  %2091 = vmatpush1.xpose.msra.mxu0 0.0
  %2092 = vmatprep.subr.mxu0 0.0
  %2093 = vmatpush1.xpose.msra.mxu0 0.0
  %2094 = vmatprep.subr.mxu0 0.0
  %2095 = vmatpush1.xpose.msra.mxu0 0.0
  %2096 = vmatprep.subr.mxu0 0.0
  %2097 = vmatpush1.xpose.msra.mxu0 0.0
  %2098 = vmatprep.subr.mxu0 0.0
  %2099 = vmatpush1.xpose.msra.mxu0 0.0
  %2100 = vmatprep.subr.mxu0 0.0
  %2101 = vmatpush1.xpose.msra.mxu0 0.0
  %2102 = vmatprep.subr.mxu0 0.0
  %2103 = vmatpush1.xpose.msra.mxu0 0.0
  %2104 = vmatprep.subr.mxu0 0.0
  %2105 = vmatpush1.xpose.msra.mxu0 0.0
  %2106 = vmatprep.subr.mxu0 0.0
  %2107 = vmatpush1.xpose.msra.mxu0 0.0
  %2108 = vmatprep.subr.mxu0 0.0
  %2109 = vmatpush1.xpose.msra.mxu0 0.0
  %2110 = vmatprep.subr.mxu0 0.0
  %2111 = vmatpush1.xpose.msra.mxu0 0.0
  %2112 = vmatprep.subr.mxu0 0.0
  %2113 = vmatpush1.xpose.msra.mxu0 0.0
  %2114 = vmatprep.subr.mxu0 0.0
  %2115 = vmatpush1.xpose.msra.mxu0 0.0
  %2116 = vmatprep.subr.mxu0 0.0
  %2117 = vmatpush1.xpose.msra.mxu0 0.0
  %2118 = vmatprep.subr.mxu0 0.0
  %2119 = vmatpush1.xpose.msra.mxu0 0.0
  %2120 = vmatprep.subr.mxu0 0.0
  %2121 = vmatpush1.xpose.msra.mxu0 0.0
  %2122 = vmatprep.subr.mxu0 0.0
  %2123 = vmatpush1.xpose.msra.mxu0 0.0
  %2124 = vmatprep.subr.mxu0 0.0
  %2125 = vmatpush1.xpose.msra.mxu0 0.0
  %2126 = vmatprep.subr.mxu0 0.0
  %2127 = vmatpush1.xpose.msra.mxu0 0.0
  %2128 = vmatprep.subr.mxu0 0.0
  %2129 = vmatpush1.xpose.msra.mxu0 0.0
  %2130 = vmatprep.subr.mxu0 0.0
  %2131 = vmatpush1.xpose.msra.mxu0 0.0
  %2132 = vmatprep.subr.mxu0 0.0
  %2133 = vmatpush1.xpose.msra.mxu0 0.0
  %2134 = vmatprep.mubr.f32.mxu0 0.0
  %2135 = vmatmul.mubr.f32.gmra.mrb[0].mxu0 %v2065
  %v2136 = vpop.f32.mrb[0].mxu0
  %v2137 = vadd.f32 0.0, %v2136
  %v2138 = vpop.f32.mrb[0].mxu0
  %2139 = vdwg.mxu0
  %v2141 = vsel %vm418, %v1795, 0
  %v2144 = vsel %vm418, %v1913, 0
  %2146 = vmatprep.subr.mxu0 0.0
  %2147 = vmatpush1.xpose.msra.mxu0 %v2144
  %2148 = vmatprep.subr.mxu0 0.0
  %2149 = vmatpush1.xpose.msra.mxu0 0.0
  %2150 = vmatprep.subr.mxu0 0.0
  %2151 = vmatpush1.xpose.msra.mxu0 0.0
  %2152 = vmatprep.subr.mxu0 0.0
  %2153 = vmatpush1.xpose.msra.mxu0 0.0
  %2154 = vmatprep.subr.mxu0 0.0
  %2155 = vmatpush1.xpose.msra.mxu0 0.0
  %2156 = vmatprep.subr.mxu0 0.0
  %2157 = vmatpush1.xpose.msra.mxu0 0.0
  %2158 = vmatprep.subr.mxu0 0.0
  %2159 = vmatpush1.xpose.msra.mxu0 0.0
  %2160 = vmatprep.subr.mxu0 0.0
  %2161 = vmatpush1.xpose.msra.mxu0 0.0
  %2162 = vmatprep.subr.mxu0 0.0
  %2163 = vmatpush1.xpose.msra.mxu0 0.0
  %2164 = vmatprep.subr.mxu0 0.0
  %2165 = vmatpush1.xpose.msra.mxu0 0.0
  %2166 = vmatprep.subr.mxu0 0.0
  %2167 = vmatpush1.xpose.msra.mxu0 0.0
  %2168 = vmatprep.subr.mxu0 0.0
  %2169 = vmatpush1.xpose.msra.mxu0 0.0
  %2170 = vmatprep.subr.mxu0 0.0
  %2171 = vmatpush1.xpose.msra.mxu0 0.0
  %2172 = vmatprep.subr.mxu0 0.0
  %2173 = vmatpush1.xpose.msra.mxu0 0.0
  %2174 = vmatprep.subr.mxu0 0.0
  %2175 = vmatpush1.xpose.msra.mxu0 0.0
  %2176 = vmatprep.subr.mxu0 0.0
  %2177 = vmatpush1.xpose.msra.mxu0 0.0
  %2178 = vmatprep.subr.mxu0 0.0
  %2179 = vmatpush1.xpose.msra.mxu0 0.0
  %2180 = vmatprep.subr.mxu0 0.0
  %2181 = vmatpush1.xpose.msra.mxu0 0.0
  %2182 = vmatprep.subr.mxu0 0.0
  %2183 = vmatpush1.xpose.msra.mxu0 0.0
  %2184 = vmatprep.subr.mxu0 0.0
  %2185 = vmatpush1.xpose.msra.mxu0 0.0
  %2186 = vmatprep.subr.mxu0 0.0
  %2187 = vmatpush1.xpose.msra.mxu0 0.0
  %2188 = vmatprep.subr.mxu0 0.0
  %2189 = vmatpush1.xpose.msra.mxu0 0.0
  %2190 = vmatprep.subr.mxu0 0.0
  %2191 = vmatpush1.xpose.msra.mxu0 0.0
  %2192 = vmatprep.subr.mxu0 0.0
  %2193 = vmatpush1.xpose.msra.mxu0 0.0
  %2194 = vmatprep.subr.mxu0 0.0
  %2195 = vmatpush1.xpose.msra.mxu0 0.0
  %2196 = vmatprep.subr.mxu0 0.0
  %2197 = vmatpush1.xpose.msra.mxu0 0.0
  %2198 = vmatprep.subr.mxu0 0.0
  %2199 = vmatpush1.xpose.msra.mxu0 0.0
  %2200 = vmatprep.subr.mxu0 0.0
  %2201 = vmatpush1.xpose.msra.mxu0 0.0
  %2202 = vmatprep.subr.mxu0 0.0
  %2203 = vmatpush1.xpose.msra.mxu0 0.0
  %2204 = vmatprep.subr.mxu0 0.0
  %2205 = vmatpush1.xpose.msra.mxu0 0.0
  %2206 = vmatprep.subr.mxu0 0.0
  %2207 = vmatpush1.xpose.msra.mxu0 0.0
  %2208 = vmatprep.subr.mxu0 0.0
  %2209 = vmatpush1.xpose.msra.mxu0 0.0
  %2210 = vmatprep.mubr.f32.mxu0 0.0
  %2211 = vmatmul.mubr.f32.gmra.mrb[0].mxu0 %v2141
  %v2212 = vpop.f32.mrb[0].mxu0
  %v2213 = vadd.f32 0.0, %v2212
  %v2214 = vpop.f32.mrb[0].mxu0
  %2215 = vdwg.mxu0
  %v2217 = vsel %vm418, %v1800, 0
  %v2220 = vsel %vm418, %v1918, 0
  %2222 = vmatprep.subr.mxu0 0.0
  %2223 = vmatpush1.xpose.msra.mxu0 %v2220
  %2224 = vmatprep.subr.mxu0 0.0
  %2225 = vmatpush1.xpose.msra.mxu0 0.0
  %2226 = vmatprep.subr.mxu0 0.0
  %2227 = vmatpush1.xpose.msra.mxu0 0.0
  %2228 = vmatprep.subr.mxu0 0.0
  %2229 = vmatpush1.xpose.msra.mxu0 0.0
  %2230 = vmatprep.subr.mxu0 0.0
  %2231 = vmatpush1.xpose.msra.mxu0 0.0
  %2232 = vmatprep.subr.mxu0 0.0
  %2233 = vmatpush1.xpose.msra.mxu0 0.0
  %2234 = vmatprep.subr.mxu0 0.0
  %2235 = vmatpush1.xpose.msra.mxu0 0.0
  %2236 = vmatprep.subr.mxu0 0.0
  %2237 = vmatpush1.xpose.msra.mxu0 0.0
  %2238 = vmatprep.subr.mxu0 0.0
  %2239 = vmatpush1.xpose.msra.mxu0 0.0
  %2240 = vmatprep.subr.mxu0 0.0
  %2241 = vmatpush1.xpose.msra.mxu0 0.0
  %2242 = vmatprep.subr.mxu0 0.0
  %2243 = vmatpush1.xpose.msra.mxu0 0.0
  %2244 = vmatprep.subr.mxu0 0.0
  %2245 = vmatpush1.xpose.msra.mxu0 0.0
  %2246 = vmatprep.subr.mxu0 0.0
  %2247 = vmatpush1.xpose.msra.mxu0 0.0
  %2248 = vmatprep.subr.mxu0 0.0
  %2249 = vmatpush1.xpose.msra.mxu0 0.0
  %2250 = vmatprep.subr.mxu0 0.0
  %2251 = vmatpush1.xpose.msra.mxu0 0.0
  %2252 = vmatprep.subr.mxu0 0.0
  %2253 = vmatpush1.xpose.msra.mxu0 0.0
  %2254 = vmatprep.subr.mxu0 0.0
  %2255 = vmatpush1.xpose.msra.mxu0 0.0
  %2256 = vmatprep.subr.mxu0 0.0
  %2257 = vmatpush1.xpose.msra.mxu0 0.0
  %2258 = vmatprep.subr.mxu0 0.0
  %2259 = vmatpush1.xpose.msra.mxu0 0.0
  %2260 = vmatprep.subr.mxu0 0.0
  %2261 = vmatpush1.xpose.msra.mxu0 0.0
  %2262 = vmatprep.subr.mxu0 0.0
  %2263 = vmatpush1.xpose.msra.mxu0 0.0
  %2264 = vmatprep.subr.mxu0 0.0
  %2265 = vmatpush1.xpose.msra.mxu0 0.0
  %2266 = vmatprep.subr.mxu0 0.0
  %2267 = vmatpush1.xpose.msra.mxu0 0.0
  %2268 = vmatprep.subr.mxu0 0.0
  %2269 = vmatpush1.xpose.msra.mxu0 0.0
  %2270 = vmatprep.subr.mxu0 0.0
  %2271 = vmatpush1.xpose.msra.mxu0 0.0
  %2272 = vmatprep.subr.mxu0 0.0
  %2273 = vmatpush1.xpose.msra.mxu0 0.0
  %2274 = vmatprep.subr.mxu0 0.0
  %2275 = vmatpush1.xpose.msra.mxu0 0.0
  %2276 = vmatprep.subr.mxu0 0.0
  %2277 = vmatpush1.xpose.msra.mxu0 0.0
  %2278 = vmatprep.subr.mxu0 0.0
  %2279 = vmatpush1.xpose.msra.mxu0 0.0
  %2280 = vmatprep.subr.mxu0 0.0
  %2281 = vmatpush1.xpose.msra.mxu0 0.0
  %2282 = vmatprep.subr.mxu0 0.0
  %2283 = vmatpush1.xpose.msra.mxu0 0.0
  %2284 = vmatprep.subr.mxu0 0.0
  %2285 = vmatpush1.xpose.msra.mxu0 0.0
  %2286 = vmatprep.mubr.f32.mxu0 0.0
  %2287 = vmatmul.mubr.f32.gmra.mrb[0].mxu0 %v2217
  %v2288 = vpop.f32.mrb[0].mxu0
  %v2289 = vadd.f32 0.0, %v2288
  %v2290 = vpop.f32.mrb[0].mxu0
  %2291 = vdwg.mxu0
  %v2293 = vsel %vm418, %v1805, 0
  %v2296 = vsel %vm418, %v1923, 0
  %2298 = vmatprep.subr.mxu0 0.0
  %2299 = vmatpush1.xpose.msra.mxu0 %v2296
  %2300 = vmatprep.subr.mxu0 0.0
  %2301 = vmatpush1.xpose.msra.mxu0 0.0
  %2302 = vmatprep.subr.mxu0 0.0
  %2303 = vmatpush1.xpose.msra.mxu0 0.0
  %2304 = vmatprep.subr.mxu0 0.0
  %2305 = vmatpush1.xpose.msra.mxu0 0.0
  %2306 = vmatprep.subr.mxu0 0.0
  %2307 = vmatpush1.xpose.msra.mxu0 0.0
  %2308 = vmatprep.subr.mxu0 0.0
  %2309 = vmatpush1.xpose.msra.mxu0 0.0
  %2310 = vmatprep.subr.mxu0 0.0
  %2311 = vmatpush1.xpose.msra.mxu0 0.0
  %2312 = vmatprep.subr.mxu0 0.0
  %2313 = vmatpush1.xpose.msra.mxu0 0.0
  %2314 = vmatprep.subr.mxu0 0.0
  %2315 = vmatpush1.xpose.msra.mxu0 0.0
  %2316 = vmatprep.subr.mxu0 0.0
  %2317 = vmatpush1.xpose.msra.mxu0 0.0
  %2318 = vmatprep.subr.mxu0 0.0
  %2319 = vmatpush1.xpose.msra.mxu0 0.0
  %2320 = vmatprep.subr.mxu0 0.0
  %2321 = vmatpush1.xpose.msra.mxu0 0.0
  %2322 = vmatprep.subr.mxu0 0.0
  %2323 = vmatpush1.xpose.msra.mxu0 0.0
  %2324 = vmatprep.subr.mxu0 0.0
  %2325 = vmatpush1.xpose.msra.mxu0 0.0
  %2326 = vmatprep.subr.mxu0 0.0
  %2327 = vmatpush1.xpose.msra.mxu0 0.0
  %2328 = vmatprep.subr.mxu0 0.0
  %2329 = vmatpush1.xpose.msra.mxu0 0.0
  %2330 = vmatprep.subr.mxu0 0.0
  %2331 = vmatpush1.xpose.msra.mxu0 0.0
  %2332 = vmatprep.subr.mxu0 0.0
  %2333 = vmatpush1.xpose.msra.mxu0 0.0
  %2334 = vmatprep.subr.mxu0 0.0
  %2335 = vmatpush1.xpose.msra.mxu0 0.0
  %2336 = vmatprep.subr.mxu0 0.0
  %2337 = vmatpush1.xpose.msra.mxu0 0.0
  %2338 = vmatprep.subr.mxu0 0.0
  %2339 = vmatpush1.xpose.msra.mxu0 0.0
  %2340 = vmatprep.subr.mxu0 0.0
  %2341 = vmatpush1.xpose.msra.mxu0 0.0
  %2342 = vmatprep.subr.mxu0 0.0
  %2343 = vmatpush1.xpose.msra.mxu0 0.0
  %2344 = vmatprep.subr.mxu0 0.0
  %2345 = vmatpush1.xpose.msra.mxu0 0.0
  %2346 = vmatprep.subr.mxu0 0.0
  %2347 = vmatpush1.xpose.msra.mxu0 0.0
  %2348 = vmatprep.subr.mxu0 0.0
  %2349 = vmatpush1.xpose.msra.mxu0 0.0
  %2350 = vmatprep.subr.mxu0 0.0
  %2351 = vmatpush1.xpose.msra.mxu0 0.0
  %2352 = vmatprep.subr.mxu0 0.0
  %2353 = vmatpush1.xpose.msra.mxu0 0.0
  %2354 = vmatprep.subr.mxu0 0.0
  %2355 = vmatpush1.xpose.msra.mxu0 0.0
  %2356 = vmatprep.subr.mxu0 0.0
  %2357 = vmatpush1.xpose.msra.mxu0 0.0
  %2358 = vmatprep.subr.mxu0 0.0
  %2359 = vmatpush1.xpose.msra.mxu0 0.0
  %2360 = vmatprep.subr.mxu0 0.0
  %2361 = vmatpush1.xpose.msra.mxu0 0.0
  %2362 = vmatprep.mubr.f32.mxu0 0.0
  %2363 = vmatmul.mubr.f32.gmra.mrb[0].mxu0 %v2293
  %v2364 = vpop.f32.mrb[0].mxu0
  %v2365 = vadd.f32 0.0, %v2364
  %v2366 = vpop.f32.mrb[0].mxu0
  %2367 = vdwg.mxu0
  %v2369 = vsel %vm418, %v1810, 0
  %v2372 = vsel %vm418, %v1928, 0
  %2374 = vmatprep.subr.mxu0 0.0
  %2375 = vmatpush1.xpose.msra.mxu0 %v2372
  %2376 = vmatprep.subr.mxu0 0.0
  %2377 = vmatpush1.xpose.msra.mxu0 0.0
  %2378 = vmatprep.subr.mxu0 0.0
  %2379 = vmatpush1.xpose.msra.mxu0 0.0
  %2380 = vmatprep.subr.mxu0 0.0
  %2381 = vmatpush1.xpose.msra.mxu0 0.0
  %2382 = vmatprep.subr.mxu0 0.0
  %2383 = vmatpush1.xpose.msra.mxu0 0.0
  %2384 = vmatprep.subr.mxu0 0.0
  %2385 = vmatpush1.xpose.msra.mxu0 0.0
  %2386 = vmatprep.subr.mxu0 0.0
  %2387 = vmatpush1.xpose.msra.mxu0 0.0
  %2388 = vmatprep.subr.mxu0 0.0
  %2389 = vmatpush1.xpose.msra.mxu0 0.0
  %2390 = vmatprep.subr.mxu0 0.0
  %2391 = vmatpush1.xpose.msra.mxu0 0.0
  %2392 = vmatprep.subr.mxu0 0.0
  %2393 = vmatpush1.xpose.msra.mxu0 0.0
  %2394 = vmatprep.subr.mxu0 0.0
  %2395 = vmatpush1.xpose.msra.mxu0 0.0
  %2396 = vmatprep.subr.mxu0 0.0
  %2397 = vmatpush1.xpose.msra.mxu0 0.0
  %2398 = vmatprep.subr.mxu0 0.0
  %2399 = vmatpush1.xpose.msra.mxu0 0.0
  %2400 = vmatprep.subr.mxu0 0.0
  %2401 = vmatpush1.xpose.msra.mxu0 0.0
  %2402 = vmatprep.subr.mxu0 0.0
  %2403 = vmatpush1.xpose.msra.mxu0 0.0
  %2404 = vmatprep.subr.mxu0 0.0
  %2405 = vmatpush1.xpose.msra.mxu0 0.0
  %2406 = vmatprep.subr.mxu0 0.0
  %2407 = vmatpush1.xpose.msra.mxu0 0.0
  %2408 = vmatprep.subr.mxu0 0.0
  %2409 = vmatpush1.xpose.msra.mxu0 0.0
  %2410 = vmatprep.subr.mxu0 0.0
  %2411 = vmatpush1.xpose.msra.mxu0 0.0
  %2412 = vmatprep.subr.mxu0 0.0
  %2413 = vmatpush1.xpose.msra.mxu0 0.0
  %2414 = vmatprep.subr.mxu0 0.0
  %2415 = vmatpush1.xpose.msra.mxu0 0.0
  %2416 = vmatprep.subr.mxu0 0.0
  %2417 = vmatpush1.xpose.msra.mxu0 0.0
  %2418 = vmatprep.subr.mxu0 0.0
  %2419 = vmatpush1.xpose.msra.mxu0 0.0
  %2420 = vmatprep.subr.mxu0 0.0
  %2421 = vmatpush1.xpose.msra.mxu0 0.0
  %2422 = vmatprep.subr.mxu0 0.0
  %2423 = vmatpush1.xpose.msra.mxu0 0.0
  %2424 = vmatprep.subr.mxu0 0.0
  %2425 = vmatpush1.xpose.msra.mxu0 0.0
  %2426 = vmatprep.subr.mxu0 0.0
  %2427 = vmatpush1.xpose.msra.mxu0 0.0
  %2428 = vmatprep.subr.mxu0 0.0
  %2429 = vmatpush1.xpose.msra.mxu0 0.0
  %2430 = vmatprep.subr.mxu0 0.0
  %2431 = vmatpush1.xpose.msra.mxu0 0.0
  %2432 = vmatprep.subr.mxu0 0.0
  %2433 = vmatpush1.xpose.msra.mxu0 0.0
  %2434 = vmatprep.subr.mxu0 0.0
  %2435 = vmatpush1.xpose.msra.mxu0 0.0
  %2436 = vmatprep.subr.mxu0 0.0
  %2437 = vmatpush1.xpose.msra.mxu0 0.0
  %2438 = vmatprep.mubr.f32.mxu0 0.0
  %2439 = vmatmul.mubr.f32.gmra.mrb[0].mxu0 %v2369
  %v2440 = vpop.f32.mrb[0].mxu0
  %v2441 = vadd.f32 0.0, %v2440
  %v2442 = vpop.f32.mrb[0].mxu0
  %2443 = vdwg.mxu0
  %v2445 = vsel %vm418, %v1815, 0
  %v2448 = vsel %vm418, %v1933, 0
  %2450 = vmatprep.subr.mxu0 0.0
  %2451 = vmatpush1.xpose.msra.mxu0 %v2448
  %2452 = vmatprep.subr.mxu0 0.0
  %2453 = vmatpush1.xpose.msra.mxu0 0.0
  %2454 = vmatprep.subr.mxu0 0.0
  %2455 = vmatpush1.xpose.msra.mxu0 0.0
  %2456 = vmatprep.subr.mxu0 0.0
  %2457 = vmatpush1.xpose.msra.mxu0 0.0
  %2458 = vmatprep.subr.mxu0 0.0
  %2459 = vmatpush1.xpose.msra.mxu0 0.0
  %2460 = vmatprep.subr.mxu0 0.0
  %2461 = vmatpush1.xpose.msra.mxu0 0.0
  %2462 = vmatprep.subr.mxu0 0.0
  %2463 = vmatpush1.xpose.msra.mxu0 0.0
  %2464 = vmatprep.subr.mxu0 0.0
  %2465 = vmatpush1.xpose.msra.mxu0 0.0
  %2466 = vmatprep.subr.mxu0 0.0
  %2467 = vmatpush1.xpose.msra.mxu0 0.0
  %2468 = vmatprep.subr.mxu0 0.0
  %2469 = vmatpush1.xpose.msra.mxu0 0.0
  %2470 = vmatprep.subr.mxu0 0.0
  %2471 = vmatpush1.xpose.msra.mxu0 0.0
  %2472 = vmatprep.subr.mxu0 0.0
  %2473 = vmatpush1.xpose.msra.mxu0 0.0
  %2474 = vmatprep.subr.mxu0 0.0
  %2475 = vmatpush1.xpose.msra.mxu0 0.0
  %2476 = vmatprep.subr.mxu0 0.0
  %2477 = vmatpush1.xpose.msra.mxu0 0.0
  %2478 = vmatprep.subr.mxu0 0.0
  %2479 = vmatpush1.xpose.msra.mxu0 0.0
  %2480 = vmatprep.subr.mxu0 0.0
  %2481 = vmatpush1.xpose.msra.mxu0 0.0
  %2482 = vmatprep.subr.mxu0 0.0
  %2483 = vmatpush1.xpose.msra.mxu0 0.0
  %2484 = vmatprep.subr.mxu0 0.0
  %2485 = vmatpush1.xpose.msra.mxu0 0.0
  %2486 = vmatprep.subr.mxu0 0.0
  %2487 = vmatpush1.xpose.msra.mxu0 0.0
  %2488 = vmatprep.subr.mxu0 0.0
  %2489 = vmatpush1.xpose.msra.mxu0 0.0
  %2490 = vmatprep.subr.mxu0 0.0
  %2491 = vmatpush1.xpose.msra.mxu0 0.0
  %2492 = vmatprep.subr.mxu0 0.0
  %2493 = vmatpush1.xpose.msra.mxu0 0.0
  %2494 = vmatprep.subr.mxu0 0.0
  %2495 = vmatpush1.xpose.msra.mxu0 0.0
  %2496 = vmatprep.subr.mxu0 0.0
  %2497 = vmatpush1.xpose.msra.mxu0 0.0
  %2498 = vmatprep.subr.mxu0 0.0
  %2499 = vmatpush1.xpose.msra.mxu0 0.0
  %2500 = vmatprep.subr.mxu0 0.0
  %2501 = vmatpush1.xpose.msra.mxu0 0.0
  %2502 = vmatprep.subr.mxu0 0.0
  %2503 = vmatpush1.xpose.msra.mxu0 0.0
  %2504 = vmatprep.subr.mxu0 0.0
  %2505 = vmatpush1.xpose.msra.mxu0 0.0
  %2506 = vmatprep.subr.mxu0 0.0
  %2507 = vmatpush1.xpose.msra.mxu0 0.0
  %2508 = vmatprep.subr.mxu0 0.0
  %2509 = vmatpush1.xpose.msra.mxu0 0.0
  %2510 = vmatprep.subr.mxu0 0.0
  %2511 = vmatpush1.xpose.msra.mxu0 0.0
  %2512 = vmatprep.subr.mxu0 0.0
  %2513 = vmatpush1.xpose.msra.mxu0 0.0
  %2514 = vmatprep.mubr.f32.mxu0 0.0
  %2515 = vmatmul.mubr.f32.gmra.mrb[0].mxu0 %v2445
  %v2516 = vpop.f32.mrb[0].mxu0
  %v2517 = vadd.f32 0.0, %v2516
  %v2518 = vpop.f32.mrb[0].mxu0
  %2519 = vdwg.mxu0
  %v2521 = vsel %vm418, %v1820, 0
  %v2524 = vsel %vm418, %v1938, 0
  %2526 = vmatprep.subr.mxu0 0.0
  %2527 = vmatpush1.xpose.msra.mxu0 %v2524
  %2528 = vmatprep.subr.mxu0 0.0
  %2529 = vmatpush1.xpose.msra.mxu0 0.0
  %2530 = vmatprep.subr.mxu0 0.0
  %2531 = vmatpush1.xpose.msra.mxu0 0.0
  %2532 = vmatprep.subr.mxu0 0.0
  %2533 = vmatpush1.xpose.msra.mxu0 0.0
  %2534 = vmatprep.subr.mxu0 0.0
  %2535 = vmatpush1.xpose.msra.mxu0 0.0
  %2536 = vmatprep.subr.mxu0 0.0
  %2537 = vmatpush1.xpose.msra.mxu0 0.0
  %2538 = vmatprep.subr.mxu0 0.0
  %2539 = vmatpush1.xpose.msra.mxu0 0.0
  %2540 = vmatprep.subr.mxu0 0.0
  %2541 = vmatpush1.xpose.msra.mxu0 0.0
  %2542 = vmatprep.subr.mxu0 0.0
  %2543 = vmatpush1.xpose.msra.mxu0 0.0
  %2544 = vmatprep.subr.mxu0 0.0
  %2545 = vmatpush1.xpose.msra.mxu0 0.0
  %2546 = vmatprep.subr.mxu0 0.0
  %2547 = vmatpush1.xpose.msra.mxu0 0.0
  %2548 = vmatprep.subr.mxu0 0.0
  %2549 = vmatpush1.xpose.msra.mxu0 0.0
  %2550 = vmatprep.subr.mxu0 0.0
  %2551 = vmatpush1.xpose.msra.mxu0 0.0
  %2552 = vmatprep.subr.mxu0 0.0
  %2553 = vmatpush1.xpose.msra.mxu0 0.0
  %2554 = vmatprep.subr.mxu0 0.0
  %2555 = vmatpush1.xpose.msra.mxu0 0.0
  %2556 = vmatprep.subr.mxu0 0.0
  %2557 = vmatpush1.xpose.msra.mxu0 0.0
  %2558 = vmatprep.subr.mxu0 0.0
  %2559 = vmatpush1.xpose.msra.mxu0 0.0
  %2560 = vmatprep.subr.mxu0 0.0
  %2561 = vmatpush1.xpose.msra.mxu0 0.0
  %2562 = vmatprep.subr.mxu0 0.0
  %2563 = vmatpush1.xpose.msra.mxu0 0.0
  %2564 = vmatprep.subr.mxu0 0.0
  %2565 = vmatpush1.xpose.msra.mxu0 0.0
  %2566 = vmatprep.subr.mxu0 0.0
  %2567 = vmatpush1.xpose.msra.mxu0 0.0
  %2568 = vmatprep.subr.mxu0 0.0
  %2569 = vmatpush1.xpose.msra.mxu0 0.0
  %2570 = vmatprep.subr.mxu0 0.0
  %2571 = vmatpush1.xpose.msra.mxu0 0.0
  %2572 = vmatprep.subr.mxu0 0.0
  %2573 = vmatpush1.xpose.msra.mxu0 0.0
  %2574 = vmatprep.subr.mxu0 0.0
  %2575 = vmatpush1.xpose.msra.mxu0 0.0
  %2576 = vmatprep.subr.mxu0 0.0
  %2577 = vmatpush1.xpose.msra.mxu0 0.0
  %2578 = vmatprep.subr.mxu0 0.0
  %2579 = vmatpush1.xpose.msra.mxu0 0.0
  %2580 = vmatprep.subr.mxu0 0.0
  %2581 = vmatpush1.xpose.msra.mxu0 0.0
  %2582 = vmatprep.subr.mxu0 0.0
  %2583 = vmatpush1.xpose.msra.mxu0 0.0
  %2584 = vmatprep.subr.mxu0 0.0
  %2585 = vmatpush1.xpose.msra.mxu0 0.0
  %2586 = vmatprep.subr.mxu0 0.0
  %2587 = vmatpush1.xpose.msra.mxu0 0.0
  %2588 = vmatprep.subr.mxu0 0.0
  %2589 = vmatpush1.xpose.msra.mxu0 0.0
  %2590 = vmatprep.mubr.f32.mxu0 0.0
  %2591 = vmatmul.mubr.f32.gmra.mrb[0].mxu0 %v2521
  %v2592 = vpop.f32.mrb[0].mxu0
  %v2593 = vadd.f32 0.0, %v2592
  %v2594 = vpop.f32.mrb[0].mxu0
  %2595 = vdwg.mxu0
  %v2597 = vsel %vm418, %v1825, 0
  %v2600 = vsel %vm418, %v1943, 0
  %2602 = vmatprep.subr.mxu0 0.0
  %2603 = vmatpush1.xpose.msra.mxu0 %v2600
  %2604 = vmatprep.subr.mxu0 0.0
  %2605 = vmatpush1.xpose.msra.mxu0 0.0
  %2606 = vmatprep.subr.mxu0 0.0
  %2607 = vmatpush1.xpose.msra.mxu0 0.0
  %2608 = vmatprep.subr.mxu0 0.0
  %2609 = vmatpush1.xpose.msra.mxu0 0.0
  %2610 = vmatprep.subr.mxu0 0.0
  %2611 = vmatpush1.xpose.msra.mxu0 0.0
  %2612 = vmatprep.subr.mxu0 0.0
  %2613 = vmatpush1.xpose.msra.mxu0 0.0
  %2614 = vmatprep.subr.mxu0 0.0
  %2615 = vmatpush1.xpose.msra.mxu0 0.0
  %2616 = vmatprep.subr.mxu0 0.0
  %2617 = vmatpush1.xpose.msra.mxu0 0.0
  %2618 = vmatprep.subr.mxu0 0.0
  %2619 = vmatpush1.xpose.msra.mxu0 0.0
  %2620 = vmatprep.subr.mxu0 0.0
  %2621 = vmatpush1.xpose.msra.mxu0 0.0
  %2622 = vmatprep.subr.mxu0 0.0
  %2623 = vmatpush1.xpose.msra.mxu0 0.0
  %2624 = vmatprep.subr.mxu0 0.0
  %2625 = vmatpush1.xpose.msra.mxu0 0.0
  %2626 = vmatprep.subr.mxu0 0.0
  %2627 = vmatpush1.xpose.msra.mxu0 0.0
  %2628 = vmatprep.subr.mxu0 0.0
  %2629 = vmatpush1.xpose.msra.mxu0 0.0
  %2630 = vmatprep.subr.mxu0 0.0
  %2631 = vmatpush1.xpose.msra.mxu0 0.0
  %2632 = vmatprep.subr.mxu0 0.0
  %2633 = vmatpush1.xpose.msra.mxu0 0.0
  %2634 = vmatprep.subr.mxu0 0.0
  %2635 = vmatpush1.xpose.msra.mxu0 0.0
  %2636 = vmatprep.subr.mxu0 0.0
  %2637 = vmatpush1.xpose.msra.mxu0 0.0
  %2638 = vmatprep.subr.mxu0 0.0
  %2639 = vmatpush1.xpose.msra.mxu0 0.0
  %2640 = vmatprep.subr.mxu0 0.0
  %2641 = vmatpush1.xpose.msra.mxu0 0.0
  %2642 = vmatprep.subr.mxu0 0.0
  %2643 = vmatpush1.xpose.msra.mxu0 0.0
  %2644 = vmatprep.subr.mxu0 0.0
  %2645 = vmatpush1.xpose.msra.mxu0 0.0
  %2646 = vmatprep.subr.mxu0 0.0
  %2647 = vmatpush1.xpose.msra.mxu0 0.0
  %2648 = vmatprep.subr.mxu0 0.0
  %2649 = vmatpush1.xpose.msra.mxu0 0.0
  %2650 = vmatprep.subr.mxu0 0.0
  %2651 = vmatpush1.xpose.msra.mxu0 0.0
  %2652 = vmatprep.subr.mxu0 0.0
  %2653 = vmatpush1.xpose.msra.mxu0 0.0
  %2654 = vmatprep.subr.mxu0 0.0
  %2655 = vmatpush1.xpose.msra.mxu0 0.0
  %2656 = vmatprep.subr.mxu0 0.0
  %2657 = vmatpush1.xpose.msra.mxu0 0.0
  %2658 = vmatprep.subr.mxu0 0.0
  %2659 = vmatpush1.xpose.msra.mxu0 0.0
  %2660 = vmatprep.subr.mxu0 0.0
  %2661 = vmatpush1.xpose.msra.mxu0 0.0
  %2662 = vmatprep.subr.mxu0 0.0
  %2663 = vmatpush1.xpose.msra.mxu0 0.0
  %2664 = vmatprep.subr.mxu0 0.0
  %2665 = vmatpush1.xpose.msra.mxu0 0.0
  %2666 = vmatprep.mubr.f32.mxu0 0.0
  %2667 = vmatmul.mubr.f32.gmra.mrb[0].mxu0 %v2597
  %v2668 = vpop.f32.mrb[0].mxu0
  %v2669 = vadd.f32 0.0, %v2668
  %v2670 = vpop.f32.mrb[0].mxu0
  %2671 = vdwg.mxu0
  %v2672 = vsel %vm1028, -1e+30, %v2137
  %v2673 = vsel %vm1028, -1e+30, %v2213
  %v2674 = vsel %vm1028, -1e+30, %v2289
  %v2675 = vsel %vm1028, -1e+30, %v2365
  %v2676 = vsel %vm1028, -1e+30, %v2441
  %v2677 = vsel %vm1028, -1e+30, %v2517
  %v2678 = vsel %vm1028, -1e+30, %v2593
  %v2679 = vsel %vm1028, -1e+30, %v2669
  %v2680 = vsel %vm418, %v2672, -inf
  %2681 = vmax.xlane.f32.xlu0 %v2680
  %v2682 = vpop.xlane.xlu0 %2681
  %v2683 = vsel %vm418, %v2673, -inf
  %2684 = vmax.xlane.f32.xlu0 %v2683
  %v2685 = vpop.xlane.xlu0 %2684
  %v2686 = vsel %vm418, %v2674, -inf
  %2687 = vmax.xlane.f32.xlu0 %v2686
  %v2688 = vpop.xlane.xlu0 %2687
  %v2689 = vsel %vm418, %v2675, -inf
  %2690 = vmax.xlane.f32.xlu0 %v2689
  %v2691 = vpop.xlane.xlu0 %2690
  %v2692 = vsel %vm418, %v2676, -inf
  %2693 = vmax.xlane.f32.xlu0 %v2692
  %v2694 = vpop.xlane.xlu0 %2693
  %v2695 = vsel %vm418, %v2677, -inf
  %2696 = vmax.xlane.f32.xlu0 %v2695
  %v2697 = vpop.xlane.xlu0 %2696
  %v2698 = vsel %vm418, %v2678, -inf
  %2699 = vmax.xlane.f32.xlu0 %v2698
  %v2700 = vpop.xlane.xlu0 %2699
  %v2701 = vsel %vm418, %v2679, -inf
  %2702 = vmax.xlane.f32.xlu0 %v2701
  %v2703 = vpop.xlane.xlu0 %2702
  %v2704 = vsub.f32 %v2672, %v2682
  %v2705 = vsub.f32 %v2673, %v2685
  %v2706 = vsub.f32 %v2674, %v2688
  %v2707 = vsub.f32 %v2675, %v2691
  %v2708 = vsub.f32 %v2676, %v2694
  %v2709 = vsub.f32 %v2677, %v2697
  %v2710 = vsub.f32 %v2678, %v2700
  %v2711 = vsub.f32 %v2679, %v2703
  %v2712 = vmul.f32 %v2704, 1.442695
  %v2713 = vpow.pop %v2712
  %v2714 = vmul.f32 %v2705, 1.442695
  %v2715 = vpow.pop %v2714
  %v2716 = vmul.f32 %v2706, 1.442695
  %v2717 = vpow.pop %v2716
  %v2718 = vmul.f32 %v2707, 1.442695
  %v2719 = vpow.pop %v2718
  %v2720 = vmul.f32 %v2708, 1.442695
  %v2721 = vpow.pop %v2720
  %v2722 = vmul.f32 %v2709, 1.442695
  %v2723 = vpow.pop %v2722
  %v2724 = vmul.f32 %v2710, 1.442695
  %v2725 = vpow.pop %v2724
  %v2726 = vmul.f32 %v2711, 1.442695
  %v2727 = vpow.pop %v2726
  %v2728 = vsel %vm418, %v2713, 0.0
  %2729 = vadd.xlane.f32.xlu0 %v2728
  %v2730 = vpop.xlane.xlu0 %2729
  %v2731 = vsel %vm418, %v2715, 0.0
  %2732 = vadd.xlane.f32.xlu0 %v2731
  %v2733 = vpop.xlane.xlu0 %2732
  %v2734 = vsel %vm418, %v2717, 0.0
  %2735 = vadd.xlane.f32.xlu0 %v2734
  %v2736 = vpop.xlane.xlu0 %2735
  %v2737 = vsel %vm418, %v2719, 0.0
  %2738 = vadd.xlane.f32.xlu0 %v2737
  %v2739 = vpop.xlane.xlu0 %2738
  %v2740 = vsel %vm418, %v2721, 0.0
  %2741 = vadd.xlane.f32.xlu0 %v2740
  %v2742 = vpop.xlane.xlu0 %2741
  %v2743 = vsel %vm418, %v2723, 0.0
  %2744 = vadd.xlane.f32.xlu0 %v2743
  %v2745 = vpop.xlane.xlu0 %2744
  %v2746 = vsel %vm418, %v2725, 0.0
  %2747 = vadd.xlane.f32.xlu0 %v2746
  %v2748 = vpop.xlane.xlu0 %2747
  %v2749 = vsel %vm418, %v2727, 0.0
  %2750 = vadd.xlane.f32.xlu0 %v2749
  %v2751 = vpop.xlane.xlu0 %2750
  %v2752 = vrcp.pop %v2730
  %v2753 = vrcp.pop %v2733
  %v2754 = vrcp.pop %v2736
  %v2755 = vrcp.pop %v2739
  %v2756 = vrcp.pop %v2742
  %v2757 = vrcp.pop %v2745
  %v2758 = vrcp.pop %v2748
  %v2759 = vrcp.pop %v2751
  %v2760 = vmul.f32 %v2713, %v2752
  %v2761 = vmul.f32 %v2715, %v2753
  %v2762 = vmul.f32 %v2717, %v2754
  %v2763 = vmul.f32 %v2719, %v2755
  %v2764 = vmul.f32 %v2721, %v2756
  %v2765 = vmul.f32 %v2723, %v2757
  %v2766 = vmul.f32 %v2725, %v2758
  %v2767 = vmul.f32 %v2727, %v2759
  %v2769 = vsel %vm418, %v2760, 0
  %2771 = vmatprep.subr.mxu0 0.0
  %2772 = vmatpush1.msra.mxu0 %v2026
  %2773 = vmatprep.subr.mxu0 0.0
  %2774 = vmatpush1.msra.mxu0 0.0
  %2775 = vmatprep.subr.mxu0 0.0
  %2776 = vmatpush1.msra.mxu0 0.0
  %2777 = vmatprep.subr.mxu0 0.0
  %2778 = vmatpush1.msra.mxu0 0.0
  %2779 = vmatprep.subr.mxu0 0.0
  %2780 = vmatpush1.msra.mxu0 0.0
  %2781 = vmatprep.subr.mxu0 0.0
  %2782 = vmatpush1.msra.mxu0 0.0
  %2783 = vmatprep.subr.mxu0 0.0
  %2784 = vmatpush1.msra.mxu0 0.0
  %2785 = vmatprep.subr.mxu0 0.0
  %2786 = vmatpush1.msra.mxu0 0.0
  %2787 = vmatprep.subr.mxu0 0.0
  %2788 = vmatpush1.msra.mxu0 0.0
  %2789 = vmatprep.subr.mxu0 0.0
  %2790 = vmatpush1.msra.mxu0 0.0
  %2791 = vmatprep.subr.mxu0 0.0
  %2792 = vmatpush1.msra.mxu0 0.0
  %2793 = vmatprep.subr.mxu0 0.0
  %2794 = vmatpush1.msra.mxu0 0.0
  %2795 = vmatprep.subr.mxu0 0.0
  %2796 = vmatpush1.msra.mxu0 0.0
  %2797 = vmatprep.subr.mxu0 0.0
  %2798 = vmatpush1.msra.mxu0 0.0
  %2799 = vmatprep.subr.mxu0 0.0
  %2800 = vmatpush1.msra.mxu0 0.0
  %2801 = vmatprep.subr.mxu0 0.0
  %2802 = vmatpush1.msra.mxu0 0.0
  %2803 = vmatprep.subr.mxu0 0.0
  %2804 = vmatpush1.msra.mxu0 0.0
  %2805 = vmatprep.subr.mxu0 0.0
  %2806 = vmatpush1.msra.mxu0 0.0
  %2807 = vmatprep.subr.mxu0 0.0
  %2808 = vmatpush1.msra.mxu0 0.0
  %2809 = vmatprep.subr.mxu0 0.0
  %2810 = vmatpush1.msra.mxu0 0.0
  %2811 = vmatprep.subr.mxu0 0.0
  %2812 = vmatpush1.msra.mxu0 0.0
  %2813 = vmatprep.subr.mxu0 0.0
  %2814 = vmatpush1.msra.mxu0 0.0
  %2815 = vmatprep.subr.mxu0 0.0
  %2816 = vmatpush1.msra.mxu0 0.0
  %2817 = vmatprep.subr.mxu0 0.0
  %2818 = vmatpush1.msra.mxu0 0.0
  %2819 = vmatprep.subr.mxu0 0.0
  %2820 = vmatpush1.msra.mxu0 0.0
  %2821 = vmatprep.subr.mxu0 0.0
  %2822 = vmatpush1.msra.mxu0 0.0
  %2823 = vmatprep.subr.mxu0 0.0
  %2824 = vmatpush1.msra.mxu0 0.0
  %2825 = vmatprep.subr.mxu0 0.0
  %2826 = vmatpush1.msra.mxu0 0.0
  %2827 = vmatprep.subr.mxu0 0.0
  %2828 = vmatpush1.msra.mxu0 0.0
  %2829 = vmatprep.subr.mxu0 0.0
  %2830 = vmatpush1.msra.mxu0 0.0
  %2831 = vmatprep.subr.mxu0 0.0
  %2832 = vmatpush1.msra.mxu0 0.0
  %2833 = vmatprep.subr.mxu0 0.0
  %2834 = vmatpush1.msra.mxu0 0.0
  %2835 = vmatprep.mubr.f32.mxu0 0.0
  %2836 = vmatmul.mubr.f32.gmra.mrb[0].mxu0 %v2769
  %v2837 = vpop.f32.mrb[0].mxu0
  %v2838 = vadd.f32 0.0, %v2837
  %v2839 = vpop.f32.mrb[0].mxu0
  %2840 = vdwg.mxu0
  %v2842 = vsel %vm418, %v2761, 0
  %2844 = vmatprep.subr.mxu0 0.0
  %2845 = vmatpush1.msra.mxu0 %v2031
  %2846 = vmatprep.subr.mxu0 0.0
  %2847 = vmatpush1.msra.mxu0 0.0
  %2848 = vmatprep.subr.mxu0 0.0
  %2849 = vmatpush1.msra.mxu0 0.0
  %2850 = vmatprep.subr.mxu0 0.0
  %2851 = vmatpush1.msra.mxu0 0.0
  %2852 = vmatprep.subr.mxu0 0.0
  %2853 = vmatpush1.msra.mxu0 0.0
  %2854 = vmatprep.subr.mxu0 0.0
  %2855 = vmatpush1.msra.mxu0 0.0
  %2856 = vmatprep.subr.mxu0 0.0
  %2857 = vmatpush1.msra.mxu0 0.0
  %2858 = vmatprep.subr.mxu0 0.0
  %2859 = vmatpush1.msra.mxu0 0.0
  %2860 = vmatprep.subr.mxu0 0.0
  %2861 = vmatpush1.msra.mxu0 0.0
  %2862 = vmatprep.subr.mxu0 0.0
  %2863 = vmatpush1.msra.mxu0 0.0
  %2864 = vmatprep.subr.mxu0 0.0
  %2865 = vmatpush1.msra.mxu0 0.0
  %2866 = vmatprep.subr.mxu0 0.0
  %2867 = vmatpush1.msra.mxu0 0.0
  %2868 = vmatprep.subr.mxu0 0.0
  %2869 = vmatpush1.msra.mxu0 0.0
  %2870 = vmatprep.subr.mxu0 0.0
  %2871 = vmatpush1.msra.mxu0 0.0
  %2872 = vmatprep.subr.mxu0 0.0
  %2873 = vmatpush1.msra.mxu0 0.0
  %2874 = vmatprep.subr.mxu0 0.0
  %2875 = vmatpush1.msra.mxu0 0.0
  %2876 = vmatprep.subr.mxu0 0.0
  %2877 = vmatpush1.msra.mxu0 0.0
  %2878 = vmatprep.subr.mxu0 0.0
  %2879 = vmatpush1.msra.mxu0 0.0
  %2880 = vmatprep.subr.mxu0 0.0
  %2881 = vmatpush1.msra.mxu0 0.0
  %2882 = vmatprep.subr.mxu0 0.0
  %2883 = vmatpush1.msra.mxu0 0.0
  %2884 = vmatprep.subr.mxu0 0.0
  %2885 = vmatpush1.msra.mxu0 0.0
  %2886 = vmatprep.subr.mxu0 0.0
  %2887 = vmatpush1.msra.mxu0 0.0
  %2888 = vmatprep.subr.mxu0 0.0
  %2889 = vmatpush1.msra.mxu0 0.0
  %2890 = vmatprep.subr.mxu0 0.0
  %2891 = vmatpush1.msra.mxu0 0.0
  %2892 = vmatprep.subr.mxu0 0.0
  %2893 = vmatpush1.msra.mxu0 0.0
  %2894 = vmatprep.subr.mxu0 0.0
  %2895 = vmatpush1.msra.mxu0 0.0
  %2896 = vmatprep.subr.mxu0 0.0
  %2897 = vmatpush1.msra.mxu0 0.0
  %2898 = vmatprep.subr.mxu0 0.0
  %2899 = vmatpush1.msra.mxu0 0.0
  %2900 = vmatprep.subr.mxu0 0.0
  %2901 = vmatpush1.msra.mxu0 0.0
  %2902 = vmatprep.subr.mxu0 0.0
  %2903 = vmatpush1.msra.mxu0 0.0
  %2904 = vmatprep.subr.mxu0 0.0
  %2905 = vmatpush1.msra.mxu0 0.0
  %2906 = vmatprep.subr.mxu0 0.0
  %2907 = vmatpush1.msra.mxu0 0.0
  %2908 = vmatprep.mubr.f32.mxu0 0.0
  %2909 = vmatmul.mubr.f32.gmra.mrb[0].mxu0 %v2842
  %v2910 = vpop.f32.mrb[0].mxu0
  %v2911 = vadd.f32 0.0, %v2910
  %v2912 = vpop.f32.mrb[0].mxu0
  %2913 = vdwg.mxu0
  %v2915 = vsel %vm418, %v2762, 0
  %2917 = vmatprep.subr.mxu0 0.0
  %2918 = vmatpush1.msra.mxu0 %v2036
  %2919 = vmatprep.subr.mxu0 0.0
  %2920 = vmatpush1.msra.mxu0 0.0
  %2921 = vmatprep.subr.mxu0 0.0
  %2922 = vmatpush1.msra.mxu0 0.0
  %2923 = vmatprep.subr.mxu0 0.0
  %2924 = vmatpush1.msra.mxu0 0.0
  %2925 = vmatprep.subr.mxu0 0.0
  %2926 = vmatpush1.msra.mxu0 0.0
  %2927 = vmatprep.subr.mxu0 0.0
  %2928 = vmatpush1.msra.mxu0 0.0
  %2929 = vmatprep.subr.mxu0 0.0
  %2930 = vmatpush1.msra.mxu0 0.0
  %2931 = vmatprep.subr.mxu0 0.0
  %2932 = vmatpush1.msra.mxu0 0.0
  %2933 = vmatprep.subr.mxu0 0.0
  %2934 = vmatpush1.msra.mxu0 0.0
  %2935 = vmatprep.subr.mxu0 0.0
  %2936 = vmatpush1.msra.mxu0 0.0
  %2937 = vmatprep.subr.mxu0 0.0
  %2938 = vmatpush1.msra.mxu0 0.0
  %2939 = vmatprep.subr.mxu0 0.0
  %2940 = vmatpush1.msra.mxu0 0.0
  %2941 = vmatprep.subr.mxu0 0.0
  %2942 = vmatpush1.msra.mxu0 0.0
  %2943 = vmatprep.subr.mxu0 0.0
  %2944 = vmatpush1.msra.mxu0 0.0
  %2945 = vmatprep.subr.mxu0 0.0
  %2946 = vmatpush1.msra.mxu0 0.0
  %2947 = vmatprep.subr.mxu0 0.0
  %2948 = vmatpush1.msra.mxu0 0.0
  %2949 = vmatprep.subr.mxu0 0.0
  %2950 = vmatpush1.msra.mxu0 0.0
  %2951 = vmatprep.subr.mxu0 0.0
  %2952 = vmatpush1.msra.mxu0 0.0
  %2953 = vmatprep.subr.mxu0 0.0
  %2954 = vmatpush1.msra.mxu0 0.0
  %2955 = vmatprep.subr.mxu0 0.0
  %2956 = vmatpush1.msra.mxu0 0.0
  %2957 = vmatprep.subr.mxu0 0.0
  %2958 = vmatpush1.msra.mxu0 0.0
  %2959 = vmatprep.subr.mxu0 0.0
  %2960 = vmatpush1.msra.mxu0 0.0
  %2961 = vmatprep.subr.mxu0 0.0
  %2962 = vmatpush1.msra.mxu0 0.0
  %2963 = vmatprep.subr.mxu0 0.0
  %2964 = vmatpush1.msra.mxu0 0.0
  %2965 = vmatprep.subr.mxu0 0.0
  %2966 = vmatpush1.msra.mxu0 0.0
  %2967 = vmatprep.subr.mxu0 0.0
  %2968 = vmatpush1.msra.mxu0 0.0
  %2969 = vmatprep.subr.mxu0 0.0
  %2970 = vmatpush1.msra.mxu0 0.0
  %2971 = vmatprep.subr.mxu0 0.0
  %2972 = vmatpush1.msra.mxu0 0.0
  %2973 = vmatprep.subr.mxu0 0.0
  %2974 = vmatpush1.msra.mxu0 0.0
  %2975 = vmatprep.subr.mxu0 0.0
  %2976 = vmatpush1.msra.mxu0 0.0
  %2977 = vmatprep.subr.mxu0 0.0
  %2978 = vmatpush1.msra.mxu0 0.0
  %2979 = vmatprep.subr.mxu0 0.0
  %2980 = vmatpush1.msra.mxu0 0.0
  %2981 = vmatprep.mubr.f32.mxu0 0.0
  %2982 = vmatmul.mubr.f32.gmra.mrb[0].mxu0 %v2915
  %v2983 = vpop.f32.mrb[0].mxu0
  %v2984 = vadd.f32 0.0, %v2983
  %v2985 = vpop.f32.mrb[0].mxu0
  %2986 = vdwg.mxu0
  %v2988 = vsel %vm418, %v2763, 0
  %2990 = vmatprep.subr.mxu0 0.0
  %2991 = vmatpush1.msra.mxu0 %v2041
  %2992 = vmatprep.subr.mxu0 0.0
  %2993 = vmatpush1.msra.mxu0 0.0
  %2994 = vmatprep.subr.mxu0 0.0
  %2995 = vmatpush1.msra.mxu0 0.0
  %2996 = vmatprep.subr.mxu0 0.0
  %2997 = vmatpush1.msra.mxu0 0.0
  %2998 = vmatprep.subr.mxu0 0.0
  %2999 = vmatpush1.msra.mxu0 0.0
  %3000 = vmatprep.subr.mxu0 0.0
  %3001 = vmatpush1.msra.mxu0 0.0
  %3002 = vmatprep.subr.mxu0 0.0
  %3003 = vmatpush1.msra.mxu0 0.0
  %3004 = vmatprep.subr.mxu0 0.0
  %3005 = vmatpush1.msra.mxu0 0.0
  %3006 = vmatprep.subr.mxu0 0.0
  %3007 = vmatpush1.msra.mxu0 0.0
  %3008 = vmatprep.subr.mxu0 0.0
  %3009 = vmatpush1.msra.mxu0 0.0
  %3010 = vmatprep.subr.mxu0 0.0
  %3011 = vmatpush1.msra.mxu0 0.0
  %3012 = vmatprep.subr.mxu0 0.0
  %3013 = vmatpush1.msra.mxu0 0.0
  %3014 = vmatprep.subr.mxu0 0.0
  %3015 = vmatpush1.msra.mxu0 0.0
  %3016 = vmatprep.subr.mxu0 0.0
  %3017 = vmatpush1.msra.mxu0 0.0
  %3018 = vmatprep.subr.mxu0 0.0
  %3019 = vmatpush1.msra.mxu0 0.0
  %3020 = vmatprep.subr.mxu0 0.0
  %3021 = vmatpush1.msra.mxu0 0.0
  %3022 = vmatprep.subr.mxu0 0.0
  %3023 = vmatpush1.msra.mxu0 0.0
  %3024 = vmatprep.subr.mxu0 0.0
  %3025 = vmatpush1.msra.mxu0 0.0
  %3026 = vmatprep.subr.mxu0 0.0
  %3027 = vmatpush1.msra.mxu0 0.0
  %3028 = vmatprep.subr.mxu0 0.0
  %3029 = vmatpush1.msra.mxu0 0.0
  %3030 = vmatprep.subr.mxu0 0.0
  %3031 = vmatpush1.msra.mxu0 0.0
  %3032 = vmatprep.subr.mxu0 0.0
  %3033 = vmatpush1.msra.mxu0 0.0
  %3034 = vmatprep.subr.mxu0 0.0
  %3035 = vmatpush1.msra.mxu0 0.0
  %3036 = vmatprep.subr.mxu0 0.0
  %3037 = vmatpush1.msra.mxu0 0.0
  %3038 = vmatprep.subr.mxu0 0.0
  %3039 = vmatpush1.msra.mxu0 0.0
  %3040 = vmatprep.subr.mxu0 0.0
  %3041 = vmatpush1.msra.mxu0 0.0
  %3042 = vmatprep.subr.mxu0 0.0
  %3043 = vmatpush1.msra.mxu0 0.0
  %3044 = vmatprep.subr.mxu0 0.0
  %3045 = vmatpush1.msra.mxu0 0.0
  %3046 = vmatprep.subr.mxu0 0.0
  %3047 = vmatpush1.msra.mxu0 0.0
  %3048 = vmatprep.subr.mxu0 0.0
  %3049 = vmatpush1.msra.mxu0 0.0
  %3050 = vmatprep.subr.mxu0 0.0
  %3051 = vmatpush1.msra.mxu0 0.0
  %3052 = vmatprep.subr.mxu0 0.0
  %3053 = vmatpush1.msra.mxu0 0.0
  %3054 = vmatprep.mubr.f32.mxu0 0.0
  %3055 = vmatmul.mubr.f32.gmra.mrb[0].mxu0 %v2988
  %v3056 = vpop.f32.mrb[0].mxu0
  %v3057 = vadd.f32 0.0, %v3056
  %v3058 = vpop.f32.mrb[0].mxu0
  %3059 = vdwg.mxu0
  %v3061 = vsel %vm418, %v2764, 0
  %3063 = vmatprep.subr.mxu0 0.0
  %3064 = vmatpush1.msra.mxu0 %v2046
  %3065 = vmatprep.subr.mxu0 0.0
  %3066 = vmatpush1.msra.mxu0 0.0
  %3067 = vmatprep.subr.mxu0 0.0
  %3068 = vmatpush1.msra.mxu0 0.0
  %3069 = vmatprep.subr.mxu0 0.0
  %3070 = vmatpush1.msra.mxu0 0.0
  %3071 = vmatprep.subr.mxu0 0.0
  %3072 = vmatpush1.msra.mxu0 0.0
  %3073 = vmatprep.subr.mxu0 0.0
  %3074 = vmatpush1.msra.mxu0 0.0
  %3075 = vmatprep.subr.mxu0 0.0
  %3076 = vmatpush1.msra.mxu0 0.0
  %3077 = vmatprep.subr.mxu0 0.0
  %3078 = vmatpush1.msra.mxu0 0.0
  %3079 = vmatprep.subr.mxu0 0.0
  %3080 = vmatpush1.msra.mxu0 0.0
  %3081 = vmatprep.subr.mxu0 0.0
  %3082 = vmatpush1.msra.mxu0 0.0
  %3083 = vmatprep.subr.mxu0 0.0
  %3084 = vmatpush1.msra.mxu0 0.0
  %3085 = vmatprep.subr.mxu0 0.0
  %3086 = vmatpush1.msra.mxu0 0.0
  %3087 = vmatprep.subr.mxu0 0.0
  %3088 = vmatpush1.msra.mxu0 0.0
  %3089 = vmatprep.subr.mxu0 0.0
  %3090 = vmatpush1.msra.mxu0 0.0
  %3091 = vmatprep.subr.mxu0 0.0
  %3092 = vmatpush1.msra.mxu0 0.0
  %3093 = vmatprep.subr.mxu0 0.0
  %3094 = vmatpush1.msra.mxu0 0.0
  %3095 = vmatprep.subr.mxu0 0.0
  %3096 = vmatpush1.msra.mxu0 0.0
  %3097 = vmatprep.subr.mxu0 0.0
  %3098 = vmatpush1.msra.mxu0 0.0
  %3099 = vmatprep.subr.mxu0 0.0
  %3100 = vmatpush1.msra.mxu0 0.0
  %3101 = vmatprep.subr.mxu0 0.0
  %3102 = vmatpush1.msra.mxu0 0.0
  %3103 = vmatprep.subr.mxu0 0.0
  %3104 = vmatpush1.msra.mxu0 0.0
  %3105 = vmatprep.subr.mxu0 0.0
  %3106 = vmatpush1.msra.mxu0 0.0
  %3107 = vmatprep.subr.mxu0 0.0
  %3108 = vmatpush1.msra.mxu0 0.0
  %3109 = vmatprep.subr.mxu0 0.0
  %3110 = vmatpush1.msra.mxu0 0.0
  %3111 = vmatprep.subr.mxu0 0.0
  %3112 = vmatpush1.msra.mxu0 0.0
  %3113 = vmatprep.subr.mxu0 0.0
  %3114 = vmatpush1.msra.mxu0 0.0
  %3115 = vmatprep.subr.mxu0 0.0
  %3116 = vmatpush1.msra.mxu0 0.0
  %3117 = vmatprep.subr.mxu0 0.0
  %3118 = vmatpush1.msra.mxu0 0.0
  %3119 = vmatprep.subr.mxu0 0.0
  %3120 = vmatpush1.msra.mxu0 0.0
  %3121 = vmatprep.subr.mxu0 0.0
  %3122 = vmatpush1.msra.mxu0 0.0
  %3123 = vmatprep.subr.mxu0 0.0
  %3124 = vmatpush1.msra.mxu0 0.0
  %3125 = vmatprep.subr.mxu0 0.0
  %3126 = vmatpush1.msra.mxu0 0.0
  %3127 = vmatprep.mubr.f32.mxu0 0.0
  %3128 = vmatmul.mubr.f32.gmra.mrb[0].mxu0 %v3061
  %v3129 = vpop.f32.mrb[0].mxu0
  %v3130 = vadd.f32 0.0, %v3129
  %v3131 = vpop.f32.mrb[0].mxu0
  %3132 = vdwg.mxu0
  %v3134 = vsel %vm418, %v2765, 0
  %3136 = vmatprep.subr.mxu0 0.0
  %3137 = vmatpush1.msra.mxu0 %v2051
  %3138 = vmatprep.subr.mxu0 0.0
  %3139 = vmatpush1.msra.mxu0 0.0
  %3140 = vmatprep.subr.mxu0 0.0
  %3141 = vmatpush1.msra.mxu0 0.0
  %3142 = vmatprep.subr.mxu0 0.0
  %3143 = vmatpush1.msra.mxu0 0.0
  %3144 = vmatprep.subr.mxu0 0.0
  %3145 = vmatpush1.msra.mxu0 0.0
  %3146 = vmatprep.subr.mxu0 0.0
  %3147 = vmatpush1.msra.mxu0 0.0
  %3148 = vmatprep.subr.mxu0 0.0
  %3149 = vmatpush1.msra.mxu0 0.0
  %3150 = vmatprep.subr.mxu0 0.0
  %3151 = vmatpush1.msra.mxu0 0.0
  %3152 = vmatprep.subr.mxu0 0.0
  %3153 = vmatpush1.msra.mxu0 0.0
  %3154 = vmatprep.subr.mxu0 0.0
  %3155 = vmatpush1.msra.mxu0 0.0
  %3156 = vmatprep.subr.mxu0 0.0
  %3157 = vmatpush1.msra.mxu0 0.0
  %3158 = vmatprep.subr.mxu0 0.0
  %3159 = vmatpush1.msra.mxu0 0.0
  %3160 = vmatprep.subr.mxu0 0.0
  %3161 = vmatpush1.msra.mxu0 0.0
  %3162 = vmatprep.subr.mxu0 0.0
  %3163 = vmatpush1.msra.mxu0 0.0
  %3164 = vmatprep.subr.mxu0 0.0
  %3165 = vmatpush1.msra.mxu0 0.0
  %3166 = vmatprep.subr.mxu0 0.0
  %3167 = vmatpush1.msra.mxu0 0.0
  %3168 = vmatprep.subr.mxu0 0.0
  %3169 = vmatpush1.msra.mxu0 0.0
  %3170 = vmatprep.subr.mxu0 0.0
  %3171 = vmatpush1.msra.mxu0 0.0
  %3172 = vmatprep.subr.mxu0 0.0
  %3173 = vmatpush1.msra.mxu0 0.0
  %3174 = vmatprep.subr.mxu0 0.0
  %3175 = vmatpush1.msra.mxu0 0.0
  %3176 = vmatprep.subr.mxu0 0.0
  %3177 = vmatpush1.msra.mxu0 0.0
  %3178 = vmatprep.subr.mxu0 0.0
  %3179 = vmatpush1.msra.mxu0 0.0
  %3180 = vmatprep.subr.mxu0 0.0
  %3181 = vmatpush1.msra.mxu0 0.0
  %3182 = vmatprep.subr.mxu0 0.0
  %3183 = vmatpush1.msra.mxu0 0.0
  %3184 = vmatprep.subr.mxu0 0.0
  %3185 = vmatpush1.msra.mxu0 0.0
  %3186 = vmatprep.subr.mxu0 0.0
  %3187 = vmatpush1.msra.mxu0 0.0
  %3188 = vmatprep.subr.mxu0 0.0
  %3189 = vmatpush1.msra.mxu0 0.0
  %3190 = vmatprep.subr.mxu0 0.0
  %3191 = vmatpush1.msra.mxu0 0.0
  %3192 = vmatprep.subr.mxu0 0.0
  %3193 = vmatpush1.msra.mxu0 0.0
  %3194 = vmatprep.subr.mxu0 0.0
  %3195 = vmatpush1.msra.mxu0 0.0
  %3196 = vmatprep.subr.mxu0 0.0
  %3197 = vmatpush1.msra.mxu0 0.0
  %3198 = vmatprep.subr.mxu0 0.0
  %3199 = vmatpush1.msra.mxu0 0.0
  %3200 = vmatprep.mubr.f32.mxu0 0.0
  %3201 = vmatmul.mubr.f32.gmra.mrb[0].mxu0 %v3134
  %v3202 = vpop.f32.mrb[0].mxu0
  %v3203 = vadd.f32 0.0, %v3202
  %v3204 = vpop.f32.mrb[0].mxu0
  %3205 = vdwg.mxu0
  %v3207 = vsel %vm418, %v2766, 0
  %3209 = vmatprep.subr.mxu0 0.0
  %3210 = vmatpush1.msra.mxu0 %v2056
  %3211 = vmatprep.subr.mxu0 0.0
  %3212 = vmatpush1.msra.mxu0 0.0
  %3213 = vmatprep.subr.mxu0 0.0
  %3214 = vmatpush1.msra.mxu0 0.0
  %3215 = vmatprep.subr.mxu0 0.0
  %3216 = vmatpush1.msra.mxu0 0.0
  %3217 = vmatprep.subr.mxu0 0.0
  %3218 = vmatpush1.msra.mxu0 0.0
  %3219 = vmatprep.subr.mxu0 0.0
  %3220 = vmatpush1.msra.mxu0 0.0
  %3221 = vmatprep.subr.mxu0 0.0
  %3222 = vmatpush1.msra.mxu0 0.0
  %3223 = vmatprep.subr.mxu0 0.0
  %3224 = vmatpush1.msra.mxu0 0.0
  %3225 = vmatprep.subr.mxu0 0.0
  %3226 = vmatpush1.msra.mxu0 0.0
  %3227 = vmatprep.subr.mxu0 0.0
  %3228 = vmatpush1.msra.mxu0 0.0
  %3229 = vmatprep.subr.mxu0 0.0
  %3230 = vmatpush1.msra.mxu0 0.0
  %3231 = vmatprep.subr.mxu0 0.0
  %3232 = vmatpush1.msra.mxu0 0.0
  %3233 = vmatprep.subr.mxu0 0.0
  %3234 = vmatpush1.msra.mxu0 0.0
  %3235 = vmatprep.subr.mxu0 0.0
  %3236 = vmatpush1.msra.mxu0 0.0
  %3237 = vmatprep.subr.mxu0 0.0
  %3238 = vmatpush1.msra.mxu0 0.0
  %3239 = vmatprep.subr.mxu0 0.0
  %3240 = vmatpush1.msra.mxu0 0.0
  %3241 = vmatprep.subr.mxu0 0.0
  %3242 = vmatpush1.msra.mxu0 0.0
  %3243 = vmatprep.subr.mxu0 0.0
  %3244 = vmatpush1.msra.mxu0 0.0
  %3245 = vmatprep.subr.mxu0 0.0
  %3246 = vmatpush1.msra.mxu0 0.0
  %3247 = vmatprep.subr.mxu0 0.0
  %3248 = vmatpush1.msra.mxu0 0.0
  %3249 = vmatprep.subr.mxu0 0.0
  %3250 = vmatpush1.msra.mxu0 0.0
  %3251 = vmatprep.subr.mxu0 0.0
  %3252 = vmatpush1.msra.mxu0 0.0
  %3253 = vmatprep.subr.mxu0 0.0
  %3254 = vmatpush1.msra.mxu0 0.0
  %3255 = vmatprep.subr.mxu0 0.0
  %3256 = vmatpush1.msra.mxu0 0.0
  %3257 = vmatprep.subr.mxu0 0.0
  %3258 = vmatpush1.msra.mxu0 0.0
  %3259 = vmatprep.subr.mxu0 0.0
  %3260 = vmatpush1.msra.mxu0 0.0
  %3261 = vmatprep.subr.mxu0 0.0
  %3262 = vmatpush1.msra.mxu0 0.0
  %3263 = vmatprep.subr.mxu0 0.0
  %3264 = vmatpush1.msra.mxu0 0.0
  %3265 = vmatprep.subr.mxu0 0.0
  %3266 = vmatpush1.msra.mxu0 0.0
  %3267 = vmatprep.subr.mxu0 0.0
  %3268 = vmatpush1.msra.mxu0 0.0
  %3269 = vmatprep.subr.mxu0 0.0
  %3270 = vmatpush1.msra.mxu0 0.0
  %3271 = vmatprep.subr.mxu0 0.0
  %3272 = vmatpush1.msra.mxu0 0.0
  %3273 = vmatprep.mubr.f32.mxu0 0.0
  %3274 = vmatmul.mubr.f32.gmra.mrb[0].mxu0 %v3207
  %v3275 = vpop.f32.mrb[0].mxu0
  %v3276 = vadd.f32 0.0, %v3275
  %v3277 = vpop.f32.mrb[0].mxu0
  %3278 = vdwg.mxu0
  %v3280 = vsel %vm418, %v2767, 0
  %3282 = vmatprep.subr.mxu0 0.0
  %3283 = vmatpush1.msra.mxu0 %v2061
  %3284 = vmatprep.subr.mxu0 0.0
  %3285 = vmatpush1.msra.mxu0 0.0
  %3286 = vmatprep.subr.mxu0 0.0
  %3287 = vmatpush1.msra.mxu0 0.0
  %3288 = vmatprep.subr.mxu0 0.0
  %3289 = vmatpush1.msra.mxu0 0.0
  %3290 = vmatprep.subr.mxu0 0.0
  %3291 = vmatpush1.msra.mxu0 0.0
  %3292 = vmatprep.subr.mxu0 0.0
  %3293 = vmatpush1.msra.mxu0 0.0
  %3294 = vmatprep.subr.mxu0 0.0
  %3295 = vmatpush1.msra.mxu0 0.0
  %3296 = vmatprep.subr.mxu0 0.0
  %3297 = vmatpush1.msra.mxu0 0.0
  %3298 = vmatprep.subr.mxu0 0.0
  %3299 = vmatpush1.msra.mxu0 0.0
  %3300 = vmatprep.subr.mxu0 0.0
  %3301 = vmatpush1.msra.mxu0 0.0
  %3302 = vmatprep.subr.mxu0 0.0
  %3303 = vmatpush1.msra.mxu0 0.0
  %3304 = vmatprep.subr.mxu0 0.0
  %3305 = vmatpush1.msra.mxu0 0.0
  %3306 = vmatprep.subr.mxu0 0.0
  %3307 = vmatpush1.msra.mxu0 0.0
  %3308 = vmatprep.subr.mxu0 0.0
  %3309 = vmatpush1.msra.mxu0 0.0
  %3310 = vmatprep.subr.mxu0 0.0
  %3311 = vmatpush1.msra.mxu0 0.0
  %3312 = vmatprep.subr.mxu0 0.0
  %3313 = vmatpush1.msra.mxu0 0.0
  %3314 = vmatprep.subr.mxu0 0.0
  %3315 = vmatpush1.msra.mxu0 0.0
  %3316 = vmatprep.subr.mxu0 0.0
  %3317 = vmatpush1.msra.mxu0 0.0
  %3318 = vmatprep.subr.mxu0 0.0
  %3319 = vmatpush1.msra.mxu0 0.0
  %3320 = vmatprep.subr.mxu0 0.0
  %3321 = vmatpush1.msra.mxu0 0.0
  %3322 = vmatprep.subr.mxu0 0.0
  %3323 = vmatpush1.msra.mxu0 0.0
  %3324 = vmatprep.subr.mxu0 0.0
  %3325 = vmatpush1.msra.mxu0 0.0
  %3326 = vmatprep.subr.mxu0 0.0
  %3327 = vmatpush1.msra.mxu0 0.0
  %3328 = vmatprep.subr.mxu0 0.0
  %3329 = vmatpush1.msra.mxu0 0.0
  %3330 = vmatprep.subr.mxu0 0.0
  %3331 = vmatpush1.msra.mxu0 0.0
  %3332 = vmatprep.subr.mxu0 0.0
  %3333 = vmatpush1.msra.mxu0 0.0
  %3334 = vmatprep.subr.mxu0 0.0
  %3335 = vmatpush1.msra.mxu0 0.0
  %3336 = vmatprep.subr.mxu0 0.0
  %3337 = vmatpush1.msra.mxu0 0.0
  %3338 = vmatprep.subr.mxu0 0.0
  %3339 = vmatpush1.msra.mxu0 0.0
  %3340 = vmatprep.subr.mxu0 0.0
  %3341 = vmatpush1.msra.mxu0 0.0
  %3342 = vmatprep.subr.mxu0 0.0
  %3343 = vmatpush1.msra.mxu0 0.0
  %3344 = vmatprep.subr.mxu0 0.0
  %3345 = vmatpush1.msra.mxu0 0.0
  %3346 = vmatprep.mubr.f32.mxu0 0.0
  %3347 = vmatmul.mubr.f32.gmra.mrb[0].mxu0 %v3280
  %v3348 = vpop.f32.mrb[0].mxu0
  %v3349 = vadd.f32 0.0, %v3348
  %v3350 = vpop.f32.mrb[0].mxu0
  %3351 = vdwg.mxu0
  %s3352 = scalar_lea.vmem %s7, 8
  %v3353 = vld [vmem:[%s3352] sm:$0xff]
  %v3355 = vsel %vm418, %v2838, 0
  %v3358 = vsel %vm418, %v2911, 0
  %v3361 = vsel %vm418, %v2984, 0
  %v3364 = vsel %vm418, %v3057, 0
  %v3367 = vsel %vm418, %v3130, 0
  %v3370 = vsel %vm418, %v3203, 0
  %v3373 = vsel %vm418, %v3276, 0
  %v3376 = vsel %vm418, %v3349, 0
  %3378 = vmatprep.subr.mxu0 0.0
  %3379 = vmatpush1.msra.mxu0 %v3353
  %3380 = vmatprep.subr.mxu0 0.0
  %3381 = vmatpush1.msra.mxu0 0.0
  %3382 = vmatprep.subr.mxu0 0.0
  %3383 = vmatpush1.msra.mxu0 0.0
  %3384 = vmatprep.subr.mxu0 0.0
  %3385 = vmatpush1.msra.mxu0 0.0
  %3386 = vmatprep.subr.mxu0 0.0
  %3387 = vmatpush1.msra.mxu0 0.0
  %3388 = vmatprep.subr.mxu0 0.0
  %3389 = vmatpush1.msra.mxu0 0.0
  %3390 = vmatprep.subr.mxu0 0.0
  %3391 = vmatpush1.msra.mxu0 0.0
  %3392 = vmatprep.subr.mxu0 0.0
  %3393 = vmatpush1.msra.mxu0 0.0
  %3394 = vmatprep.subr.mxu0 0.0
  %3395 = vmatpush1.msra.mxu0 0.0
  %3396 = vmatprep.subr.mxu0 0.0
  %3397 = vmatpush1.msra.mxu0 0.0
  %3398 = vmatprep.subr.mxu0 0.0
  %3399 = vmatpush1.msra.mxu0 0.0
  %3400 = vmatprep.subr.mxu0 0.0
  %3401 = vmatpush1.msra.mxu0 0.0
  %3402 = vmatprep.subr.mxu0 0.0
  %3403 = vmatpush1.msra.mxu0 0.0
  %3404 = vmatprep.subr.mxu0 0.0
  %3405 = vmatpush1.msra.mxu0 0.0
  %3406 = vmatprep.subr.mxu0 0.0
  %3407 = vmatpush1.msra.mxu0 0.0
  %3408 = vmatprep.subr.mxu0 0.0
  %3409 = vmatpush1.msra.mxu0 0.0
  %3410 = vmatprep.subr.mxu0 0.0
  %3411 = vmatpush1.msra.mxu0 0.0
  %3412 = vmatprep.subr.mxu0 0.0
  %3413 = vmatpush1.msra.mxu0 0.0
  %3414 = vmatprep.subr.mxu0 0.0
  %3415 = vmatpush1.msra.mxu0 0.0
  %3416 = vmatprep.subr.mxu0 0.0
  %3417 = vmatpush1.msra.mxu0 0.0
  %3418 = vmatprep.subr.mxu0 0.0
  %3419 = vmatpush1.msra.mxu0 0.0
  %3420 = vmatprep.subr.mxu0 0.0
  %3421 = vmatpush1.msra.mxu0 0.0
  %3422 = vmatprep.subr.mxu0 0.0
  %3423 = vmatpush1.msra.mxu0 0.0
  %3424 = vmatprep.subr.mxu0 0.0
  %3425 = vmatpush1.msra.mxu0 0.0
  %3426 = vmatprep.subr.mxu0 0.0
  %3427 = vmatpush1.msra.mxu0 0.0
  %3428 = vmatprep.subr.mxu0 0.0
  %3429 = vmatpush1.msra.mxu0 0.0
  %3430 = vmatprep.subr.mxu0 0.0
  %3431 = vmatpush1.msra.mxu0 0.0
  %3432 = vmatprep.subr.mxu0 0.0
  %3433 = vmatpush1.msra.mxu0 0.0
  %3434 = vmatprep.subr.mxu0 0.0
  %3435 = vmatpush1.msra.mxu0 0.0
  %3436 = vmatprep.subr.mxu0 0.0
  %3437 = vmatpush1.msra.mxu0 0.0
  %3438 = vmatprep.subr.mxu0 0.0
  %3439 = vmatpush1.msra.mxu0 0.0
  %3440 = vmatprep.subr.mxu0 0.0
  %3441 = vmatpush1.msra.mxu0 0.0
  %3442 = vmatprep.mubr.f32.mxu0 0.0
  %3443 = vmatmul.mubr.f32.gmra.mrb[0].mxu0 %v3355
  %v3444 = vpop.f32.mrb[0].mxu0
  %v3445 = vadd.f32 0.0, %v3444
  %v3446 = vpop.f32.mrb[0].mxu0
  %3447 = vmatprep.mubr.f32.mxu0 0.0
  %3448 = vmatmul.mubr.f32.gmra.mrb[0].mxu0 %v3358
  %v3449 = vpop.f32.mrb[0].mxu0
  %v3450 = vadd.f32 0.0, %v3449
  %v3451 = vpop.f32.mrb[0].mxu0
  %3452 = vmatprep.mubr.f32.mxu0 0.0
  %3453 = vmatmul.mubr.f32.gmra.mrb[0].mxu0 %v3361
  %v3454 = vpop.f32.mrb[0].mxu0
  %v3455 = vadd.f32 0.0, %v3454
  %v3456 = vpop.f32.mrb[0].mxu0
  %3457 = vmatprep.mubr.f32.mxu0 0.0
  %3458 = vmatmul.mubr.f32.gmra.mrb[0].mxu0 %v3364
  %v3459 = vpop.f32.mrb[0].mxu0
  %v3460 = vadd.f32 0.0, %v3459
  %v3461 = vpop.f32.mrb[0].mxu0
  %3462 = vmatprep.mubr.f32.mxu0 0.0
  %3463 = vmatmul.mubr.f32.gmra.mrb[0].mxu0 %v3367
  %v3464 = vpop.f32.mrb[0].mxu0
  %v3465 = vadd.f32 0.0, %v3464
  %v3466 = vpop.f32.mrb[0].mxu0
  %3467 = vmatprep.mubr.f32.mxu0 0.0
  %3468 = vmatmul.mubr.f32.gmra.mrb[0].mxu0 %v3370
  %v3469 = vpop.f32.mrb[0].mxu0
  %v3470 = vadd.f32 0.0, %v3469
  %v3471 = vpop.f32.mrb[0].mxu0
  %3472 = vmatprep.mubr.f32.mxu0 0.0
  %3473 = vmatmul.mubr.f32.gmra.mrb[0].mxu0 %v3373
  %v3474 = vpop.f32.mrb[0].mxu0
  %v3475 = vadd.f32 0.0, %v3474
  %v3476 = vpop.f32.mrb[0].mxu0
  %3477 = vmatprep.mubr.f32.mxu0 0.0
  %3478 = vmatmul.mubr.f32.gmra.mrb[0].mxu0 %v3376
  %v3479 = vpop.f32.mrb[0].mxu0
  %v3480 = vadd.f32 0.0, %v3479
  %v3481 = vpop.f32.mrb[0].mxu0
  %3482 = vdwg.mxu0
  %v3484 = vsel %vm418, %v1195, 0
  %v3487 = vsel %vm418, %v1268, 0
  %v3490 = vsel %vm418, %v1341, 0
  %v3493 = vsel %vm418, %v1414, 0
  %v3496 = vsel %vm418, %v1487, 0
  %v3499 = vsel %vm418, %v1560, 0
  %v3502 = vsel %vm418, %v1633, 0
  %v3505 = vsel %vm418, %v1706, 0
  %3507 = vmatprep.subr.mxu0 0.0
  %3508 = vmatpush1.msra.mxu0 %v1709
  %3509 = vmatprep.subr.mxu0 0.0
  %3510 = vmatpush1.msra.mxu0 0.0
  %3511 = vmatprep.subr.mxu0 0.0
  %3512 = vmatpush1.msra.mxu0 0.0
  %3513 = vmatprep.subr.mxu0 0.0
  %3514 = vmatpush1.msra.mxu0 0.0
  %3515 = vmatprep.subr.mxu0 0.0
  %3516 = vmatpush1.msra.mxu0 0.0
  %3517 = vmatprep.subr.mxu0 0.0
  %3518 = vmatpush1.msra.mxu0 0.0
  %3519 = vmatprep.subr.mxu0 0.0
  %3520 = vmatpush1.msra.mxu0 0.0
  %3521 = vmatprep.subr.mxu0 0.0
  %3522 = vmatpush1.msra.mxu0 0.0
  %3523 = vmatprep.subr.mxu0 0.0
  %3524 = vmatpush1.msra.mxu0 0.0
  %3525 = vmatprep.subr.mxu0 0.0
  %3526 = vmatpush1.msra.mxu0 0.0
  %3527 = vmatprep.subr.mxu0 0.0
  %3528 = vmatpush1.msra.mxu0 0.0
  %3529 = vmatprep.subr.mxu0 0.0
  %3530 = vmatpush1.msra.mxu0 0.0
  %3531 = vmatprep.subr.mxu0 0.0
  %3532 = vmatpush1.msra.mxu0 0.0
  %3533 = vmatprep.subr.mxu0 0.0
  %3534 = vmatpush1.msra.mxu0 0.0
  %3535 = vmatprep.subr.mxu0 0.0
  %3536 = vmatpush1.msra.mxu0 0.0
  %3537 = vmatprep.subr.mxu0 0.0
  %3538 = vmatpush1.msra.mxu0 0.0
  %3539 = vmatprep.subr.mxu0 0.0
  %3540 = vmatpush1.msra.mxu0 0.0
  %3541 = vmatprep.subr.mxu0 0.0
  %3542 = vmatpush1.msra.mxu0 0.0
  %3543 = vmatprep.subr.mxu0 0.0
  %3544 = vmatpush1.msra.mxu0 0.0
  %3545 = vmatprep.subr.mxu0 0.0
  %3546 = vmatpush1.msra.mxu0 0.0
  %3547 = vmatprep.subr.mxu0 0.0
  %3548 = vmatpush1.msra.mxu0 0.0
  %3549 = vmatprep.subr.mxu0 0.0
  %3550 = vmatpush1.msra.mxu0 0.0
  %3551 = vmatprep.subr.mxu0 0.0
  %3552 = vmatpush1.msra.mxu0 0.0
  %3553 = vmatprep.subr.mxu0 0.0
  %3554 = vmatpush1.msra.mxu0 0.0
  %3555 = vmatprep.subr.mxu0 0.0
  %3556 = vmatpush1.msra.mxu0 0.0
  %3557 = vmatprep.subr.mxu0 0.0
  %3558 = vmatpush1.msra.mxu0 0.0
  %3559 = vmatprep.subr.mxu0 0.0
  %3560 = vmatpush1.msra.mxu0 0.0
  %3561 = vmatprep.subr.mxu0 0.0
  %3562 = vmatpush1.msra.mxu0 0.0
  %3563 = vmatprep.subr.mxu0 0.0
  %3564 = vmatpush1.msra.mxu0 0.0
  %3565 = vmatprep.subr.mxu0 0.0
  %3566 = vmatpush1.msra.mxu0 0.0
  %3567 = vmatprep.subr.mxu0 0.0
  %3568 = vmatpush1.msra.mxu0 0.0
  %3569 = vmatprep.subr.mxu0 0.0
  %3570 = vmatpush1.msra.mxu0 0.0
  %3571 = vmatprep.mubr.f32.mxu0 0.0
  %3572 = vmatmul.mubr.f32.gmra.mrb[0].mxu0 %v3484
  %v3573 = vpop.f32.mrb[0].mxu0
  %v3574 = vadd.f32 %v3445, %v3573
  %v3575 = vpop.f32.mrb[0].mxu0
  %3576 = vmatprep.mubr.f32.mxu0 0.0
  %3577 = vmatmul.mubr.f32.gmra.mrb[0].mxu0 %v3487
  %v3578 = vpop.f32.mrb[0].mxu0
  %v3579 = vadd.f32 %v3450, %v3578
  %v3580 = vpop.f32.mrb[0].mxu0
  %3581 = vmatprep.mubr.f32.mxu0 0.0
  %3582 = vmatmul.mubr.f32.gmra.mrb[0].mxu0 %v3490
  %v3583 = vpop.f32.mrb[0].mxu0
  %v3584 = vadd.f32 %v3455, %v3583
  %v3585 = vpop.f32.mrb[0].mxu0
  %3586 = vmatprep.mubr.f32.mxu0 0.0
  %3587 = vmatmul.mubr.f32.gmra.mrb[0].mxu0 %v3493
  %v3588 = vpop.f32.mrb[0].mxu0
  %v3589 = vadd.f32 %v3460, %v3588
  %v3590 = vpop.f32.mrb[0].mxu0
  %3591 = vmatprep.mubr.f32.mxu0 0.0
  %3592 = vmatmul.mubr.f32.gmra.mrb[0].mxu0 %v3496
  %v3593 = vpop.f32.mrb[0].mxu0
  %v3594 = vadd.f32 %v3465, %v3593
  %v3595 = vpop.f32.mrb[0].mxu0
  %3596 = vmatprep.mubr.f32.mxu0 0.0
  %3597 = vmatmul.mubr.f32.gmra.mrb[0].mxu0 %v3499
  %v3598 = vpop.f32.mrb[0].mxu0
  %v3599 = vadd.f32 %v3470, %v3598
  %v3600 = vpop.f32.mrb[0].mxu0
  %3601 = vmatprep.mubr.f32.mxu0 0.0
  %3602 = vmatmul.mubr.f32.gmra.mrb[0].mxu0 %v3502
  %v3603 = vpop.f32.mrb[0].mxu0
  %v3604 = vadd.f32 %v3475, %v3603
  %v3605 = vpop.f32.mrb[0].mxu0
  %3606 = vmatprep.mubr.f32.mxu0 0.0
  %3607 = vmatmul.mubr.f32.gmra.mrb[0].mxu0 %v3505
  %v3608 = vpop.f32.mrb[0].mxu0
  %v3609 = vadd.f32 %v3480, %v3608
  %v3610 = vpop.f32.mrb[0].mxu0
  %3611 = vdwg.mxu0
  %s3612 = scalar_lea.vmem %s1, 64
  %v3613 = vld [vmem:[%s3612] sm:$0xff]
  %v3614 = vld [vmem:[%s3612 + $0x8] sm:$0xff]
  %v3615 = vld [vmem:[%s3612 + $0x10] sm:$0xff]
  %v3616 = vld [vmem:[%s3612 + $0x18] sm:$0xff]
  %s3617 = scalar_lea.vmem %s4, 2
  %v3618 = vld [vmem:[%s3617] sm:$0x1]
  %v3620 = vlaneseq
  %v3621 = vshrl.u32 %v3620, 7
  %v3622 = vsub.s32 0, %v3621
  %v3623 = vrot.slane %v3618, %v3622
  %3625 = vmatprep.subr.mxu0 0.0
  %3626 = vmatpush1.msra.mxu0 %v3613
  %3627 = vmatprep.subr.mxu0 0.0
  %3628 = vmatpush1.msra.mxu0 %v3614
  %3629 = vmatprep.subr.mxu0 0.0
  %3630 = vmatpush1.msra.mxu0 %v3615
  %3631 = vmatprep.subr.mxu0 0.0
  %3632 = vmatpush1.msra.mxu0 %v3616
  %3633 = vmatprep.subr.mxu0 0.0
  %3634 = vmatpush1.msra.mxu0 0.0
  %3635 = vmatprep.subr.mxu0 0.0
  %3636 = vmatpush1.msra.mxu0 0.0
  %3637 = vmatprep.subr.mxu0 0.0
  %3638 = vmatpush1.msra.mxu0 0.0
  %3639 = vmatprep.subr.mxu0 0.0
  %3640 = vmatpush1.msra.mxu0 0.0
  %3641 = vmatprep.subr.mxu0 0.0
  %3642 = vmatpush1.msra.mxu0 0.0
  %3643 = vmatprep.subr.mxu0 0.0
  %3644 = vmatpush1.msra.mxu0 0.0
  %3645 = vmatprep.subr.mxu0 0.0
  %3646 = vmatpush1.msra.mxu0 0.0
  %3647 = vmatprep.subr.mxu0 0.0
  %3648 = vmatpush1.msra.mxu0 0.0
  %3649 = vmatprep.subr.mxu0 0.0
  %3650 = vmatpush1.msra.mxu0 0.0
  %3651 = vmatprep.subr.mxu0 0.0
  %3652 = vmatpush1.msra.mxu0 0.0
  %3653 = vmatprep.subr.mxu0 0.0
  %3654 = vmatpush1.msra.mxu0 0.0
  %3655 = vmatprep.subr.mxu0 0.0
  %3656 = vmatpush1.msra.mxu0 0.0
  %3657 = vmatprep.subr.mxu0 0.0
  %3658 = vmatpush1.msra.mxu0 0.0
  %3659 = vmatprep.subr.mxu0 0.0
  %3660 = vmatpush1.msra.mxu0 0.0
  %3661 = vmatprep.subr.mxu0 0.0
  %3662 = vmatpush1.msra.mxu0 0.0
  %3663 = vmatprep.subr.mxu0 0.0
  %3664 = vmatpush1.msra.mxu0 0.0
  %3665 = vmatprep.subr.mxu0 0.0
  %3666 = vmatpush1.msra.mxu0 0.0
  %3667 = vmatprep.subr.mxu0 0.0
  %3668 = vmatpush1.msra.mxu0 0.0
  %3669 = vmatprep.subr.mxu0 0.0
  %3670 = vmatpush1.msra.mxu0 0.0
  %3671 = vmatprep.subr.mxu0 0.0
  %3672 = vmatpush1.msra.mxu0 0.0
  %3673 = vmatprep.subr.mxu0 0.0
  %3674 = vmatpush1.msra.mxu0 0.0
  %3675 = vmatprep.subr.mxu0 0.0
  %3676 = vmatpush1.msra.mxu0 0.0
  %3677 = vmatprep.subr.mxu0 0.0
  %3678 = vmatpush1.msra.mxu0 0.0
  %3679 = vmatprep.subr.mxu0 0.0
  %3680 = vmatpush1.msra.mxu0 0.0
  %3681 = vmatprep.subr.mxu0 0.0
  %3682 = vmatpush1.msra.mxu0 0.0
  %3683 = vmatprep.subr.mxu0 0.0
  %3684 = vmatpush1.msra.mxu0 0.0
  %3685 = vmatprep.subr.mxu0 0.0
  %3686 = vmatpush1.msra.mxu0 0.0
  %3687 = vmatprep.subr.mxu0 0.0
  %3688 = vmatpush1.msra.mxu0 0.0
  %3689 = vmatprep.mubr.f32.mxu0 0.0
  %3690 = vmatmul.mubr.f32.gmra.mrb[0].mxu0 %v58
  %v3691 = vpop.f32.mrb[0].mxu0
  %v3692 = vadd.f32 %v3623, %v3691
  %v3693 = vpop.f32.mrb[0].mxu0
  %3694 = vmatprep.mubr.f32.mxu0 0.0
  %3695 = vmatmul.mubr.f32.gmra.mrb[0].mxu0 %v61
  %v3696 = vpop.f32.mrb[0].mxu0
  %v3697 = vadd.f32 %v3623, %v3696
  %v3698 = vpop.f32.mrb[0].mxu0
  %3699 = vmatprep.mubr.f32.mxu0 0.0
  %3700 = vmatmul.mubr.f32.gmra.mrb[0].mxu0 %v64
  %v3701 = vpop.f32.mrb[0].mxu0
  %v3702 = vadd.f32 %v3623, %v3701
  %v3703 = vpop.f32.mrb[0].mxu0
  %3704 = vmatprep.mubr.f32.mxu0 0.0
  %3705 = vmatmul.mubr.f32.gmra.mrb[0].mxu0 %v67
  %v3706 = vpop.f32.mrb[0].mxu0
  %v3707 = vadd.f32 %v3623, %v3706
  %v3708 = vpop.f32.mrb[0].mxu0
  %3709 = vmatprep.mubr.f32.mxu0 0.0
  %3710 = vmatmul.mubr.f32.gmra.mrb[0].mxu0 %v70
  %v3711 = vpop.f32.mrb[0].mxu0
  %v3712 = vadd.f32 %v3623, %v3711
  %v3713 = vpop.f32.mrb[0].mxu0
  %3714 = vmatprep.mubr.f32.mxu0 0.0
  %3715 = vmatmul.mubr.f32.gmra.mrb[0].mxu0 %v73
  %v3716 = vpop.f32.mrb[0].mxu0
  %v3717 = vadd.f32 %v3623, %v3716
  %v3718 = vpop.f32.mrb[0].mxu0
  %3719 = vmatprep.mubr.f32.mxu0 0.0
  %3720 = vmatmul.mubr.f32.gmra.mrb[0].mxu0 %v76
  %v3721 = vpop.f32.mrb[0].mxu0
  %v3722 = vadd.f32 %v3623, %v3721
  %v3723 = vpop.f32.mrb[0].mxu0
  %3724 = vmatprep.mubr.f32.mxu0 0.0
  %3725 = vmatmul.mubr.f32.gmra.mrb[0].mxu0 %v79
  %v3726 = vpop.f32.mrb[0].mxu0
  %v3727 = vadd.f32 %v3623, %v3726
  %v3728 = vpop.f32.mrb[0].mxu0
  %3729 = vdwg.mxu0
  %s3730 = scalar_lea.vmem %s2, 64
  %v3731 = vld [vmem:[%s3730] sm:$0xff]
  %v3732 = vld [vmem:[%s3730 + $0x8] sm:$0xff]
  %v3733 = vld [vmem:[%s3730 + $0x10] sm:$0xff]
  %v3734 = vld [vmem:[%s3730 + $0x18] sm:$0xff]
  %s3735 = scalar_lea.vmem %s5, 2
  %v3736 = vld [vmem:[%s3735] sm:$0x1]
  %v3738 = vlaneseq
  %v3739 = vshrl.u32 %v3738, 7
  %v3740 = vsub.s32 0, %v3739
  %v3741 = vrot.slane %v3736, %v3740
  %3743 = vmatprep.subr.mxu0 0.0
  %3744 = vmatpush1.msra.mxu0 %v3731
  %3745 = vmatprep.subr.mxu0 0.0
  %3746 = vmatpush1.msra.mxu0 %v3732
  %3747 = vmatprep.subr.mxu0 0.0
  %3748 = vmatpush1.msra.mxu0 %v3733
  %3749 = vmatprep.subr.mxu0 0.0
  %3750 = vmatpush1.msra.mxu0 %v3734
  %3751 = vmatprep.subr.mxu0 0.0
  %3752 = vmatpush1.msra.mxu0 0.0
  %3753 = vmatprep.subr.mxu0 0.0
  %3754 = vmatpush1.msra.mxu0 0.0
  %3755 = vmatprep.subr.mxu0 0.0
  %3756 = vmatpush1.msra.mxu0 0.0
  %3757 = vmatprep.subr.mxu0 0.0
  %3758 = vmatpush1.msra.mxu0 0.0
  %3759 = vmatprep.subr.mxu0 0.0
  %3760 = vmatpush1.msra.mxu0 0.0
  %3761 = vmatprep.subr.mxu0 0.0
  %3762 = vmatpush1.msra.mxu0 0.0
  %3763 = vmatprep.subr.mxu0 0.0
  %3764 = vmatpush1.msra.mxu0 0.0
  %3765 = vmatprep.subr.mxu0 0.0
  %3766 = vmatpush1.msra.mxu0 0.0
  %3767 = vmatprep.subr.mxu0 0.0
  %3768 = vmatpush1.msra.mxu0 0.0
  %3769 = vmatprep.subr.mxu0 0.0
  %3770 = vmatpush1.msra.mxu0 0.0
  %3771 = vmatprep.subr.mxu0 0.0
  %3772 = vmatpush1.msra.mxu0 0.0
  %3773 = vmatprep.subr.mxu0 0.0
  %3774 = vmatpush1.msra.mxu0 0.0
  %3775 = vmatprep.subr.mxu0 0.0
  %3776 = vmatpush1.msra.mxu0 0.0
  %3777 = vmatprep.subr.mxu0 0.0
  %3778 = vmatpush1.msra.mxu0 0.0
  %3779 = vmatprep.subr.mxu0 0.0
  %3780 = vmatpush1.msra.mxu0 0.0
  %3781 = vmatprep.subr.mxu0 0.0
  %3782 = vmatpush1.msra.mxu0 0.0
  %3783 = vmatprep.subr.mxu0 0.0
  %3784 = vmatpush1.msra.mxu0 0.0
  %3785 = vmatprep.subr.mxu0 0.0
  %3786 = vmatpush1.msra.mxu0 0.0
  %3787 = vmatprep.subr.mxu0 0.0
  %3788 = vmatpush1.msra.mxu0 0.0
  %3789 = vmatprep.subr.mxu0 0.0
  %3790 = vmatpush1.msra.mxu0 0.0
  %3791 = vmatprep.subr.mxu0 0.0
  %3792 = vmatpush1.msra.mxu0 0.0
  %3793 = vmatprep.subr.mxu0 0.0
  %3794 = vmatpush1.msra.mxu0 0.0
  %3795 = vmatprep.subr.mxu0 0.0
  %3796 = vmatpush1.msra.mxu0 0.0
  %3797 = vmatprep.subr.mxu0 0.0
  %3798 = vmatpush1.msra.mxu0 0.0
  %3799 = vmatprep.subr.mxu0 0.0
  %3800 = vmatpush1.msra.mxu0 0.0
  %3801 = vmatprep.subr.mxu0 0.0
  %3802 = vmatpush1.msra.mxu0 0.0
  %3803 = vmatprep.subr.mxu0 0.0
  %3804 = vmatpush1.msra.mxu0 0.0
  %3805 = vmatprep.subr.mxu0 0.0
  %3806 = vmatpush1.msra.mxu0 0.0
  %3807 = vmatprep.mubr.f32.mxu0 0.0
  %3808 = vmatmul.mubr.f32.gmra.mrb[0].mxu0 %v58
  %v3809 = vpop.f32.mrb[0].mxu0
  %v3810 = vadd.f32 %v3741, %v3809
  %v3811 = vpop.f32.mrb[0].mxu0
  %3812 = vmatprep.mubr.f32.mxu0 0.0
  %3813 = vmatmul.mubr.f32.gmra.mrb[0].mxu0 %v61
  %v3814 = vpop.f32.mrb[0].mxu0
  %v3815 = vadd.f32 %v3741, %v3814
  %v3816 = vpop.f32.mrb[0].mxu0
  %3817 = vmatprep.mubr.f32.mxu0 0.0
  %3818 = vmatmul.mubr.f32.gmra.mrb[0].mxu0 %v64
  %v3819 = vpop.f32.mrb[0].mxu0
  %v3820 = vadd.f32 %v3741, %v3819
  %v3821 = vpop.f32.mrb[0].mxu0
  %3822 = vmatprep.mubr.f32.mxu0 0.0
  %3823 = vmatmul.mubr.f32.gmra.mrb[0].mxu0 %v67
  %v3824 = vpop.f32.mrb[0].mxu0
  %v3825 = vadd.f32 %v3741, %v3824
  %v3826 = vpop.f32.mrb[0].mxu0
  %3827 = vmatprep.mubr.f32.mxu0 0.0
  %3828 = vmatmul.mubr.f32.gmra.mrb[0].mxu0 %v70
  %v3829 = vpop.f32.mrb[0].mxu0
  %v3830 = vadd.f32 %v3741, %v3829
  %v3831 = vpop.f32.mrb[0].mxu0
  %3832 = vmatprep.mubr.f32.mxu0 0.0
  %3833 = vmatmul.mubr.f32.gmra.mrb[0].mxu0 %v73
  %v3834 = vpop.f32.mrb[0].mxu0
  %v3835 = vadd.f32 %v3741, %v3834
  %v3836 = vpop.f32.mrb[0].mxu0
  %3837 = vmatprep.mubr.f32.mxu0 0.0
  %3838 = vmatmul.mubr.f32.gmra.mrb[0].mxu0 %v76
  %v3839 = vpop.f32.mrb[0].mxu0
  %v3840 = vadd.f32 %v3741, %v3839
  %v3841 = vpop.f32.mrb[0].mxu0
  %3842 = vmatprep.mubr.f32.mxu0 0.0
  %3843 = vmatmul.mubr.f32.gmra.mrb[0].mxu0 %v79
  %v3844 = vpop.f32.mrb[0].mxu0
  %v3845 = vadd.f32 %v3741, %v3844
  %v3846 = vpop.f32.mrb[0].mxu0
  %3847 = vdwg.mxu0
  %s3848 = scalar_lea.vmem %s3, 64
  %v3849 = vld [vmem:[%s3848] sm:$0xff]
  %v3850 = vld [vmem:[%s3848 + $0x8] sm:$0xff]
  %v3851 = vld [vmem:[%s3848 + $0x10] sm:$0xff]
  %v3852 = vld [vmem:[%s3848 + $0x18] sm:$0xff]
  %s3853 = scalar_lea.vmem %s6, 2
  %v3854 = vld [vmem:[%s3853] sm:$0x1]
  %v3856 = vlaneseq
  %v3857 = vshrl.u32 %v3856, 7
  %v3858 = vsub.s32 0, %v3857
  %v3859 = vrot.slane %v3854, %v3858
  %3861 = vmatprep.subr.mxu0 0.0
  %3862 = vmatpush1.msra.mxu0 %v3849
  %3863 = vmatprep.subr.mxu0 0.0
  %3864 = vmatpush1.msra.mxu0 %v3850
  %3865 = vmatprep.subr.mxu0 0.0
  %3866 = vmatpush1.msra.mxu0 %v3851
  %3867 = vmatprep.subr.mxu0 0.0
  %3868 = vmatpush1.msra.mxu0 %v3852
  %3869 = vmatprep.subr.mxu0 0.0
  %3870 = vmatpush1.msra.mxu0 0.0
  %3871 = vmatprep.subr.mxu0 0.0
  %3872 = vmatpush1.msra.mxu0 0.0
  %3873 = vmatprep.subr.mxu0 0.0
  %3874 = vmatpush1.msra.mxu0 0.0
  %3875 = vmatprep.subr.mxu0 0.0
  %3876 = vmatpush1.msra.mxu0 0.0
  %3877 = vmatprep.subr.mxu0 0.0
  %3878 = vmatpush1.msra.mxu0 0.0
  %3879 = vmatprep.subr.mxu0 0.0
  %3880 = vmatpush1.msra.mxu0 0.0
  %3881 = vmatprep.subr.mxu0 0.0
  %3882 = vmatpush1.msra.mxu0 0.0
  %3883 = vmatprep.subr.mxu0 0.0
  %3884 = vmatpush1.msra.mxu0 0.0
  %3885 = vmatprep.subr.mxu0 0.0
  %3886 = vmatpush1.msra.mxu0 0.0
  %3887 = vmatprep.subr.mxu0 0.0
  %3888 = vmatpush1.msra.mxu0 0.0
  %3889 = vmatprep.subr.mxu0 0.0
  %3890 = vmatpush1.msra.mxu0 0.0
  %3891 = vmatprep.subr.mxu0 0.0
  %3892 = vmatpush1.msra.mxu0 0.0
  %3893 = vmatprep.subr.mxu0 0.0
  %3894 = vmatpush1.msra.mxu0 0.0
  %3895 = vmatprep.subr.mxu0 0.0
  %3896 = vmatpush1.msra.mxu0 0.0
  %3897 = vmatprep.subr.mxu0 0.0
  %3898 = vmatpush1.msra.mxu0 0.0
  %3899 = vmatprep.subr.mxu0 0.0
  %3900 = vmatpush1.msra.mxu0 0.0
  %3901 = vmatprep.subr.mxu0 0.0
  %3902 = vmatpush1.msra.mxu0 0.0
  %3903 = vmatprep.subr.mxu0 0.0
  %3904 = vmatpush1.msra.mxu0 0.0
  %3905 = vmatprep.subr.mxu0 0.0
  %3906 = vmatpush1.msra.mxu0 0.0
  %3907 = vmatprep.subr.mxu0 0.0
  %3908 = vmatpush1.msra.mxu0 0.0
  %3909 = vmatprep.subr.mxu0 0.0
  %3910 = vmatpush1.msra.mxu0 0.0
  %3911 = vmatprep.subr.mxu0 0.0
  %3912 = vmatpush1.msra.mxu0 0.0
  %3913 = vmatprep.subr.mxu0 0.0
  %3914 = vmatpush1.msra.mxu0 0.0
  %3915 = vmatprep.subr.mxu0 0.0
  %3916 = vmatpush1.msra.mxu0 0.0
  %3917 = vmatprep.subr.mxu0 0.0
  %3918 = vmatpush1.msra.mxu0 0.0
  %3919 = vmatprep.subr.mxu0 0.0
  %3920 = vmatpush1.msra.mxu0 0.0
  %3921 = vmatprep.subr.mxu0 0.0
  %3922 = vmatpush1.msra.mxu0 0.0
  %3923 = vmatprep.subr.mxu0 0.0
  %3924 = vmatpush1.msra.mxu0 0.0
  %3925 = vmatprep.mubr.f32.mxu0 0.0
  %3926 = vmatmul.mubr.f32.gmra.mrb[0].mxu0 %v58
  %v3927 = vpop.f32.mrb[0].mxu0
  %v3928 = vadd.f32 %v3859, %v3927
  %v3929 = vpop.f32.mrb[0].mxu0
  %3930 = vmatprep.mubr.f32.mxu0 0.0
  %3931 = vmatmul.mubr.f32.gmra.mrb[0].mxu0 %v61
  %v3932 = vpop.f32.mrb[0].mxu0
  %v3933 = vadd.f32 %v3859, %v3932
  %v3934 = vpop.f32.mrb[0].mxu0
  %3935 = vmatprep.mubr.f32.mxu0 0.0
  %3936 = vmatmul.mubr.f32.gmra.mrb[0].mxu0 %v64
  %v3937 = vpop.f32.mrb[0].mxu0
  %v3938 = vadd.f32 %v3859, %v3937
  %v3939 = vpop.f32.mrb[0].mxu0
  %3940 = vmatprep.mubr.f32.mxu0 0.0
  %3941 = vmatmul.mubr.f32.gmra.mrb[0].mxu0 %v67
  %v3942 = vpop.f32.mrb[0].mxu0
  %v3943 = vadd.f32 %v3859, %v3942
  %v3944 = vpop.f32.mrb[0].mxu0
  %3945 = vmatprep.mubr.f32.mxu0 0.0
  %3946 = vmatmul.mubr.f32.gmra.mrb[0].mxu0 %v70
  %v3947 = vpop.f32.mrb[0].mxu0
  %v3948 = vadd.f32 %v3859, %v3947
  %v3949 = vpop.f32.mrb[0].mxu0
  %3950 = vmatprep.mubr.f32.mxu0 0.0
  %3951 = vmatmul.mubr.f32.gmra.mrb[0].mxu0 %v73
  %v3952 = vpop.f32.mrb[0].mxu0
  %v3953 = vadd.f32 %v3859, %v3952
  %v3954 = vpop.f32.mrb[0].mxu0
  %3955 = vmatprep.mubr.f32.mxu0 0.0
  %3956 = vmatmul.mubr.f32.gmra.mrb[0].mxu0 %v76
  %v3957 = vpop.f32.mrb[0].mxu0
  %v3958 = vadd.f32 %v3859, %v3957
  %v3959 = vpop.f32.mrb[0].mxu0
  %3960 = vmatprep.mubr.f32.mxu0 0.0
  %3961 = vmatmul.mubr.f32.gmra.mrb[0].mxu0 %v79
  %v3962 = vpop.f32.mrb[0].mxu0
  %v3963 = vadd.f32 %v3859, %v3962
  %v3964 = vpop.f32.mrb[0].mxu0
  %3965 = vdwg.mxu0
  %v3967 = vsel %vm418, %v3692, 0
  %v3970 = vsel %vm418, %v3810, 0
  %3972 = vmatprep.subr.mxu0 0.0
  %3973 = vmatpush1.xpose.msra.mxu0 %v3970
  %3974 = vmatprep.subr.mxu0 0.0
  %3975 = vmatpush1.xpose.msra.mxu0 0.0
  %3976 = vmatprep.subr.mxu0 0.0
  %3977 = vmatpush1.xpose.msra.mxu0 0.0
  %3978 = vmatprep.subr.mxu0 0.0
  %3979 = vmatpush1.xpose.msra.mxu0 0.0
  %3980 = vmatprep.subr.mxu0 0.0
  %3981 = vmatpush1.xpose.msra.mxu0 0.0
  %3982 = vmatprep.subr.mxu0 0.0
  %3983 = vmatpush1.xpose.msra.mxu0 0.0
  %3984 = vmatprep.subr.mxu0 0.0
  %3985 = vmatpush1.xpose.msra.mxu0 0.0
  %3986 = vmatprep.subr.mxu0 0.0
  %3987 = vmatpush1.xpose.msra.mxu0 0.0
  %3988 = vmatprep.subr.mxu0 0.0
  %3989 = vmatpush1.xpose.msra.mxu0 0.0
  %3990 = vmatprep.subr.mxu0 0.0
  %3991 = vmatpush1.xpose.msra.mxu0 0.0
  %3992 = vmatprep.subr.mxu0 0.0
  %3993 = vmatpush1.xpose.msra.mxu0 0.0
  %3994 = vmatprep.subr.mxu0 0.0
  %3995 = vmatpush1.xpose.msra.mxu0 0.0
  %3996 = vmatprep.subr.mxu0 0.0
  %3997 = vmatpush1.xpose.msra.mxu0 0.0
  %3998 = vmatprep.subr.mxu0 0.0
  %3999 = vmatpush1.xpose.msra.mxu0 0.0
  %4000 = vmatprep.subr.mxu0 0.0
  %4001 = vmatpush1.xpose.msra.mxu0 0.0
  %4002 = vmatprep.subr.mxu0 0.0
  %4003 = vmatpush1.xpose.msra.mxu0 0.0
  %4004 = vmatprep.subr.mxu0 0.0
  %4005 = vmatpush1.xpose.msra.mxu0 0.0
  %4006 = vmatprep.subr.mxu0 0.0
  %4007 = vmatpush1.xpose.msra.mxu0 0.0
  %4008 = vmatprep.subr.mxu0 0.0
  %4009 = vmatpush1.xpose.msra.mxu0 0.0
  %4010 = vmatprep.subr.mxu0 0.0
  %4011 = vmatpush1.xpose.msra.mxu0 0.0
  %4012 = vmatprep.subr.mxu0 0.0
  %4013 = vmatpush1.xpose.msra.mxu0 0.0
  %4014 = vmatprep.subr.mxu0 0.0
  %4015 = vmatpush1.xpose.msra.mxu0 0.0
  %4016 = vmatprep.subr.mxu0 0.0
  %4017 = vmatpush1.xpose.msra.mxu0 0.0
  %4018 = vmatprep.subr.mxu0 0.0
  %4019 = vmatpush1.xpose.msra.mxu0 0.0
  %4020 = vmatprep.subr.mxu0 0.0
  %4021 = vmatpush1.xpose.msra.mxu0 0.0
  %4022 = vmatprep.subr.mxu0 0.0
  %4023 = vmatpush1.xpose.msra.mxu0 0.0
  %4024 = vmatprep.subr.mxu0 0.0
  %4025 = vmatpush1.xpose.msra.mxu0 0.0
  %4026 = vmatprep.subr.mxu0 0.0
  %4027 = vmatpush1.xpose.msra.mxu0 0.0
  %4028 = vmatprep.subr.mxu0 0.0
  %4029 = vmatpush1.xpose.msra.mxu0 0.0
  %4030 = vmatprep.subr.mxu0 0.0
  %4031 = vmatpush1.xpose.msra.mxu0 0.0
  %4032 = vmatprep.subr.mxu0 0.0
  %4033 = vmatpush1.xpose.msra.mxu0 0.0
  %4034 = vmatprep.subr.mxu0 0.0
  %4035 = vmatpush1.xpose.msra.mxu0 0.0
  %4036 = vmatprep.mubr.f32.mxu0 0.0
  %4037 = vmatmul.mubr.f32.gmra.mrb[0].mxu0 %v3967
  %v4038 = vpop.f32.mrb[0].mxu0
  %v4039 = vadd.f32 0.0, %v4038
  %v4040 = vpop.f32.mrb[0].mxu0
  %4041 = vdwg.mxu0
  %v4043 = vsel %vm418, %v3697, 0
  %v4046 = vsel %vm418, %v3815, 0
  %4048 = vmatprep.subr.mxu0 0.0
  %4049 = vmatpush1.xpose.msra.mxu0 %v4046
  %4050 = vmatprep.subr.mxu0 0.0
  %4051 = vmatpush1.xpose.msra.mxu0 0.0
  %4052 = vmatprep.subr.mxu0 0.0
  %4053 = vmatpush1.xpose.msra.mxu0 0.0
  %4054 = vmatprep.subr.mxu0 0.0
  %4055 = vmatpush1.xpose.msra.mxu0 0.0
  %4056 = vmatprep.subr.mxu0 0.0
  %4057 = vmatpush1.xpose.msra.mxu0 0.0
  %4058 = vmatprep.subr.mxu0 0.0
  %4059 = vmatpush1.xpose.msra.mxu0 0.0
  %4060 = vmatprep.subr.mxu0 0.0
  %4061 = vmatpush1.xpose.msra.mxu0 0.0
  %4062 = vmatprep.subr.mxu0 0.0
  %4063 = vmatpush1.xpose.msra.mxu0 0.0
  %4064 = vmatprep.subr.mxu0 0.0
  %4065 = vmatpush1.xpose.msra.mxu0 0.0
  %4066 = vmatprep.subr.mxu0 0.0
  %4067 = vmatpush1.xpose.msra.mxu0 0.0
  %4068 = vmatprep.subr.mxu0 0.0
  %4069 = vmatpush1.xpose.msra.mxu0 0.0
  %4070 = vmatprep.subr.mxu0 0.0
  %4071 = vmatpush1.xpose.msra.mxu0 0.0
  %4072 = vmatprep.subr.mxu0 0.0
  %4073 = vmatpush1.xpose.msra.mxu0 0.0
  %4074 = vmatprep.subr.mxu0 0.0
  %4075 = vmatpush1.xpose.msra.mxu0 0.0
  %4076 = vmatprep.subr.mxu0 0.0
  %4077 = vmatpush1.xpose.msra.mxu0 0.0
  %4078 = vmatprep.subr.mxu0 0.0
  %4079 = vmatpush1.xpose.msra.mxu0 0.0
  %4080 = vmatprep.subr.mxu0 0.0
  %4081 = vmatpush1.xpose.msra.mxu0 0.0
  %4082 = vmatprep.subr.mxu0 0.0
  %4083 = vmatpush1.xpose.msra.mxu0 0.0
  %4084 = vmatprep.subr.mxu0 0.0
  %4085 = vmatpush1.xpose.msra.mxu0 0.0
  %4086 = vmatprep.subr.mxu0 0.0
  %4087 = vmatpush1.xpose.msra.mxu0 0.0
  %4088 = vmatprep.subr.mxu0 0.0
  %4089 = vmatpush1.xpose.msra.mxu0 0.0
  %4090 = vmatprep.subr.mxu0 0.0
  %4091 = vmatpush1.xpose.msra.mxu0 0.0
  %4092 = vmatprep.subr.mxu0 0.0
  %4093 = vmatpush1.xpose.msra.mxu0 0.0
  %4094 = vmatprep.subr.mxu0 0.0
  %4095 = vmatpush1.xpose.msra.mxu0 0.0
  %4096 = vmatprep.subr.mxu0 0.0
  %4097 = vmatpush1.xpose.msra.mxu0 0.0
  %4098 = vmatprep.subr.mxu0 0.0
  %4099 = vmatpush1.xpose.msra.mxu0 0.0
  %4100 = vmatprep.subr.mxu0 0.0
  %4101 = vmatpush1.xpose.msra.mxu0 0.0
  %4102 = vmatprep.subr.mxu0 0.0
  %4103 = vmatpush1.xpose.msra.mxu0 0.0
  %4104 = vmatprep.subr.mxu0 0.0
  %4105 = vmatpush1.xpose.msra.mxu0 0.0
  %4106 = vmatprep.subr.mxu0 0.0
  %4107 = vmatpush1.xpose.msra.mxu0 0.0
  %4108 = vmatprep.subr.mxu0 0.0
  %4109 = vmatpush1.xpose.msra.mxu0 0.0
  %4110 = vmatprep.subr.mxu0 0.0
  %4111 = vmatpush1.xpose.msra.mxu0 0.0
  %4112 = vmatprep.mubr.f32.mxu0 0.0
  %4113 = vmatmul.mubr.f32.gmra.mrb[0].mxu0 %v4043
  %v4114 = vpop.f32.mrb[0].mxu0
  %v4115 = vadd.f32 0.0, %v4114
  %v4116 = vpop.f32.mrb[0].mxu0
  %4117 = vdwg.mxu0
  %v4119 = vsel %vm418, %v3702, 0
  %v4122 = vsel %vm418, %v3820, 0
  %4124 = vmatprep.subr.mxu0 0.0
  %4125 = vmatpush1.xpose.msra.mxu0 %v4122
  %4126 = vmatprep.subr.mxu0 0.0
  %4127 = vmatpush1.xpose.msra.mxu0 0.0
  %4128 = vmatprep.subr.mxu0 0.0
  %4129 = vmatpush1.xpose.msra.mxu0 0.0
  %4130 = vmatprep.subr.mxu0 0.0
  %4131 = vmatpush1.xpose.msra.mxu0 0.0
  %4132 = vmatprep.subr.mxu0 0.0
  %4133 = vmatpush1.xpose.msra.mxu0 0.0
  %4134 = vmatprep.subr.mxu0 0.0
  %4135 = vmatpush1.xpose.msra.mxu0 0.0
  %4136 = vmatprep.subr.mxu0 0.0
  %4137 = vmatpush1.xpose.msra.mxu0 0.0
  %4138 = vmatprep.subr.mxu0 0.0
  %4139 = vmatpush1.xpose.msra.mxu0 0.0
  %4140 = vmatprep.subr.mxu0 0.0
  %4141 = vmatpush1.xpose.msra.mxu0 0.0
  %4142 = vmatprep.subr.mxu0 0.0
  %4143 = vmatpush1.xpose.msra.mxu0 0.0
  %4144 = vmatprep.subr.mxu0 0.0
  %4145 = vmatpush1.xpose.msra.mxu0 0.0
  %4146 = vmatprep.subr.mxu0 0.0
  %4147 = vmatpush1.xpose.msra.mxu0 0.0
  %4148 = vmatprep.subr.mxu0 0.0
  %4149 = vmatpush1.xpose.msra.mxu0 0.0
  %4150 = vmatprep.subr.mxu0 0.0
  %4151 = vmatpush1.xpose.msra.mxu0 0.0
  %4152 = vmatprep.subr.mxu0 0.0
  %4153 = vmatpush1.xpose.msra.mxu0 0.0
  %4154 = vmatprep.subr.mxu0 0.0
  %4155 = vmatpush1.xpose.msra.mxu0 0.0
  %4156 = vmatprep.subr.mxu0 0.0
  %4157 = vmatpush1.xpose.msra.mxu0 0.0
  %4158 = vmatprep.subr.mxu0 0.0
  %4159 = vmatpush1.xpose.msra.mxu0 0.0
  %4160 = vmatprep.subr.mxu0 0.0
  %4161 = vmatpush1.xpose.msra.mxu0 0.0
  %4162 = vmatprep.subr.mxu0 0.0
  %4163 = vmatpush1.xpose.msra.mxu0 0.0
  %4164 = vmatprep.subr.mxu0 0.0
  %4165 = vmatpush1.xpose.msra.mxu0 0.0
  %4166 = vmatprep.subr.mxu0 0.0
  %4167 = vmatpush1.xpose.msra.mxu0 0.0
  %4168 = vmatprep.subr.mxu0 0.0
  %4169 = vmatpush1.xpose.msra.mxu0 0.0
  %4170 = vmatprep.subr.mxu0 0.0
  %4171 = vmatpush1.xpose.msra.mxu0 0.0
  %4172 = vmatprep.subr.mxu0 0.0
  %4173 = vmatpush1.xpose.msra.mxu0 0.0
  %4174 = vmatprep.subr.mxu0 0.0
  %4175 = vmatpush1.xpose.msra.mxu0 0.0
  %4176 = vmatprep.subr.mxu0 0.0
  %4177 = vmatpush1.xpose.msra.mxu0 0.0
  %4178 = vmatprep.subr.mxu0 0.0
  %4179 = vmatpush1.xpose.msra.mxu0 0.0
  %4180 = vmatprep.subr.mxu0 0.0
  %4181 = vmatpush1.xpose.msra.mxu0 0.0
  %4182 = vmatprep.subr.mxu0 0.0
  %4183 = vmatpush1.xpose.msra.mxu0 0.0
  %4184 = vmatprep.subr.mxu0 0.0
  %4185 = vmatpush1.xpose.msra.mxu0 0.0
  %4186 = vmatprep.subr.mxu0 0.0
  %4187 = vmatpush1.xpose.msra.mxu0 0.0
  %4188 = vmatprep.mubr.f32.mxu0 0.0
  %4189 = vmatmul.mubr.f32.gmra.mrb[0].mxu0 %v4119
  %v4190 = vpop.f32.mrb[0].mxu0
  %v4191 = vadd.f32 0.0, %v4190
  %v4192 = vpop.f32.mrb[0].mxu0
  %4193 = vdwg.mxu0
  %v4195 = vsel %vm418, %v3707, 0
  %v4198 = vsel %vm418, %v3825, 0
  %4200 = vmatprep.subr.mxu0 0.0
  %4201 = vmatpush1.xpose.msra.mxu0 %v4198
  %4202 = vmatprep.subr.mxu0 0.0
  %4203 = vmatpush1.xpose.msra.mxu0 0.0
  %4204 = vmatprep.subr.mxu0 0.0
  %4205 = vmatpush1.xpose.msra.mxu0 0.0
  %4206 = vmatprep.subr.mxu0 0.0
  %4207 = vmatpush1.xpose.msra.mxu0 0.0
  %4208 = vmatprep.subr.mxu0 0.0
  %4209 = vmatpush1.xpose.msra.mxu0 0.0
  %4210 = vmatprep.subr.mxu0 0.0
  %4211 = vmatpush1.xpose.msra.mxu0 0.0
  %4212 = vmatprep.subr.mxu0 0.0
  %4213 = vmatpush1.xpose.msra.mxu0 0.0
  %4214 = vmatprep.subr.mxu0 0.0
  %4215 = vmatpush1.xpose.msra.mxu0 0.0
  %4216 = vmatprep.subr.mxu0 0.0
  %4217 = vmatpush1.xpose.msra.mxu0 0.0
  %4218 = vmatprep.subr.mxu0 0.0
  %4219 = vmatpush1.xpose.msra.mxu0 0.0
  %4220 = vmatprep.subr.mxu0 0.0
  %4221 = vmatpush1.xpose.msra.mxu0 0.0
  %4222 = vmatprep.subr.mxu0 0.0
  %4223 = vmatpush1.xpose.msra.mxu0 0.0
  %4224 = vmatprep.subr.mxu0 0.0
  %4225 = vmatpush1.xpose.msra.mxu0 0.0
  %4226 = vmatprep.subr.mxu0 0.0
  %4227 = vmatpush1.xpose.msra.mxu0 0.0
  %4228 = vmatprep.subr.mxu0 0.0
  %4229 = vmatpush1.xpose.msra.mxu0 0.0
  %4230 = vmatprep.subr.mxu0 0.0
  %4231 = vmatpush1.xpose.msra.mxu0 0.0
  %4232 = vmatprep.subr.mxu0 0.0
  %4233 = vmatpush1.xpose.msra.mxu0 0.0
  %4234 = vmatprep.subr.mxu0 0.0
  %4235 = vmatpush1.xpose.msra.mxu0 0.0
  %4236 = vmatprep.subr.mxu0 0.0
  %4237 = vmatpush1.xpose.msra.mxu0 0.0
  %4238 = vmatprep.subr.mxu0 0.0
  %4239 = vmatpush1.xpose.msra.mxu0 0.0
  %4240 = vmatprep.subr.mxu0 0.0
  %4241 = vmatpush1.xpose.msra.mxu0 0.0
  %4242 = vmatprep.subr.mxu0 0.0
  %4243 = vmatpush1.xpose.msra.mxu0 0.0
  %4244 = vmatprep.subr.mxu0 0.0
  %4245 = vmatpush1.xpose.msra.mxu0 0.0
  %4246 = vmatprep.subr.mxu0 0.0
  %4247 = vmatpush1.xpose.msra.mxu0 0.0
  %4248 = vmatprep.subr.mxu0 0.0
  %4249 = vmatpush1.xpose.msra.mxu0 0.0
  %4250 = vmatprep.subr.mxu0 0.0
  %4251 = vmatpush1.xpose.msra.mxu0 0.0
  %4252 = vmatprep.subr.mxu0 0.0
  %4253 = vmatpush1.xpose.msra.mxu0 0.0
  %4254 = vmatprep.subr.mxu0 0.0
  %4255 = vmatpush1.xpose.msra.mxu0 0.0
  %4256 = vmatprep.subr.mxu0 0.0
  %4257 = vmatpush1.xpose.msra.mxu0 0.0
  %4258 = vmatprep.subr.mxu0 0.0
  %4259 = vmatpush1.xpose.msra.mxu0 0.0
  %4260 = vmatprep.subr.mxu0 0.0
  %4261 = vmatpush1.xpose.msra.mxu0 0.0
  %4262 = vmatprep.subr.mxu0 0.0
  %4263 = vmatpush1.xpose.msra.mxu0 0.0
  %4264 = vmatprep.mubr.f32.mxu0 0.0
  %4265 = vmatmul.mubr.f32.gmra.mrb[0].mxu0 %v4195
  %v4266 = vpop.f32.mrb[0].mxu0
  %v4267 = vadd.f32 0.0, %v4266
  %v4268 = vpop.f32.mrb[0].mxu0
  %4269 = vdwg.mxu0
  %v4271 = vsel %vm418, %v3712, 0
  %v4274 = vsel %vm418, %v3830, 0
  %4276 = vmatprep.subr.mxu0 0.0
  %4277 = vmatpush1.xpose.msra.mxu0 %v4274
  %4278 = vmatprep.subr.mxu0 0.0
  %4279 = vmatpush1.xpose.msra.mxu0 0.0
  %4280 = vmatprep.subr.mxu0 0.0
  %4281 = vmatpush1.xpose.msra.mxu0 0.0
  %4282 = vmatprep.subr.mxu0 0.0
  %4283 = vmatpush1.xpose.msra.mxu0 0.0
  %4284 = vmatprep.subr.mxu0 0.0
  %4285 = vmatpush1.xpose.msra.mxu0 0.0
  %4286 = vmatprep.subr.mxu0 0.0
  %4287 = vmatpush1.xpose.msra.mxu0 0.0
  %4288 = vmatprep.subr.mxu0 0.0
  %4289 = vmatpush1.xpose.msra.mxu0 0.0
  %4290 = vmatprep.subr.mxu0 0.0
  %4291 = vmatpush1.xpose.msra.mxu0 0.0
  %4292 = vmatprep.subr.mxu0 0.0
  %4293 = vmatpush1.xpose.msra.mxu0 0.0
  %4294 = vmatprep.subr.mxu0 0.0
  %4295 = vmatpush1.xpose.msra.mxu0 0.0
  %4296 = vmatprep.subr.mxu0 0.0
  %4297 = vmatpush1.xpose.msra.mxu0 0.0
  %4298 = vmatprep.subr.mxu0 0.0
  %4299 = vmatpush1.xpose.msra.mxu0 0.0
  %4300 = vmatprep.subr.mxu0 0.0
  %4301 = vmatpush1.xpose.msra.mxu0 0.0
  %4302 = vmatprep.subr.mxu0 0.0
  %4303 = vmatpush1.xpose.msra.mxu0 0.0
  %4304 = vmatprep.subr.mxu0 0.0
  %4305 = vmatpush1.xpose.msra.mxu0 0.0
  %4306 = vmatprep.subr.mxu0 0.0
  %4307 = vmatpush1.xpose.msra.mxu0 0.0
  %4308 = vmatprep.subr.mxu0 0.0
  %4309 = vmatpush1.xpose.msra.mxu0 0.0
  %4310 = vmatprep.subr.mxu0 0.0
  %4311 = vmatpush1.xpose.msra.mxu0 0.0
  %4312 = vmatprep.subr.mxu0 0.0
  %4313 = vmatpush1.xpose.msra.mxu0 0.0
  %4314 = vmatprep.subr.mxu0 0.0
  %4315 = vmatpush1.xpose.msra.mxu0 0.0
  %4316 = vmatprep.subr.mxu0 0.0
  %4317 = vmatpush1.xpose.msra.mxu0 0.0
  %4318 = vmatprep.subr.mxu0 0.0
  %4319 = vmatpush1.xpose.msra.mxu0 0.0
  %4320 = vmatprep.subr.mxu0 0.0
  %4321 = vmatpush1.xpose.msra.mxu0 0.0
  %4322 = vmatprep.subr.mxu0 0.0
  %4323 = vmatpush1.xpose.msra.mxu0 0.0
  %4324 = vmatprep.subr.mxu0 0.0
  %4325 = vmatpush1.xpose.msra.mxu0 0.0
  %4326 = vmatprep.subr.mxu0 0.0
  %4327 = vmatpush1.xpose.msra.mxu0 0.0
  %4328 = vmatprep.subr.mxu0 0.0
  %4329 = vmatpush1.xpose.msra.mxu0 0.0
  %4330 = vmatprep.subr.mxu0 0.0
  %4331 = vmatpush1.xpose.msra.mxu0 0.0
  %4332 = vmatprep.subr.mxu0 0.0
  %4333 = vmatpush1.xpose.msra.mxu0 0.0
  %4334 = vmatprep.subr.mxu0 0.0
  %4335 = vmatpush1.xpose.msra.mxu0 0.0
  %4336 = vmatprep.subr.mxu0 0.0
  %4337 = vmatpush1.xpose.msra.mxu0 0.0
  %4338 = vmatprep.subr.mxu0 0.0
  %4339 = vmatpush1.xpose.msra.mxu0 0.0
  %4340 = vmatprep.mubr.f32.mxu0 0.0
  %4341 = vmatmul.mubr.f32.gmra.mrb[0].mxu0 %v4271
  %v4342 = vpop.f32.mrb[0].mxu0
  %v4343 = vadd.f32 0.0, %v4342
  %v4344 = vpop.f32.mrb[0].mxu0
  %4345 = vdwg.mxu0
  %v4347 = vsel %vm418, %v3717, 0
  %v4350 = vsel %vm418, %v3835, 0
  %4352 = vmatprep.subr.mxu0 0.0
  %4353 = vmatpush1.xpose.msra.mxu0 %v4350
  %4354 = vmatprep.subr.mxu0 0.0
  %4355 = vmatpush1.xpose.msra.mxu0 0.0
  %4356 = vmatprep.subr.mxu0 0.0
  %4357 = vmatpush1.xpose.msra.mxu0 0.0
  %4358 = vmatprep.subr.mxu0 0.0
  %4359 = vmatpush1.xpose.msra.mxu0 0.0
  %4360 = vmatprep.subr.mxu0 0.0
  %4361 = vmatpush1.xpose.msra.mxu0 0.0
  %4362 = vmatprep.subr.mxu0 0.0
  %4363 = vmatpush1.xpose.msra.mxu0 0.0
  %4364 = vmatprep.subr.mxu0 0.0
  %4365 = vmatpush1.xpose.msra.mxu0 0.0
  %4366 = vmatprep.subr.mxu0 0.0
  %4367 = vmatpush1.xpose.msra.mxu0 0.0
  %4368 = vmatprep.subr.mxu0 0.0
  %4369 = vmatpush1.xpose.msra.mxu0 0.0
  %4370 = vmatprep.subr.mxu0 0.0
  %4371 = vmatpush1.xpose.msra.mxu0 0.0
  %4372 = vmatprep.subr.mxu0 0.0
  %4373 = vmatpush1.xpose.msra.mxu0 0.0
  %4374 = vmatprep.subr.mxu0 0.0
  %4375 = vmatpush1.xpose.msra.mxu0 0.0
  %4376 = vmatprep.subr.mxu0 0.0
  %4377 = vmatpush1.xpose.msra.mxu0 0.0
  %4378 = vmatprep.subr.mxu0 0.0
  %4379 = vmatpush1.xpose.msra.mxu0 0.0
  %4380 = vmatprep.subr.mxu0 0.0
  %4381 = vmatpush1.xpose.msra.mxu0 0.0
  %4382 = vmatprep.subr.mxu0 0.0
  %4383 = vmatpush1.xpose.msra.mxu0 0.0
  %4384 = vmatprep.subr.mxu0 0.0
  %4385 = vmatpush1.xpose.msra.mxu0 0.0
  %4386 = vmatprep.subr.mxu0 0.0
  %4387 = vmatpush1.xpose.msra.mxu0 0.0
  %4388 = vmatprep.subr.mxu0 0.0
  %4389 = vmatpush1.xpose.msra.mxu0 0.0
  %4390 = vmatprep.subr.mxu0 0.0
  %4391 = vmatpush1.xpose.msra.mxu0 0.0
  %4392 = vmatprep.subr.mxu0 0.0
  %4393 = vmatpush1.xpose.msra.mxu0 0.0
  %4394 = vmatprep.subr.mxu0 0.0
  %4395 = vmatpush1.xpose.msra.mxu0 0.0
  %4396 = vmatprep.subr.mxu0 0.0
  %4397 = vmatpush1.xpose.msra.mxu0 0.0
  %4398 = vmatprep.subr.mxu0 0.0
  %4399 = vmatpush1.xpose.msra.mxu0 0.0
  %4400 = vmatprep.subr.mxu0 0.0
  %4401 = vmatpush1.xpose.msra.mxu0 0.0
  %4402 = vmatprep.subr.mxu0 0.0
  %4403 = vmatpush1.xpose.msra.mxu0 0.0
  %4404 = vmatprep.subr.mxu0 0.0
  %4405 = vmatpush1.xpose.msra.mxu0 0.0
  %4406 = vmatprep.subr.mxu0 0.0
  %4407 = vmatpush1.xpose.msra.mxu0 0.0
  %4408 = vmatprep.subr.mxu0 0.0
  %4409 = vmatpush1.xpose.msra.mxu0 0.0
  %4410 = vmatprep.subr.mxu0 0.0
  %4411 = vmatpush1.xpose.msra.mxu0 0.0
  %4412 = vmatprep.subr.mxu0 0.0
  %4413 = vmatpush1.xpose.msra.mxu0 0.0
  %4414 = vmatprep.subr.mxu0 0.0
  %4415 = vmatpush1.xpose.msra.mxu0 0.0
  %4416 = vmatprep.mubr.f32.mxu0 0.0
  %4417 = vmatmul.mubr.f32.gmra.mrb[0].mxu0 %v4347
  %v4418 = vpop.f32.mrb[0].mxu0
  %v4419 = vadd.f32 0.0, %v4418
  %v4420 = vpop.f32.mrb[0].mxu0
  %4421 = vdwg.mxu0
  %v4423 = vsel %vm418, %v3722, 0
  %v4426 = vsel %vm418, %v3840, 0
  %4428 = vmatprep.subr.mxu0 0.0
  %4429 = vmatpush1.xpose.msra.mxu0 %v4426
  %4430 = vmatprep.subr.mxu0 0.0
  %4431 = vmatpush1.xpose.msra.mxu0 0.0
  %4432 = vmatprep.subr.mxu0 0.0
  %4433 = vmatpush1.xpose.msra.mxu0 0.0
  %4434 = vmatprep.subr.mxu0 0.0
  %4435 = vmatpush1.xpose.msra.mxu0 0.0
  %4436 = vmatprep.subr.mxu0 0.0
  %4437 = vmatpush1.xpose.msra.mxu0 0.0
  %4438 = vmatprep.subr.mxu0 0.0
  %4439 = vmatpush1.xpose.msra.mxu0 0.0
  %4440 = vmatprep.subr.mxu0 0.0
  %4441 = vmatpush1.xpose.msra.mxu0 0.0
  %4442 = vmatprep.subr.mxu0 0.0
  %4443 = vmatpush1.xpose.msra.mxu0 0.0
  %4444 = vmatprep.subr.mxu0 0.0
  %4445 = vmatpush1.xpose.msra.mxu0 0.0
  %4446 = vmatprep.subr.mxu0 0.0
  %4447 = vmatpush1.xpose.msra.mxu0 0.0
  %4448 = vmatprep.subr.mxu0 0.0
  %4449 = vmatpush1.xpose.msra.mxu0 0.0
  %4450 = vmatprep.subr.mxu0 0.0
  %4451 = vmatpush1.xpose.msra.mxu0 0.0
  %4452 = vmatprep.subr.mxu0 0.0
  %4453 = vmatpush1.xpose.msra.mxu0 0.0
  %4454 = vmatprep.subr.mxu0 0.0
  %4455 = vmatpush1.xpose.msra.mxu0 0.0
  %4456 = vmatprep.subr.mxu0 0.0
  %4457 = vmatpush1.xpose.msra.mxu0 0.0
  %4458 = vmatprep.subr.mxu0 0.0
  %4459 = vmatpush1.xpose.msra.mxu0 0.0
  %4460 = vmatprep.subr.mxu0 0.0
  %4461 = vmatpush1.xpose.msra.mxu0 0.0
  %4462 = vmatprep.subr.mxu0 0.0
  %4463 = vmatpush1.xpose.msra.mxu0 0.0
  %4464 = vmatprep.subr.mxu0 0.0
  %4465 = vmatpush1.xpose.msra.mxu0 0.0
  %4466 = vmatprep.subr.mxu0 0.0
  %4467 = vmatpush1.xpose.msra.mxu0 0.0
  %4468 = vmatprep.subr.mxu0 0.0
  %4469 = vmatpush1.xpose.msra.mxu0 0.0
  %4470 = vmatprep.subr.mxu0 0.0
  %4471 = vmatpush1.xpose.msra.mxu0 0.0
  %4472 = vmatprep.subr.mxu0 0.0
  %4473 = vmatpush1.xpose.msra.mxu0 0.0
  %4474 = vmatprep.subr.mxu0 0.0
  %4475 = vmatpush1.xpose.msra.mxu0 0.0
  %4476 = vmatprep.subr.mxu0 0.0
  %4477 = vmatpush1.xpose.msra.mxu0 0.0
  %4478 = vmatprep.subr.mxu0 0.0
  %4479 = vmatpush1.xpose.msra.mxu0 0.0
  %4480 = vmatprep.subr.mxu0 0.0
  %4481 = vmatpush1.xpose.msra.mxu0 0.0
  %4482 = vmatprep.subr.mxu0 0.0
  %4483 = vmatpush1.xpose.msra.mxu0 0.0
  %4484 = vmatprep.subr.mxu0 0.0
  %4485 = vmatpush1.xpose.msra.mxu0 0.0
  %4486 = vmatprep.subr.mxu0 0.0
  %4487 = vmatpush1.xpose.msra.mxu0 0.0
  %4488 = vmatprep.subr.mxu0 0.0
  %4489 = vmatpush1.xpose.msra.mxu0 0.0
  %4490 = vmatprep.subr.mxu0 0.0
  %4491 = vmatpush1.xpose.msra.mxu0 0.0
  %4492 = vmatprep.mubr.f32.mxu0 0.0
  %4493 = vmatmul.mubr.f32.gmra.mrb[0].mxu0 %v4423
  %v4494 = vpop.f32.mrb[0].mxu0
  %v4495 = vadd.f32 0.0, %v4494
  %v4496 = vpop.f32.mrb[0].mxu0
  %4497 = vdwg.mxu0
  %v4499 = vsel %vm418, %v3727, 0
  %v4502 = vsel %vm418, %v3845, 0
  %4504 = vmatprep.subr.mxu0 0.0
  %4505 = vmatpush1.xpose.msra.mxu0 %v4502
  %4506 = vmatprep.subr.mxu0 0.0
  %4507 = vmatpush1.xpose.msra.mxu0 0.0
  %4508 = vmatprep.subr.mxu0 0.0
  %4509 = vmatpush1.xpose.msra.mxu0 0.0
  %4510 = vmatprep.subr.mxu0 0.0
  %4511 = vmatpush1.xpose.msra.mxu0 0.0
  %4512 = vmatprep.subr.mxu0 0.0
  %4513 = vmatpush1.xpose.msra.mxu0 0.0
  %4514 = vmatprep.subr.mxu0 0.0
  %4515 = vmatpush1.xpose.msra.mxu0 0.0
  %4516 = vmatprep.subr.mxu0 0.0
  %4517 = vmatpush1.xpose.msra.mxu0 0.0
  %4518 = vmatprep.subr.mxu0 0.0
  %4519 = vmatpush1.xpose.msra.mxu0 0.0
  %4520 = vmatprep.subr.mxu0 0.0
  %4521 = vmatpush1.xpose.msra.mxu0 0.0
  %4522 = vmatprep.subr.mxu0 0.0
  %4523 = vmatpush1.xpose.msra.mxu0 0.0
  %4524 = vmatprep.subr.mxu0 0.0
  %4525 = vmatpush1.xpose.msra.mxu0 0.0
  %4526 = vmatprep.subr.mxu0 0.0
  %4527 = vmatpush1.xpose.msra.mxu0 0.0
  %4528 = vmatprep.subr.mxu0 0.0
  %4529 = vmatpush1.xpose.msra.mxu0 0.0
  %4530 = vmatprep.subr.mxu0 0.0
  %4531 = vmatpush1.xpose.msra.mxu0 0.0
  %4532 = vmatprep.subr.mxu0 0.0
  %4533 = vmatpush1.xpose.msra.mxu0 0.0
  %4534 = vmatprep.subr.mxu0 0.0
  %4535 = vmatpush1.xpose.msra.mxu0 0.0
  %4536 = vmatprep.subr.mxu0 0.0
  %4537 = vmatpush1.xpose.msra.mxu0 0.0
  %4538 = vmatprep.subr.mxu0 0.0
  %4539 = vmatpush1.xpose.msra.mxu0 0.0
  %4540 = vmatprep.subr.mxu0 0.0
  %4541 = vmatpush1.xpose.msra.mxu0 0.0
  %4542 = vmatprep.subr.mxu0 0.0
  %4543 = vmatpush1.xpose.msra.mxu0 0.0
  %4544 = vmatprep.subr.mxu0 0.0
  %4545 = vmatpush1.xpose.msra.mxu0 0.0
  %4546 = vmatprep.subr.mxu0 0.0
  %4547 = vmatpush1.xpose.msra.mxu0 0.0
  %4548 = vmatprep.subr.mxu0 0.0
  %4549 = vmatpush1.xpose.msra.mxu0 0.0
  %4550 = vmatprep.subr.mxu0 0.0
  %4551 = vmatpush1.xpose.msra.mxu0 0.0
  %4552 = vmatprep.subr.mxu0 0.0
  %4553 = vmatpush1.xpose.msra.mxu0 0.0
  %4554 = vmatprep.subr.mxu0 0.0
  %4555 = vmatpush1.xpose.msra.mxu0 0.0
  %4556 = vmatprep.subr.mxu0 0.0
  %4557 = vmatpush1.xpose.msra.mxu0 0.0
  %4558 = vmatprep.subr.mxu0 0.0
  %4559 = vmatpush1.xpose.msra.mxu0 0.0
  %4560 = vmatprep.subr.mxu0 0.0
  %4561 = vmatpush1.xpose.msra.mxu0 0.0
  %4562 = vmatprep.subr.mxu0 0.0
  %4563 = vmatpush1.xpose.msra.mxu0 0.0
  %4564 = vmatprep.subr.mxu0 0.0
  %4565 = vmatpush1.xpose.msra.mxu0 0.0
  %4566 = vmatprep.subr.mxu0 0.0
  %4567 = vmatpush1.xpose.msra.mxu0 0.0
  %4568 = vmatprep.mubr.f32.mxu0 0.0
  %4569 = vmatmul.mubr.f32.gmra.mrb[0].mxu0 %v4499
  %v4570 = vpop.f32.mrb[0].mxu0
  %v4571 = vadd.f32 0.0, %v4570
  %v4572 = vpop.f32.mrb[0].mxu0
  %4573 = vdwg.mxu0
  %v4574 = vsel %vm1028, -1e+30, %v4039
  %v4575 = vsel %vm1028, -1e+30, %v4115
  %v4576 = vsel %vm1028, -1e+30, %v4191
  %v4577 = vsel %vm1028, -1e+30, %v4267
  %v4578 = vsel %vm1028, -1e+30, %v4343
  %v4579 = vsel %vm1028, -1e+30, %v4419
  %v4580 = vsel %vm1028, -1e+30, %v4495
  %v4581 = vsel %vm1028, -1e+30, %v4571
  %v4582 = vsel %vm418, %v4574, -inf
  %4583 = vmax.xlane.f32.xlu0 %v4582
  %v4584 = vpop.xlane.xlu0 %4583
  %v4585 = vsel %vm418, %v4575, -inf
  %4586 = vmax.xlane.f32.xlu0 %v4585
  %v4587 = vpop.xlane.xlu0 %4586
  %v4588 = vsel %vm418, %v4576, -inf
  %4589 = vmax.xlane.f32.xlu0 %v4588
  %v4590 = vpop.xlane.xlu0 %4589
  %v4591 = vsel %vm418, %v4577, -inf
  %4592 = vmax.xlane.f32.xlu0 %v4591
  %v4593 = vpop.xlane.xlu0 %4592
  %v4594 = vsel %vm418, %v4578, -inf
  %4595 = vmax.xlane.f32.xlu0 %v4594
  %v4596 = vpop.xlane.xlu0 %4595
  %v4597 = vsel %vm418, %v4579, -inf
  %4598 = vmax.xlane.f32.xlu0 %v4597
  %v4599 = vpop.xlane.xlu0 %4598
  %v4600 = vsel %vm418, %v4580, -inf
  %4601 = vmax.xlane.f32.xlu0 %v4600
  %v4602 = vpop.xlane.xlu0 %4601
  %v4603 = vsel %vm418, %v4581, -inf
  %4604 = vmax.xlane.f32.xlu0 %v4603
  %v4605 = vpop.xlane.xlu0 %4604
  %v4606 = vsub.f32 %v4574, %v4584
  %v4607 = vsub.f32 %v4575, %v4587
  %v4608 = vsub.f32 %v4576, %v4590
  %v4609 = vsub.f32 %v4577, %v4593
  %v4610 = vsub.f32 %v4578, %v4596
  %v4611 = vsub.f32 %v4579, %v4599
  %v4612 = vsub.f32 %v4580, %v4602
  %v4613 = vsub.f32 %v4581, %v4605
  %v4614 = vmul.f32 %v4606, 1.442695
  %v4615 = vpow.pop %v4614
  %v4616 = vmul.f32 %v4607, 1.442695
  %v4617 = vpow.pop %v4616
  %v4618 = vmul.f32 %v4608, 1.442695
  %v4619 = vpow.pop %v4618
  %v4620 = vmul.f32 %v4609, 1.442695
  %v4621 = vpow.pop %v4620
  %v4622 = vmul.f32 %v4610, 1.442695
  %v4623 = vpow.pop %v4622
  %v4624 = vmul.f32 %v4611, 1.442695
  %v4625 = vpow.pop %v4624
  %v4626 = vmul.f32 %v4612, 1.442695
  %v4627 = vpow.pop %v4626
  %v4628 = vmul.f32 %v4613, 1.442695
  %v4629 = vpow.pop %v4628
  %v4630 = vsel %vm418, %v4615, 0.0
  %4631 = vadd.xlane.f32.xlu0 %v4630
  %v4632 = vpop.xlane.xlu0 %4631
  %v4633 = vsel %vm418, %v4617, 0.0
  %4634 = vadd.xlane.f32.xlu0 %v4633
  %v4635 = vpop.xlane.xlu0 %4634
  %v4636 = vsel %vm418, %v4619, 0.0
  %4637 = vadd.xlane.f32.xlu0 %v4636
  %v4638 = vpop.xlane.xlu0 %4637
  %v4639 = vsel %vm418, %v4621, 0.0
  %4640 = vadd.xlane.f32.xlu0 %v4639
  %v4641 = vpop.xlane.xlu0 %4640
  %v4642 = vsel %vm418, %v4623, 0.0
  %4643 = vadd.xlane.f32.xlu0 %v4642
  %v4644 = vpop.xlane.xlu0 %4643
  %v4645 = vsel %vm418, %v4625, 0.0
  %4646 = vadd.xlane.f32.xlu0 %v4645
  %v4647 = vpop.xlane.xlu0 %4646
  %v4648 = vsel %vm418, %v4627, 0.0
  %4649 = vadd.xlane.f32.xlu0 %v4648
  %v4650 = vpop.xlane.xlu0 %4649
  %v4651 = vsel %vm418, %v4629, 0.0
  %4652 = vadd.xlane.f32.xlu0 %v4651
  %v4653 = vpop.xlane.xlu0 %4652
  %v4654 = vrcp.pop %v4632
  %v4655 = vrcp.pop %v4635
  %v4656 = vrcp.pop %v4638
  %v4657 = vrcp.pop %v4641
  %v4658 = vrcp.pop %v4644
  %v4659 = vrcp.pop %v4647
  %v4660 = vrcp.pop %v4650
  %v4661 = vrcp.pop %v4653
  %v4662 = vmul.f32 %v4615, %v4654
  %v4663 = vmul.f32 %v4617, %v4655
  %v4664 = vmul.f32 %v4619, %v4656
  %v4665 = vmul.f32 %v4621, %v4657
  %v4666 = vmul.f32 %v4623, %v4658
  %v4667 = vmul.f32 %v4625, %v4659
  %v4668 = vmul.f32 %v4627, %v4660
  %v4669 = vmul.f32 %v4629, %v4661
  %v4671 = vsel %vm418, %v4662, 0
  %4673 = vmatprep.subr.mxu0 0.0
  %4674 = vmatpush1.msra.mxu0 %v3928
  %4675 = vmatprep.subr.mxu0 0.0
  %4676 = vmatpush1.msra.mxu0 0.0
  %4677 = vmatprep.subr.mxu0 0.0
  %4678 = vmatpush1.msra.mxu0 0.0
  %4679 = vmatprep.subr.mxu0 0.0
  %4680 = vmatpush1.msra.mxu0 0.0
  %4681 = vmatprep.subr.mxu0 0.0
  %4682 = vmatpush1.msra.mxu0 0.0
  %4683 = vmatprep.subr.mxu0 0.0
  %4684 = vmatpush1.msra.mxu0 0.0
  %4685 = vmatprep.subr.mxu0 0.0
  %4686 = vmatpush1.msra.mxu0 0.0
  %4687 = vmatprep.subr.mxu0 0.0
  %4688 = vmatpush1.msra.mxu0 0.0
  %4689 = vmatprep.subr.mxu0 0.0
  %4690 = vmatpush1.msra.mxu0 0.0
  %4691 = vmatprep.subr.mxu0 0.0
  %4692 = vmatpush1.msra.mxu0 0.0
  %4693 = vmatprep.subr.mxu0 0.0
  %4694 = vmatpush1.msra.mxu0 0.0
  %4695 = vmatprep.subr.mxu0 0.0
  %4696 = vmatpush1.msra.mxu0 0.0
  %4697 = vmatprep.subr.mxu0 0.0
  %4698 = vmatpush1.msra.mxu0 0.0
  %4699 = vmatprep.subr.mxu0 0.0
  %4700 = vmatpush1.msra.mxu0 0.0
  %4701 = vmatprep.subr.mxu0 0.0
  %4702 = vmatpush1.msra.mxu0 0.0
  %4703 = vmatprep.subr.mxu0 0.0
  %4704 = vmatpush1.msra.mxu0 0.0
  %4705 = vmatprep.subr.mxu0 0.0
  %4706 = vmatpush1.msra.mxu0 0.0
  %4707 = vmatprep.subr.mxu0 0.0
  %4708 = vmatpush1.msra.mxu0 0.0
  %4709 = vmatprep.subr.mxu0 0.0
  %4710 = vmatpush1.msra.mxu0 0.0
  %4711 = vmatprep.subr.mxu0 0.0
  %4712 = vmatpush1.msra.mxu0 0.0
  %4713 = vmatprep.subr.mxu0 0.0
  %4714 = vmatpush1.msra.mxu0 0.0
  %4715 = vmatprep.subr.mxu0 0.0
  %4716 = vmatpush1.msra.mxu0 0.0
  %4717 = vmatprep.subr.mxu0 0.0
  %4718 = vmatpush1.msra.mxu0 0.0
  %4719 = vmatprep.subr.mxu0 0.0
  %4720 = vmatpush1.msra.mxu0 0.0
  %4721 = vmatprep.subr.mxu0 0.0
  %4722 = vmatpush1.msra.mxu0 0.0
  %4723 = vmatprep.subr.mxu0 0.0
  %4724 = vmatpush1.msra.mxu0 0.0
  %4725 = vmatprep.subr.mxu0 0.0
  %4726 = vmatpush1.msra.mxu0 0.0
  %4727 = vmatprep.subr.mxu0 0.0
  %4728 = vmatpush1.msra.mxu0 0.0
  %4729 = vmatprep.subr.mxu0 0.0
  %4730 = vmatpush1.msra.mxu0 0.0
  %4731 = vmatprep.subr.mxu0 0.0
  %4732 = vmatpush1.msra.mxu0 0.0
  %4733 = vmatprep.subr.mxu0 0.0
  %4734 = vmatpush1.msra.mxu0 0.0
  %4735 = vmatprep.subr.mxu0 0.0
  %4736 = vmatpush1.msra.mxu0 0.0
  %4737 = vmatprep.mubr.f32.mxu0 0.0
  %4738 = vmatmul.mubr.f32.gmra.mrb[0].mxu0 %v4671
  %v4739 = vpop.f32.mrb[0].mxu0
  %v4740 = vadd.f32 0.0, %v4739
  %v4741 = vpop.f32.mrb[0].mxu0
  %4742 = vdwg.mxu0
  %v4744 = vsel %vm418, %v4663, 0
  %4746 = vmatprep.subr.mxu0 0.0
  %4747 = vmatpush1.msra.mxu0 %v3933
  %4748 = vmatprep.subr.mxu0 0.0
  %4749 = vmatpush1.msra.mxu0 0.0
  %4750 = vmatprep.subr.mxu0 0.0
  %4751 = vmatpush1.msra.mxu0 0.0
  %4752 = vmatprep.subr.mxu0 0.0
  %4753 = vmatpush1.msra.mxu0 0.0
  %4754 = vmatprep.subr.mxu0 0.0
  %4755 = vmatpush1.msra.mxu0 0.0
  %4756 = vmatprep.subr.mxu0 0.0
  %4757 = vmatpush1.msra.mxu0 0.0
  %4758 = vmatprep.subr.mxu0 0.0
  %4759 = vmatpush1.msra.mxu0 0.0
  %4760 = vmatprep.subr.mxu0 0.0
  %4761 = vmatpush1.msra.mxu0 0.0
  %4762 = vmatprep.subr.mxu0 0.0
  %4763 = vmatpush1.msra.mxu0 0.0
  %4764 = vmatprep.subr.mxu0 0.0
  %4765 = vmatpush1.msra.mxu0 0.0
  %4766 = vmatprep.subr.mxu0 0.0
  %4767 = vmatpush1.msra.mxu0 0.0
  %4768 = vmatprep.subr.mxu0 0.0
  %4769 = vmatpush1.msra.mxu0 0.0
  %4770 = vmatprep.subr.mxu0 0.0
  %4771 = vmatpush1.msra.mxu0 0.0
  %4772 = vmatprep.subr.mxu0 0.0
  %4773 = vmatpush1.msra.mxu0 0.0
  %4774 = vmatprep.subr.mxu0 0.0
  %4775 = vmatpush1.msra.mxu0 0.0
  %4776 = vmatprep.subr.mxu0 0.0
  %4777 = vmatpush1.msra.mxu0 0.0
  %4778 = vmatprep.subr.mxu0 0.0
  %4779 = vmatpush1.msra.mxu0 0.0
  %4780 = vmatprep.subr.mxu0 0.0
  %4781 = vmatpush1.msra.mxu0 0.0
  %4782 = vmatprep.subr.mxu0 0.0
  %4783 = vmatpush1.msra.mxu0 0.0
  %4784 = vmatprep.subr.mxu0 0.0
  %4785 = vmatpush1.msra.mxu0 0.0
  %4786 = vmatprep.subr.mxu0 0.0
  %4787 = vmatpush1.msra.mxu0 0.0
  %4788 = vmatprep.subr.mxu0 0.0
  %4789 = vmatpush1.msra.mxu0 0.0
  %4790 = vmatprep.subr.mxu0 0.0
  %4791 = vmatpush1.msra.mxu0 0.0
  %4792 = vmatprep.subr.mxu0 0.0
  %4793 = vmatpush1.msra.mxu0 0.0
  %4794 = vmatprep.subr.mxu0 0.0
  %4795 = vmatpush1.msra.mxu0 0.0
  %4796 = vmatprep.subr.mxu0 0.0
  %4797 = vmatpush1.msra.mxu0 0.0
  %4798 = vmatprep.subr.mxu0 0.0
  %4799 = vmatpush1.msra.mxu0 0.0
  %4800 = vmatprep.subr.mxu0 0.0
  %4801 = vmatpush1.msra.mxu0 0.0
  %4802 = vmatprep.subr.mxu0 0.0
  %4803 = vmatpush1.msra.mxu0 0.0
  %4804 = vmatprep.subr.mxu0 0.0
  %4805 = vmatpush1.msra.mxu0 0.0
  %4806 = vmatprep.subr.mxu0 0.0
  %4807 = vmatpush1.msra.mxu0 0.0
  %4808 = vmatprep.subr.mxu0 0.0
  %4809 = vmatpush1.msra.mxu0 0.0
  %4810 = vmatprep.mubr.f32.mxu0 0.0
  %4811 = vmatmul.mubr.f32.gmra.mrb[0].mxu0 %v4744
  %v4812 = vpop.f32.mrb[0].mxu0
  %v4813 = vadd.f32 0.0, %v4812
  %v4814 = vpop.f32.mrb[0].mxu0
  %4815 = vdwg.mxu0
  %v4817 = vsel %vm418, %v4664, 0
  %4819 = vmatprep.subr.mxu0 0.0
  %4820 = vmatpush1.msra.mxu0 %v3938
  %4821 = vmatprep.subr.mxu0 0.0
  %4822 = vmatpush1.msra.mxu0 0.0
  %4823 = vmatprep.subr.mxu0 0.0
  %4824 = vmatpush1.msra.mxu0 0.0
  %4825 = vmatprep.subr.mxu0 0.0
  %4826 = vmatpush1.msra.mxu0 0.0
  %4827 = vmatprep.subr.mxu0 0.0
  %4828 = vmatpush1.msra.mxu0 0.0
  %4829 = vmatprep.subr.mxu0 0.0
  %4830 = vmatpush1.msra.mxu0 0.0
  %4831 = vmatprep.subr.mxu0 0.0
  %4832 = vmatpush1.msra.mxu0 0.0
  %4833 = vmatprep.subr.mxu0 0.0
  %4834 = vmatpush1.msra.mxu0 0.0
  %4835 = vmatprep.subr.mxu0 0.0
  %4836 = vmatpush1.msra.mxu0 0.0
  %4837 = vmatprep.subr.mxu0 0.0
  %4838 = vmatpush1.msra.mxu0 0.0
  %4839 = vmatprep.subr.mxu0 0.0
  %4840 = vmatpush1.msra.mxu0 0.0
  %4841 = vmatprep.subr.mxu0 0.0
  %4842 = vmatpush1.msra.mxu0 0.0
  %4843 = vmatprep.subr.mxu0 0.0
  %4844 = vmatpush1.msra.mxu0 0.0
  %4845 = vmatprep.subr.mxu0 0.0
  %4846 = vmatpush1.msra.mxu0 0.0
  %4847 = vmatprep.subr.mxu0 0.0
  %4848 = vmatpush1.msra.mxu0 0.0
  %4849 = vmatprep.subr.mxu0 0.0
  %4850 = vmatpush1.msra.mxu0 0.0
  %4851 = vmatprep.subr.mxu0 0.0
  %4852 = vmatpush1.msra.mxu0 0.0
  %4853 = vmatprep.subr.mxu0 0.0
  %4854 = vmatpush1.msra.mxu0 0.0
  %4855 = vmatprep.subr.mxu0 0.0
  %4856 = vmatpush1.msra.mxu0 0.0
  %4857 = vmatprep.subr.mxu0 0.0
  %4858 = vmatpush1.msra.mxu0 0.0
  %4859 = vmatprep.subr.mxu0 0.0
  %4860 = vmatpush1.msra.mxu0 0.0
  %4861 = vmatprep.subr.mxu0 0.0
  %4862 = vmatpush1.msra.mxu0 0.0
  %4863 = vmatprep.subr.mxu0 0.0
  %4864 = vmatpush1.msra.mxu0 0.0
  %4865 = vmatprep.subr.mxu0 0.0
  %4866 = vmatpush1.msra.mxu0 0.0
  %4867 = vmatprep.subr.mxu0 0.0
  %4868 = vmatpush1.msra.mxu0 0.0
  %4869 = vmatprep.subr.mxu0 0.0
  %4870 = vmatpush1.msra.mxu0 0.0
  %4871 = vmatprep.subr.mxu0 0.0
  %4872 = vmatpush1.msra.mxu0 0.0
  %4873 = vmatprep.subr.mxu0 0.0
  %4874 = vmatpush1.msra.mxu0 0.0
  %4875 = vmatprep.subr.mxu0 0.0
  %4876 = vmatpush1.msra.mxu0 0.0
  %4877 = vmatprep.subr.mxu0 0.0
  %4878 = vmatpush1.msra.mxu0 0.0
  %4879 = vmatprep.subr.mxu0 0.0
  %4880 = vmatpush1.msra.mxu0 0.0
  %4881 = vmatprep.subr.mxu0 0.0
  %4882 = vmatpush1.msra.mxu0 0.0
  %4883 = vmatprep.mubr.f32.mxu0 0.0
  %4884 = vmatmul.mubr.f32.gmra.mrb[0].mxu0 %v4817
  %v4885 = vpop.f32.mrb[0].mxu0
  %v4886 = vadd.f32 0.0, %v4885
  %v4887 = vpop.f32.mrb[0].mxu0
  %4888 = vdwg.mxu0
  %v4890 = vsel %vm418, %v4665, 0
  %4892 = vmatprep.subr.mxu0 0.0
  %4893 = vmatpush1.msra.mxu0 %v3943
  %4894 = vmatprep.subr.mxu0 0.0
  %4895 = vmatpush1.msra.mxu0 0.0
  %4896 = vmatprep.subr.mxu0 0.0
  %4897 = vmatpush1.msra.mxu0 0.0
  %4898 = vmatprep.subr.mxu0 0.0
  %4899 = vmatpush1.msra.mxu0 0.0
  %4900 = vmatprep.subr.mxu0 0.0
  %4901 = vmatpush1.msra.mxu0 0.0
  %4902 = vmatprep.subr.mxu0 0.0
  %4903 = vmatpush1.msra.mxu0 0.0
  %4904 = vmatprep.subr.mxu0 0.0
  %4905 = vmatpush1.msra.mxu0 0.0
  %4906 = vmatprep.subr.mxu0 0.0
  %4907 = vmatpush1.msra.mxu0 0.0
  %4908 = vmatprep.subr.mxu0 0.0
  %4909 = vmatpush1.msra.mxu0 0.0
  %4910 = vmatprep.subr.mxu0 0.0
  %4911 = vmatpush1.msra.mxu0 0.0
  %4912 = vmatprep.subr.mxu0 0.0
  %4913 = vmatpush1.msra.mxu0 0.0
  %4914 = vmatprep.subr.mxu0 0.0
  %4915 = vmatpush1.msra.mxu0 0.0
  %4916 = vmatprep.subr.mxu0 0.0
  %4917 = vmatpush1.msra.mxu0 0.0
  %4918 = vmatprep.subr.mxu0 0.0
  %4919 = vmatpush1.msra.mxu0 0.0
  %4920 = vmatprep.subr.mxu0 0.0
  %4921 = vmatpush1.msra.mxu0 0.0
  %4922 = vmatprep.subr.mxu0 0.0
  %4923 = vmatpush1.msra.mxu0 0.0
  %4924 = vmatprep.subr.mxu0 0.0
  %4925 = vmatpush1.msra.mxu0 0.0
  %4926 = vmatprep.subr.mxu0 0.0
  %4927 = vmatpush1.msra.mxu0 0.0
  %4928 = vmatprep.subr.mxu0 0.0
  %4929 = vmatpush1.msra.mxu0 0.0
  %4930 = vmatprep.subr.mxu0 0.0
  %4931 = vmatpush1.msra.mxu0 0.0
  %4932 = vmatprep.subr.mxu0 0.0
  %4933 = vmatpush1.msra.mxu0 0.0
  %4934 = vmatprep.subr.mxu0 0.0
  %4935 = vmatpush1.msra.mxu0 0.0
  %4936 = vmatprep.subr.mxu0 0.0
  %4937 = vmatpush1.msra.mxu0 0.0
  %4938 = vmatprep.subr.mxu0 0.0
  %4939 = vmatpush1.msra.mxu0 0.0
  %4940 = vmatprep.subr.mxu0 0.0
  %4941 = vmatpush1.msra.mxu0 0.0
  %4942 = vmatprep.subr.mxu0 0.0
  %4943 = vmatpush1.msra.mxu0 0.0
  %4944 = vmatprep.subr.mxu0 0.0
  %4945 = vmatpush1.msra.mxu0 0.0
  %4946 = vmatprep.subr.mxu0 0.0
  %4947 = vmatpush1.msra.mxu0 0.0
  %4948 = vmatprep.subr.mxu0 0.0
  %4949 = vmatpush1.msra.mxu0 0.0
  %4950 = vmatprep.subr.mxu0 0.0
  %4951 = vmatpush1.msra.mxu0 0.0
  %4952 = vmatprep.subr.mxu0 0.0
  %4953 = vmatpush1.msra.mxu0 0.0
  %4954 = vmatprep.subr.mxu0 0.0
  %4955 = vmatpush1.msra.mxu0 0.0
  %4956 = vmatprep.mubr.f32.mxu0 0.0
  %4957 = vmatmul.mubr.f32.gmra.mrb[0].mxu0 %v4890
  %v4958 = vpop.f32.mrb[0].mxu0
  %v4959 = vadd.f32 0.0, %v4958
  %v4960 = vpop.f32.mrb[0].mxu0
  %4961 = vdwg.mxu0
  %v4963 = vsel %vm418, %v4666, 0
  %4965 = vmatprep.subr.mxu0 0.0
  %4966 = vmatpush1.msra.mxu0 %v3948
  %4967 = vmatprep.subr.mxu0 0.0
  %4968 = vmatpush1.msra.mxu0 0.0
  %4969 = vmatprep.subr.mxu0 0.0
  %4970 = vmatpush1.msra.mxu0 0.0
  %4971 = vmatprep.subr.mxu0 0.0
  %4972 = vmatpush1.msra.mxu0 0.0
  %4973 = vmatprep.subr.mxu0 0.0
  %4974 = vmatpush1.msra.mxu0 0.0
  %4975 = vmatprep.subr.mxu0 0.0
  %4976 = vmatpush1.msra.mxu0 0.0
  %4977 = vmatprep.subr.mxu0 0.0
  %4978 = vmatpush1.msra.mxu0 0.0
  %4979 = vmatprep.subr.mxu0 0.0
  %4980 = vmatpush1.msra.mxu0 0.0
  %4981 = vmatprep.subr.mxu0 0.0
  %4982 = vmatpush1.msra.mxu0 0.0
  %4983 = vmatprep.subr.mxu0 0.0
  %4984 = vmatpush1.msra.mxu0 0.0
  %4985 = vmatprep.subr.mxu0 0.0
  %4986 = vmatpush1.msra.mxu0 0.0
  %4987 = vmatprep.subr.mxu0 0.0
  %4988 = vmatpush1.msra.mxu0 0.0
  %4989 = vmatprep.subr.mxu0 0.0
  %4990 = vmatpush1.msra.mxu0 0.0
  %4991 = vmatprep.subr.mxu0 0.0
  %4992 = vmatpush1.msra.mxu0 0.0
  %4993 = vmatprep.subr.mxu0 0.0
  %4994 = vmatpush1.msra.mxu0 0.0
  %4995 = vmatprep.subr.mxu0 0.0
  %4996 = vmatpush1.msra.mxu0 0.0
  %4997 = vmatprep.subr.mxu0 0.0
  %4998 = vmatpush1.msra.mxu0 0.0
  %4999 = vmatprep.subr.mxu0 0.0
  %5000 = vmatpush1.msra.mxu0 0.0
  %5001 = vmatprep.subr.mxu0 0.0
  %5002 = vmatpush1.msra.mxu0 0.0
  %5003 = vmatprep.subr.mxu0 0.0
  %5004 = vmatpush1.msra.mxu0 0.0
  %5005 = vmatprep.subr.mxu0 0.0
  %5006 = vmatpush1.msra.mxu0 0.0
  %5007 = vmatprep.subr.mxu0 0.0
  %5008 = vmatpush1.msra.mxu0 0.0
  %5009 = vmatprep.subr.mxu0 0.0
  %5010 = vmatpush1.msra.mxu0 0.0
  %5011 = vmatprep.subr.mxu0 0.0
  %5012 = vmatpush1.msra.mxu0 0.0
  %5013 = vmatprep.subr.mxu0 0.0
  %5014 = vmatpush1.msra.mxu0 0.0
  %5015 = vmatprep.subr.mxu0 0.0
  %5016 = vmatpush1.msra.mxu0 0.0
  %5017 = vmatprep.subr.mxu0 0.0
  %5018 = vmatpush1.msra.mxu0 0.0
  %5019 = vmatprep.subr.mxu0 0.0
  %5020 = vmatpush1.msra.mxu0 0.0
  %5021 = vmatprep.subr.mxu0 0.0
  %5022 = vmatpush1.msra.mxu0 0.0
  %5023 = vmatprep.subr.mxu0 0.0
  %5024 = vmatpush1.msra.mxu0 0.0
  %5025 = vmatprep.subr.mxu0 0.0
  %5026 = vmatpush1.msra.mxu0 0.0
  %5027 = vmatprep.subr.mxu0 0.0
  %5028 = vmatpush1.msra.mxu0 0.0
  %5029 = vmatprep.mubr.f32.mxu0 0.0
  %5030 = vmatmul.mubr.f32.gmra.mrb[0].mxu0 %v4963
  %v5031 = vpop.f32.mrb[0].mxu0
  %v5032 = vadd.f32 0.0, %v5031
  %v5033 = vpop.f32.mrb[0].mxu0
  %5034 = vdwg.mxu0
  %v5036 = vsel %vm418, %v4667, 0
  %5038 = vmatprep.subr.mxu0 0.0
  %5039 = vmatpush1.msra.mxu0 %v3953
  %5040 = vmatprep.subr.mxu0 0.0
  %5041 = vmatpush1.msra.mxu0 0.0
  %5042 = vmatprep.subr.mxu0 0.0
  %5043 = vmatpush1.msra.mxu0 0.0
  %5044 = vmatprep.subr.mxu0 0.0
  %5045 = vmatpush1.msra.mxu0 0.0
  %5046 = vmatprep.subr.mxu0 0.0
  %5047 = vmatpush1.msra.mxu0 0.0
  %5048 = vmatprep.subr.mxu0 0.0
  %5049 = vmatpush1.msra.mxu0 0.0
  %5050 = vmatprep.subr.mxu0 0.0
  %5051 = vmatpush1.msra.mxu0 0.0
  %5052 = vmatprep.subr.mxu0 0.0
  %5053 = vmatpush1.msra.mxu0 0.0
  %5054 = vmatprep.subr.mxu0 0.0
  %5055 = vmatpush1.msra.mxu0 0.0
  %5056 = vmatprep.subr.mxu0 0.0
  %5057 = vmatpush1.msra.mxu0 0.0
  %5058 = vmatprep.subr.mxu0 0.0
  %5059 = vmatpush1.msra.mxu0 0.0
  %5060 = vmatprep.subr.mxu0 0.0
  %5061 = vmatpush1.msra.mxu0 0.0
  %5062 = vmatprep.subr.mxu0 0.0
  %5063 = vmatpush1.msra.mxu0 0.0
  %5064 = vmatprep.subr.mxu0 0.0
  %5065 = vmatpush1.msra.mxu0 0.0
  %5066 = vmatprep.subr.mxu0 0.0
  %5067 = vmatpush1.msra.mxu0 0.0
  %5068 = vmatprep.subr.mxu0 0.0
  %5069 = vmatpush1.msra.mxu0 0.0
  %5070 = vmatprep.subr.mxu0 0.0
  %5071 = vmatpush1.msra.mxu0 0.0
  %5072 = vmatprep.subr.mxu0 0.0
  %5073 = vmatpush1.msra.mxu0 0.0
  %5074 = vmatprep.subr.mxu0 0.0
  %5075 = vmatpush1.msra.mxu0 0.0
  %5076 = vmatprep.subr.mxu0 0.0
  %5077 = vmatpush1.msra.mxu0 0.0
  %5078 = vmatprep.subr.mxu0 0.0
  %5079 = vmatpush1.msra.mxu0 0.0
  %5080 = vmatprep.subr.mxu0 0.0
  %5081 = vmatpush1.msra.mxu0 0.0
  %5082 = vmatprep.subr.mxu0 0.0
  %5083 = vmatpush1.msra.mxu0 0.0
  %5084 = vmatprep.subr.mxu0 0.0
  %5085 = vmatpush1.msra.mxu0 0.0
  %5086 = vmatprep.subr.mxu0 0.0
  %5087 = vmatpush1.msra.mxu0 0.0
  %5088 = vmatprep.subr.mxu0 0.0
  %5089 = vmatpush1.msra.mxu0 0.0
  %5090 = vmatprep.subr.mxu0 0.0
  %5091 = vmatpush1.msra.mxu0 0.0
  %5092 = vmatprep.subr.mxu0 0.0
  %5093 = vmatpush1.msra.mxu0 0.0
  %5094 = vmatprep.subr.mxu0 0.0
  %5095 = vmatpush1.msra.mxu0 0.0
  %5096 = vmatprep.subr.mxu0 0.0
  %5097 = vmatpush1.msra.mxu0 0.0
  %5098 = vmatprep.subr.mxu0 0.0
  %5099 = vmatpush1.msra.mxu0 0.0
  %5100 = vmatprep.subr.mxu0 0.0
  %5101 = vmatpush1.msra.mxu0 0.0
  %5102 = vmatprep.mubr.f32.mxu0 0.0
  %5103 = vmatmul.mubr.f32.gmra.mrb[0].mxu0 %v5036
  %v5104 = vpop.f32.mrb[0].mxu0
  %v5105 = vadd.f32 0.0, %v5104
  %v5106 = vpop.f32.mrb[0].mxu0
  %5107 = vdwg.mxu0
  %v5109 = vsel %vm418, %v4668, 0
  %5111 = vmatprep.subr.mxu0 0.0
  %5112 = vmatpush1.msra.mxu0 %v3958
  %5113 = vmatprep.subr.mxu0 0.0
  %5114 = vmatpush1.msra.mxu0 0.0
  %5115 = vmatprep.subr.mxu0 0.0
  %5116 = vmatpush1.msra.mxu0 0.0
  %5117 = vmatprep.subr.mxu0 0.0
  %5118 = vmatpush1.msra.mxu0 0.0
  %5119 = vmatprep.subr.mxu0 0.0
  %5120 = vmatpush1.msra.mxu0 0.0
  %5121 = vmatprep.subr.mxu0 0.0
  %5122 = vmatpush1.msra.mxu0 0.0
  %5123 = vmatprep.subr.mxu0 0.0
  %5124 = vmatpush1.msra.mxu0 0.0
  %5125 = vmatprep.subr.mxu0 0.0
  %5126 = vmatpush1.msra.mxu0 0.0
  %5127 = vmatprep.subr.mxu0 0.0
  %5128 = vmatpush1.msra.mxu0 0.0
  %5129 = vmatprep.subr.mxu0 0.0
  %5130 = vmatpush1.msra.mxu0 0.0
  %5131 = vmatprep.subr.mxu0 0.0
  %5132 = vmatpush1.msra.mxu0 0.0
  %5133 = vmatprep.subr.mxu0 0.0
  %5134 = vmatpush1.msra.mxu0 0.0
  %5135 = vmatprep.subr.mxu0 0.0
  %5136 = vmatpush1.msra.mxu0 0.0
  %5137 = vmatprep.subr.mxu0 0.0
  %5138 = vmatpush1.msra.mxu0 0.0
  %5139 = vmatprep.subr.mxu0 0.0
  %5140 = vmatpush1.msra.mxu0 0.0
  %5141 = vmatprep.subr.mxu0 0.0
  %5142 = vmatpush1.msra.mxu0 0.0
  %5143 = vmatprep.subr.mxu0 0.0
  %5144 = vmatpush1.msra.mxu0 0.0
  %5145 = vmatprep.subr.mxu0 0.0
  %5146 = vmatpush1.msra.mxu0 0.0
  %5147 = vmatprep.subr.mxu0 0.0
  %5148 = vmatpush1.msra.mxu0 0.0
  %5149 = vmatprep.subr.mxu0 0.0
  %5150 = vmatpush1.msra.mxu0 0.0
  %5151 = vmatprep.subr.mxu0 0.0
  %5152 = vmatpush1.msra.mxu0 0.0
  %5153 = vmatprep.subr.mxu0 0.0
  %5154 = vmatpush1.msra.mxu0 0.0
  %5155 = vmatprep.subr.mxu0 0.0
  %5156 = vmatpush1.msra.mxu0 0.0
  %5157 = vmatprep.subr.mxu0 0.0
  %5158 = vmatpush1.msra.mxu0 0.0
  %5159 = vmatprep.subr.mxu0 0.0
  %5160 = vmatpush1.msra.mxu0 0.0
  %5161 = vmatprep.subr.mxu0 0.0
  %5162 = vmatpush1.msra.mxu0 0.0
  %5163 = vmatprep.subr.mxu0 0.0
  %5164 = vmatpush1.msra.mxu0 0.0
  %5165 = vmatprep.subr.mxu0 0.0
  %5166 = vmatpush1.msra.mxu0 0.0
  %5167 = vmatprep.subr.mxu0 0.0
  %5168 = vmatpush1.msra.mxu0 0.0
  %5169 = vmatprep.subr.mxu0 0.0
  %5170 = vmatpush1.msra.mxu0 0.0
  %5171 = vmatprep.subr.mxu0 0.0
  %5172 = vmatpush1.msra.mxu0 0.0
  %5173 = vmatprep.subr.mxu0 0.0
  %5174 = vmatpush1.msra.mxu0 0.0
  %5175 = vmatprep.mubr.f32.mxu0 0.0
  %5176 = vmatmul.mubr.f32.gmra.mrb[0].mxu0 %v5109
  %v5177 = vpop.f32.mrb[0].mxu0
  %v5178 = vadd.f32 0.0, %v5177
  %v5179 = vpop.f32.mrb[0].mxu0
  %5180 = vdwg.mxu0
  %v5182 = vsel %vm418, %v4669, 0
  %5184 = vmatprep.subr.mxu0 0.0
  %5185 = vmatpush1.msra.mxu0 %v3963
  %5186 = vmatprep.subr.mxu0 0.0
  %5187 = vmatpush1.msra.mxu0 0.0
  %5188 = vmatprep.subr.mxu0 0.0
  %5189 = vmatpush1.msra.mxu0 0.0
  %5190 = vmatprep.subr.mxu0 0.0
  %5191 = vmatpush1.msra.mxu0 0.0
  %5192 = vmatprep.subr.mxu0 0.0
  %5193 = vmatpush1.msra.mxu0 0.0
  %5194 = vmatprep.subr.mxu0 0.0
  %5195 = vmatpush1.msra.mxu0 0.0
  %5196 = vmatprep.subr.mxu0 0.0
  %5197 = vmatpush1.msra.mxu0 0.0
  %5198 = vmatprep.subr.mxu0 0.0
  %5199 = vmatpush1.msra.mxu0 0.0
  %5200 = vmatprep.subr.mxu0 0.0
  %5201 = vmatpush1.msra.mxu0 0.0
  %5202 = vmatprep.subr.mxu0 0.0
  %5203 = vmatpush1.msra.mxu0 0.0
  %5204 = vmatprep.subr.mxu0 0.0
  %5205 = vmatpush1.msra.mxu0 0.0
  %5206 = vmatprep.subr.mxu0 0.0
  %5207 = vmatpush1.msra.mxu0 0.0
  %5208 = vmatprep.subr.mxu0 0.0
  %5209 = vmatpush1.msra.mxu0 0.0
  %5210 = vmatprep.subr.mxu0 0.0
  %5211 = vmatpush1.msra.mxu0 0.0
  %5212 = vmatprep.subr.mxu0 0.0
  %5213 = vmatpush1.msra.mxu0 0.0
  %5214 = vmatprep.subr.mxu0 0.0
  %5215 = vmatpush1.msra.mxu0 0.0
  %5216 = vmatprep.subr.mxu0 0.0
  %5217 = vmatpush1.msra.mxu0 0.0
  %5218 = vmatprep.subr.mxu0 0.0
  %5219 = vmatpush1.msra.mxu0 0.0
  %5220 = vmatprep.subr.mxu0 0.0
  %5221 = vmatpush1.msra.mxu0 0.0
  %5222 = vmatprep.subr.mxu0 0.0
  %5223 = vmatpush1.msra.mxu0 0.0
  %5224 = vmatprep.subr.mxu0 0.0
  %5225 = vmatpush1.msra.mxu0 0.0
  %5226 = vmatprep.subr.mxu0 0.0
  %5227 = vmatpush1.msra.mxu0 0.0
  %5228 = vmatprep.subr.mxu0 0.0
  %5229 = vmatpush1.msra.mxu0 0.0
  %5230 = vmatprep.subr.mxu0 0.0
  %5231 = vmatpush1.msra.mxu0 0.0
  %5232 = vmatprep.subr.mxu0 0.0
  %5233 = vmatpush1.msra.mxu0 0.0
  %5234 = vmatprep.subr.mxu0 0.0
  %5235 = vmatpush1.msra.mxu0 0.0
  %5236 = vmatprep.subr.mxu0 0.0
  %5237 = vmatpush1.msra.mxu0 0.0
  %5238 = vmatprep.subr.mxu0 0.0
  %5239 = vmatpush1.msra.mxu0 0.0
  %5240 = vmatprep.subr.mxu0 0.0
  %5241 = vmatpush1.msra.mxu0 0.0
  %5242 = vmatprep.subr.mxu0 0.0
  %5243 = vmatpush1.msra.mxu0 0.0
  %5244 = vmatprep.subr.mxu0 0.0
  %5245 = vmatpush1.msra.mxu0 0.0
  %5246 = vmatprep.subr.mxu0 0.0
  %5247 = vmatpush1.msra.mxu0 0.0
  %5248 = vmatprep.mubr.f32.mxu0 0.0
  %5249 = vmatmul.mubr.f32.gmra.mrb[0].mxu0 %v5182
  %v5250 = vpop.f32.mrb[0].mxu0
  %v5251 = vadd.f32 0.0, %v5250
  %v5252 = vpop.f32.mrb[0].mxu0
  %5253 = vdwg.mxu0
  %s5254 = scalar_lea.vmem %s7, 16
  %v5255 = vld [vmem:[%s5254] sm:$0xff]
  %v5257 = vsel %vm418, %v4740, 0
  %v5260 = vsel %vm418, %v4813, 0
  %v5263 = vsel %vm418, %v4886, 0
  %v5266 = vsel %vm418, %v4959, 0
  %v5269 = vsel %vm418, %v5032, 0
  %v5272 = vsel %vm418, %v5105, 0
  %v5275 = vsel %vm418, %v5178, 0
  %v5278 = vsel %vm418, %v5251, 0
  %5280 = vmatprep.subr.mxu0 0.0
  %5281 = vmatpush1.msra.mxu0 %v5255
  %5282 = vmatprep.subr.mxu0 0.0
  %5283 = vmatpush1.msra.mxu0 0.0
  %5284 = vmatprep.subr.mxu0 0.0
  %5285 = vmatpush1.msra.mxu0 0.0
  %5286 = vmatprep.subr.mxu0 0.0
  %5287 = vmatpush1.msra.mxu0 0.0
  %5288 = vmatprep.subr.mxu0 0.0
  %5289 = vmatpush1.msra.mxu0 0.0
  %5290 = vmatprep.subr.mxu0 0.0
  %5291 = vmatpush1.msra.mxu0 0.0
  %5292 = vmatprep.subr.mxu0 0.0
  %5293 = vmatpush1.msra.mxu0 0.0
  %5294 = vmatprep.subr.mxu0 0.0
  %5295 = vmatpush1.msra.mxu0 0.0
  %5296 = vmatprep.subr.mxu0 0.0
  %5297 = vmatpush1.msra.mxu0 0.0
  %5298 = vmatprep.subr.mxu0 0.0
  %5299 = vmatpush1.msra.mxu0 0.0
  %5300 = vmatprep.subr.mxu0 0.0
  %5301 = vmatpush1.msra.mxu0 0.0
  %5302 = vmatprep.subr.mxu0 0.0
  %5303 = vmatpush1.msra.mxu0 0.0
  %5304 = vmatprep.subr.mxu0 0.0
  %5305 = vmatpush1.msra.mxu0 0.0
  %5306 = vmatprep.subr.mxu0 0.0
  %5307 = vmatpush1.msra.mxu0 0.0
  %5308 = vmatprep.subr.mxu0 0.0
  %5309 = vmatpush1.msra.mxu0 0.0
  %5310 = vmatprep.subr.mxu0 0.0
  %5311 = vmatpush1.msra.mxu0 0.0
  %5312 = vmatprep.subr.mxu0 0.0
  %5313 = vmatpush1.msra.mxu0 0.0
  %5314 = vmatprep.subr.mxu0 0.0
  %5315 = vmatpush1.msra.mxu0 0.0
  %5316 = vmatprep.subr.mxu0 0.0
  %5317 = vmatpush1.msra.mxu0 0.0
  %5318 = vmatprep.subr.mxu0 0.0
  %5319 = vmatpush1.msra.mxu0 0.0
  %5320 = vmatprep.subr.mxu0 0.0
  %5321 = vmatpush1.msra.mxu0 0.0
  %5322 = vmatprep.subr.mxu0 0.0
  %5323 = vmatpush1.msra.mxu0 0.0
  %5324 = vmatprep.subr.mxu0 0.0
  %5325 = vmatpush1.msra.mxu0 0.0
  %5326 = vmatprep.subr.mxu0 0.0
  %5327 = vmatpush1.msra.mxu0 0.0
  %5328 = vmatprep.subr.mxu0 0.0
  %5329 = vmatpush1.msra.mxu0 0.0
  %5330 = vmatprep.subr.mxu0 0.0
  %5331 = vmatpush1.msra.mxu0 0.0
  %5332 = vmatprep.subr.mxu0 0.0
  %5333 = vmatpush1.msra.mxu0 0.0
  %5334 = vmatprep.subr.mxu0 0.0
  %5335 = vmatpush1.msra.mxu0 0.0
  %5336 = vmatprep.subr.mxu0 0.0
  %5337 = vmatpush1.msra.mxu0 0.0
  %5338 = vmatprep.subr.mxu0 0.0
  %5339 = vmatpush1.msra.mxu0 0.0
  %5340 = vmatprep.subr.mxu0 0.0
  %5341 = vmatpush1.msra.mxu0 0.0
  %5342 = vmatprep.subr.mxu0 0.0
  %5343 = vmatpush1.msra.mxu0 0.0
  %5344 = vmatprep.mubr.f32.mxu0 0.0
  %5345 = vmatmul.mubr.f32.gmra.mrb[0].mxu0 %v5257
  %v5346 = vpop.f32.mrb[0].mxu0
  %v5347 = vadd.f32 0.0, %v5346
  %v5348 = vpop.f32.mrb[0].mxu0
  %5349 = vmatprep.mubr.f32.mxu0 0.0
  %5350 = vmatmul.mubr.f32.gmra.mrb[0].mxu0 %v5260
  %v5351 = vpop.f32.mrb[0].mxu0
  %v5352 = vadd.f32 0.0, %v5351
  %v5353 = vpop.f32.mrb[0].mxu0
  %5354 = vmatprep.mubr.f32.mxu0 0.0
  %5355 = vmatmul.mubr.f32.gmra.mrb[0].mxu0 %v5263
  %v5356 = vpop.f32.mrb[0].mxu0
  %v5357 = vadd.f32 0.0, %v5356
  %v5358 = vpop.f32.mrb[0].mxu0
  %5359 = vmatprep.mubr.f32.mxu0 0.0
  %5360 = vmatmul.mubr.f32.gmra.mrb[0].mxu0 %v5266
  %v5361 = vpop.f32.mrb[0].mxu0
  %v5362 = vadd.f32 0.0, %v5361
  %v5363 = vpop.f32.mrb[0].mxu0
  %5364 = vmatprep.mubr.f32.mxu0 0.0
  %5365 = vmatmul.mubr.f32.gmra.mrb[0].mxu0 %v5269
  %v5366 = vpop.f32.mrb[0].mxu0
  %v5367 = vadd.f32 0.0, %v5366
  %v5368 = vpop.f32.mrb[0].mxu0
  %5369 = vmatprep.mubr.f32.mxu0 0.0
  %5370 = vmatmul.mubr.f32.gmra.mrb[0].mxu0 %v5272
  %v5371 = vpop.f32.mrb[0].mxu0
  %v5372 = vadd.f32 0.0, %v5371
  %v5373 = vpop.f32.mrb[0].mxu0
  %5374 = vmatprep.mubr.f32.mxu0 0.0
  %5375 = vmatmul.mubr.f32.gmra.mrb[0].mxu0 %v5275
  %v5376 = vpop.f32.mrb[0].mxu0
  %v5377 = vadd.f32 0.0, %v5376
  %v5378 = vpop.f32.mrb[0].mxu0
  %5379 = vmatprep.mubr.f32.mxu0 0.0
  %5380 = vmatmul.mubr.f32.gmra.mrb[0].mxu0 %v5278
  %v5381 = vpop.f32.mrb[0].mxu0
  %v5382 = vadd.f32 0.0, %v5381
  %v5383 = vpop.f32.mrb[0].mxu0
  %5384 = vdwg.mxu0
  %v5385 = vadd.f32 %v3574, %v5347
  %v5386 = vadd.f32 %v3579, %v5352
  %v5387 = vadd.f32 %v3584, %v5357
  %v5388 = vadd.f32 %v3589, %v5362
  %v5389 = vadd.f32 %v3594, %v5367
  %v5390 = vadd.f32 %v3599, %v5372
  %v5391 = vadd.f32 %v3604, %v5377
  %v5392 = vadd.f32 %v3609, %v5382
  %s5393 = scalar_lea.vmem %s1, 96
  %v5394 = vld [vmem:[%s5393] sm:$0xff]
  %v5395 = vld [vmem:[%s5393 + $0x8] sm:$0xff]
  %v5396 = vld [vmem:[%s5393 + $0x10] sm:$0xff]
  %v5397 = vld [vmem:[%s5393 + $0x18] sm:$0xff]
  %s5398 = scalar_lea.vmem %s4, 3
  %v5399 = vld [vmem:[%s5398] sm:$0x1]
  %v5401 = vlaneseq
  %v5402 = vshrl.u32 %v5401, 7
  %v5403 = vsub.s32 0, %v5402
  %v5404 = vrot.slane %v5399, %v5403
  %5406 = vmatprep.subr.mxu0 0.0
  %5407 = vmatpush1.msra.mxu0 %v5394
  %5408 = vmatprep.subr.mxu0 0.0
  %5409 = vmatpush1.msra.mxu0 %v5395
  %5410 = vmatprep.subr.mxu0 0.0
  %5411 = vmatpush1.msra.mxu0 %v5396
  %5412 = vmatprep.subr.mxu0 0.0
  %5413 = vmatpush1.msra.mxu0 %v5397
  %5414 = vmatprep.subr.mxu0 0.0
  %5415 = vmatpush1.msra.mxu0 0.0
  %5416 = vmatprep.subr.mxu0 0.0
  %5417 = vmatpush1.msra.mxu0 0.0
  %5418 = vmatprep.subr.mxu0 0.0
  %5419 = vmatpush1.msra.mxu0 0.0
  %5420 = vmatprep.subr.mxu0 0.0
  %5421 = vmatpush1.msra.mxu0 0.0
  %5422 = vmatprep.subr.mxu0 0.0
  %5423 = vmatpush1.msra.mxu0 0.0
  %5424 = vmatprep.subr.mxu0 0.0
  %5425 = vmatpush1.msra.mxu0 0.0
  %5426 = vmatprep.subr.mxu0 0.0
  %5427 = vmatpush1.msra.mxu0 0.0
  %5428 = vmatprep.subr.mxu0 0.0
  %5429 = vmatpush1.msra.mxu0 0.0
  %5430 = vmatprep.subr.mxu0 0.0
  %5431 = vmatpush1.msra.mxu0 0.0
  %5432 = vmatprep.subr.mxu0 0.0
  %5433 = vmatpush1.msra.mxu0 0.0
  %5434 = vmatprep.subr.mxu0 0.0
  %5435 = vmatpush1.msra.mxu0 0.0
  %5436 = vmatprep.subr.mxu0 0.0
  %5437 = vmatpush1.msra.mxu0 0.0
  %5438 = vmatprep.subr.mxu0 0.0
  %5439 = vmatpush1.msra.mxu0 0.0
  %5440 = vmatprep.subr.mxu0 0.0
  %5441 = vmatpush1.msra.mxu0 0.0
  %5442 = vmatprep.subr.mxu0 0.0
  %5443 = vmatpush1.msra.mxu0 0.0
  %5444 = vmatprep.subr.mxu0 0.0
  %5445 = vmatpush1.msra.mxu0 0.0
  %5446 = vmatprep.subr.mxu0 0.0
  %5447 = vmatpush1.msra.mxu0 0.0
  %5448 = vmatprep.subr.mxu0 0.0
  %5449 = vmatpush1.msra.mxu0 0.0
  %5450 = vmatprep.subr.mxu0 0.0
  %5451 = vmatpush1.msra.mxu0 0.0
  %5452 = vmatprep.subr.mxu0 0.0
  %5453 = vmatpush1.msra.mxu0 0.0
  %5454 = vmatprep.subr.mxu0 0.0
  %5455 = vmatpush1.msra.mxu0 0.0
  %5456 = vmatprep.subr.mxu0 0.0
  %5457 = vmatpush1.msra.mxu0 0.0
  %5458 = vmatprep.subr.mxu0 0.0
  %5459 = vmatpush1.msra.mxu0 0.0
  %5460 = vmatprep.subr.mxu0 0.0
  %5461 = vmatpush1.msra.mxu0 0.0
  %5462 = vmatprep.subr.mxu0 0.0
  %5463 = vmatpush1.msra.mxu0 0.0
  %5464 = vmatprep.subr.mxu0 0.0
  %5465 = vmatpush1.msra.mxu0 0.0
  %5466 = vmatprep.subr.mxu0 0.0
  %5467 = vmatpush1.msra.mxu0 0.0
  %5468 = vmatprep.subr.mxu0 0.0
  %5469 = vmatpush1.msra.mxu0 0.0
  %5470 = vmatprep.mubr.f32.mxu0 0.0
  %5471 = vmatmul.mubr.f32.gmra.mrb[0].mxu0 %v58
  %v5472 = vpop.f32.mrb[0].mxu0
  %v5473 = vadd.f32 %v5404, %v5472
  %v5474 = vpop.f32.mrb[0].mxu0
  %5475 = vmatprep.mubr.f32.mxu0 0.0
  %5476 = vmatmul.mubr.f32.gmra.mrb[0].mxu0 %v61
  %v5477 = vpop.f32.mrb[0].mxu0
  %v5478 = vadd.f32 %v5404, %v5477
  %v5479 = vpop.f32.mrb[0].mxu0
  %5480 = vmatprep.mubr.f32.mxu0 0.0
  %5481 = vmatmul.mubr.f32.gmra.mrb[0].mxu0 %v64
  %v5482 = vpop.f32.mrb[0].mxu0
  %v5483 = vadd.f32 %v5404, %v5482
  %v5484 = vpop.f32.mrb[0].mxu0
  %5485 = vmatprep.mubr.f32.mxu0 0.0
  %5486 = vmatmul.mubr.f32.gmra.mrb[0].mxu0 %v67
  %v5487 = vpop.f32.mrb[0].mxu0
  %v5488 = vadd.f32 %v5404, %v5487
  %v5489 = vpop.f32.mrb[0].mxu0
  %5490 = vmatprep.mubr.f32.mxu0 0.0
  %5491 = vmatmul.mubr.f32.gmra.mrb[0].mxu0 %v70
  %v5492 = vpop.f32.mrb[0].mxu0
  %v5493 = vadd.f32 %v5404, %v5492
  %v5494 = vpop.f32.mrb[0].mxu0
  %5495 = vmatprep.mubr.f32.mxu0 0.0
  %5496 = vmatmul.mubr.f32.gmra.mrb[0].mxu0 %v73
  %v5497 = vpop.f32.mrb[0].mxu0
  %v5498 = vadd.f32 %v5404, %v5497
  %v5499 = vpop.f32.mrb[0].mxu0
  %5500 = vmatprep.mubr.f32.mxu0 0.0
  %5501 = vmatmul.mubr.f32.gmra.mrb[0].mxu0 %v76
  %v5502 = vpop.f32.mrb[0].mxu0
  %v5503 = vadd.f32 %v5404, %v5502
  %v5504 = vpop.f32.mrb[0].mxu0
  %5505 = vmatprep.mubr.f32.mxu0 0.0
  %5506 = vmatmul.mubr.f32.gmra.mrb[0].mxu0 %v79
  %v5507 = vpop.f32.mrb[0].mxu0
  %v5508 = vadd.f32 %v5404, %v5507
  %v5509 = vpop.f32.mrb[0].mxu0
  %5510 = vdwg.mxu0
  %s5511 = scalar_lea.vmem %s2, 96
  %v5512 = vld [vmem:[%s5511] sm:$0xff]
  %v5513 = vld [vmem:[%s5511 + $0x8] sm:$0xff]
  %v5514 = vld [vmem:[%s5511 + $0x10] sm:$0xff]
  %v5515 = vld [vmem:[%s5511 + $0x18] sm:$0xff]
  %s5516 = scalar_lea.vmem %s5, 3
  %v5517 = vld [vmem:[%s5516] sm:$0x1]
  %v5519 = vlaneseq
  %v5520 = vshrl.u32 %v5519, 7
  %v5521 = vsub.s32 0, %v5520
  %v5522 = vrot.slane %v5517, %v5521
  %5524 = vmatprep.subr.mxu0 0.0
  %5525 = vmatpush1.msra.mxu0 %v5512
  %5526 = vmatprep.subr.mxu0 0.0
  %5527 = vmatpush1.msra.mxu0 %v5513
  %5528 = vmatprep.subr.mxu0 0.0
  %5529 = vmatpush1.msra.mxu0 %v5514
  %5530 = vmatprep.subr.mxu0 0.0
  %5531 = vmatpush1.msra.mxu0 %v5515
  %5532 = vmatprep.subr.mxu0 0.0
  %5533 = vmatpush1.msra.mxu0 0.0
  %5534 = vmatprep.subr.mxu0 0.0
  %5535 = vmatpush1.msra.mxu0 0.0
  %5536 = vmatprep.subr.mxu0 0.0
  %5537 = vmatpush1.msra.mxu0 0.0
  %5538 = vmatprep.subr.mxu0 0.0
  %5539 = vmatpush1.msra.mxu0 0.0
  %5540 = vmatprep.subr.mxu0 0.0
  %5541 = vmatpush1.msra.mxu0 0.0
  %5542 = vmatprep.subr.mxu0 0.0
  %5543 = vmatpush1.msra.mxu0 0.0
  %5544 = vmatprep.subr.mxu0 0.0
  %5545 = vmatpush1.msra.mxu0 0.0
  %5546 = vmatprep.subr.mxu0 0.0
  %5547 = vmatpush1.msra.mxu0 0.0
  %5548 = vmatprep.subr.mxu0 0.0
  %5549 = vmatpush1.msra.mxu0 0.0
  %5550 = vmatprep.subr.mxu0 0.0
  %5551 = vmatpush1.msra.mxu0 0.0
  %5552 = vmatprep.subr.mxu0 0.0
  %5553 = vmatpush1.msra.mxu0 0.0
  %5554 = vmatprep.subr.mxu0 0.0
  %5555 = vmatpush1.msra.mxu0 0.0
  %5556 = vmatprep.subr.mxu0 0.0
  %5557 = vmatpush1.msra.mxu0 0.0
  %5558 = vmatprep.subr.mxu0 0.0
  %5559 = vmatpush1.msra.mxu0 0.0
  %5560 = vmatprep.subr.mxu0 0.0
  %5561 = vmatpush1.msra.mxu0 0.0
  %5562 = vmatprep.subr.mxu0 0.0
  %5563 = vmatpush1.msra.mxu0 0.0
  %5564 = vmatprep.subr.mxu0 0.0
  %5565 = vmatpush1.msra.mxu0 0.0
  %5566 = vmatprep.subr.mxu0 0.0
  %5567 = vmatpush1.msra.mxu0 0.0
  %5568 = vmatprep.subr.mxu0 0.0
  %5569 = vmatpush1.msra.mxu0 0.0
  %5570 = vmatprep.subr.mxu0 0.0
  %5571 = vmatpush1.msra.mxu0 0.0
  %5572 = vmatprep.subr.mxu0 0.0
  %5573 = vmatpush1.msra.mxu0 0.0
  %5574 = vmatprep.subr.mxu0 0.0
  %5575 = vmatpush1.msra.mxu0 0.0
  %5576 = vmatprep.subr.mxu0 0.0
  %5577 = vmatpush1.msra.mxu0 0.0
  %5578 = vmatprep.subr.mxu0 0.0
  %5579 = vmatpush1.msra.mxu0 0.0
  %5580 = vmatprep.subr.mxu0 0.0
  %5581 = vmatpush1.msra.mxu0 0.0
  %5582 = vmatprep.subr.mxu0 0.0
  %5583 = vmatpush1.msra.mxu0 0.0
  %5584 = vmatprep.subr.mxu0 0.0
  %5585 = vmatpush1.msra.mxu0 0.0
  %5586 = vmatprep.subr.mxu0 0.0
  %5587 = vmatpush1.msra.mxu0 0.0
  %5588 = vmatprep.mubr.f32.mxu0 0.0
  %5589 = vmatmul.mubr.f32.gmra.mrb[0].mxu0 %v58
  %v5590 = vpop.f32.mrb[0].mxu0
  %v5591 = vadd.f32 %v5522, %v5590
  %v5592 = vpop.f32.mrb[0].mxu0
  %5593 = vmatprep.mubr.f32.mxu0 0.0
  %5594 = vmatmul.mubr.f32.gmra.mrb[0].mxu0 %v61
  %v5595 = vpop.f32.mrb[0].mxu0
  %v5596 = vadd.f32 %v5522, %v5595
  %v5597 = vpop.f32.mrb[0].mxu0
  %5598 = vmatprep.mubr.f32.mxu0 0.0
  %5599 = vmatmul.mubr.f32.gmra.mrb[0].mxu0 %v64
  %v5600 = vpop.f32.mrb[0].mxu0
  %v5601 = vadd.f32 %v5522, %v5600
  %v5602 = vpop.f32.mrb[0].mxu0
  %5603 = vmatprep.mubr.f32.mxu0 0.0
  %5604 = vmatmul.mubr.f32.gmra.mrb[0].mxu0 %v67
  %v5605 = vpop.f32.mrb[0].mxu0
  %v5606 = vadd.f32 %v5522, %v5605
  %v5607 = vpop.f32.mrb[0].mxu0
  %5608 = vmatprep.mubr.f32.mxu0 0.0
  %5609 = vmatmul.mubr.f32.gmra.mrb[0].mxu0 %v70
  %v5610 = vpop.f32.mrb[0].mxu0
  %v5611 = vadd.f32 %v5522, %v5610
  %v5612 = vpop.f32.mrb[0].mxu0
  %5613 = vmatprep.mubr.f32.mxu0 0.0
  %5614 = vmatmul.mubr.f32.gmra.mrb[0].mxu0 %v73
  %v5615 = vpop.f32.mrb[0].mxu0
  %v5616 = vadd.f32 %v5522, %v5615
  %v5617 = vpop.f32.mrb[0].mxu0
  %5618 = vmatprep.mubr.f32.mxu0 0.0
  %5619 = vmatmul.mubr.f32.gmra.mrb[0].mxu0 %v76
  %v5620 = vpop.f32.mrb[0].mxu0
  %v5621 = vadd.f32 %v5522, %v5620
  %v5622 = vpop.f32.mrb[0].mxu0
  %5623 = vmatprep.mubr.f32.mxu0 0.0
  %5624 = vmatmul.mubr.f32.gmra.mrb[0].mxu0 %v79
  %v5625 = vpop.f32.mrb[0].mxu0
  %v5626 = vadd.f32 %v5522, %v5625
  %v5627 = vpop.f32.mrb[0].mxu0
  %5628 = vdwg.mxu0
  %s5629 = scalar_lea.vmem %s3, 96
  %v5630 = vld [vmem:[%s5629] sm:$0xff]
  %v5631 = vld [vmem:[%s5629 + $0x8] sm:$0xff]
  %v5632 = vld [vmem:[%s5629 + $0x10] sm:$0xff]
  %v5633 = vld [vmem:[%s5629 + $0x18] sm:$0xff]
  %s5634 = scalar_lea.vmem %s6, 3
  %v5635 = vld [vmem:[%s5634] sm:$0x1]
  %v5637 = vlaneseq
  %v5638 = vshrl.u32 %v5637, 7
  %v5639 = vsub.s32 0, %v5638
  %v5640 = vrot.slane %v5635, %v5639
  %5642 = vmatprep.subr.mxu0 0.0
  %5643 = vmatpush1.msra.mxu0 %v5630
  %5644 = vmatprep.subr.mxu0 0.0
  %5645 = vmatpush1.msra.mxu0 %v5631
  %5646 = vmatprep.subr.mxu0 0.0
  %5647 = vmatpush1.msra.mxu0 %v5632
  %5648 = vmatprep.subr.mxu0 0.0
  %5649 = vmatpush1.msra.mxu0 %v5633
  %5650 = vmatprep.subr.mxu0 0.0
  %5651 = vmatpush1.msra.mxu0 0.0
  %5652 = vmatprep.subr.mxu0 0.0
  %5653 = vmatpush1.msra.mxu0 0.0
  %5654 = vmatprep.subr.mxu0 0.0
  %5655 = vmatpush1.msra.mxu0 0.0
  %5656 = vmatprep.subr.mxu0 0.0
  %5657 = vmatpush1.msra.mxu0 0.0
  %5658 = vmatprep.subr.mxu0 0.0
  %5659 = vmatpush1.msra.mxu0 0.0
  %5660 = vmatprep.subr.mxu0 0.0
  %5661 = vmatpush1.msra.mxu0 0.0
  %5662 = vmatprep.subr.mxu0 0.0
  %5663 = vmatpush1.msra.mxu0 0.0
  %5664 = vmatprep.subr.mxu0 0.0
  %5665 = vmatpush1.msra.mxu0 0.0
  %5666 = vmatprep.subr.mxu0 0.0
  %5667 = vmatpush1.msra.mxu0 0.0
  %5668 = vmatprep.subr.mxu0 0.0
  %5669 = vmatpush1.msra.mxu0 0.0
  %5670 = vmatprep.subr.mxu0 0.0
  %5671 = vmatpush1.msra.mxu0 0.0
  %5672 = vmatprep.subr.mxu0 0.0
  %5673 = vmatpush1.msra.mxu0 0.0
  %5674 = vmatprep.subr.mxu0 0.0
  %5675 = vmatpush1.msra.mxu0 0.0
  %5676 = vmatprep.subr.mxu0 0.0
  %5677 = vmatpush1.msra.mxu0 0.0
  %5678 = vmatprep.subr.mxu0 0.0
  %5679 = vmatpush1.msra.mxu0 0.0
  %5680 = vmatprep.subr.mxu0 0.0
  %5681 = vmatpush1.msra.mxu0 0.0
  %5682 = vmatprep.subr.mxu0 0.0
  %5683 = vmatpush1.msra.mxu0 0.0
  %5684 = vmatprep.subr.mxu0 0.0
  %5685 = vmatpush1.msra.mxu0 0.0
  %5686 = vmatprep.subr.mxu0 0.0
  %5687 = vmatpush1.msra.mxu0 0.0
  %5688 = vmatprep.subr.mxu0 0.0
  %5689 = vmatpush1.msra.mxu0 0.0
  %5690 = vmatprep.subr.mxu0 0.0
  %5691 = vmatpush1.msra.mxu0 0.0
  %5692 = vmatprep.subr.mxu0 0.0
  %5693 = vmatpush1.msra.mxu0 0.0
  %5694 = vmatprep.subr.mxu0 0.0
  %5695 = vmatpush1.msra.mxu0 0.0
  %5696 = vmatprep.subr.mxu0 0.0
  %5697 = vmatpush1.msra.mxu0 0.0
  %5698 = vmatprep.subr.mxu0 0.0
  %5699 = vmatpush1.msra.mxu0 0.0
  %5700 = vmatprep.subr.mxu0 0.0
  %5701 = vmatpush1.msra.mxu0 0.0
  %5702 = vmatprep.subr.mxu0 0.0
  %5703 = vmatpush1.msra.mxu0 0.0
  %5704 = vmatprep.subr.mxu0 0.0
  %5705 = vmatpush1.msra.mxu0 0.0
  %5706 = vmatprep.mubr.f32.mxu0 0.0
  %5707 = vmatmul.mubr.f32.gmra.mrb[0].mxu0 %v58
  %v5708 = vpop.f32.mrb[0].mxu0
  %v5709 = vadd.f32 %v5640, %v5708
  %v5710 = vpop.f32.mrb[0].mxu0
  %5711 = vmatprep.mubr.f32.mxu0 0.0
  %5712 = vmatmul.mubr.f32.gmra.mrb[0].mxu0 %v61
  %v5713 = vpop.f32.mrb[0].mxu0
  %v5714 = vadd.f32 %v5640, %v5713
  %v5715 = vpop.f32.mrb[0].mxu0
  %5716 = vmatprep.mubr.f32.mxu0 0.0
  %5717 = vmatmul.mubr.f32.gmra.mrb[0].mxu0 %v64
  %v5718 = vpop.f32.mrb[0].mxu0
  %v5719 = vadd.f32 %v5640, %v5718
  %v5720 = vpop.f32.mrb[0].mxu0
  %5721 = vmatprep.mubr.f32.mxu0 0.0
  %5722 = vmatmul.mubr.f32.gmra.mrb[0].mxu0 %v67
  %v5723 = vpop.f32.mrb[0].mxu0
  %v5724 = vadd.f32 %v5640, %v5723
  %v5725 = vpop.f32.mrb[0].mxu0
  %5726 = vmatprep.mubr.f32.mxu0 0.0
  %5727 = vmatmul.mubr.f32.gmra.mrb[0].mxu0 %v70
  %v5728 = vpop.f32.mrb[0].mxu0
  %v5729 = vadd.f32 %v5640, %v5728
  %v5730 = vpop.f32.mrb[0].mxu0
  %5731 = vmatprep.mubr.f32.mxu0 0.0
  %5732 = vmatmul.mubr.f32.gmra.mrb[0].mxu0 %v73
  %v5733 = vpop.f32.mrb[0].mxu0
  %v5734 = vadd.f32 %v5640, %v5733
  %v5735 = vpop.f32.mrb[0].mxu0
  %5736 = vmatprep.mubr.f32.mxu0 0.0
  %5737 = vmatmul.mubr.f32.gmra.mrb[0].mxu0 %v76
  %v5738 = vpop.f32.mrb[0].mxu0
  %v5739 = vadd.f32 %v5640, %v5738
  %v5740 = vpop.f32.mrb[0].mxu0
  %5741 = vmatprep.mubr.f32.mxu0 0.0
  %5742 = vmatmul.mubr.f32.gmra.mrb[0].mxu0 %v79
  %v5743 = vpop.f32.mrb[0].mxu0
  %v5744 = vadd.f32 %v5640, %v5743
  %v5745 = vpop.f32.mrb[0].mxu0
  %5746 = vdwg.mxu0
  %v5748 = vsel %vm418, %v5473, 0
  %v5751 = vsel %vm418, %v5591, 0
  %5753 = vmatprep.subr.mxu0 0.0
  %5754 = vmatpush1.xpose.msra.mxu0 %v5751
  %5755 = vmatprep.subr.mxu0 0.0
  %5756 = vmatpush1.xpose.msra.mxu0 0.0
  %5757 = vmatprep.subr.mxu0 0.0
  %5758 = vmatpush1.xpose.msra.mxu0 0.0
  %5759 = vmatprep.subr.mxu0 0.0
  %5760 = vmatpush1.xpose.msra.mxu0 0.0
  %5761 = vmatprep.subr.mxu0 0.0
  %5762 = vmatpush1.xpose.msra.mxu0 0.0
  %5763 = vmatprep.subr.mxu0 0.0
  %5764 = vmatpush1.xpose.msra.mxu0 0.0
  %5765 = vmatprep.subr.mxu0 0.0
  %5766 = vmatpush1.xpose.msra.mxu0 0.0
  %5767 = vmatprep.subr.mxu0 0.0
  %5768 = vmatpush1.xpose.msra.mxu0 0.0
  %5769 = vmatprep.subr.mxu0 0.0
  %5770 = vmatpush1.xpose.msra.mxu0 0.0
  %5771 = vmatprep.subr.mxu0 0.0
  %5772 = vmatpush1.xpose.msra.mxu0 0.0
  %5773 = vmatprep.subr.mxu0 0.0
  %5774 = vmatpush1.xpose.msra.mxu0 0.0
  %5775 = vmatprep.subr.mxu0 0.0
  %5776 = vmatpush1.xpose.msra.mxu0 0.0
  %5777 = vmatprep.subr.mxu0 0.0
  %5778 = vmatpush1.xpose.msra.mxu0 0.0
  %5779 = vmatprep.subr.mxu0 0.0
  %5780 = vmatpush1.xpose.msra.mxu0 0.0
  %5781 = vmatprep.subr.mxu0 0.0
  %5782 = vmatpush1.xpose.msra.mxu0 0.0
  %5783 = vmatprep.subr.mxu0 0.0
  %5784 = vmatpush1.xpose.msra.mxu0 0.0
  %5785 = vmatprep.subr.mxu0 0.0
  %5786 = vmatpush1.xpose.msra.mxu0 0.0
  %5787 = vmatprep.subr.mxu0 0.0
  %5788 = vmatpush1.xpose.msra.mxu0 0.0
  %5789 = vmatprep.subr.mxu0 0.0
  %5790 = vmatpush1.xpose.msra.mxu0 0.0
  %5791 = vmatprep.subr.mxu0 0.0
  %5792 = vmatpush1.xpose.msra.mxu0 0.0
  %5793 = vmatprep.subr.mxu0 0.0
  %5794 = vmatpush1.xpose.msra.mxu0 0.0
  %5795 = vmatprep.subr.mxu0 0.0
  %5796 = vmatpush1.xpose.msra.mxu0 0.0
  %5797 = vmatprep.subr.mxu0 0.0
  %5798 = vmatpush1.xpose.msra.mxu0 0.0
  %5799 = vmatprep.subr.mxu0 0.0
  %5800 = vmatpush1.xpose.msra.mxu0 0.0
  %5801 = vmatprep.subr.mxu0 0.0
  %5802 = vmatpush1.xpose.msra.mxu0 0.0
  %5803 = vmatprep.subr.mxu0 0.0
  %5804 = vmatpush1.xpose.msra.mxu0 0.0
  %5805 = vmatprep.subr.mxu0 0.0
  %5806 = vmatpush1.xpose.msra.mxu0 0.0
  %5807 = vmatprep.subr.mxu0 0.0
  %5808 = vmatpush1.xpose.msra.mxu0 0.0
  %5809 = vmatprep.subr.mxu0 0.0
  %5810 = vmatpush1.xpose.msra.mxu0 0.0
  %5811 = vmatprep.subr.mxu0 0.0
  %5812 = vmatpush1.xpose.msra.mxu0 0.0
  %5813 = vmatprep.subr.mxu0 0.0
  %5814 = vmatpush1.xpose.msra.mxu0 0.0
  %5815 = vmatprep.subr.mxu0 0.0
  %5816 = vmatpush1.xpose.msra.mxu0 0.0
  %5817 = vmatprep.mubr.f32.mxu0 0.0
  %5818 = vmatmul.mubr.f32.gmra.mrb[0].mxu0 %v5748
  %v5819 = vpop.f32.mrb[0].mxu0
  %v5820 = vadd.f32 0.0, %v5819
  %v5821 = vpop.f32.mrb[0].mxu0
  %5822 = vdwg.mxu0
  %v5824 = vsel %vm418, %v5478, 0
  %v5827 = vsel %vm418, %v5596, 0
  %5829 = vmatprep.subr.mxu0 0.0
  %5830 = vmatpush1.xpose.msra.mxu0 %v5827
  %5831 = vmatprep.subr.mxu0 0.0
  %5832 = vmatpush1.xpose.msra.mxu0 0.0
  %5833 = vmatprep.subr.mxu0 0.0
  %5834 = vmatpush1.xpose.msra.mxu0 0.0
  %5835 = vmatprep.subr.mxu0 0.0
  %5836 = vmatpush1.xpose.msra.mxu0 0.0
  %5837 = vmatprep.subr.mxu0 0.0
  %5838 = vmatpush1.xpose.msra.mxu0 0.0
  %5839 = vmatprep.subr.mxu0 0.0
  %5840 = vmatpush1.xpose.msra.mxu0 0.0
  %5841 = vmatprep.subr.mxu0 0.0
  %5842 = vmatpush1.xpose.msra.mxu0 0.0
  %5843 = vmatprep.subr.mxu0 0.0
  %5844 = vmatpush1.xpose.msra.mxu0 0.0
  %5845 = vmatprep.subr.mxu0 0.0
  %5846 = vmatpush1.xpose.msra.mxu0 0.0
  %5847 = vmatprep.subr.mxu0 0.0
  %5848 = vmatpush1.xpose.msra.mxu0 0.0
  %5849 = vmatprep.subr.mxu0 0.0
  %5850 = vmatpush1.xpose.msra.mxu0 0.0
  %5851 = vmatprep.subr.mxu0 0.0
  %5852 = vmatpush1.xpose.msra.mxu0 0.0
  %5853 = vmatprep.subr.mxu0 0.0
  %5854 = vmatpush1.xpose.msra.mxu0 0.0
  %5855 = vmatprep.subr.mxu0 0.0
  %5856 = vmatpush1.xpose.msra.mxu0 0.0
  %5857 = vmatprep.subr.mxu0 0.0
  %5858 = vmatpush1.xpose.msra.mxu0 0.0
  %5859 = vmatprep.subr.mxu0 0.0
  %5860 = vmatpush1.xpose.msra.mxu0 0.0
  %5861 = vmatprep.subr.mxu0 0.0
  %5862 = vmatpush1.xpose.msra.mxu0 0.0
  %5863 = vmatprep.subr.mxu0 0.0
  %5864 = vmatpush1.xpose.msra.mxu0 0.0
  %5865 = vmatprep.subr.mxu0 0.0
  %5866 = vmatpush1.xpose.msra.mxu0 0.0
  %5867 = vmatprep.subr.mxu0 0.0
  %5868 = vmatpush1.xpose.msra.mxu0 0.0
  %5869 = vmatprep.subr.mxu0 0.0
  %5870 = vmatpush1.xpose.msra.mxu0 0.0
  %5871 = vmatprep.subr.mxu0 0.0
  %5872 = vmatpush1.xpose.msra.mxu0 0.0
  %5873 = vmatprep.subr.mxu0 0.0
  %5874 = vmatpush1.xpose.msra.mxu0 0.0
  %5875 = vmatprep.subr.mxu0 0.0
  %5876 = vmatpush1.xpose.msra.mxu0 0.0
  %5877 = vmatprep.subr.mxu0 0.0
  %5878 = vmatpush1.xpose.msra.mxu0 0.0
  %5879 = vmatprep.subr.mxu0 0.0
  %5880 = vmatpush1.xpose.msra.mxu0 0.0
  %5881 = vmatprep.subr.mxu0 0.0
  %5882 = vmatpush1.xpose.msra.mxu0 0.0
  %5883 = vmatprep.subr.mxu0 0.0
  %5884 = vmatpush1.xpose.msra.mxu0 0.0
  %5885 = vmatprep.subr.mxu0 0.0
  %5886 = vmatpush1.xpose.msra.mxu0 0.0
  %5887 = vmatprep.subr.mxu0 0.0
  %5888 = vmatpush1.xpose.msra.mxu0 0.0
  %5889 = vmatprep.subr.mxu0 0.0
  %5890 = vmatpush1.xpose.msra.mxu0 0.0
  %5891 = vmatprep.subr.mxu0 0.0
  %5892 = vmatpush1.xpose.msra.mxu0 0.0
  %5893 = vmatprep.mubr.f32.mxu0 0.0
  %5894 = vmatmul.mubr.f32.gmra.mrb[0].mxu0 %v5824
  %v5895 = vpop.f32.mrb[0].mxu0
  %v5896 = vadd.f32 0.0, %v5895
  %v5897 = vpop.f32.mrb[0].mxu0
  %5898 = vdwg.mxu0
  %v5900 = vsel %vm418, %v5483, 0
  %v5903 = vsel %vm418, %v5601, 0
  %5905 = vmatprep.subr.mxu0 0.0
  %5906 = vmatpush1.xpose.msra.mxu0 %v5903
  %5907 = vmatprep.subr.mxu0 0.0
  %5908 = vmatpush1.xpose.msra.mxu0 0.0
  %5909 = vmatprep.subr.mxu0 0.0
  %5910 = vmatpush1.xpose.msra.mxu0 0.0
  %5911 = vmatprep.subr.mxu0 0.0
  %5912 = vmatpush1.xpose.msra.mxu0 0.0
  %5913 = vmatprep.subr.mxu0 0.0
  %5914 = vmatpush1.xpose.msra.mxu0 0.0
  %5915 = vmatprep.subr.mxu0 0.0
  %5916 = vmatpush1.xpose.msra.mxu0 0.0
  %5917 = vmatprep.subr.mxu0 0.0
  %5918 = vmatpush1.xpose.msra.mxu0 0.0
  %5919 = vmatprep.subr.mxu0 0.0
  %5920 = vmatpush1.xpose.msra.mxu0 0.0
  %5921 = vmatprep.subr.mxu0 0.0
  %5922 = vmatpush1.xpose.msra.mxu0 0.0
  %5923 = vmatprep.subr.mxu0 0.0
  %5924 = vmatpush1.xpose.msra.mxu0 0.0
  %5925 = vmatprep.subr.mxu0 0.0
  %5926 = vmatpush1.xpose.msra.mxu0 0.0
  %5927 = vmatprep.subr.mxu0 0.0
  %5928 = vmatpush1.xpose.msra.mxu0 0.0
  %5929 = vmatprep.subr.mxu0 0.0
  %5930 = vmatpush1.xpose.msra.mxu0 0.0
  %5931 = vmatprep.subr.mxu0 0.0
  %5932 = vmatpush1.xpose.msra.mxu0 0.0
  %5933 = vmatprep.subr.mxu0 0.0
  %5934 = vmatpush1.xpose.msra.mxu0 0.0
  %5935 = vmatprep.subr.mxu0 0.0
  %5936 = vmatpush1.xpose.msra.mxu0 0.0
  %5937 = vmatprep.subr.mxu0 0.0
  %5938 = vmatpush1.xpose.msra.mxu0 0.0
  %5939 = vmatprep.subr.mxu0 0.0
  %5940 = vmatpush1.xpose.msra.mxu0 0.0
  %5941 = vmatprep.subr.mxu0 0.0
  %5942 = vmatpush1.xpose.msra.mxu0 0.0
  %5943 = vmatprep.subr.mxu0 0.0
  %5944 = vmatpush1.xpose.msra.mxu0 0.0
  %5945 = vmatprep.subr.mxu0 0.0
  %5946 = vmatpush1.xpose.msra.mxu0 0.0
  %5947 = vmatprep.subr.mxu0 0.0
  %5948 = vmatpush1.xpose.msra.mxu0 0.0
  %5949 = vmatprep.subr.mxu0 0.0
  %5950 = vmatpush1.xpose.msra.mxu0 0.0
  %5951 = vmatprep.subr.mxu0 0.0
  %5952 = vmatpush1.xpose.msra.mxu0 0.0
  %5953 = vmatprep.subr.mxu0 0.0
  %5954 = vmatpush1.xpose.msra.mxu0 0.0
  %5955 = vmatprep.subr.mxu0 0.0
  %5956 = vmatpush1.xpose.msra.mxu0 0.0
  %5957 = vmatprep.subr.mxu0 0.0
  %5958 = vmatpush1.xpose.msra.mxu0 0.0
  %5959 = vmatprep.subr.mxu0 0.0
  %5960 = vmatpush1.xpose.msra.mxu0 0.0
  %5961 = vmatprep.subr.mxu0 0.0
  %5962 = vmatpush1.xpose.msra.mxu0 0.0
  %5963 = vmatprep.subr.mxu0 0.0
  %5964 = vmatpush1.xpose.msra.mxu0 0.0
  %5965 = vmatprep.subr.mxu0 0.0
  %5966 = vmatpush1.xpose.msra.mxu0 0.0
  %5967 = vmatprep.subr.mxu0 0.0
  %5968 = vmatpush1.xpose.msra.mxu0 0.0
  %5969 = vmatprep.mubr.f32.mxu0 0.0
  %5970 = vmatmul.mubr.f32.gmra.mrb[0].mxu0 %v5900
  %v5971 = vpop.f32.mrb[0].mxu0
  %v5972 = vadd.f32 0.0, %v5971
  %v5973 = vpop.f32.mrb[0].mxu0
  %5974 = vdwg.mxu0
  %v5976 = vsel %vm418, %v5488, 0
  %v5979 = vsel %vm418, %v5606, 0
  %5981 = vmatprep.subr.mxu0 0.0
  %5982 = vmatpush1.xpose.msra.mxu0 %v5979
  %5983 = vmatprep.subr.mxu0 0.0
  %5984 = vmatpush1.xpose.msra.mxu0 0.0
  %5985 = vmatprep.subr.mxu0 0.0
  %5986 = vmatpush1.xpose.msra.mxu0 0.0
  %5987 = vmatprep.subr.mxu0 0.0
  %5988 = vmatpush1.xpose.msra.mxu0 0.0
  %5989 = vmatprep.subr.mxu0 0.0
  %5990 = vmatpush1.xpose.msra.mxu0 0.0
  %5991 = vmatprep.subr.mxu0 0.0
  %5992 = vmatpush1.xpose.msra.mxu0 0.0
  %5993 = vmatprep.subr.mxu0 0.0
  %5994 = vmatpush1.xpose.msra.mxu0 0.0
  %5995 = vmatprep.subr.mxu0 0.0
  %5996 = vmatpush1.xpose.msra.mxu0 0.0
  %5997 = vmatprep.subr.mxu0 0.0
  %5998 = vmatpush1.xpose.msra.mxu0 0.0
  %5999 = vmatprep.subr.mxu0 0.0
  %6000 = vmatpush1.xpose.msra.mxu0 0.0
  %6001 = vmatprep.subr.mxu0 0.0
  %6002 = vmatpush1.xpose.msra.mxu0 0.0
  %6003 = vmatprep.subr.mxu0 0.0
  %6004 = vmatpush1.xpose.msra.mxu0 0.0
  %6005 = vmatprep.subr.mxu0 0.0
  %6006 = vmatpush1.xpose.msra.mxu0 0.0
  %6007 = vmatprep.subr.mxu0 0.0
  %6008 = vmatpush1.xpose.msra.mxu0 0.0
  %6009 = vmatprep.subr.mxu0 0.0
  %6010 = vmatpush1.xpose.msra.mxu0 0.0
  %6011 = vmatprep.subr.mxu0 0.0
  %6012 = vmatpush1.xpose.msra.mxu0 0.0
  %6013 = vmatprep.subr.mxu0 0.0
  %6014 = vmatpush1.xpose.msra.mxu0 0.0
  %6015 = vmatprep.subr.mxu0 0.0
  %6016 = vmatpush1.xpose.msra.mxu0 0.0
  %6017 = vmatprep.subr.mxu0 0.0
  %6018 = vmatpush1.xpose.msra.mxu0 0.0
  %6019 = vmatprep.subr.mxu0 0.0
  %6020 = vmatpush1.xpose.msra.mxu0 0.0
  %6021 = vmatprep.subr.mxu0 0.0
  %6022 = vmatpush1.xpose.msra.mxu0 0.0
  %6023 = vmatprep.subr.mxu0 0.0
  %6024 = vmatpush1.xpose.msra.mxu0 0.0
  %6025 = vmatprep.subr.mxu0 0.0
  %6026 = vmatpush1.xpose.msra.mxu0 0.0
  %6027 = vmatprep.subr.mxu0 0.0
  %6028 = vmatpush1.xpose.msra.mxu0 0.0
  %6029 = vmatprep.subr.mxu0 0.0
  %6030 = vmatpush1.xpose.msra.mxu0 0.0
  %6031 = vmatprep.subr.mxu0 0.0
  %6032 = vmatpush1.xpose.msra.mxu0 0.0
  %6033 = vmatprep.subr.mxu0 0.0
  %6034 = vmatpush1.xpose.msra.mxu0 0.0
  %6035 = vmatprep.subr.mxu0 0.0
  %6036 = vmatpush1.xpose.msra.mxu0 0.0
  %6037 = vmatprep.subr.mxu0 0.0
  %6038 = vmatpush1.xpose.msra.mxu0 0.0
  %6039 = vmatprep.subr.mxu0 0.0
  %6040 = vmatpush1.xpose.msra.mxu0 0.0
  %6041 = vmatprep.subr.mxu0 0.0
  %6042 = vmatpush1.xpose.msra.mxu0 0.0
  %6043 = vmatprep.subr.mxu0 0.0
  %6044 = vmatpush1.xpose.msra.mxu0 0.0
  %6045 = vmatprep.mubr.f32.mxu0 0.0
  %6046 = vmatmul.mubr.f32.gmra.mrb[0].mxu0 %v5976
  %v6047 = vpop.f32.mrb[0].mxu0
  %v6048 = vadd.f32 0.0, %v6047
  %v6049 = vpop.f32.mrb[0].mxu0
  %6050 = vdwg.mxu0
  %v6052 = vsel %vm418, %v5493, 0
  %v6055 = vsel %vm418, %v5611, 0
  %6057 = vmatprep.subr.mxu0 0.0
  %6058 = vmatpush1.xpose.msra.mxu0 %v6055
  %6059 = vmatprep.subr.mxu0 0.0
  %6060 = vmatpush1.xpose.msra.mxu0 0.0
  %6061 = vmatprep.subr.mxu0 0.0
  %6062 = vmatpush1.xpose.msra.mxu0 0.0
  %6063 = vmatprep.subr.mxu0 0.0
  %6064 = vmatpush1.xpose.msra.mxu0 0.0
  %6065 = vmatprep.subr.mxu0 0.0
  %6066 = vmatpush1.xpose.msra.mxu0 0.0
  %6067 = vmatprep.subr.mxu0 0.0
  %6068 = vmatpush1.xpose.msra.mxu0 0.0
  %6069 = vmatprep.subr.mxu0 0.0
  %6070 = vmatpush1.xpose.msra.mxu0 0.0
  %6071 = vmatprep.subr.mxu0 0.0
  %6072 = vmatpush1.xpose.msra.mxu0 0.0
  %6073 = vmatprep.subr.mxu0 0.0
  %6074 = vmatpush1.xpose.msra.mxu0 0.0
  %6075 = vmatprep.subr.mxu0 0.0
  %6076 = vmatpush1.xpose.msra.mxu0 0.0
  %6077 = vmatprep.subr.mxu0 0.0
  %6078 = vmatpush1.xpose.msra.mxu0 0.0
  %6079 = vmatprep.subr.mxu0 0.0
  %6080 = vmatpush1.xpose.msra.mxu0 0.0
  %6081 = vmatprep.subr.mxu0 0.0
  %6082 = vmatpush1.xpose.msra.mxu0 0.0
  %6083 = vmatprep.subr.mxu0 0.0
  %6084 = vmatpush1.xpose.msra.mxu0 0.0
  %6085 = vmatprep.subr.mxu0 0.0
  %6086 = vmatpush1.xpose.msra.mxu0 0.0
  %6087 = vmatprep.subr.mxu0 0.0
  %6088 = vmatpush1.xpose.msra.mxu0 0.0
  %6089 = vmatprep.subr.mxu0 0.0
  %6090 = vmatpush1.xpose.msra.mxu0 0.0
  %6091 = vmatprep.subr.mxu0 0.0
  %6092 = vmatpush1.xpose.msra.mxu0 0.0
  %6093 = vmatprep.subr.mxu0 0.0
  %6094 = vmatpush1.xpose.msra.mxu0 0.0
  %6095 = vmatprep.subr.mxu0 0.0
  %6096 = vmatpush1.xpose.msra.mxu0 0.0
  %6097 = vmatprep.subr.mxu0 0.0
  %6098 = vmatpush1.xpose.msra.mxu0 0.0
  %6099 = vmatprep.subr.mxu0 0.0
  %6100 = vmatpush1.xpose.msra.mxu0 0.0
  %6101 = vmatprep.subr.mxu0 0.0
  %6102 = vmatpush1.xpose.msra.mxu0 0.0
  %6103 = vmatprep.subr.mxu0 0.0
  %6104 = vmatpush1.xpose.msra.mxu0 0.0
  %6105 = vmatprep.subr.mxu0 0.0
  %6106 = vmatpush1.xpose.msra.mxu0 0.0
  %6107 = vmatprep.subr.mxu0 0.0
  %6108 = vmatpush1.xpose.msra.mxu0 0.0
  %6109 = vmatprep.subr.mxu0 0.0
  %6110 = vmatpush1.xpose.msra.mxu0 0.0
  %6111 = vmatprep.subr.mxu0 0.0
  %6112 = vmatpush1.xpose.msra.mxu0 0.0
  %6113 = vmatprep.subr.mxu0 0.0
  %6114 = vmatpush1.xpose.msra.mxu0 0.0
  %6115 = vmatprep.subr.mxu0 0.0
  %6116 = vmatpush1.xpose.msra.mxu0 0.0
  %6117 = vmatprep.subr.mxu0 0.0
  %6118 = vmatpush1.xpose.msra.mxu0 0.0
  %6119 = vmatprep.subr.mxu0 0.0
  %6120 = vmatpush1.xpose.msra.mxu0 0.0
  %6121 = vmatprep.mubr.f32.mxu0 0.0
  %6122 = vmatmul.mubr.f32.gmra.mrb[0].mxu0 %v6052
  %v6123 = vpop.f32.mrb[0].mxu0
  %v6124 = vadd.f32 0.0, %v6123
  %v6125 = vpop.f32.mrb[0].mxu0
  %6126 = vdwg.mxu0
  %v6128 = vsel %vm418, %v5498, 0
  %v6131 = vsel %vm418, %v5616, 0
  %6133 = vmatprep.subr.mxu0 0.0
  %6134 = vmatpush1.xpose.msra.mxu0 %v6131
  %6135 = vmatprep.subr.mxu0 0.0
  %6136 = vmatpush1.xpose.msra.mxu0 0.0
  %6137 = vmatprep.subr.mxu0 0.0
  %6138 = vmatpush1.xpose.msra.mxu0 0.0
  %6139 = vmatprep.subr.mxu0 0.0
  %6140 = vmatpush1.xpose.msra.mxu0 0.0
  %6141 = vmatprep.subr.mxu0 0.0
  %6142 = vmatpush1.xpose.msra.mxu0 0.0
  %6143 = vmatprep.subr.mxu0 0.0
  %6144 = vmatpush1.xpose.msra.mxu0 0.0
  %6145 = vmatprep.subr.mxu0 0.0
  %6146 = vmatpush1.xpose.msra.mxu0 0.0
  %6147 = vmatprep.subr.mxu0 0.0
  %6148 = vmatpush1.xpose.msra.mxu0 0.0
  %6149 = vmatprep.subr.mxu0 0.0
  %6150 = vmatpush1.xpose.msra.mxu0 0.0
  %6151 = vmatprep.subr.mxu0 0.0
  %6152 = vmatpush1.xpose.msra.mxu0 0.0
  %6153 = vmatprep.subr.mxu0 0.0
  %6154 = vmatpush1.xpose.msra.mxu0 0.0
  %6155 = vmatprep.subr.mxu0 0.0
  %6156 = vmatpush1.xpose.msra.mxu0 0.0
  %6157 = vmatprep.subr.mxu0 0.0
  %6158 = vmatpush1.xpose.msra.mxu0 0.0
  %6159 = vmatprep.subr.mxu0 0.0
  %6160 = vmatpush1.xpose.msra.mxu0 0.0
  %6161 = vmatprep.subr.mxu0 0.0
  %6162 = vmatpush1.xpose.msra.mxu0 0.0
  %6163 = vmatprep.subr.mxu0 0.0
  %6164 = vmatpush1.xpose.msra.mxu0 0.0
  %6165 = vmatprep.subr.mxu0 0.0
  %6166 = vmatpush1.xpose.msra.mxu0 0.0
  %6167 = vmatprep.subr.mxu0 0.0
  %6168 = vmatpush1.xpose.msra.mxu0 0.0
  %6169 = vmatprep.subr.mxu0 0.0
  %6170 = vmatpush1.xpose.msra.mxu0 0.0
  %6171 = vmatprep.subr.mxu0 0.0
  %6172 = vmatpush1.xpose.msra.mxu0 0.0
  %6173 = vmatprep.subr.mxu0 0.0
  %6174 = vmatpush1.xpose.msra.mxu0 0.0
  %6175 = vmatprep.subr.mxu0 0.0
  %6176 = vmatpush1.xpose.msra.mxu0 0.0
  %6177 = vmatprep.subr.mxu0 0.0
  %6178 = vmatpush1.xpose.msra.mxu0 0.0
  %6179 = vmatprep.subr.mxu0 0.0
  %6180 = vmatpush1.xpose.msra.mxu0 0.0
  %6181 = vmatprep.subr.mxu0 0.0
  %6182 = vmatpush1.xpose.msra.mxu0 0.0
  %6183 = vmatprep.subr.mxu0 0.0
  %6184 = vmatpush1.xpose.msra.mxu0 0.0
  %6185 = vmatprep.subr.mxu0 0.0
  %6186 = vmatpush1.xpose.msra.mxu0 0.0
  %6187 = vmatprep.subr.mxu0 0.0
  %6188 = vmatpush1.xpose.msra.mxu0 0.0
  %6189 = vmatprep.subr.mxu0 0.0
  %6190 = vmatpush1.xpose.msra.mxu0 0.0
  %6191 = vmatprep.subr.mxu0 0.0
  %6192 = vmatpush1.xpose.msra.mxu0 0.0
  %6193 = vmatprep.subr.mxu0 0.0
  %6194 = vmatpush1.xpose.msra.mxu0 0.0
  %6195 = vmatprep.subr.mxu0 0.0
  %6196 = vmatpush1.xpose.msra.mxu0 0.0
  %6197 = vmatprep.mubr.f32.mxu0 0.0
  %6198 = vmatmul.mubr.f32.gmra.mrb[0].mxu0 %v6128
  %v6199 = vpop.f32.mrb[0].mxu0
  %v6200 = vadd.f32 0.0, %v6199
  %v6201 = vpop.f32.mrb[0].mxu0
  %6202 = vdwg.mxu0
  %v6204 = vsel %vm418, %v5503, 0
  %v6207 = vsel %vm418, %v5621, 0
  %6209 = vmatprep.subr.mxu0 0.0
  %6210 = vmatpush1.xpose.msra.mxu0 %v6207
  %6211 = vmatprep.subr.mxu0 0.0
  %6212 = vmatpush1.xpose.msra.mxu0 0.0
  %6213 = vmatprep.subr.mxu0 0.0
  %6214 = vmatpush1.xpose.msra.mxu0 0.0
  %6215 = vmatprep.subr.mxu0 0.0
  %6216 = vmatpush1.xpose.msra.mxu0 0.0
  %6217 = vmatprep.subr.mxu0 0.0
  %6218 = vmatpush1.xpose.msra.mxu0 0.0
  %6219 = vmatprep.subr.mxu0 0.0
  %6220 = vmatpush1.xpose.msra.mxu0 0.0
  %6221 = vmatprep.subr.mxu0 0.0
  %6222 = vmatpush1.xpose.msra.mxu0 0.0
  %6223 = vmatprep.subr.mxu0 0.0
  %6224 = vmatpush1.xpose.msra.mxu0 0.0
  %6225 = vmatprep.subr.mxu0 0.0
  %6226 = vmatpush1.xpose.msra.mxu0 0.0
  %6227 = vmatprep.subr.mxu0 0.0
  %6228 = vmatpush1.xpose.msra.mxu0 0.0
  %6229 = vmatprep.subr.mxu0 0.0
  %6230 = vmatpush1.xpose.msra.mxu0 0.0
  %6231 = vmatprep.subr.mxu0 0.0
  %6232 = vmatpush1.xpose.msra.mxu0 0.0
  %6233 = vmatprep.subr.mxu0 0.0
  %6234 = vmatpush1.xpose.msra.mxu0 0.0
  %6235 = vmatprep.subr.mxu0 0.0
  %6236 = vmatpush1.xpose.msra.mxu0 0.0
  %6237 = vmatprep.subr.mxu0 0.0
  %6238 = vmatpush1.xpose.msra.mxu0 0.0
  %6239 = vmatprep.subr.mxu0 0.0
  %6240 = vmatpush1.xpose.msra.mxu0 0.0
  %6241 = vmatprep.subr.mxu0 0.0
  %6242 = vmatpush1.xpose.msra.mxu0 0.0
  %6243 = vmatprep.subr.mxu0 0.0
  %6244 = vmatpush1.xpose.msra.mxu0 0.0
  %6245 = vmatprep.subr.mxu0 0.0
  %6246 = vmatpush1.xpose.msra.mxu0 0.0
  %6247 = vmatprep.subr.mxu0 0.0
  %6248 = vmatpush1.xpose.msra.mxu0 0.0
  %6249 = vmatprep.subr.mxu0 0.0
  %6250 = vmatpush1.xpose.msra.mxu0 0.0
  %6251 = vmatprep.subr.mxu0 0.0
  %6252 = vmatpush1.xpose.msra.mxu0 0.0
  %6253 = vmatprep.subr.mxu0 0.0
  %6254 = vmatpush1.xpose.msra.mxu0 0.0
  %6255 = vmatprep.subr.mxu0 0.0
  %6256 = vmatpush1.xpose.msra.mxu0 0.0
  %6257 = vmatprep.subr.mxu0 0.0
  %6258 = vmatpush1.xpose.msra.mxu0 0.0
  %6259 = vmatprep.subr.mxu0 0.0
  %6260 = vmatpush1.xpose.msra.mxu0 0.0
  %6261 = vmatprep.subr.mxu0 0.0
  %6262 = vmatpush1.xpose.msra.mxu0 0.0
  %6263 = vmatprep.subr.mxu0 0.0
  %6264 = vmatpush1.xpose.msra.mxu0 0.0
  %6265 = vmatprep.subr.mxu0 0.0
  %6266 = vmatpush1.xpose.msra.mxu0 0.0
  %6267 = vmatprep.subr.mxu0 0.0
  %6268 = vmatpush1.xpose.msra.mxu0 0.0
  %6269 = vmatprep.subr.mxu0 0.0
  %6270 = vmatpush1.xpose.msra.mxu0 0.0
  %6271 = vmatprep.subr.mxu0 0.0
  %6272 = vmatpush1.xpose.msra.mxu0 0.0
  %6273 = vmatprep.mubr.f32.mxu0 0.0
  %6274 = vmatmul.mubr.f32.gmra.mrb[0].mxu0 %v6204
  %v6275 = vpop.f32.mrb[0].mxu0
  %v6276 = vadd.f32 0.0, %v6275
  %v6277 = vpop.f32.mrb[0].mxu0
  %6278 = vdwg.mxu0
  %v6280 = vsel %vm418, %v5508, 0
  %v6283 = vsel %vm418, %v5626, 0
  %6285 = vmatprep.subr.mxu0 0.0
  %6286 = vmatpush1.xpose.msra.mxu0 %v6283
  %6287 = vmatprep.subr.mxu0 0.0
  %6288 = vmatpush1.xpose.msra.mxu0 0.0
  %6289 = vmatprep.subr.mxu0 0.0
  %6290 = vmatpush1.xpose.msra.mxu0 0.0
  %6291 = vmatprep.subr.mxu0 0.0
  %6292 = vmatpush1.xpose.msra.mxu0 0.0
  %6293 = vmatprep.subr.mxu0 0.0
  %6294 = vmatpush1.xpose.msra.mxu0 0.0
  %6295 = vmatprep.subr.mxu0 0.0
  %6296 = vmatpush1.xpose.msra.mxu0 0.0
  %6297 = vmatprep.subr.mxu0 0.0
  %6298 = vmatpush1.xpose.msra.mxu0 0.0
  %6299 = vmatprep.subr.mxu0 0.0
  %6300 = vmatpush1.xpose.msra.mxu0 0.0
  %6301 = vmatprep.subr.mxu0 0.0
  %6302 = vmatpush1.xpose.msra.mxu0 0.0
  %6303 = vmatprep.subr.mxu0 0.0
  %6304 = vmatpush1.xpose.msra.mxu0 0.0
  %6305 = vmatprep.subr.mxu0 0.0
  %6306 = vmatpush1.xpose.msra.mxu0 0.0
  %6307 = vmatprep.subr.mxu0 0.0
  %6308 = vmatpush1.xpose.msra.mxu0 0.0
  %6309 = vmatprep.subr.mxu0 0.0
  %6310 = vmatpush1.xpose.msra.mxu0 0.0
  %6311 = vmatprep.subr.mxu0 0.0
  %6312 = vmatpush1.xpose.msra.mxu0 0.0
  %6313 = vmatprep.subr.mxu0 0.0
  %6314 = vmatpush1.xpose.msra.mxu0 0.0
  %6315 = vmatprep.subr.mxu0 0.0
  %6316 = vmatpush1.xpose.msra.mxu0 0.0
  %6317 = vmatprep.subr.mxu0 0.0
  %6318 = vmatpush1.xpose.msra.mxu0 0.0
  %6319 = vmatprep.subr.mxu0 0.0
  %6320 = vmatpush1.xpose.msra.mxu0 0.0
  %6321 = vmatprep.subr.mxu0 0.0
  %6322 = vmatpush1.xpose.msra.mxu0 0.0
  %6323 = vmatprep.subr.mxu0 0.0
  %6324 = vmatpush1.xpose.msra.mxu0 0.0
  %6325 = vmatprep.subr.mxu0 0.0
  %6326 = vmatpush1.xpose.msra.mxu0 0.0
  %6327 = vmatprep.subr.mxu0 0.0
  %6328 = vmatpush1.xpose.msra.mxu0 0.0
  %6329 = vmatprep.subr.mxu0 0.0
  %6330 = vmatpush1.xpose.msra.mxu0 0.0
  %6331 = vmatprep.subr.mxu0 0.0
  %6332 = vmatpush1.xpose.msra.mxu0 0.0
  %6333 = vmatprep.subr.mxu0 0.0
  %6334 = vmatpush1.xpose.msra.mxu0 0.0
  %6335 = vmatprep.subr.mxu0 0.0
  %6336 = vmatpush1.xpose.msra.mxu0 0.0
  %6337 = vmatprep.subr.mxu0 0.0
  %6338 = vmatpush1.xpose.msra.mxu0 0.0
  %6339 = vmatprep.subr.mxu0 0.0
  %6340 = vmatpush1.xpose.msra.mxu0 0.0
  %6341 = vmatprep.subr.mxu0 0.0
  %6342 = vmatpush1.xpose.msra.mxu0 0.0
  %6343 = vmatprep.subr.mxu0 0.0
  %6344 = vmatpush1.xpose.msra.mxu0 0.0
  %6345 = vmatprep.subr.mxu0 0.0
  %6346 = vmatpush1.xpose.msra.mxu0 0.0
  %6347 = vmatprep.subr.mxu0 0.0
  %6348 = vmatpush1.xpose.msra.mxu0 0.0
  %6349 = vmatprep.mubr.f32.mxu0 0.0
  %6350 = vmatmul.mubr.f32.gmra.mrb[0].mxu0 %v6280
  %v6351 = vpop.f32.mrb[0].mxu0
  %v6352 = vadd.f32 0.0, %v6351
  %v6353 = vpop.f32.mrb[0].mxu0
  %6354 = vdwg.mxu0
  %v6355 = vsel %vm1028, -1e+30, %v5820
  %v6356 = vsel %vm1028, -1e+30, %v5896
  %v6357 = vsel %vm1028, -1e+30, %v5972
  %v6358 = vsel %vm1028, -1e+30, %v6048
  %v6359 = vsel %vm1028, -1e+30, %v6124
  %v6360 = vsel %vm1028, -1e+30, %v6200
  %v6361 = vsel %vm1028, -1e+30, %v6276
  %v6362 = vsel %vm1028, -1e+30, %v6352
  %v6363 = vsel %vm418, %v6355, -inf
  %6364 = vmax.xlane.f32.xlu0 %v6363
  %v6365 = vpop.xlane.xlu0 %6364
  %v6366 = vsel %vm418, %v6356, -inf
  %6367 = vmax.xlane.f32.xlu0 %v6366
  %v6368 = vpop.xlane.xlu0 %6367
  %v6369 = vsel %vm418, %v6357, -inf
  %6370 = vmax.xlane.f32.xlu0 %v6369
  %v6371 = vpop.xlane.xlu0 %6370
  %v6372 = vsel %vm418, %v6358, -inf
  %6373 = vmax.xlane.f32.xlu0 %v6372
  %v6374 = vpop.xlane.xlu0 %6373
  %v6375 = vsel %vm418, %v6359, -inf
  %6376 = vmax.xlane.f32.xlu0 %v6375
  %v6377 = vpop.xlane.xlu0 %6376
  %v6378 = vsel %vm418, %v6360, -inf
  %6379 = vmax.xlane.f32.xlu0 %v6378
  %v6380 = vpop.xlane.xlu0 %6379
  %v6381 = vsel %vm418, %v6361, -inf
  %6382 = vmax.xlane.f32.xlu0 %v6381
  %v6383 = vpop.xlane.xlu0 %6382
  %v6384 = vsel %vm418, %v6362, -inf
  %6385 = vmax.xlane.f32.xlu0 %v6384
  %v6386 = vpop.xlane.xlu0 %6385
  %v6387 = vsub.f32 %v6355, %v6365
  %v6388 = vsub.f32 %v6356, %v6368
  %v6389 = vsub.f32 %v6357, %v6371
  %v6390 = vsub.f32 %v6358, %v6374
  %v6391 = vsub.f32 %v6359, %v6377
  %v6392 = vsub.f32 %v6360, %v6380
  %v6393 = vsub.f32 %v6361, %v6383
  %v6394 = vsub.f32 %v6362, %v6386
  %v6395 = vmul.f32 %v6387, 1.442695
  %v6396 = vpow.pop %v6395
  %v6397 = vmul.f32 %v6388, 1.442695
  %v6398 = vpow.pop %v6397
  %v6399 = vmul.f32 %v6389, 1.442695
  %v6400 = vpow.pop %v6399
  %v6401 = vmul.f32 %v6390, 1.442695
  %v6402 = vpow.pop %v6401
  %v6403 = vmul.f32 %v6391, 1.442695
  %v6404 = vpow.pop %v6403
  %v6405 = vmul.f32 %v6392, 1.442695
  %v6406 = vpow.pop %v6405
  %v6407 = vmul.f32 %v6393, 1.442695
  %v6408 = vpow.pop %v6407
  %v6409 = vmul.f32 %v6394, 1.442695
  %v6410 = vpow.pop %v6409
  %v6411 = vsel %vm418, %v6396, 0.0
  %6412 = vadd.xlane.f32.xlu0 %v6411
  %v6413 = vpop.xlane.xlu0 %6412
  %v6414 = vsel %vm418, %v6398, 0.0
  %6415 = vadd.xlane.f32.xlu0 %v6414
  %v6416 = vpop.xlane.xlu0 %6415
  %v6417 = vsel %vm418, %v6400, 0.0
  %6418 = vadd.xlane.f32.xlu0 %v6417
  %v6419 = vpop.xlane.xlu0 %6418
  %v6420 = vsel %vm418, %v6402, 0.0
  %6421 = vadd.xlane.f32.xlu0 %v6420
  %v6422 = vpop.xlane.xlu0 %6421
  %v6423 = vsel %vm418, %v6404, 0.0
  %6424 = vadd.xlane.f32.xlu0 %v6423
  %v6425 = vpop.xlane.xlu0 %6424
  %v6426 = vsel %vm418, %v6406, 0.0
  %6427 = vadd.xlane.f32.xlu0 %v6426
  %v6428 = vpop.xlane.xlu0 %6427
  %v6429 = vsel %vm418, %v6408, 0.0
  %6430 = vadd.xlane.f32.xlu0 %v6429
  %v6431 = vpop.xlane.xlu0 %6430
  %v6432 = vsel %vm418, %v6410, 0.0
  %6433 = vadd.xlane.f32.xlu0 %v6432
  %v6434 = vpop.xlane.xlu0 %6433
  %v6435 = vrcp.pop %v6413
  %v6436 = vrcp.pop %v6416
  %v6437 = vrcp.pop %v6419
  %v6438 = vrcp.pop %v6422
  %v6439 = vrcp.pop %v6425
  %v6440 = vrcp.pop %v6428
  %v6441 = vrcp.pop %v6431
  %v6442 = vrcp.pop %v6434
  %v6443 = vmul.f32 %v6396, %v6435
  %v6444 = vmul.f32 %v6398, %v6436
  %v6445 = vmul.f32 %v6400, %v6437
  %v6446 = vmul.f32 %v6402, %v6438
  %v6447 = vmul.f32 %v6404, %v6439
  %v6448 = vmul.f32 %v6406, %v6440
  %v6449 = vmul.f32 %v6408, %v6441
  %v6450 = vmul.f32 %v6410, %v6442
  %v6452 = vsel %vm418, %v6443, 0
  %6454 = vmatprep.subr.mxu0 0.0
  %6455 = vmatpush1.msra.mxu0 %v5709
  %6456 = vmatprep.subr.mxu0 0.0
  %6457 = vmatpush1.msra.mxu0 0.0
  %6458 = vmatprep.subr.mxu0 0.0
  %6459 = vmatpush1.msra.mxu0 0.0
  %6460 = vmatprep.subr.mxu0 0.0
  %6461 = vmatpush1.msra.mxu0 0.0
  %6462 = vmatprep.subr.mxu0 0.0
  %6463 = vmatpush1.msra.mxu0 0.0
  %6464 = vmatprep.subr.mxu0 0.0
  %6465 = vmatpush1.msra.mxu0 0.0
  %6466 = vmatprep.subr.mxu0 0.0
  %6467 = vmatpush1.msra.mxu0 0.0
  %6468 = vmatprep.subr.mxu0 0.0
  %6469 = vmatpush1.msra.mxu0 0.0
  %6470 = vmatprep.subr.mxu0 0.0
  %6471 = vmatpush1.msra.mxu0 0.0
  %6472 = vmatprep.subr.mxu0 0.0
  %6473 = vmatpush1.msra.mxu0 0.0
  %6474 = vmatprep.subr.mxu0 0.0
  %6475 = vmatpush1.msra.mxu0 0.0
  %6476 = vmatprep.subr.mxu0 0.0
  %6477 = vmatpush1.msra.mxu0 0.0
  %6478 = vmatprep.subr.mxu0 0.0
  %6479 = vmatpush1.msra.mxu0 0.0
  %6480 = vmatprep.subr.mxu0 0.0
  %6481 = vmatpush1.msra.mxu0 0.0
  %6482 = vmatprep.subr.mxu0 0.0
  %6483 = vmatpush1.msra.mxu0 0.0
  %6484 = vmatprep.subr.mxu0 0.0
  %6485 = vmatpush1.msra.mxu0 0.0
  %6486 = vmatprep.subr.mxu0 0.0
  %6487 = vmatpush1.msra.mxu0 0.0
  %6488 = vmatprep.subr.mxu0 0.0
  %6489 = vmatpush1.msra.mxu0 0.0
  %6490 = vmatprep.subr.mxu0 0.0
  %6491 = vmatpush1.msra.mxu0 0.0
  %6492 = vmatprep.subr.mxu0 0.0
  %6493 = vmatpush1.msra.mxu0 0.0
  %6494 = vmatprep.subr.mxu0 0.0
  %6495 = vmatpush1.msra.mxu0 0.0
  %6496 = vmatprep.subr.mxu0 0.0
  %6497 = vmatpush1.msra.mxu0 0.0
  %6498 = vmatprep.subr.mxu0 0.0
  %6499 = vmatpush1.msra.mxu0 0.0
  %6500 = vmatprep.subr.mxu0 0.0
  %6501 = vmatpush1.msra.mxu0 0.0
  %6502 = vmatprep.subr.mxu0 0.0
  %6503 = vmatpush1.msra.mxu0 0.0
  %6504 = vmatprep.subr.mxu0 0.0
  %6505 = vmatpush1.msra.mxu0 0.0
  %6506 = vmatprep.subr.mxu0 0.0
  %6507 = vmatpush1.msra.mxu0 0.0
  %6508 = vmatprep.subr.mxu0 0.0
  %6509 = vmatpush1.msra.mxu0 0.0
  %6510 = vmatprep.subr.mxu0 0.0
  %6511 = vmatpush1.msra.mxu0 0.0
  %6512 = vmatprep.subr.mxu0 0.0
  %6513 = vmatpush1.msra.mxu0 0.0
  %6514 = vmatprep.subr.mxu0 0.0
  %6515 = vmatpush1.msra.mxu0 0.0
  %6516 = vmatprep.subr.mxu0 0.0
  %6517 = vmatpush1.msra.mxu0 0.0
  %6518 = vmatprep.mubr.f32.mxu0 0.0
  %6519 = vmatmul.mubr.f32.gmra.mrb[0].mxu0 %v6452
  %v6520 = vpop.f32.mrb[0].mxu0
  %v6521 = vadd.f32 0.0, %v6520
  %v6522 = vpop.f32.mrb[0].mxu0
  %6523 = vdwg.mxu0
  %v6525 = vsel %vm418, %v6444, 0
  %6527 = vmatprep.subr.mxu0 0.0
  %6528 = vmatpush1.msra.mxu0 %v5714
  %6529 = vmatprep.subr.mxu0 0.0
  %6530 = vmatpush1.msra.mxu0 0.0
  %6531 = vmatprep.subr.mxu0 0.0
  %6532 = vmatpush1.msra.mxu0 0.0
  %6533 = vmatprep.subr.mxu0 0.0
  %6534 = vmatpush1.msra.mxu0 0.0
  %6535 = vmatprep.subr.mxu0 0.0
  %6536 = vmatpush1.msra.mxu0 0.0
  %6537 = vmatprep.subr.mxu0 0.0
  %6538 = vmatpush1.msra.mxu0 0.0
  %6539 = vmatprep.subr.mxu0 0.0
  %6540 = vmatpush1.msra.mxu0 0.0
  %6541 = vmatprep.subr.mxu0 0.0
  %6542 = vmatpush1.msra.mxu0 0.0
  %6543 = vmatprep.subr.mxu0 0.0
  %6544 = vmatpush1.msra.mxu0 0.0
  %6545 = vmatprep.subr.mxu0 0.0
  %6546 = vmatpush1.msra.mxu0 0.0
  %6547 = vmatprep.subr.mxu0 0.0
  %6548 = vmatpush1.msra.mxu0 0.0
  %6549 = vmatprep.subr.mxu0 0.0
  %6550 = vmatpush1.msra.mxu0 0.0
  %6551 = vmatprep.subr.mxu0 0.0
  %6552 = vmatpush1.msra.mxu0 0.0
  %6553 = vmatprep.subr.mxu0 0.0
  %6554 = vmatpush1.msra.mxu0 0.0
  %6555 = vmatprep.subr.mxu0 0.0
  %6556 = vmatpush1.msra.mxu0 0.0
  %6557 = vmatprep.subr.mxu0 0.0
  %6558 = vmatpush1.msra.mxu0 0.0
  %6559 = vmatprep.subr.mxu0 0.0
  %6560 = vmatpush1.msra.mxu0 0.0
  %6561 = vmatprep.subr.mxu0 0.0
  %6562 = vmatpush1.msra.mxu0 0.0
  %6563 = vmatprep.subr.mxu0 0.0
  %6564 = vmatpush1.msra.mxu0 0.0
  %6565 = vmatprep.subr.mxu0 0.0
  %6566 = vmatpush1.msra.mxu0 0.0
  %6567 = vmatprep.subr.mxu0 0.0
  %6568 = vmatpush1.msra.mxu0 0.0
  %6569 = vmatprep.subr.mxu0 0.0
  %6570 = vmatpush1.msra.mxu0 0.0
  %6571 = vmatprep.subr.mxu0 0.0
  %6572 = vmatpush1.msra.mxu0 0.0
  %6573 = vmatprep.subr.mxu0 0.0
  %6574 = vmatpush1.msra.mxu0 0.0
  %6575 = vmatprep.subr.mxu0 0.0
  %6576 = vmatpush1.msra.mxu0 0.0
  %6577 = vmatprep.subr.mxu0 0.0
  %6578 = vmatpush1.msra.mxu0 0.0
  %6579 = vmatprep.subr.mxu0 0.0
  %6580 = vmatpush1.msra.mxu0 0.0
  %6581 = vmatprep.subr.mxu0 0.0
  %6582 = vmatpush1.msra.mxu0 0.0
  %6583 = vmatprep.subr.mxu0 0.0
  %6584 = vmatpush1.msra.mxu0 0.0
  %6585 = vmatprep.subr.mxu0 0.0
  %6586 = vmatpush1.msra.mxu0 0.0
  %6587 = vmatprep.subr.mxu0 0.0
  %6588 = vmatpush1.msra.mxu0 0.0
  %6589 = vmatprep.subr.mxu0 0.0
  %6590 = vmatpush1.msra.mxu0 0.0
  %6591 = vmatprep.mubr.f32.mxu0 0.0
  %6592 = vmatmul.mubr.f32.gmra.mrb[0].mxu0 %v6525
  %v6593 = vpop.f32.mrb[0].mxu0
  %v6594 = vadd.f32 0.0, %v6593
  %v6595 = vpop.f32.mrb[0].mxu0
  %6596 = vdwg.mxu0
  %v6598 = vsel %vm418, %v6445, 0
  %6600 = vmatprep.subr.mxu0 0.0
  %6601 = vmatpush1.msra.mxu0 %v5719
  %6602 = vmatprep.subr.mxu0 0.0
  %6603 = vmatpush1.msra.mxu0 0.0
  %6604 = vmatprep.subr.mxu0 0.0
  %6605 = vmatpush1.msra.mxu0 0.0
  %6606 = vmatprep.subr.mxu0 0.0
  %6607 = vmatpush1.msra.mxu0 0.0
  %6608 = vmatprep.subr.mxu0 0.0
  %6609 = vmatpush1.msra.mxu0 0.0
  %6610 = vmatprep.subr.mxu0 0.0
  %6611 = vmatpush1.msra.mxu0 0.0
  %6612 = vmatprep.subr.mxu0 0.0
  %6613 = vmatpush1.msra.mxu0 0.0
  %6614 = vmatprep.subr.mxu0 0.0
  %6615 = vmatpush1.msra.mxu0 0.0
  %6616 = vmatprep.subr.mxu0 0.0
  %6617 = vmatpush1.msra.mxu0 0.0
  %6618 = vmatprep.subr.mxu0 0.0
  %6619 = vmatpush1.msra.mxu0 0.0
  %6620 = vmatprep.subr.mxu0 0.0
  %6621 = vmatpush1.msra.mxu0 0.0
  %6622 = vmatprep.subr.mxu0 0.0
  %6623 = vmatpush1.msra.mxu0 0.0
  %6624 = vmatprep.subr.mxu0 0.0
  %6625 = vmatpush1.msra.mxu0 0.0
  %6626 = vmatprep.subr.mxu0 0.0
  %6627 = vmatpush1.msra.mxu0 0.0
  %6628 = vmatprep.subr.mxu0 0.0
  %6629 = vmatpush1.msra.mxu0 0.0
  %6630 = vmatprep.subr.mxu0 0.0
  %6631 = vmatpush1.msra.mxu0 0.0
  %6632 = vmatprep.subr.mxu0 0.0
  %6633 = vmatpush1.msra.mxu0 0.0
  %6634 = vmatprep.subr.mxu0 0.0
  %6635 = vmatpush1.msra.mxu0 0.0
  %6636 = vmatprep.subr.mxu0 0.0
  %6637 = vmatpush1.msra.mxu0 0.0
  %6638 = vmatprep.subr.mxu0 0.0
  %6639 = vmatpush1.msra.mxu0 0.0
  %6640 = vmatprep.subr.mxu0 0.0
  %6641 = vmatpush1.msra.mxu0 0.0
  %6642 = vmatprep.subr.mxu0 0.0
  %6643 = vmatpush1.msra.mxu0 0.0
  %6644 = vmatprep.subr.mxu0 0.0
  %6645 = vmatpush1.msra.mxu0 0.0
  %6646 = vmatprep.subr.mxu0 0.0
  %6647 = vmatpush1.msra.mxu0 0.0
  %6648 = vmatprep.subr.mxu0 0.0
  %6649 = vmatpush1.msra.mxu0 0.0
  %6650 = vmatprep.subr.mxu0 0.0
  %6651 = vmatpush1.msra.mxu0 0.0
  %6652 = vmatprep.subr.mxu0 0.0
  %6653 = vmatpush1.msra.mxu0 0.0
  %6654 = vmatprep.subr.mxu0 0.0
  %6655 = vmatpush1.msra.mxu0 0.0
  %6656 = vmatprep.subr.mxu0 0.0
  %6657 = vmatpush1.msra.mxu0 0.0
  %6658 = vmatprep.subr.mxu0 0.0
  %6659 = vmatpush1.msra.mxu0 0.0
  %6660 = vmatprep.subr.mxu0 0.0
  %6661 = vmatpush1.msra.mxu0 0.0
  %6662 = vmatprep.subr.mxu0 0.0
  %6663 = vmatpush1.msra.mxu0 0.0
  %6664 = vmatprep.mubr.f32.mxu0 0.0
  %6665 = vmatmul.mubr.f32.gmra.mrb[0].mxu0 %v6598
  %v6666 = vpop.f32.mrb[0].mxu0
  %v6667 = vadd.f32 0.0, %v6666
  %v6668 = vpop.f32.mrb[0].mxu0
  %6669 = vdwg.mxu0
  %v6671 = vsel %vm418, %v6446, 0
  %6673 = vmatprep.subr.mxu0 0.0
  %6674 = vmatpush1.msra.mxu0 %v5724
  %6675 = vmatprep.subr.mxu0 0.0
  %6676 = vmatpush1.msra.mxu0 0.0
  %6677 = vmatprep.subr.mxu0 0.0
  %6678 = vmatpush1.msra.mxu0 0.0
  %6679 = vmatprep.subr.mxu0 0.0
  %6680 = vmatpush1.msra.mxu0 0.0
  %6681 = vmatprep.subr.mxu0 0.0
  %6682 = vmatpush1.msra.mxu0 0.0
  %6683 = vmatprep.subr.mxu0 0.0
  %6684 = vmatpush1.msra.mxu0 0.0
  %6685 = vmatprep.subr.mxu0 0.0
  %6686 = vmatpush1.msra.mxu0 0.0
  %6687 = vmatprep.subr.mxu0 0.0
  %6688 = vmatpush1.msra.mxu0 0.0
  %6689 = vmatprep.subr.mxu0 0.0
  %6690 = vmatpush1.msra.mxu0 0.0
  %6691 = vmatprep.subr.mxu0 0.0
  %6692 = vmatpush1.msra.mxu0 0.0
  %6693 = vmatprep.subr.mxu0 0.0
  %6694 = vmatpush1.msra.mxu0 0.0
  %6695 = vmatprep.subr.mxu0 0.0
  %6696 = vmatpush1.msra.mxu0 0.0
  %6697 = vmatprep.subr.mxu0 0.0
  %6698 = vmatpush1.msra.mxu0 0.0
  %6699 = vmatprep.subr.mxu0 0.0
  %6700 = vmatpush1.msra.mxu0 0.0
  %6701 = vmatprep.subr.mxu0 0.0
  %6702 = vmatpush1.msra.mxu0 0.0
  %6703 = vmatprep.subr.mxu0 0.0
  %6704 = vmatpush1.msra.mxu0 0.0
  %6705 = vmatprep.subr.mxu0 0.0
  %6706 = vmatpush1.msra.mxu0 0.0
  %6707 = vmatprep.subr.mxu0 0.0
  %6708 = vmatpush1.msra.mxu0 0.0
  %6709 = vmatprep.subr.mxu0 0.0
  %6710 = vmatpush1.msra.mxu0 0.0
  %6711 = vmatprep.subr.mxu0 0.0
  %6712 = vmatpush1.msra.mxu0 0.0
  %6713 = vmatprep.subr.mxu0 0.0
  %6714 = vmatpush1.msra.mxu0 0.0
  %6715 = vmatprep.subr.mxu0 0.0
  %6716 = vmatpush1.msra.mxu0 0.0
  %6717 = vmatprep.subr.mxu0 0.0
  %6718 = vmatpush1.msra.mxu0 0.0
  %6719 = vmatprep.subr.mxu0 0.0
  %6720 = vmatpush1.msra.mxu0 0.0
  %6721 = vmatprep.subr.mxu0 0.0
  %6722 = vmatpush1.msra.mxu0 0.0
  %6723 = vmatprep.subr.mxu0 0.0
  %6724 = vmatpush1.msra.mxu0 0.0
  %6725 = vmatprep.subr.mxu0 0.0
  %6726 = vmatpush1.msra.mxu0 0.0
  %6727 = vmatprep.subr.mxu0 0.0
  %6728 = vmatpush1.msra.mxu0 0.0
  %6729 = vmatprep.subr.mxu0 0.0
  %6730 = vmatpush1.msra.mxu0 0.0
  %6731 = vmatprep.subr.mxu0 0.0
  %6732 = vmatpush1.msra.mxu0 0.0
  %6733 = vmatprep.subr.mxu0 0.0
  %6734 = vmatpush1.msra.mxu0 0.0
  %6735 = vmatprep.subr.mxu0 0.0
  %6736 = vmatpush1.msra.mxu0 0.0
  %6737 = vmatprep.mubr.f32.mxu0 0.0
  %6738 = vmatmul.mubr.f32.gmra.mrb[0].mxu0 %v6671
  %v6739 = vpop.f32.mrb[0].mxu0
  %v6740 = vadd.f32 0.0, %v6739
  %v6741 = vpop.f32.mrb[0].mxu0
  %6742 = vdwg.mxu0
  %v6744 = vsel %vm418, %v6447, 0
  %6746 = vmatprep.subr.mxu0 0.0
  %6747 = vmatpush1.msra.mxu0 %v5729
  %6748 = vmatprep.subr.mxu0 0.0
  %6749 = vmatpush1.msra.mxu0 0.0
  %6750 = vmatprep.subr.mxu0 0.0
  %6751 = vmatpush1.msra.mxu0 0.0
  %6752 = vmatprep.subr.mxu0 0.0
  %6753 = vmatpush1.msra.mxu0 0.0
  %6754 = vmatprep.subr.mxu0 0.0
  %6755 = vmatpush1.msra.mxu0 0.0
  %6756 = vmatprep.subr.mxu0 0.0
  %6757 = vmatpush1.msra.mxu0 0.0
  %6758 = vmatprep.subr.mxu0 0.0
  %6759 = vmatpush1.msra.mxu0 0.0
  %6760 = vmatprep.subr.mxu0 0.0
  %6761 = vmatpush1.msra.mxu0 0.0
  %6762 = vmatprep.subr.mxu0 0.0
  %6763 = vmatpush1.msra.mxu0 0.0
  %6764 = vmatprep.subr.mxu0 0.0
  %6765 = vmatpush1.msra.mxu0 0.0
  %6766 = vmatprep.subr.mxu0 0.0
  %6767 = vmatpush1.msra.mxu0 0.0
  %6768 = vmatprep.subr.mxu0 0.0
  %6769 = vmatpush1.msra.mxu0 0.0
  %6770 = vmatprep.subr.mxu0 0.0
  %6771 = vmatpush1.msra.mxu0 0.0
  %6772 = vmatprep.subr.mxu0 0.0
  %6773 = vmatpush1.msra.mxu0 0.0
  %6774 = vmatprep.subr.mxu0 0.0
  %6775 = vmatpush1.msra.mxu0 0.0
  %6776 = vmatprep.subr.mxu0 0.0
  %6777 = vmatpush1.msra.mxu0 0.0
  %6778 = vmatprep.subr.mxu0 0.0
  %6779 = vmatpush1.msra.mxu0 0.0
  %6780 = vmatprep.subr.mxu0 0.0
  %6781 = vmatpush1.msra.mxu0 0.0
  %6782 = vmatprep.subr.mxu0 0.0
  %6783 = vmatpush1.msra.mxu0 0.0
  %6784 = vmatprep.subr.mxu0 0.0
  %6785 = vmatpush1.msra.mxu0 0.0
  %6786 = vmatprep.subr.mxu0 0.0
  %6787 = vmatpush1.msra.mxu0 0.0
  %6788 = vmatprep.subr.mxu0 0.0
  %6789 = vmatpush1.msra.mxu0 0.0
  %6790 = vmatprep.subr.mxu0 0.0
  %6791 = vmatpush1.msra.mxu0 0.0
  %6792 = vmatprep.subr.mxu0 0.0
  %6793 = vmatpush1.msra.mxu0 0.0
  %6794 = vmatprep.subr.mxu0 0.0
  %6795 = vmatpush1.msra.mxu0 0.0
  %6796 = vmatprep.subr.mxu0 0.0
  %6797 = vmatpush1.msra.mxu0 0.0
  %6798 = vmatprep.subr.mxu0 0.0
  %6799 = vmatpush1.msra.mxu0 0.0
  %6800 = vmatprep.subr.mxu0 0.0
  %6801 = vmatpush1.msra.mxu0 0.0
  %6802 = vmatprep.subr.mxu0 0.0
  %6803 = vmatpush1.msra.mxu0 0.0
  %6804 = vmatprep.subr.mxu0 0.0
  %6805 = vmatpush1.msra.mxu0 0.0
  %6806 = vmatprep.subr.mxu0 0.0
  %6807 = vmatpush1.msra.mxu0 0.0
  %6808 = vmatprep.subr.mxu0 0.0
  %6809 = vmatpush1.msra.mxu0 0.0
  %6810 = vmatprep.mubr.f32.mxu0 0.0
  %6811 = vmatmul.mubr.f32.gmra.mrb[0].mxu0 %v6744
  %v6812 = vpop.f32.mrb[0].mxu0
  %v6813 = vadd.f32 0.0, %v6812
  %v6814 = vpop.f32.mrb[0].mxu0
  %6815 = vdwg.mxu0
  %v6817 = vsel %vm418, %v6448, 0
  %6819 = vmatprep.subr.mxu0 0.0
  %6820 = vmatpush1.msra.mxu0 %v5734
  %6821 = vmatprep.subr.mxu0 0.0
  %6822 = vmatpush1.msra.mxu0 0.0
  %6823 = vmatprep.subr.mxu0 0.0
  %6824 = vmatpush1.msra.mxu0 0.0
  %6825 = vmatprep.subr.mxu0 0.0
  %6826 = vmatpush1.msra.mxu0 0.0
  %6827 = vmatprep.subr.mxu0 0.0
  %6828 = vmatpush1.msra.mxu0 0.0
  %6829 = vmatprep.subr.mxu0 0.0
  %6830 = vmatpush1.msra.mxu0 0.0
  %6831 = vmatprep.subr.mxu0 0.0
  %6832 = vmatpush1.msra.mxu0 0.0
  %6833 = vmatprep.subr.mxu0 0.0
  %6834 = vmatpush1.msra.mxu0 0.0
  %6835 = vmatprep.subr.mxu0 0.0
  %6836 = vmatpush1.msra.mxu0 0.0
  %6837 = vmatprep.subr.mxu0 0.0
  %6838 = vmatpush1.msra.mxu0 0.0
  %6839 = vmatprep.subr.mxu0 0.0
  %6840 = vmatpush1.msra.mxu0 0.0
  %6841 = vmatprep.subr.mxu0 0.0
  %6842 = vmatpush1.msra.mxu0 0.0
  %6843 = vmatprep.subr.mxu0 0.0
  %6844 = vmatpush1.msra.mxu0 0.0
  %6845 = vmatprep.subr.mxu0 0.0
  %6846 = vmatpush1.msra.mxu0 0.0
  %6847 = vmatprep.subr.mxu0 0.0
  %6848 = vmatpush1.msra.mxu0 0.0
  %6849 = vmatprep.subr.mxu0 0.0
  %6850 = vmatpush1.msra.mxu0 0.0
  %6851 = vmatprep.subr.mxu0 0.0
  %6852 = vmatpush1.msra.mxu0 0.0
  %6853 = vmatprep.subr.mxu0 0.0
  %6854 = vmatpush1.msra.mxu0 0.0
  %6855 = vmatprep.subr.mxu0 0.0
  %6856 = vmatpush1.msra.mxu0 0.0
  %6857 = vmatprep.subr.mxu0 0.0
  %6858 = vmatpush1.msra.mxu0 0.0
  %6859 = vmatprep.subr.mxu0 0.0
  %6860 = vmatpush1.msra.mxu0 0.0
  %6861 = vmatprep.subr.mxu0 0.0
  %6862 = vmatpush1.msra.mxu0 0.0
  %6863 = vmatprep.subr.mxu0 0.0
  %6864 = vmatpush1.msra.mxu0 0.0
  %6865 = vmatprep.subr.mxu0 0.0
  %6866 = vmatpush1.msra.mxu0 0.0
  %6867 = vmatprep.subr.mxu0 0.0
  %6868 = vmatpush1.msra.mxu0 0.0
  %6869 = vmatprep.subr.mxu0 0.0
  %6870 = vmatpush1.msra.mxu0 0.0
  %6871 = vmatprep.subr.mxu0 0.0
  %6872 = vmatpush1.msra.mxu0 0.0
  %6873 = vmatprep.subr.mxu0 0.0
  %6874 = vmatpush1.msra.mxu0 0.0
  %6875 = vmatprep.subr.mxu0 0.0
  %6876 = vmatpush1.msra.mxu0 0.0
  %6877 = vmatprep.subr.mxu0 0.0
  %6878 = vmatpush1.msra.mxu0 0.0
  %6879 = vmatprep.subr.mxu0 0.0
  %6880 = vmatpush1.msra.mxu0 0.0
  %6881 = vmatprep.subr.mxu0 0.0
  %6882 = vmatpush1.msra.mxu0 0.0
  %6883 = vmatprep.mubr.f32.mxu0 0.0
  %6884 = vmatmul.mubr.f32.gmra.mrb[0].mxu0 %v6817
  %v6885 = vpop.f32.mrb[0].mxu0
  %v6886 = vadd.f32 0.0, %v6885
  %v6887 = vpop.f32.mrb[0].mxu0
  %6888 = vdwg.mxu0
  %v6890 = vsel %vm418, %v6449, 0
  %6892 = vmatprep.subr.mxu0 0.0
  %6893 = vmatpush1.msra.mxu0 %v5739
  %6894 = vmatprep.subr.mxu0 0.0
  %6895 = vmatpush1.msra.mxu0 0.0
  %6896 = vmatprep.subr.mxu0 0.0
  %6897 = vmatpush1.msra.mxu0 0.0
  %6898 = vmatprep.subr.mxu0 0.0
  %6899 = vmatpush1.msra.mxu0 0.0
  %6900 = vmatprep.subr.mxu0 0.0
  %6901 = vmatpush1.msra.mxu0 0.0
  %6902 = vmatprep.subr.mxu0 0.0
  %6903 = vmatpush1.msra.mxu0 0.0
  %6904 = vmatprep.subr.mxu0 0.0
  %6905 = vmatpush1.msra.mxu0 0.0
  %6906 = vmatprep.subr.mxu0 0.0
  %6907 = vmatpush1.msra.mxu0 0.0
  %6908 = vmatprep.subr.mxu0 0.0
  %6909 = vmatpush1.msra.mxu0 0.0
  %6910 = vmatprep.subr.mxu0 0.0
  %6911 = vmatpush1.msra.mxu0 0.0
  %6912 = vmatprep.subr.mxu0 0.0
  %6913 = vmatpush1.msra.mxu0 0.0
  %6914 = vmatprep.subr.mxu0 0.0
  %6915 = vmatpush1.msra.mxu0 0.0
  %6916 = vmatprep.subr.mxu0 0.0
  %6917 = vmatpush1.msra.mxu0 0.0
  %6918 = vmatprep.subr.mxu0 0.0
  %6919 = vmatpush1.msra.mxu0 0.0
  %6920 = vmatprep.subr.mxu0 0.0
  %6921 = vmatpush1.msra.mxu0 0.0
  %6922 = vmatprep.subr.mxu0 0.0
  %6923 = vmatpush1.msra.mxu0 0.0
  %6924 = vmatprep.subr.mxu0 0.0
  %6925 = vmatpush1.msra.mxu0 0.0
  %6926 = vmatprep.subr.mxu0 0.0
  %6927 = vmatpush1.msra.mxu0 0.0
  %6928 = vmatprep.subr.mxu0 0.0
  %6929 = vmatpush1.msra.mxu0 0.0
  %6930 = vmatprep.subr.mxu0 0.0
  %6931 = vmatpush1.msra.mxu0 0.0
  %6932 = vmatprep.subr.mxu0 0.0
  %6933 = vmatpush1.msra.mxu0 0.0
  %6934 = vmatprep.subr.mxu0 0.0
  %6935 = vmatpush1.msra.mxu0 0.0
  %6936 = vmatprep.subr.mxu0 0.0
  %6937 = vmatpush1.msra.mxu0 0.0
  %6938 = vmatprep.subr.mxu0 0.0
  %6939 = vmatpush1.msra.mxu0 0.0
  %6940 = vmatprep.subr.mxu0 0.0
  %6941 = vmatpush1.msra.mxu0 0.0
  %6942 = vmatprep.subr.mxu0 0.0
  %6943 = vmatpush1.msra.mxu0 0.0
  %6944 = vmatprep.subr.mxu0 0.0
  %6945 = vmatpush1.msra.mxu0 0.0
  %6946 = vmatprep.subr.mxu0 0.0
  %6947 = vmatpush1.msra.mxu0 0.0
  %6948 = vmatprep.subr.mxu0 0.0
  %6949 = vmatpush1.msra.mxu0 0.0
  %6950 = vmatprep.subr.mxu0 0.0
  %6951 = vmatpush1.msra.mxu0 0.0
  %6952 = vmatprep.subr.mxu0 0.0
  %6953 = vmatpush1.msra.mxu0 0.0
  %6954 = vmatprep.subr.mxu0 0.0
  %6955 = vmatpush1.msra.mxu0 0.0
  %6956 = vmatprep.mubr.f32.mxu0 0.0
  %6957 = vmatmul.mubr.f32.gmra.mrb[0].mxu0 %v6890
  %v6958 = vpop.f32.mrb[0].mxu0
  %v6959 = vadd.f32 0.0, %v6958
  %v6960 = vpop.f32.mrb[0].mxu0
  %6961 = vdwg.mxu0
  %v6963 = vsel %vm418, %v6450, 0
  %6965 = vmatprep.subr.mxu0 0.0
  %6966 = vmatpush1.msra.mxu0 %v5744
  %6967 = vmatprep.subr.mxu0 0.0
  %6968 = vmatpush1.msra.mxu0 0.0
  %6969 = vmatprep.subr.mxu0 0.0
  %6970 = vmatpush1.msra.mxu0 0.0
  %6971 = vmatprep.subr.mxu0 0.0
  %6972 = vmatpush1.msra.mxu0 0.0
  %6973 = vmatprep.subr.mxu0 0.0
  %6974 = vmatpush1.msra.mxu0 0.0
  %6975 = vmatprep.subr.mxu0 0.0
  %6976 = vmatpush1.msra.mxu0 0.0
  %6977 = vmatprep.subr.mxu0 0.0
  %6978 = vmatpush1.msra.mxu0 0.0
  %6979 = vmatprep.subr.mxu0 0.0
  %6980 = vmatpush1.msra.mxu0 0.0
  %6981 = vmatprep.subr.mxu0 0.0
  %6982 = vmatpush1.msra.mxu0 0.0
  %6983 = vmatprep.subr.mxu0 0.0
  %6984 = vmatpush1.msra.mxu0 0.0
  %6985 = vmatprep.subr.mxu0 0.0
  %6986 = vmatpush1.msra.mxu0 0.0
  %6987 = vmatprep.subr.mxu0 0.0
  %6988 = vmatpush1.msra.mxu0 0.0
  %6989 = vmatprep.subr.mxu0 0.0
  %6990 = vmatpush1.msra.mxu0 0.0
  %6991 = vmatprep.subr.mxu0 0.0
  %6992 = vmatpush1.msra.mxu0 0.0
  %6993 = vmatprep.subr.mxu0 0.0
  %6994 = vmatpush1.msra.mxu0 0.0
  %6995 = vmatprep.subr.mxu0 0.0
  %6996 = vmatpush1.msra.mxu0 0.0
  %6997 = vmatprep.subr.mxu0 0.0
  %6998 = vmatpush1.msra.mxu0 0.0
  %6999 = vmatprep.subr.mxu0 0.0
  %7000 = vmatpush1.msra.mxu0 0.0
  %7001 = vmatprep.subr.mxu0 0.0
  %7002 = vmatpush1.msra.mxu0 0.0
  %7003 = vmatprep.subr.mxu0 0.0
  %7004 = vmatpush1.msra.mxu0 0.0
  %7005 = vmatprep.subr.mxu0 0.0
  %7006 = vmatpush1.msra.mxu0 0.0
  %7007 = vmatprep.subr.mxu0 0.0
  %7008 = vmatpush1.msra.mxu0 0.0
  %7009 = vmatprep.subr.mxu0 0.0
  %7010 = vmatpush1.msra.mxu0 0.0
  %7011 = vmatprep.subr.mxu0 0.0
  %7012 = vmatpush1.msra.mxu0 0.0
  %7013 = vmatprep.subr.mxu0 0.0
  %7014 = vmatpush1.msra.mxu0 0.0
  %7015 = vmatprep.subr.mxu0 0.0
  %7016 = vmatpush1.msra.mxu0 0.0
  %7017 = vmatprep.subr.mxu0 0.0
  %7018 = vmatpush1.msra.mxu0 0.0
  %7019 = vmatprep.subr.mxu0 0.0
  %7020 = vmatpush1.msra.mxu0 0.0
  %7021 = vmatprep.subr.mxu0 0.0
  %7022 = vmatpush1.msra.mxu0 0.0
  %7023 = vmatprep.subr.mxu0 0.0
  %7024 = vmatpush1.msra.mxu0 0.0
  %7025 = vmatprep.subr.mxu0 0.0
  %7026 = vmatpush1.msra.mxu0 0.0
  %7027 = vmatprep.subr.mxu0 0.0
  %7028 = vmatpush1.msra.mxu0 0.0
  %7029 = vmatprep.mubr.f32.mxu0 0.0
  %7030 = vmatmul.mubr.f32.gmra.mrb[0].mxu0 %v6963
  %v7031 = vpop.f32.mrb[0].mxu0
  %v7032 = vadd.f32 0.0, %v7031
  %v7033 = vpop.f32.mrb[0].mxu0
  %7034 = vdwg.mxu0
  %s7035 = scalar_lea.vmem %s7, 24
  %v7036 = vld [vmem:[%s7035] sm:$0xff]
  %v7038 = vsel %vm418, %v6521, 0
  %v7041 = vsel %vm418, %v6594, 0
  %v7044 = vsel %vm418, %v6667, 0
  %v7047 = vsel %vm418, %v6740, 0
  %v7050 = vsel %vm418, %v6813, 0
  %v7053 = vsel %vm418, %v6886, 0
  %v7056 = vsel %vm418, %v6959, 0
  %v7059 = vsel %vm418, %v7032, 0
  %7061 = vmatprep.subr.mxu0 0.0
  %7062 = vmatpush1.msra.mxu0 %v7036
  %7063 = vmatprep.subr.mxu0 0.0
  %7064 = vmatpush1.msra.mxu0 0.0
  %7065 = vmatprep.subr.mxu0 0.0
  %7066 = vmatpush1.msra.mxu0 0.0
  %7067 = vmatprep.subr.mxu0 0.0
  %7068 = vmatpush1.msra.mxu0 0.0
  %7069 = vmatprep.subr.mxu0 0.0
  %7070 = vmatpush1.msra.mxu0 0.0
  %7071 = vmatprep.subr.mxu0 0.0
  %7072 = vmatpush1.msra.mxu0 0.0
  %7073 = vmatprep.subr.mxu0 0.0
  %7074 = vmatpush1.msra.mxu0 0.0
  %7075 = vmatprep.subr.mxu0 0.0
  %7076 = vmatpush1.msra.mxu0 0.0
  %7077 = vmatprep.subr.mxu0 0.0
  %7078 = vmatpush1.msra.mxu0 0.0
  %7079 = vmatprep.subr.mxu0 0.0
  %7080 = vmatpush1.msra.mxu0 0.0
  %7081 = vmatprep.subr.mxu0 0.0
  %7082 = vmatpush1.msra.mxu0 0.0
  %7083 = vmatprep.subr.mxu0 0.0
  %7084 = vmatpush1.msra.mxu0 0.0
  %7085 = vmatprep.subr.mxu0 0.0
  %7086 = vmatpush1.msra.mxu0 0.0
  %7087 = vmatprep.subr.mxu0 0.0
  %7088 = vmatpush1.msra.mxu0 0.0
  %7089 = vmatprep.subr.mxu0 0.0
  %7090 = vmatpush1.msra.mxu0 0.0
  %7091 = vmatprep.subr.mxu0 0.0
  %7092 = vmatpush1.msra.mxu0 0.0
  %7093 = vmatprep.subr.mxu0 0.0
  %7094 = vmatpush1.msra.mxu0 0.0
  %7095 = vmatprep.subr.mxu0 0.0
  %7096 = vmatpush1.msra.mxu0 0.0
  %7097 = vmatprep.subr.mxu0 0.0
  %7098 = vmatpush1.msra.mxu0 0.0
  %7099 = vmatprep.subr.mxu0 0.0
  %7100 = vmatpush1.msra.mxu0 0.0
  %7101 = vmatprep.subr.mxu0 0.0
  %7102 = vmatpush1.msra.mxu0 0.0
  %7103 = vmatprep.subr.mxu0 0.0
  %7104 = vmatpush1.msra.mxu0 0.0
  %7105 = vmatprep.subr.mxu0 0.0
  %7106 = vmatpush1.msra.mxu0 0.0
  %7107 = vmatprep.subr.mxu0 0.0
  %7108 = vmatpush1.msra.mxu0 0.0
  %7109 = vmatprep.subr.mxu0 0.0
  %7110 = vmatpush1.msra.mxu0 0.0
  %7111 = vmatprep.subr.mxu0 0.0
  %7112 = vmatpush1.msra.mxu0 0.0
  %7113 = vmatprep.subr.mxu0 0.0
  %7114 = vmatpush1.msra.mxu0 0.0
  %7115 = vmatprep.subr.mxu0 0.0
  %7116 = vmatpush1.msra.mxu0 0.0
  %7117 = vmatprep.subr.mxu0 0.0
  %7118 = vmatpush1.msra.mxu0 0.0
  %7119 = vmatprep.subr.mxu0 0.0
  %7120 = vmatpush1.msra.mxu0 0.0
  %7121 = vmatprep.subr.mxu0 0.0
  %7122 = vmatpush1.msra.mxu0 0.0
  %7123 = vmatprep.subr.mxu0 0.0
  %7124 = vmatpush1.msra.mxu0 0.0
  %7125 = vmatprep.mubr.f32.mxu0 0.0
  %7126 = vmatmul.mubr.f32.gmra.mrb[0].mxu0 %v7038
  %v7127 = vpop.f32.mrb[0].mxu0
  %v7128 = vadd.f32 0.0, %v7127
  %v7129 = vpop.f32.mrb[0].mxu0
  %7130 = vmatprep.mubr.f32.mxu0 0.0
  %7131 = vmatmul.mubr.f32.gmra.mrb[0].mxu0 %v7041
  %v7132 = vpop.f32.mrb[0].mxu0
  %v7133 = vadd.f32 0.0, %v7132
  %v7134 = vpop.f32.mrb[0].mxu0
  %7135 = vmatprep.mubr.f32.mxu0 0.0
  %7136 = vmatmul.mubr.f32.gmra.mrb[0].mxu0 %v7044
  %v7137 = vpop.f32.mrb[0].mxu0
  %v7138 = vadd.f32 0.0, %v7137
  %v7139 = vpop.f32.mrb[0].mxu0
  %7140 = vmatprep.mubr.f32.mxu0 0.0
  %7141 = vmatmul.mubr.f32.gmra.mrb[0].mxu0 %v7047
  %v7142 = vpop.f32.mrb[0].mxu0
  %v7143 = vadd.f32 0.0, %v7142
  %v7144 = vpop.f32.mrb[0].mxu0
  %7145 = vmatprep.mubr.f32.mxu0 0.0
  %7146 = vmatmul.mubr.f32.gmra.mrb[0].mxu0 %v7050
  %v7147 = vpop.f32.mrb[0].mxu0
  %v7148 = vadd.f32 0.0, %v7147
  %v7149 = vpop.f32.mrb[0].mxu0
  %7150 = vmatprep.mubr.f32.mxu0 0.0
  %7151 = vmatmul.mubr.f32.gmra.mrb[0].mxu0 %v7053
  %v7152 = vpop.f32.mrb[0].mxu0
  %v7153 = vadd.f32 0.0, %v7152
  %v7154 = vpop.f32.mrb[0].mxu0
  %7155 = vmatprep.mubr.f32.mxu0 0.0
  %7156 = vmatmul.mubr.f32.gmra.mrb[0].mxu0 %v7056
  %v7157 = vpop.f32.mrb[0].mxu0
  %v7158 = vadd.f32 0.0, %v7157
  %v7159 = vpop.f32.mrb[0].mxu0
  %7160 = vmatprep.mubr.f32.mxu0 0.0
  %7161 = vmatmul.mubr.f32.gmra.mrb[0].mxu0 %v7059
  %v7162 = vpop.f32.mrb[0].mxu0
  %v7163 = vadd.f32 0.0, %v7162
  %v7164 = vpop.f32.mrb[0].mxu0
  %7165 = vdwg.mxu0
  %v7166 = vadd.f32 %v5385, %v7128
  %v7167 = vadd.f32 %v5386, %v7133
  %v7168 = vadd.f32 %v5387, %v7138
  %v7169 = vadd.f32 %v5388, %v7143
  %v7170 = vadd.f32 %v5389, %v7148
  %v7171 = vadd.f32 %v5390, %v7153
  %v7172 = vadd.f32 %v5391, %v7158
  %v7173 = vadd.f32 %v5392, %v7163
  %v7174 = vld [vmem:[%s8] sm:$0x1]
  %v7176 = vlaneseq
  %v7177 = vshrl.u32 %v7176, 7
  %v7178 = vsub.s32 0, %v7177
  %v7179 = vrot.slane %v7174, %v7178
  %v7181 = vadd.f32 %v7166, %v7179
  %v7182 = vadd.f32 %v7167, %v7179
  %v7183 = vadd.f32 %v7168, %v7179
  %v7184 = vadd.f32 %v7169, %v7179
  %v7185 = vadd.f32 %v7170, %v7179
  %v7186 = vadd.f32 %v7171, %v7179
  %v7187 = vadd.f32 %v7172, %v7179
  %v7188 = vadd.f32 %v7173, %v7179
  %7189 = vst.msk [vmem:[%s9] sm:$0xff] %vm56, %v7181
  %7190 = vst.msk [vmem:[%s9 + $0x8] sm:$0xff] %vm56, %v7182
  %7191 = vst.msk [vmem:[%s9 + $0x10] sm:$0xff] %vm56, %v7183
  %7192 = vst.msk [vmem:[%s9 + $0x18] sm:$0xff] %vm56, %v7184
  %7193 = vst.msk [vmem:[%s9 + $0x20] sm:$0xff] %vm56, %v7185
  %7194 = vst.msk [vmem:[%s9 + $0x28] sm:$0xff] %vm56, %v7186
  %7195 = vst.msk [vmem:[%s9 + $0x30] sm:$0xff] %vm56, %v7187
  %7196 = vst.msk [vmem:[%s9 + $0x38] sm:$0xff] %vm56, %v7188
  // Predicated region
  $region38: #{tpu_custom_call.1} parent=0 // pred_check
    _
  $region39: #{tpu_custom_call.1} parent=0 // pred_check_branch
    %7198 = sbr.rel (0) target = $region41
  $region40: #{tpu_custom_call.1} parent=0 // pred_region
    _
  $region41: #{tpu_custom_call.1} parent=0 // pred_fallthru
    _
  // Predicated region
  $region42: #{tpu_custom_call.1} parent=0 // pred_check
    _
  $region43: #{tpu_custom_call.1} parent=0 // pred_check_branch
    %7200 = sbr.rel (0) target = $region45
  $region44: #{tpu_custom_call.1} parent=0 // pred_region
    _
  $region45: #{tpu_custom_call.1} parent=0 // pred_fallthru
    _

</llo_original>
